<compile_context>
chip_gen: v6e
topology: v6e:2x2x1
jax: 0.10.0
libtpu: 0.0.40
codegen_flags: <defaults>
</compile_context>

<pallas_src>
import functools
import math

import jax
import jax.numpy as jnp
from jax.experimental import pallas as pl
from jax.experimental.pallas import tpu as pltpu

# ---------------- configuration ----------------
C = 8                      # multiplicity of each irrep in "Cx0e + Cx1o"
EDGE_DIM = 16              # edge_attr_dim
INV_NEURONS = 8            # invariant_neurons
WEIGHT_NUMEL = 4 * C       # 4 'uuu' paths, C weights each
A0 = 0.5                   # path weight for 0e outputs  (sqrt(1/4))
A1 = math.sqrt(3.0) / 2.0  # path weight for 1o outputs  (sqrt(3/4))

N_NODES = 64
N_EDGES = 128
EDGE_TILE = 128            # one lane-dense tile -> grid=(1,) at this toy size

F32 = jnp.float32
_PREC = jax.lax.Precision.HIGHEST   # exact-ish f32 on the (idle) MXU

# ---------------- packed parameter slab layout ----------------
# Each weight matrix (already transposed to [out, in] for the feature-major layout) lives at
# rows [off, off+nr), cols [0, nc); its bias lives at the same rows, column BIAS_COL.
BIAS_COL = 32
SLAB_COLS = 40
_SLAB_ENTRIES = [          # (name, n_rows=out, n_cols=in)
    ("w_inner", 4 * C, 4 * C),
    ("ngpre_w1", 2 * C, 2 * C),
    ("ngpre_w2", 2 * C, 2 * C),
    ("w_inp", 4 * C, 4 * C),
    ("wm1", 2 * INV_NEURONS, EDGE_DIM + 2 * C),
    ("wm2", 2 * WEIGHT_NUMEL, 2 * INV_NEURONS),
    ("ng_w1", 2 * C, 2 * C),
    ("ng_w2", 2 * C, 2 * C),
    ("w_res", 4 * C, 4 * C),
]
_SLAB = {}
_off = 0
for _name, _nr, _nc in _SLAB_ENTRIES:
    _SLAB[_name] = (_off, _nr, _nc)
    _off += _nr
SLAB_ROWS = _off           # 240 (every offset is a multiple of 8)

_BIAS_OF = {"w_inner": "b_inner", "ngpre_w1": "ngpre_b1", "ngpre_w2": "ngpre_b2",
            "w_inp": "b_inp", "wm1": "bm1", "wm2": "bm2",
            "ng_w1": "ng_b1", "ng_w2": "ng_b2", "w_res": "b_res"}


# ---------------- in-kernel helpers ----------------
def _silu(y):
    # divide -> EUP approx reciprocal (frees VALU slots)
    return y * pl.reciprocal(1.0 + jnp.exp(-y), approx=True)


def _ssp(y):  # shifted softplus (stable)
    return jnp.maximum(y, 0.0) + jnp.log(1.0 + jnp.exp(-jnp.abs(y))) - math.log(2.0)


def _dot(a, b):
    return jnp.dot(a, b, preferred_element_type=F32, precision=_PREC)


def _wb(slab_ref, name):
    """Static views into the packed parameter slab: (W^T [out,in], bias [out,1])."""
    r0, nr, nc = _SLAB[name]
    w = slab_ref[r0:r0 + nr, 0:nc]
    b = slab_ref[r0:r0 + nr, BIAS_COL:BIAS_COL + 1]
    return w, b


def _norm_gate_t(s, vx, vy, vz, w1, b1, w2, b2):
    """e3nn-style NormGate in feature-major layout ([channels, cols])."""
    nrm = jnp.sqrt(vx * vx + vy * vy + vz * vz + 1e-12)
    f0 = jnp.concatenate([s, nrm], axis=0)                 # [2C, cols]
    h = _silu(_dot(w1, f0) + b1)
    g = _dot(w2, h) + b2
    gs, gv = g[0:C, :], g[C:2 * C, :]
    return gs, vx * gv, vy * gv, vz * gv


# ---------------- the single fused kernel ----------------
def _fused_kernel(node_x_ref, idx_ref, edge_attr_ref, pair_ref, slab_ref, out_ref,
                  *, n_nodes):
    t = idx_ref.shape[1]                                    # edge tile (lanes)

    # ---------- node-side (feature-major [4C, N], tiny) ----------
    x = node_x_ref[...]                                     # [4C, N]
    w, b = _wb(slab_ref, "w_inner")
    a0 = _dot(w, x) + b                                     # linear_node_pair_inner
    s, vx, vy, vz = x[0:C], x[C:2 * C], x[2 * C:3 * C], x[3 * C:4 * C]
    w1, b1 = _wb(slab_ref, "ngpre_w1")
    w2, b2 = _wb(slab_ref, "ngpre_w2")
    gs, gvx, gvy, gvz = _norm_gate_t(s, vx, vy, vz, w1, b1, w2, b2)   # norm_gate_pre
    ng = jnp.concatenate([gs, gvx, gvy, gvz], axis=0)       # [4C, N]
    w, b = _wb(slab_ref, "w_inp")
    h = _dot(w, ng) + b                                     # linear_node_pair_input

    # ---------- per-edge gather: ONE fused one-hot matmul on the MXU ----------
    feat = jnp.concatenate([a0, h], axis=0)                 # [8C, N]
    idx2 = jnp.concatenate([idx_ref[0:1, :], idx_ref[1:2, :]], axis=1)   # [1, 2T] dst|src
    ni = jax.lax.broadcasted_iota(jnp.int32, (n_nodes, 2 * t), 0)
    onehot = (ni == idx2).astype(F32)                       # [N, 2T]
    g = _dot(feat, onehot)                                  # [8C, 2T]
    a0_d, a0_s = g[0:4 * C, 0:t], g[0:4 * C, t:2 * t]
    h_d, h_s = g[4 * C:8 * C, 0:t], g[4 * C:8 * C, t:2 * t]

    # ---------- s0 = [0.5*dst0e + 0.5*src0e, <1o,1o>/3] ----------
    ds = a0_d[0:C]
    dvx, dvy, dvz = a0_d[C:2 * C], a0_d[2 * C:3 * C], a0_d[3 * C:4 * C]
    ss = a0_s[0:C]
    svx, svy, svz = a0_s[C:2 * C], a0_s[2 * C:3 * C], a0_s[3 * C:4 * C]
    ip = (dvx * svx + dvy * svy + dvz * svz) * (1.0 / 3.0)
    s0 = jnp.concatenate([0.5 * ds + 0.5 * ss, ip], axis=0)  # [2C, T]

    # ---------- fused per-edge weight MLPs (block-diagonal) ----------
    # rows 0:W   <- fc_node_pair(edge_attr)   (SSP hidden, scales folded host-side)
    # rows W:2W  <- fc(s0)                    (SiLU hidden)
    mlp_in = jnp.concatenate([edge_attr_ref[...], s0], axis=0)        # [EDGE_DIM+2C, T]
    wm1, bm1 = _wb(slab_ref, "wm1")
    wm2, bm2 = _wb(slab_ref, "wm2")
    m1 = _dot(wm1, mlp_in) + bm1                                       # [2*INV, T]
    m1 = jnp.concatenate([_ssp(m1[0:INV_NEURONS]), _silu(m1[INV_NEURONS:])], axis=0)
    m2 = _dot(wm2, m1) + bm2                                           # [2*WN, T]
    wgt = m2[0:WEIGHT_NUMEL] * m2[WEIGHT_NUMEL:2 * WEIGHT_NUMEL]       # wa * wb  [4C, T]
    tw0, tw1, tw2, tw3 = wgt[0:C], wgt[C:2 * C], wgt[2 * C:3 * C], wgt[3 * C:4 * C]

    # ---------- weighted 'uuu' tensor product (x = src, y = dst) ----------
    xs = h_s[0:C]
    xvx, xvy, xvz = h_s[C:2 * C], h_s[2 * C:3 * C], h_s[3 * C:4 * C]
    ys = h_d[0:C]
    yvx, yvy, yvz = h_d[C:2 * C], h_d[2 * C:3 * C], h_d[3 * C:4 * C]
    tp_dot = (xvx * yvx + xvy * yvy + xvz * yvz) * (1.0 / math.sqrt(3.0))
    ps = A0 * (tw0 * xs * ys + tw3 * tp_dot)                 # 0e outputs
    c1 = A1 * tw1 * xs                                       # 0e(src) x 1o(dst)
    c2 = A1 * tw2 * ys                                       # 1o(src) x 0e(dst)
    pvx = c1 * yvx + c2 * xvx
    pvy = c1 * yvy + c2 * xvy
    pvz = c1 * yvz + c2 * xvz

    # ---------- post NormGate + node_residual + resnet add ----------
    w1, b1 = _wb(slab_ref, "ng_w1")
    w2, b2 = _wb(slab_ref, "ng_w2")
    qs, qvx, qvy, qvz = _norm_gate_t(ps, pvx, pvy, pvz, w1, b1, w2, b2)
    q = jnp.concatenate([qs, qvx, qvy, qvz], axis=0)         # [4C, T]
    w, b = _wb(slab_ref, "w_res")
    out_ref[...] = _dot(w, q) + b + pair_ref[...]            # lane-dense [32, 128] store


# ---------------- wrapper around the pallas_call ----------------
def nondiag_fused(slab, node_x_t, idx, edge_attr_t, pair_t):
    n4c = 4 * C
    n_nodes = node_x_t.shape[1]
    E = idx.shape[1]
    assert E % EDGE_TILE == 0
    grid = (E // EDGE_TILE,)
    return pl.pallas_call(
        functools.partial(_fused_kernel, n_nodes=n_nodes),
        out_shape=jax.ShapeDtypeStruct((n4c, E), jnp.float32),
        grid=grid,
        in_specs=[
            pl.BlockSpec((n4c, n_nodes), lambda i: (0, 0)),          # node table (VMEM resident)
            pl.BlockSpec((8, EDGE_TILE), lambda i: (0, i)),          # dst/src indices (rows 0/1)
            pl.BlockSpec((EDGE_DIM, EDGE_TILE), lambda i: (0, i)),   # edge_attr^T
            pl.BlockSpec((n4c, EDGE_TILE), lambda i: (0, i)),        # node_pair_attr^T (resnet)
            pl.BlockSpec((SLAB_ROWS, SLAB_COLS), lambda i: (0, 0)),  # packed params: ONE DMA
        ],
        out_specs=pl.BlockSpec((n4c, EDGE_TILE), lambda i: (0, i)),
        compiler_params=pltpu.CompilerParams(
            dimension_semantics=("arbitrary",)),
        cost_estimate=pl.CostEstimate(flops=4_000_000, transcendentals=10_000,
                                      bytes_accessed=200_000),
    )(node_x_t, idx, edge_attr_t, pair_t, slab)


# ---------------- parameters ----------------
def init_params(key):
    ks = jax.random.split(key, 23)
    n = lambda i, shape, s=1.0: s * jax.random.normal(ks[i], shape, dtype=jnp.float32)
    p = {}
    # linear_node_pair_inner
    p["inner_Ws"], p["inner_bs"], p["inner_Wv"] = n(0, (C, C)), n(1, (C,), 0.1), n(2, (C, C))
    # norm_gate_pre.fc : Linear(2C,2C) -> SiLU -> Linear(2C,2C)
    p["ngpre_W1"], p["ngpre_b1"] = n(3, (2 * C, 2 * C), 1 / math.sqrt(2 * C)), n(4, (2 * C,), 0.1)
    p["ngpre_W2"], p["ngpre_b2"] = n(5, (2 * C, 2 * C), 1 / math.sqrt(2 * C)), n(6, (2 * C,), 0.1)
    # linear_node_pair_input
    p["inp_Ws"], p["inp_bs"], p["inp_Wv"] = n(7, (C, C)), n(8, (C,), 0.1), n(9, (C, C))
    # fc_node_pair : e3nn FullyConnectedNet [EDGE_DIM, INV_NEURONS, WEIGHT_NUMEL], SSP, no bias
    p["fcn_W1"], p["fcn_W2"] = n(10, (EDGE_DIM, INV_NEURONS)), n(11, (INV_NEURONS, WEIGHT_NUMEL))
    # fc : Linear(2C, C) -> SiLU -> Linear(C, WEIGHT_NUMEL)
    p["fc_W1"], p["fc_b1"] = n(12, (2 * C, C), 1 / math.sqrt(2 * C)), n(13, (C,), 0.1)
    p["fc_W2"], p["fc_b2"] = n(14, (C, WEIGHT_NUMEL), 1 / math.sqrt(C)), n(15, (WEIGHT_NUMEL,), 0.1)
    # norm_gate (post-TP)
    p["ng_W1"], p["ng_b1"] = n(16, (2 * C, 2 * C), 1 / math.sqrt(2 * C)), n(17, (2 * C,), 0.1)
    p["ng_W2"], p["ng_b2"] = n(18, (2 * C, 2 * C), 1 / math.sqrt(2 * C)), n(19, (2 * C,), 0.1)
    # node_residual
    p["res_Ws"], p["res_bs"], p["res_Wv"] = n(20, (C, C)), n(21, (C,), 0.1), n(22, (C, C))
    return p


def _blockdiag4(Ws, Wv, scale):
    """e3nn Linear on "Cx0e + Cx1o" acting on [s|vx|vy|vz]: diag(Ws,Wv,Wv,Wv)*scale."""
    Z = jnp.zeros((C, C), jnp.float32)
    rows = [jnp.concatenate([Ws, Z, Z, Z], axis=1),
            jnp.concatenate([Z, Wv, Z, Z], axis=1),
            jnp.concatenate([Z, Z, Wv, Z], axis=1),
            jnp.concatenate([Z, Z, Z, Wv], axis=1)]
    return scale * jnp.concatenate(rows, axis=0)


def _blockdiag2(Wa, Wb):
    ra, ca = Wa.shape
    rb, cb = Wb.shape
    top = jnp.concatenate([Wa, jnp.zeros((ra, cb), jnp.float32)], axis=1)
    bot = jnp.concatenate([jnp.zeros((rb, ca), jnp.float32), Wb], axis=1)
    return jnp.concatenate([top, bot], axis=0)


def prepare_params(p):
    """Fold normalization scales into weights and build block-diagonal matrices (host-side)."""
    inv_c = 1.0 / math.sqrt(C)
    z3c = jnp.zeros((3 * C,), jnp.float32)
    prep = {
        "w_inner": _blockdiag4(p["inner_Ws"], p["inner_Wv"], inv_c),
        "b_inner": jnp.concatenate([p["inner_bs"], z3c]),
        "ngpre_w1": p["ngpre_W1"], "ngpre_b1": p["ngpre_b1"],
        "ngpre_w2": p["ngpre_W2"], "ngpre_b2": p["ngpre_b2"],
        "w_inp": _blockdiag4(p["inp_Ws"], p["inp_Wv"], inv_c),
        "b_inp": jnp.concatenate([p["inp_bs"], z3c]),
        # fused per-edge weight MLPs: input [edge_attr | s0], output [wa | wb]
        "wm1": _blockdiag2(p["fcn_W1"] / math.sqrt(EDGE_DIM), p["fc_W1"]),
        "bm1": jnp.concatenate([jnp.zeros((INV_NEURONS,), jnp.float32), p["fc_b1"]]),
        "wm2": _blockdiag2(p["fcn_W2"] / math.sqrt(INV_NEURONS), p["fc_W2"]),
        "bm2": jnp.concatenate([jnp.zeros((WEIGHT_NUMEL,), jnp.float32), p["fc_b2"]]),
        "ng_w1": p["ng_W1"], "ng_b1": p["ng_b1"],
        "ng_w2": p["ng_W2"], "ng_b2": p["ng_b2"],
        "w_res": _blockdiag4(p["res_Ws"], p["res_Wv"], inv_c),
        "b_res": jnp.concatenate([p["res_bs"], z3c]),
    }
    return {k: v.astype(jnp.float32) for k, v in prep.items()}


def pack_slab(prep):
    """Pack all (transposed) weights + biases into one f32 slab -> a single parameter DMA."""
    slab = jnp.zeros((SLAB_ROWS, SLAB_COLS), jnp.float32)
    for name, (r0, nr, nc) in _SLAB.items():
        w_t = prep[name].T                         # [out, in] for feature-major matmuls
        b = prep[_BIAS_OF[name]].reshape(-1, 1)    # [out, 1]
        assert w_t.shape == (nr, nc) and b.shape == (nr, 1)
        slab = slab.at[r0:r0 + nr, 0:nc].set(w_t)
        slab = slab.at[r0:r0 + nr, BIAS_COL:BIAS_COL + 1].set(b)
    return slab


# ---------------- full NonDiagLayer forward ----------------
@jax.jit
def nondiag_forward(slab, node_s, node_v, edge_index, edge_attr, pair_s, pair_v):
    dst, src = edge_index[0], edge_index[1]
    E = edge_attr.shape[0]
    # layout plumbing (outside the kernel): feature-major / transposed inputs
    node_x_t = jnp.concatenate([node_s, node_v], axis=-1).astype(jnp.float32).T   # [4C, N]
    pair_t = jnp.concatenate([pair_s, pair_v], axis=-1).astype(jnp.float32).T     # [4C, E]
    edge_attr_t = edge_attr.astype(jnp.float32).T                                 # [ED, E]
    idx = jnp.zeros((8, E), jnp.int32)
    idx = idx.at[0].set(dst.astype(jnp.int32)).at[1].set(src.astype(jnp.int32))   # [8, E]
    out_t = nondiag_fused(slab, node_x_t, idx, edge_attr_t, pair_t)               # [4C, E]
    out = out_t.T                                                                  # [E, 4C]
    return out[:, :C], out[:, C:]


# ---------------- driver ----------------
if __name__ == "__main__":
    key = jax.random.PRNGKey(0)
    kp, k1, k2, k3, k4, k5, k6 = jax.random.split(key, 7)

    params = init_params(kp)
    prep = prepare_params(params)
    slab = pack_slab(prep)          # scale folding + block-diag + slab packing, done once

    node_s = jax.random.normal(k1, (N_NODES, C), dtype=jnp.float32)
    node_v = jax.random.normal(k2, (N_NODES, 3 * C), dtype=jnp.float32)
    edge_attr = jax.random.normal(k3, (N_EDGES, EDGE_DIM), dtype=jnp.float32)
    edge_index = jax.random.randint(k4, (2, N_EDGES), 0, N_NODES, dtype=jnp.int32)
    pair_s = jax.random.normal(k5, (N_EDGES, C), dtype=jnp.float32)
    pair_v = jax.random.normal(k6, (N_EDGES, 3 * C), dtype=jnp.float32)

    out_s, out_v = nondiag_forward(slab, node_s, node_v, edge_index,
                                   edge_attr, pair_s, pair_v)
    jax.block_until_ready((out_s, out_v))

    assert out_s.shape == (N_EDGES, C) and out_v.shape == (N_EDGES, 3 * C)
    assert bool(jnp.all(jnp.isfinite(out_s))) and bool(jnp.all(jnp.isfinite(out_v)))
    print("KERNEL_OK")
</pallas_src>

<mosaic_0001>
module attributes {stable_mosaic.version = 11 : i64} {
  func.func @_fused_kernel(%arg0: i32, %arg1: memref<32x64xf32, #tpu.memory_space<vmem>>, %arg2: memref<8x128xi32, #tpu.memory_space<vmem>>, %arg3: memref<16x128xf32, #tpu.memory_space<vmem>>, %arg4: memref<32x128xf32, #tpu.memory_space<vmem>>, %arg5: memref<240x40xf32, #tpu.memory_space<vmem>>, %arg6: memref<32x128xf32, #tpu.memory_space<vmem>>) attributes {dimension_semantics = [#tpu.dimension_semantics<arbitrary>], iteration_bounds = array<i64: 1>, scalar_prefetch = 0 : i64, scratch_operands = 0 : i64, tpu.core_type = #tpu.core_type<tc>, window_params = [{pipeline_mode = #tpu.pipeline_mode<synchronous>, transform_indices = @transform_0, window_bounds = array<i64: 32, 64>}, {transform_indices = @transform_1, window_bounds = array<i64: 8, 128>}, {transform_indices = @transform_2, window_bounds = array<i64: 16, 128>}, {transform_indices = @transform_3, window_bounds = array<i64: 32, 128>}, {pipeline_mode = #tpu.pipeline_mode<synchronous>, transform_indices = @transform_4, window_bounds = array<i64: 240, 40>}, {transform_indices = @transform_5, window_bounds = array<i64: 32, 128>}]} {
    %c0 = arith.constant 0 : index
    %c0_0 = arith.constant 0 : index
    %0 = vector.load %arg1[%c0, %c0_0] : memref<32x64xf32, #tpu.memory_space<vmem>>, vector<32x64xf32>
    %c0_1 = arith.constant 0 : index
    %c0_2 = arith.constant 0 : index
    %1 = vector.load %arg5[%c0_1, %c0_2] : memref<240x40xf32, #tpu.memory_space<vmem>>, vector<32x32xf32>
    %c0_3 = arith.constant 0 : index
    %c32 = arith.constant 32 : index
    %2 = vector.load %arg5[%c0_3, %c32] : memref<240x40xf32, #tpu.memory_space<vmem>>, vector<32x1xf32>
    %cst = arith.constant dense<0.000000e+00> : vector<32x64xf32>
    %3 = tpu.matmul %1, %0, %cst {dimension_numbers = #tpu.dot_dimension_numbers<[1], [0], [0], [1], [0, 0, 1, 1], [], []>, precision = #tpu.contract_precision<fp32>} : vector<32x32xf32>, vector<32x64xf32>, vector<32x64xf32> -> vector<32x64xf32>
    %4 = vector.broadcast %2 : vector<32x1xf32> to vector<32x64xf32>
    %5 = arith.addf %3, %4 : vector<32x64xf32>
    %6 = vector.extract_strided_slice %0 {offsets = [0, 0], sizes = [8, 64], strides = [1, 1]} : vector<32x64xf32> to vector<8x64xf32>
    %7 = vector.extract_strided_slice %0 {offsets = [8, 0], sizes = [8, 64], strides = [1, 1]} : vector<32x64xf32> to vector<8x64xf32>
    %8 = vector.extract_strided_slice %0 {offsets = [16, 0], sizes = [8, 64], strides = [1, 1]} : vector<32x64xf32> to vector<8x64xf32>
    %9 = vector.extract_strided_slice %0 {offsets = [24, 0], sizes = [8, 64], strides = [1, 1]} : vector<32x64xf32> to vector<8x64xf32>
    %c32_4 = arith.constant 32 : index
    %c0_5 = arith.constant 0 : index
    %10 = vector.load %arg5[%c32_4, %c0_5] : memref<240x40xf32, #tpu.memory_space<vmem>>, vector<16x16xf32>
    %c32_6 = arith.constant 32 : index
    %c32_7 = arith.constant 32 : index
    %11 = vector.load %arg5[%c32_6, %c32_7] : memref<240x40xf32, #tpu.memory_space<vmem>>, vector<16x1xf32>
    %c48 = arith.constant 48 : index
    %c0_8 = arith.constant 0 : index
    %12 = vector.load %arg5[%c48, %c0_8] : memref<240x40xf32, #tpu.memory_space<vmem>>, vector<16x16xf32>
    %c48_9 = arith.constant 48 : index
    %c32_10 = arith.constant 32 : index
    %13 = vector.load %arg5[%c48_9, %c32_10] : memref<240x40xf32, #tpu.memory_space<vmem>>, vector<16x1xf32>
    %14 = arith.mulf %7, %7 : vector<8x64xf32>
    %15 = arith.mulf %8, %8 : vector<8x64xf32>
    %16 = arith.addf %14, %15 : vector<8x64xf32>
    %17 = arith.mulf %9, %9 : vector<8x64xf32>
    %18 = arith.addf %16, %17 : vector<8x64xf32>
    %cst_11 = arith.constant 9.99999996E-13 : f32
    %19 = vector.broadcast %cst_11 : f32 to vector<8x64xf32>
    %20 = arith.addf %18, %19 : vector<8x64xf32>
    %21 = math.sqrt %20 : vector<8x64xf32>
    %22 = tpu.concatenate %6, %21 in 0 : vector<8x64xf32>, vector<8x64xf32> -> vector<16x64xf32>
    %cst_12 = arith.constant dense<0.000000e+00> : vector<16x64xf32>
    %23 = tpu.matmul %10, %22, %cst_12 {dimension_numbers = #tpu.dot_dimension_numbers<[1], [0], [0], [1], [0, 0, 1, 1], [], []>, precision = #tpu.contract_precision<fp32>} : vector<16x16xf32>, vector<16x64xf32>, vector<16x64xf32> -> vector<16x64xf32>
    %24 = vector.broadcast %11 : vector<16x1xf32> to vector<16x64xf32>
    %25 = arith.addf %23, %24 : vector<16x64xf32>
    %cst_13 = arith.constant 0.000000e+00 : f32
    %26 = vector.broadcast %cst_13 : f32 to vector<16x64xf32>
    %27 = arith.subf %26, %25 : vector<16x64xf32>
    %28 = math.exp %27 : vector<16x64xf32>
    %cst_14 = arith.constant 1.000000e+00 : f32
    %29 = vector.broadcast %cst_14 : f32 to vector<16x64xf32>
    %30 = arith.addf %29, %28 : vector<16x64xf32>
    %31 = tpu.reciprocal %30 {approx = true} : vector<16x64xf32> -> vector<16x64xf32>
    %32 = arith.mulf %25, %31 : vector<16x64xf32>
    %cst_15 = arith.constant dense<0.000000e+00> : vector<16x64xf32>
    %33 = tpu.matmul %12, %32, %cst_15 {dimension_numbers = #tpu.dot_dimension_numbers<[1], [0], [0], [1], [0, 0, 1, 1], [], []>, precision = #tpu.contract_precision<fp32>} : vector<16x16xf32>, vector<16x64xf32>, vector<16x64xf32> -> vector<16x64xf32>
    %34 = vector.broadcast %13 : vector<16x1xf32> to vector<16x64xf32>
    %35 = arith.addf %33, %34 : vector<16x64xf32>
    %36 = vector.extract_strided_slice %35 {offsets = [0, 0], sizes = [8, 64], strides = [1, 1]} : vector<16x64xf32> to vector<8x64xf32>
    %37 = vector.extract_strided_slice %35 {offsets = [8, 0], sizes = [8, 64], strides = [1, 1]} : vector<16x64xf32> to vector<8x64xf32>
    %38 = arith.mulf %7, %37 : vector<8x64xf32>
    %39 = arith.mulf %8, %37 : vector<8x64xf32>
    %40 = arith.mulf %9, %37 : vector<8x64xf32>
    %41 = tpu.concatenate %36, %38, %39, %40 in 0 : vector<8x64xf32>, vector<8x64xf32>, vector<8x64xf32>, vector<8x64xf32> -> vector<32x64xf32>
    %c64 = arith.constant 64 : index
    %c0_16 = arith.constant 0 : index
    %42 = vector.load %arg5[%c64, %c0_16] : memref<240x40xf32, #tpu.memory_space<vmem>>, vector<32x32xf32>
    %c64_17 = arith.constant 64 : index
    %c32_18 = arith.constant 32 : index
    %43 = vector.load %arg5[%c64_17, %c32_18] : memref<240x40xf32, #tpu.memory_space<vmem>>, vector<32x1xf32>
    %cst_19 = arith.constant dense<0.000000e+00> : vector<32x64xf32>
    %44 = tpu.matmul %42, %41, %cst_19 {dimension_numbers = #tpu.dot_dimension_numbers<[1], [0], [0], [1], [0, 0, 1, 1], [], []>, precision = #tpu.contract_precision<fp32>} : vector<32x32xf32>, vector<32x64xf32>, vector<32x64xf32> -> vector<32x64xf32>
    %45 = vector.broadcast %43 : vector<32x1xf32> to vector<32x64xf32>
    %46 = arith.addf %44, %45 : vector<32x64xf32>
    %47 = tpu.concatenate %5, %46 in 0 : vector<32x64xf32>, vector<32x64xf32> -> vector<64x64xf32>
    %c0_20 = arith.constant 0 : index
    %c0_21 = arith.constant 0 : index
    %48 = vector.load %arg2[%c0_20, %c0_21] : memref<8x128xi32, #tpu.memory_space<vmem>>, vector<1x128xi32>
    %c1 = arith.constant 1 : index
    %c0_22 = arith.constant 0 : index
    %49 = vector.load %arg2[%c1, %c0_22] : memref<8x128xi32, #tpu.memory_space<vmem>>, vector<1x128xi32>
    %50 = tpu.concatenate %48, %49 in 1 : vector<1x128xi32>, vector<1x128xi32> -> vector<1x256xi32>
    %51 = tpu.iota {dimensions = array<i32: 0>} : vector<64x256xi32>
    %52 = vector.broadcast %50 : vector<1x256xi32> to vector<64x256xi32>
    %53 = arith.cmpi eq, %51, %52 : vector<64x256xi32>
    %54 = arith.extui %53 : vector<64x256xi1> to vector<64x256xi32>
    %55 = arith.sitofp %54 : vector<64x256xi32> to vector<64x256xf32>
    %cst_23 = arith.constant dense<0.000000e+00> : vector<64x256xf32>
    %56 = tpu.matmul %47, %55, %cst_23 {dimension_numbers = #tpu.dot_dimension_numbers<[1], [0], [0], [1], [0, 0, 1, 1], [], []>, precision = #tpu.contract_precision<fp32>} : vector<64x64xf32>, vector<64x256xf32>, vector<64x256xf32> -> vector<64x256xf32>
    %57 = vector.extract_strided_slice %56 {offsets = [0, 0], sizes = [32, 128], strides = [1, 1]} : vector<64x256xf32> to vector<32x128xf32>
    %58 = vector.extract_strided_slice %56 {offsets = [0, 128], sizes = [32, 128], strides = [1, 1]} : vector<64x256xf32> to vector<32x128xf32>
    %59 = vector.extract_strided_slice %56 {offsets = [32, 0], sizes = [32, 128], strides = [1, 1]} : vector<64x256xf32> to vector<32x128xf32>
    %60 = vector.extract_strided_slice %56 {offsets = [32, 128], sizes = [32, 128], strides = [1, 1]} : vector<64x256xf32> to vector<32x128xf32>
    %61 = vector.extract_strided_slice %57 {offsets = [0, 0], sizes = [8, 128], strides = [1, 1]} : vector<32x128xf32> to vector<8x128xf32>
    %62 = vector.extract_strided_slice %57 {offsets = [8, 0], sizes = [8, 128], strides = [1, 1]} : vector<32x128xf32> to vector<8x128xf32>
    %63 = vector.extract_strided_slice %57 {offsets = [16, 0], sizes = [8, 128], strides = [1, 1]} : vector<32x128xf32> to vector<8x128xf32>
    %64 = vector.extract_strided_slice %57 {offsets = [24, 0], sizes = [8, 128], strides = [1, 1]} : vector<32x128xf32> to vector<8x128xf32>
    %65 = vector.extract_strided_slice %58 {offsets = [0, 0], sizes = [8, 128], strides = [1, 1]} : vector<32x128xf32> to vector<8x128xf32>
    %66 = vector.extract_strided_slice %58 {offsets = [8, 0], sizes = [8, 128], strides = [1, 1]} : vector<32x128xf32> to vector<8x128xf32>
    %67 = vector.extract_strided_slice %58 {offsets = [16, 0], sizes = [8, 128], strides = [1, 1]} : vector<32x128xf32> to vector<8x128xf32>
    %68 = vector.extract_strided_slice %58 {offsets = [24, 0], sizes = [8, 128], strides = [1, 1]} : vector<32x128xf32> to vector<8x128xf32>
    %69 = arith.mulf %62, %66 : vector<8x128xf32>
    %70 = arith.mulf %63, %67 : vector<8x128xf32>
    %71 = arith.addf %69, %70 : vector<8x128xf32>
    %72 = arith.mulf %64, %68 : vector<8x128xf32>
    %73 = arith.addf %71, %72 : vector<8x128xf32>
    %cst_24 = arith.constant 0.333333343 : f32
    %74 = vector.broadcast %cst_24 : f32 to vector<8x128xf32>
    %75 = arith.mulf %73, %74 : vector<8x128xf32>
    %cst_25 = arith.constant 5.000000e-01 : f32
    %76 = vector.broadcast %cst_25 : f32 to vector<8x128xf32>
    %77 = arith.mulf %76, %61 : vector<8x128xf32>
    %cst_26 = arith.constant 5.000000e-01 : f32
    %78 = vector.broadcast %cst_26 : f32 to vector<8x128xf32>
    %79 = arith.mulf %78, %65 : vector<8x128xf32>
    %80 = arith.addf %77, %79 : vector<8x128xf32>
    %81 = tpu.concatenate %80, %75 in 0 : vector<8x128xf32>, vector<8x128xf32> -> vector<16x128xf32>
    %c0_27 = arith.constant 0 : index
    %c0_28 = arith.constant 0 : index
    %82 = vector.load %arg3[%c0_27, %c0_28] : memref<16x128xf32, #tpu.memory_space<vmem>>, vector<16x128xf32>
    %83 = tpu.concatenate %82, %81 in 0 : vector<16x128xf32>, vector<16x128xf32> -> vector<32x128xf32>
    %c96 = arith.constant 96 : index
    %c0_29 = arith.constant 0 : index
    %84 = vector.load %arg5[%c96, %c0_29] : memref<240x40xf32, #tpu.memory_space<vmem>>, vector<16x32xf32>
    %c96_30 = arith.constant 96 : index
    %c32_31 = arith.constant 32 : index
    %85 = vector.load %arg5[%c96_30, %c32_31] : memref<240x40xf32, #tpu.memory_space<vmem>>, vector<16x1xf32>
    %c112 = arith.constant 112 : index
    %c0_32 = arith.constant 0 : index
    %86 = vector.load %arg5[%c112, %c0_32] : memref<240x40xf32, #tpu.memory_space<vmem>>, vector<64x16xf32>
    %c112_33 = arith.constant 112 : index
    %c32_34 = arith.constant 32 : index
    %87 = vector.load %arg5[%c112_33, %c32_34] : memref<240x40xf32, #tpu.memory_space<vmem>>, vector<64x1xf32>
    %cst_35 = arith.constant dense<0.000000e+00> : vector<16x128xf32>
    %88 = tpu.matmul %84, %83, %cst_35 {dimension_numbers = #tpu.dot_dimension_numbers<[1], [0], [0], [1], [0, 0, 1, 1], [], []>, precision = #tpu.contract_precision<fp32>} : vector<16x32xf32>, vector<32x128xf32>, vector<16x128xf32> -> vector<16x128xf32>
    %89 = vector.broadcast %85 : vector<16x1xf32> to vector<16x128xf32>
    %90 = arith.addf %88, %89 : vector<16x128xf32>
    %91 = vector.extract_strided_slice %90 {offsets = [0, 0], sizes = [8, 128], strides = [1, 1]} : vector<16x128xf32> to vector<8x128xf32>
    %cst_36 = arith.constant 0.000000e+00 : f32
    %92 = vector.broadcast %cst_36 : f32 to vector<8x128xf32>
    %93 = arith.maximumf %91, %92 : vector<8x128xf32>
    %94 = math.absf %91 : vector<8x128xf32>
    %cst_37 = arith.constant 0.000000e+00 : f32
    %95 = vector.broadcast %cst_37 : f32 to vector<8x128xf32>
    %96 = arith.subf %95, %94 : vector<8x128xf32>
    %97 = math.exp %96 : vector<8x128xf32>
    %cst_38 = arith.constant 1.000000e+00 : f32
    %98 = vector.broadcast %cst_38 : f32 to vector<8x128xf32>
    %99 = arith.addf %98, %97 : vector<8x128xf32>
    %100 = math.log %99 : vector<8x128xf32>
    %101 = arith.addf %93, %100 : vector<8x128xf32>
    %cst_39 = arith.constant 0.693147182 : f32
    %102 = vector.broadcast %cst_39 : f32 to vector<8x128xf32>
    %103 = arith.subf %101, %102 : vector<8x128xf32>
    %104 = vector.extract_strided_slice %90 {offsets = [8, 0], sizes = [8, 128], strides = [1, 1]} : vector<16x128xf32> to vector<8x128xf32>
    %cst_40 = arith.constant 0.000000e+00 : f32
    %105 = vector.broadcast %cst_40 : f32 to vector<8x128xf32>
    %106 = arith.subf %105, %104 : vector<8x128xf32>
    %107 = math.exp %106 : vector<8x128xf32>
    %cst_41 = arith.constant 1.000000e+00 : f32
    %108 = vector.broadcast %cst_41 : f32 to vector<8x128xf32>
    %109 = arith.addf %108, %107 : vector<8x128xf32>
    %110 = tpu.reciprocal %109 {approx = true} : vector<8x128xf32> -> vector<8x128xf32>
    %111 = arith.mulf %104, %110 : vector<8x128xf32>
    %112 = tpu.concatenate %103, %111 in 0 : vector<8x128xf32>, vector<8x128xf32> -> vector<16x128xf32>
    %cst_42 = arith.constant dense<0.000000e+00> : vector<64x128xf32>
    %113 = tpu.matmul %86, %112, %cst_42 {dimension_numbers = #tpu.dot_dimension_numbers<[1], [0], [0], [1], [0, 0, 1, 1], [], []>, precision = #tpu.contract_precision<fp32>} : vector<64x16xf32>, vector<16x128xf32>, vector<64x128xf32> -> vector<64x128xf32>
    %114 = vector.broadcast %87 : vector<64x1xf32> to vector<64x128xf32>
    %115 = arith.addf %113, %114 : vector<64x128xf32>
    %116 = vector.extract_strided_slice %115 {offsets = [0, 0], sizes = [32, 128], strides = [1, 1]} : vector<64x128xf32> to vector<32x128xf32>
    %117 = vector.extract_strided_slice %115 {offsets = [32, 0], sizes = [32, 128], strides = [1, 1]} : vector<64x128xf32> to vector<32x128xf32>
    %118 = arith.mulf %116, %117 : vector<32x128xf32>
    %119 = vector.extract_strided_slice %118 {offsets = [0, 0], sizes = [8, 128], strides = [1, 1]} : vector<32x128xf32> to vector<8x128xf32>
    %120 = vector.extract_strided_slice %118 {offsets = [8, 0], sizes = [8, 128], strides = [1, 1]} : vector<32x128xf32> to vector<8x128xf32>
    %121 = vector.extract_strided_slice %118 {offsets = [16, 0], sizes = [8, 128], strides = [1, 1]} : vector<32x128xf32> to vector<8x128xf32>
    %122 = vector.extract_strided_slice %118 {offsets = [24, 0], sizes = [8, 128], strides = [1, 1]} : vector<32x128xf32> to vector<8x128xf32>
    %123 = vector.extract_strided_slice %60 {offsets = [0, 0], sizes = [8, 128], strides = [1, 1]} : vector<32x128xf32> to vector<8x128xf32>
    %124 = vector.extract_strided_slice %60 {offsets = [8, 0], sizes = [8, 128], strides = [1, 1]} : vector<32x128xf32> to vector<8x128xf32>
    %125 = vector.extract_strided_slice %60 {offsets = [16, 0], sizes = [8, 128], strides = [1, 1]} : vector<32x128xf32> to vector<8x128xf32>
    %126 = vector.extract_strided_slice %60 {offsets = [24, 0], sizes = [8, 128], strides = [1, 1]} : vector<32x128xf32> to vector<8x128xf32>
    %127 = vector.extract_strided_slice %59 {offsets = [0, 0], sizes = [8, 128], strides = [1, 1]} : vector<32x128xf32> to vector<8x128xf32>
    %128 = vector.extract_strided_slice %59 {offsets = [8, 0], sizes = [8, 128], strides = [1, 1]} : vector<32x128xf32> to vector<8x128xf32>
    %129 = vector.extract_strided_slice %59 {offsets = [16, 0], sizes = [8, 128], strides = [1, 1]} : vector<32x128xf32> to vector<8x128xf32>
    %130 = vector.extract_strided_slice %59 {offsets = [24, 0], sizes = [8, 128], strides = [1, 1]} : vector<32x128xf32> to vector<8x128xf32>
    %131 = arith.mulf %124, %128 : vector<8x128xf32>
    %132 = arith.mulf %125, %129 : vector<8x128xf32>
    %133 = arith.addf %131, %132 : vector<8x128xf32>
    %134 = arith.mulf %126, %130 : vector<8x128xf32>
    %135 = arith.addf %133, %134 : vector<8x128xf32>
    %cst_43 = arith.constant 0.577350259 : f32
    %136 = vector.broadcast %cst_43 : f32 to vector<8x128xf32>
    %137 = arith.mulf %135, %136 : vector<8x128xf32>
    %138 = arith.mulf %119, %123 : vector<8x128xf32>
    %139 = arith.mulf %138, %127 : vector<8x128xf32>
    %140 = arith.mulf %122, %137 : vector<8x128xf32>
    %141 = arith.addf %139, %140 : vector<8x128xf32>
    %cst_44 = arith.constant 5.000000e-01 : f32
    %142 = vector.broadcast %cst_44 : f32 to vector<8x128xf32>
    %143 = arith.mulf %142, %141 : vector<8x128xf32>
    %cst_45 = arith.constant 0.866025388 : f32
    %144 = vector.broadcast %cst_45 : f32 to vector<8x128xf32>
    %145 = arith.mulf %144, %120 : vector<8x128xf32>
    %146 = arith.mulf %145, %123 : vector<8x128xf32>
    %cst_46 = arith.constant 0.866025388 : f32
    %147 = vector.broadcast %cst_46 : f32 to vector<8x128xf32>
    %148 = arith.mulf %147, %121 : vector<8x128xf32>
    %149 = arith.mulf %148, %127 : vector<8x128xf32>
    %150 = arith.mulf %146, %128 : vector<8x128xf32>
    %151 = arith.mulf %149, %124 : vector<8x128xf32>
    %152 = arith.addf %150, %151 : vector<8x128xf32>
    %153 = arith.mulf %146, %129 : vector<8x128xf32>
    %154 = arith.mulf %149, %125 : vector<8x128xf32>
    %155 = arith.addf %153, %154 : vector<8x128xf32>
    %156 = arith.mulf %146, %130 : vector<8x128xf32>
    %157 = arith.mulf %149, %126 : vector<8x128xf32>
    %158 = arith.addf %156, %157 : vector<8x128xf32>
    %c176 = arith.constant 176 : index
    %c0_47 = arith.constant 0 : index
    %159 = vector.load %arg5[%c176, %c0_47] : memref<240x40xf32, #tpu.memory_space<vmem>>, vector<16x16xf32>
    %c176_48 = arith.constant 176 : index
    %c32_49 = arith.constant 32 : index
    %160 = vector.load %arg5[%c176_48, %c32_49] : memref<240x40xf32, #tpu.memory_space<vmem>>, vector<16x1xf32>
    %c192 = arith.constant 192 : index
    %c0_50 = arith.constant 0 : index
    %161 = vector.load %arg5[%c192, %c0_50] : memref<240x40xf32, #tpu.memory_space<vmem>>, vector<16x16xf32>
    %c192_51 = arith.constant 192 : index
    %c32_52 = arith.constant 32 : index
    %162 = vector.load %arg5[%c192_51, %c32_52] : memref<240x40xf32, #tpu.memory_space<vmem>>, vector<16x1xf32>
    %163 = arith.mulf %152, %152 : vector<8x128xf32>
    %164 = arith.mulf %155, %155 : vector<8x128xf32>
    %165 = arith.addf %163, %164 : vector<8x128xf32>
    %166 = arith.mulf %158, %158 : vector<8x128xf32>
    %167 = arith.addf %165, %166 : vector<8x128xf32>
    %cst_53 = arith.constant 9.99999996E-13 : f32
    %168 = vector.broadcast %cst_53 : f32 to vector<8x128xf32>
    %169 = arith.addf %167, %168 : vector<8x128xf32>
    %170 = math.sqrt %169 : vector<8x128xf32>
    %171 = tpu.concatenate %143, %170 in 0 : vector<8x128xf32>, vector<8x128xf32> -> vector<16x128xf32>
    %cst_54 = arith.constant dense<0.000000e+00> : vector<16x128xf32>
    %172 = tpu.matmul %159, %171, %cst_54 {dimension_numbers = #tpu.dot_dimension_numbers<[1], [0], [0], [1], [0, 0, 1, 1], [], []>, precision = #tpu.contract_precision<fp32>} : vector<16x16xf32>, vector<16x128xf32>, vector<16x128xf32> -> vector<16x128xf32>
    %173 = vector.broadcast %160 : vector<16x1xf32> to vector<16x128xf32>
    %174 = arith.addf %172, %173 : vector<16x128xf32>
    %cst_55 = arith.constant 0.000000e+00 : f32
    %175 = vector.broadcast %cst_55 : f32 to vector<16x128xf32>
    %176 = arith.subf %175, %174 : vector<16x128xf32>
    %177 = math.exp %176 : vector<16x128xf32>
    %cst_56 = arith.constant 1.000000e+00 : f32
    %178 = vector.broadcast %cst_56 : f32 to vector<16x128xf32>
    %179 = arith.addf %178, %177 : vector<16x128xf32>
    %180 = tpu.reciprocal %179 {approx = true} : vector<16x128xf32> -> vector<16x128xf32>
    %181 = arith.mulf %174, %180 : vector<16x128xf32>
    %cst_57 = arith.constant dense<0.000000e+00> : vector<16x128xf32>
    %182 = tpu.matmul %161, %181, %cst_57 {dimension_numbers = #tpu.dot_dimension_numbers<[1], [0], [0], [1], [0, 0, 1, 1], [], []>, precision = #tpu.contract_precision<fp32>} : vector<16x16xf32>, vector<16x128xf32>, vector<16x128xf32> -> vector<16x128xf32>
    %183 = vector.broadcast %162 : vector<16x1xf32> to vector<16x128xf32>
    %184 = arith.addf %182, %183 : vector<16x128xf32>
    %185 = vector.extract_strided_slice %184 {offsets = [0, 0], sizes = [8, 128], strides = [1, 1]} : vector<16x128xf32> to vector<8x128xf32>
    %186 = vector.extract_strided_slice %184 {offsets = [8, 0], sizes = [8, 128], strides = [1, 1]} : vector<16x128xf32> to vector<8x128xf32>
    %187 = arith.mulf %152, %186 : vector<8x128xf32>
    %188 = arith.mulf %155, %186 : vector<8x128xf32>
    %189 = arith.mulf %158, %186 : vector<8x128xf32>
    %190 = tpu.concatenate %185, %187, %188, %189 in 0 : vector<8x128xf32>, vector<8x128xf32>, vector<8x128xf32>, vector<8x128xf32> -> vector<32x128xf32>
    %c208 = arith.constant 208 : index
    %c0_58 = arith.constant 0 : index
    %191 = vector.load %arg5[%c208, %c0_58] : memref<240x40xf32, #tpu.memory_space<vmem>>, vector<32x32xf32>
    %c208_59 = arith.constant 208 : index
    %c32_60 = arith.constant 32 : index
    %192 = vector.load %arg5[%c208_59, %c32_60] : memref<240x40xf32, #tpu.memory_space<vmem>>, vector<32x1xf32>
    %cst_61 = arith.constant dense<0.000000e+00> : vector<32x128xf32>
    %193 = tpu.matmul %191, %190, %cst_61 {dimension_numbers = #tpu.dot_dimension_numbers<[1], [0], [0], [1], [0, 0, 1, 1], [], []>, precision = #tpu.contract_precision<fp32>} : vector<32x32xf32>, vector<32x128xf32>, vector<32x128xf32> -> vector<32x128xf32>
    %194 = vector.broadcast %192 : vector<32x1xf32> to vector<32x128xf32>
    %195 = arith.addf %193, %194 : vector<32x128xf32>
    %c0_62 = arith.constant 0 : index
    %c0_63 = arith.constant 0 : index
    %196 = vector.load %arg4[%c0_62, %c0_63] : memref<32x128xf32, #tpu.memory_space<vmem>>, vector<32x128xf32>
    %197 = arith.addf %195, %196 : vector<32x128xf32>
    %c0_64 = arith.constant 0 : index
    %c0_65 = arith.constant 0 : index
    %198 = vector.load %arg6[%c0_64, %c0_65] : memref<32x128xf32, #tpu.memory_space<vmem>>, vector<32x128xf32>
    tpu.vector_store %arg6[%c0_64, %c0_65], %197 {strides = array<i32>} : memref<32x128xf32, #tpu.memory_space<vmem>>, vector<32x128xf32>,
    return
  }
  func.func @transform_0(%arg0: i32) -> (i32, i32) {
    %c0_i32 = arith.constant 0 : i32
    %c0_i32_0 = arith.constant 0 : i32
    %c0_i32_1 = arith.constant 0 : i32
    return %c0_i32, %c0_i32_0 : i32, i32
  }
  func.func @transform_1(%arg0: i32) -> (i32, i32) {
    %c0_i32 = arith.constant 0 : i32
    %c0_i32_0 = arith.constant 0 : i32
    return %c0_i32, %arg0 : i32, i32
  }
  func.func @transform_2(%arg0: i32) -> (i32, i32) {
    %c0_i32 = arith.constant 0 : i32
    %c0_i32_0 = arith.constant 0 : i32
    return %c0_i32, %arg0 : i32, i32
  }
  func.func @transform_3(%arg0: i32) -> (i32, i32) {
    %c0_i32 = arith.constant 0 : i32
    %c0_i32_0 = arith.constant 0 : i32
    return %c0_i32, %arg0 : i32, i32
  }
  func.func @transform_4(%arg0: i32) -> (i32, i32) {
    %c0_i32 = arith.constant 0 : i32
    %c0_i32_0 = arith.constant 0 : i32
    %c0_i32_1 = arith.constant 0 : i32
    return %c0_i32, %c0_i32_0 : i32, i32
  }
  func.func @transform_5(%arg0: i32) -> (i32, i32) {
    %c0_i32 = arith.constant 0 : i32
    %c0_i32_0 = arith.constant 0 : i32
    return %c0_i32, %arg0 : i32, i32
  }
}

</mosaic_0001>

<llo_original>
// kernel: nondiag_forward.1
$region0: #{nondiag_forward.1}
  #allocation0 [shape = 'u32[]', space=smem, size = 0x4, offset = 0x4, fixed_abs, tag = 'smem constant byte address 0x4 - core index']
  #allocation1 [shape = 'u32[144,128]{1,0:T(1,128)}', space=vmem, size = 0x12000, scoped, tag = 'internal scratch']
  %s0 = inlined_call_operand.vmem [shape: f32[32,64], index: 0, kind: input, shape index: {}]
  %s1 = inlined_call_operand.vmem [shape: s32[8,128], index: 1, kind: input, shape index: {}]
  %s2 = inlined_call_operand.vmem [shape: f32[16,128], index: 2, kind: input, shape index: {}]
  %s3 = inlined_call_operand.vmem [shape: f32[32,128], index: 3, kind: input, shape index: {}]
  %s4 = inlined_call_operand.vmem [shape: f32[240,40], index: 4, kind: input, shape index: {}]
  %s5 = inlined_call_operand.vmem [shape: f32[32,128], index: 5, kind: output, shape index: {}]
  %s6 = sld [smem:[#allocation0]]
  $region30: #{nondiag_forward.1} parent=0
    _
  %s8 = ssub.s32 1, %s6
  %s9 = scalar_select 0, %s8, %s6
  // Predicated region
  $region2: #{nondiag_forward.1} parent=0 // pred_check
    _
  $region3: #{nondiag_forward.1} parent=0 // pred_check_branch
    %11 = sbr.rel (0) target = $region5
  $region4: #{nondiag_forward.1} parent=0 // pred_region
    _
  $region5: #{nondiag_forward.1} parent=0 // pred_fallthru
    _
  // Predicated region
  $region6: #{nondiag_forward.1} parent=0 // pred_check
    _
  $region7: #{nondiag_forward.1} parent=0 // pred_check_branch
    %13 = sbr.rel (0) target = $region9
  $region8: #{nondiag_forward.1} parent=0 // pred_region
    _
  $region9: #{nondiag_forward.1} parent=0 // pred_fallthru
    _
  // Predicated region
  $region10: #{nondiag_forward.1} parent=0 // pred_check
    _
  $region11: #{nondiag_forward.1} parent=0 // pred_check_branch
    %15 = sbr.rel (0) target = $region13
  $region12: #{nondiag_forward.1} parent=0 // pred_region
    _
  $region13: #{nondiag_forward.1} parent=0 // pred_fallthru
    _
  // Predicated region
  $region14: #{nondiag_forward.1} parent=0 // pred_check
    _
  $region15: #{nondiag_forward.1} parent=0 // pred_check_branch
    %17 = sbr.rel (0) target = $region17
  $region16: #{nondiag_forward.1} parent=0 // pred_region
    _
  $region17: #{nondiag_forward.1} parent=0 // pred_fallthru
    _
  // Predicated region
  $region18: #{nondiag_forward.1} parent=0 // pred_check
    _
  $region19: #{nondiag_forward.1} parent=0 // pred_check_branch
    %19 = sbr.rel (0) target = $region21
  $region20: #{nondiag_forward.1} parent=0 // pred_region
    _
  $region21: #{nondiag_forward.1} parent=0 // pred_fallthru
    _
  %v20 = vld [vmem:[%s0] sm:$0xff]
  %v21 = vld [vmem:[%s0 + $0x8] sm:$0xff]
  %v22 = vld [vmem:[%s0 + $0x10] sm:$0xff]
  %v23 = vld [vmem:[%s0 + $0x18] sm:$0xff]
  %v24 = vld [vmem:[%s4] sm:$0xff]
  %v25 = vld [vmem:[%s4 + $0x8] sm:$0xff]
  %v26 = vld [vmem:[%s4 + $0x10] sm:$0xff]
  %v27 = vld [vmem:[%s4 + $0x18] sm:$0xff]
  %29 = vset.pattern.permute.xlu0 32
  %30 = vperm.xlu0 %29, %v24
  %v31 = vpop.permute.xlu0 %30
  %34 = vset.pattern.permute.xlu0 32
  %35 = vperm.xlu0 %34, %v25
  %v36 = vpop.permute.xlu0 %35
  %39 = vset.pattern.permute.xlu0 32
  %40 = vperm.xlu0 %39, %v26
  %v41 = vpop.permute.xlu0 %40
  %44 = vset.pattern.permute.xlu0 32
  %45 = vperm.xlu0 %44, %v27
  %v46 = vpop.permute.xlu0 %45
  %vm48 = vcmask 261120
  %v49 = vsel %vm48, %v24, 0
  %v51 = vsel %vm48, %v25, 0
  %v53 = vsel %vm48, %v26, 0
  %v55 = vsel %vm48, %v27, 0
  %57 = vmatprep.subr.mxu0 0.0
  %58 = vmatpush1.msra.mxu0 0.0
  %59 = vmatprep.subr.mxu0 0.0
  %60 = vmatpush1.msra.mxu0 0.0
  %61 = vmatprep.subr.mxu0 0.0
  %62 = vmatpush1.msra.mxu0 0.0
  %63 = vmatprep.subr.mxu0 0.0
  %64 = vmatpush1.msra.mxu0 0.0
  %65 = vmatprep.subr.mxu0 0.0
  %66 = vmatpush1.msra.mxu0 0.0
  %67 = vmatprep.subr.mxu0 0.0
  %68 = vmatpush1.msra.mxu0 0.0
  %69 = vmatprep.subr.mxu0 0.0
  %70 = vmatpush1.msra.mxu0 0.0
  %71 = vmatprep.subr.mxu0 0.0
  %72 = vmatpush1.msra.mxu0 0.0
  %73 = vmatprep.subr.mxu0 0.0
  %74 = vmatpush1.msra.mxu0 0.0
  %75 = vmatprep.subr.mxu0 0.0
  %76 = vmatpush1.msra.mxu0 0.0
  %77 = vmatprep.subr.mxu0 0.0
  %78 = vmatpush1.msra.mxu0 0.0
  %79 = vmatprep.subr.mxu0 0.0
  %80 = vmatpush1.msra.mxu0 0.0
  %81 = vmatprep.subr.mxu0 0.0
  %v82 = vand.u32 %v23, 4294901760
  %83 = vmatpush1.msra.mxu0 %v82
  %84 = vmatprep.subr.mxu0 0.0
  %v85 = vand.u32 %v22, 4294901760
  %86 = vmatpush1.msra.mxu0 %v85
  %87 = vmatprep.subr.mxu0 0.0
  %v88 = vand.u32 %v21, 4294901760
  %89 = vmatpush1.msra.mxu0 %v88
  %90 = vmatprep.subr.mxu0 0.0
  %v91 = vand.u32 %v20, 4294901760
  %92 = vmatpush1.msra.mxu0 %v91
  %93 = vmatprep.subr.mxu0 0.0
  %94 = vmatpush2.msra.mxu0 0.0
  %95 = vmatprep.subr.mxu0 0.0
  %96 = vmatpush2.msra.mxu0 0.0
  %97 = vmatprep.subr.mxu0 0.0
  %98 = vmatpush2.msra.mxu0 0.0
  %99 = vmatprep.subr.mxu0 0.0
  %100 = vmatpush2.msra.mxu0 0.0
  %101 = vmatprep.subr.mxu0 0.0
  %102 = vmatpush2.msra.mxu0 0.0
  %103 = vmatprep.subr.mxu0 0.0
  %104 = vmatpush2.msra.mxu0 0.0
  %105 = vmatprep.subr.mxu0 0.0
  %106 = vmatpush2.msra.mxu0 0.0
  %107 = vmatprep.subr.mxu0 0.0
  %108 = vmatpush2.msra.mxu0 0.0
  %109 = vmatprep.subr.mxu0 0.0
  %110 = vmatpush2.msra.mxu0 0.0
  %111 = vmatprep.subr.mxu0 0.0
  %112 = vmatpush2.msra.mxu0 0.0
  %113 = vmatprep.subr.mxu0 0.0
  %114 = vmatpush2.msra.mxu0 0.0
  %115 = vmatprep.subr.mxu0 0.0
  %116 = vmatpush2.msra.mxu0 0.0
  %117 = vmatprep.subr.mxu0 0.0
  %118 = vmatpush2.msra.mxu0 0.0
  %119 = vmatprep.subr.mxu0 0.0
  %120 = vmatpush2.msra.mxu0 0.0
  %121 = vmatprep.subr.mxu0 0.0
  %122 = vmatpush2.msra.mxu0 0.0
  %123 = vmatprep.subr.mxu0 0.0
  %124 = vmatpush2.msra.mxu0 0.0
  %125 = vmatprep.mubr.f32.mxu0 0.0
  %v126 = vand.u32 %v49, 4294901760
  %v127 = vsub.f32 %v49, %v126
  %v128 = vand.u32 %v127, 4294901760
  %v129 = vsub.f32 %v127, %v128
  %v130 = vand.u32 %v129, 4294901760
  %131 = vmatmul.mubr.f32.gmra.mxu0 %v130
  %v132 = vpop.f32.mrf.mxu0
  %v133 = vadd.f32 %v31, %v132
  %v134 = vpop.f32.mrf.mxu0
  %135 = vmatprep.mubr.f32.mxu0 0.0
  %v136 = vand.u32 %v51, 4294901760
  %v137 = vsub.f32 %v51, %v136
  %v138 = vand.u32 %v137, 4294901760
  %v139 = vsub.f32 %v137, %v138
  %v140 = vand.u32 %v139, 4294901760
  %141 = vmatmul.mubr.f32.gmra.mxu0 %v140
  %v142 = vpop.f32.mrf.mxu0
  %v143 = vadd.f32 %v36, %v142
  %v144 = vpop.f32.mrf.mxu0
  %145 = vmatprep.mubr.f32.mxu0 0.0
  %v146 = vand.u32 %v53, 4294901760
  %v147 = vsub.f32 %v53, %v146
  %v148 = vand.u32 %v147, 4294901760
  %v149 = vsub.f32 %v147, %v148
  %v150 = vand.u32 %v149, 4294901760
  %151 = vmatmul.mubr.f32.gmra.mxu0 %v150
  %v152 = vpop.f32.mrf.mxu0
  %v153 = vadd.f32 %v41, %v152
  %v154 = vpop.f32.mrf.mxu0
  %155 = vmatprep.mubr.f32.mxu0 0.0
  %v156 = vand.u32 %v55, 4294901760
  %v157 = vsub.f32 %v55, %v156
  %v158 = vand.u32 %v157, 4294901760
  %v159 = vsub.f32 %v157, %v158
  %v160 = vand.u32 %v159, 4294901760
  %161 = vmatmul.mubr.f32.gmra.mxu0 %v160
  %v162 = vpop.f32.mrf.mxu0
  %v163 = vadd.f32 %v46, %v162
  %v164 = vpop.f32.mrf.mxu0
  %165 = vdwg.mxu0
  %166 = vmatprep.subr.mxu0 0.0
  %167 = vmatpush1.msra.mxu0 0.0
  %168 = vmatprep.subr.mxu0 0.0
  %169 = vmatpush1.msra.mxu0 0.0
  %170 = vmatprep.subr.mxu0 0.0
  %171 = vmatpush1.msra.mxu0 0.0
  %172 = vmatprep.subr.mxu0 0.0
  %173 = vmatpush1.msra.mxu0 0.0
  %174 = vmatprep.subr.mxu0 0.0
  %175 = vmatpush1.msra.mxu0 0.0
  %176 = vmatprep.subr.mxu0 0.0
  %177 = vmatpush1.msra.mxu0 0.0
  %178 = vmatprep.subr.mxu0 0.0
  %179 = vmatpush1.msra.mxu0 0.0
  %180 = vmatprep.subr.mxu0 0.0
  %181 = vmatpush1.msra.mxu0 0.0
  %182 = vmatprep.subr.mxu0 0.0
  %183 = vmatpush1.msra.mxu0 0.0
  %184 = vmatprep.subr.mxu0 0.0
  %185 = vmatpush1.msra.mxu0 0.0
  %186 = vmatprep.subr.mxu0 0.0
  %187 = vmatpush1.msra.mxu0 0.0
  %188 = vmatprep.subr.mxu0 0.0
  %189 = vmatpush1.msra.mxu0 0.0
  %190 = vmatprep.subr.mxu0 0.0
  %v191 = vand.u32 %v23, 4294901760
  %v192 = vsub.f32 %v23, %v191
  %v193 = vand.u32 %v192, 4294901760
  %v194 = vsub.f32 %v192, %v193
  %v195 = vand.u32 %v194, 4294901760
  %196 = vmatpush1.msra.mxu0 %v195
  %197 = vmatprep.subr.mxu0 0.0
  %v198 = vand.u32 %v22, 4294901760
  %v199 = vsub.f32 %v22, %v198
  %v200 = vand.u32 %v199, 4294901760
  %v201 = vsub.f32 %v199, %v200
  %v202 = vand.u32 %v201, 4294901760
  %203 = vmatpush1.msra.mxu0 %v202
  %204 = vmatprep.subr.mxu0 0.0
  %v205 = vand.u32 %v21, 4294901760
  %v206 = vsub.f32 %v21, %v205
  %v207 = vand.u32 %v206, 4294901760
  %v208 = vsub.f32 %v206, %v207
  %v209 = vand.u32 %v208, 4294901760
  %210 = vmatpush1.msra.mxu0 %v209
  %211 = vmatprep.subr.mxu0 0.0
  %v212 = vand.u32 %v20, 4294901760
  %v213 = vsub.f32 %v20, %v212
  %v214 = vand.u32 %v213, 4294901760
  %v215 = vsub.f32 %v213, %v214
  %v216 = vand.u32 %v215, 4294901760
  %217 = vmatpush1.msra.mxu0 %v216
  %218 = vmatprep.subr.mxu0 0.0
  %219 = vmatpush2.msra.mxu0 0.0
  %220 = vmatprep.subr.mxu0 0.0
  %221 = vmatpush2.msra.mxu0 0.0
  %222 = vmatprep.subr.mxu0 0.0
  %223 = vmatpush2.msra.mxu0 0.0
  %224 = vmatprep.subr.mxu0 0.0
  %225 = vmatpush2.msra.mxu0 0.0
  %226 = vmatprep.subr.mxu0 0.0
  %227 = vmatpush2.msra.mxu0 0.0
  %228 = vmatprep.subr.mxu0 0.0
  %229 = vmatpush2.msra.mxu0 0.0
  %230 = vmatprep.subr.mxu0 0.0
  %231 = vmatpush2.msra.mxu0 0.0
  %232 = vmatprep.subr.mxu0 0.0
  %233 = vmatpush2.msra.mxu0 0.0
  %234 = vmatprep.subr.mxu0 0.0
  %235 = vmatpush2.msra.mxu0 0.0
  %236 = vmatprep.subr.mxu0 0.0
  %237 = vmatpush2.msra.mxu0 0.0
  %238 = vmatprep.subr.mxu0 0.0
  %239 = vmatpush2.msra.mxu0 0.0
  %240 = vmatprep.subr.mxu0 0.0
  %241 = vmatpush2.msra.mxu0 0.0
  %242 = vmatprep.subr.mxu0 0.0
  %243 = vmatpush2.msra.mxu0 0.0
  %244 = vmatprep.subr.mxu0 0.0
  %245 = vmatpush2.msra.mxu0 0.0
  %246 = vmatprep.subr.mxu0 0.0
  %247 = vmatpush2.msra.mxu0 0.0
  %248 = vmatprep.subr.mxu0 0.0
  %249 = vmatpush2.msra.mxu0 0.0
  %250 = vmatprep.mubr.f32.mxu0 0.0
  %v251 = vand.u32 %v49, 4294901760
  %252 = vmatmul.mubr.f32.gmra.mxu0 %v251
  %v253 = vpop.f32.mrf.mxu0
  %v254 = vadd.f32 %v133, %v253
  %v255 = vpop.f32.mrf.mxu0
  %256 = vmatprep.mubr.f32.mxu0 0.0
  %v257 = vand.u32 %v51, 4294901760
  %258 = vmatmul.mubr.f32.gmra.mxu0 %v257
  %v259 = vpop.f32.mrf.mxu0
  %v260 = vadd.f32 %v143, %v259
  %v261 = vpop.f32.mrf.mxu0
  %262 = vmatprep.mubr.f32.mxu0 0.0
  %v263 = vand.u32 %v53, 4294901760
  %264 = vmatmul.mubr.f32.gmra.mxu0 %v263
  %v265 = vpop.f32.mrf.mxu0
  %v266 = vadd.f32 %v153, %v265
  %v267 = vpop.f32.mrf.mxu0
  %268 = vmatprep.mubr.f32.mxu0 0.0
  %v269 = vand.u32 %v55, 4294901760
  %270 = vmatmul.mubr.f32.gmra.mxu0 %v269
  %v271 = vpop.f32.mrf.mxu0
  %v272 = vadd.f32 %v163, %v271
  %v273 = vpop.f32.mrf.mxu0
  %274 = vdwg.mxu0
  %275 = vmatprep.subr.mxu0 0.0
  %276 = vmatpush1.msra.mxu0 0.0
  %277 = vmatprep.subr.mxu0 0.0
  %278 = vmatpush1.msra.mxu0 0.0
  %279 = vmatprep.subr.mxu0 0.0
  %280 = vmatpush1.msra.mxu0 0.0
  %281 = vmatprep.subr.mxu0 0.0
  %282 = vmatpush1.msra.mxu0 0.0
  %283 = vmatprep.subr.mxu0 0.0
  %284 = vmatpush1.msra.mxu0 0.0
  %285 = vmatprep.subr.mxu0 0.0
  %286 = vmatpush1.msra.mxu0 0.0
  %287 = vmatprep.subr.mxu0 0.0
  %288 = vmatpush1.msra.mxu0 0.0
  %289 = vmatprep.subr.mxu0 0.0
  %290 = vmatpush1.msra.mxu0 0.0
  %291 = vmatprep.subr.mxu0 0.0
  %292 = vmatpush1.msra.mxu0 0.0
  %293 = vmatprep.subr.mxu0 0.0
  %294 = vmatpush1.msra.mxu0 0.0
  %295 = vmatprep.subr.mxu0 0.0
  %296 = vmatpush1.msra.mxu0 0.0
  %297 = vmatprep.subr.mxu0 0.0
  %298 = vmatpush1.msra.mxu0 0.0
  %299 = vmatprep.subr.mxu0 0.0
  %v300 = vand.u32 %v23, 4294901760
  %v301 = vsub.f32 %v23, %v300
  %302 = vmatpush1.msra.mxu0 %v301
  %303 = vmatprep.subr.mxu0 0.0
  %v304 = vand.u32 %v22, 4294901760
  %v305 = vsub.f32 %v22, %v304
  %306 = vmatpush1.msra.mxu0 %v305
  %307 = vmatprep.subr.mxu0 0.0
  %v308 = vand.u32 %v21, 4294901760
  %v309 = vsub.f32 %v21, %v308
  %310 = vmatpush1.msra.mxu0 %v309
  %311 = vmatprep.subr.mxu0 0.0
  %v312 = vand.u32 %v20, 4294901760
  %v313 = vsub.f32 %v20, %v312
  %314 = vmatpush1.msra.mxu0 %v313
  %315 = vmatprep.subr.mxu0 0.0
  %316 = vmatpush2.msra.mxu0 0.0
  %317 = vmatprep.subr.mxu0 0.0
  %318 = vmatpush2.msra.mxu0 0.0
  %319 = vmatprep.subr.mxu0 0.0
  %320 = vmatpush2.msra.mxu0 0.0
  %321 = vmatprep.subr.mxu0 0.0
  %322 = vmatpush2.msra.mxu0 0.0
  %323 = vmatprep.subr.mxu0 0.0
  %324 = vmatpush2.msra.mxu0 0.0
  %325 = vmatprep.subr.mxu0 0.0
  %326 = vmatpush2.msra.mxu0 0.0
  %327 = vmatprep.subr.mxu0 0.0
  %328 = vmatpush2.msra.mxu0 0.0
  %329 = vmatprep.subr.mxu0 0.0
  %330 = vmatpush2.msra.mxu0 0.0
  %331 = vmatprep.subr.mxu0 0.0
  %332 = vmatpush2.msra.mxu0 0.0
  %333 = vmatprep.subr.mxu0 0.0
  %334 = vmatpush2.msra.mxu0 0.0
  %335 = vmatprep.subr.mxu0 0.0
  %336 = vmatpush2.msra.mxu0 0.0
  %337 = vmatprep.subr.mxu0 0.0
  %338 = vmatpush2.msra.mxu0 0.0
  %339 = vmatprep.subr.mxu0 0.0
  %340 = vmatpush2.msra.mxu0 0.0
  %341 = vmatprep.subr.mxu0 0.0
  %342 = vmatpush2.msra.mxu0 0.0
  %343 = vmatprep.subr.mxu0 0.0
  %344 = vmatpush2.msra.mxu0 0.0
  %345 = vmatprep.subr.mxu0 0.0
  %346 = vmatpush2.msra.mxu0 0.0
  %347 = vmatprep.mubr.f32.mxu0 0.0
  %v348 = vand.u32 %v49, 4294901760
  %v349 = vsub.f32 %v49, %v348
  %350 = vmatmul.mubr.f32.gmra.mxu0 %v349
  %v351 = vpop.f32.mrf.mxu0
  %v352 = vadd.f32 %v254, %v351
  %v353 = vpop.f32.mrf.mxu0
  %354 = vmatprep.mubr.f32.mxu0 0.0
  %v355 = vand.u32 %v51, 4294901760
  %v356 = vsub.f32 %v51, %v355
  %357 = vmatmul.mubr.f32.gmra.mxu0 %v356
  %v358 = vpop.f32.mrf.mxu0
  %v359 = vadd.f32 %v260, %v358
  %v360 = vpop.f32.mrf.mxu0
  %361 = vmatprep.mubr.f32.mxu0 0.0
  %v362 = vand.u32 %v53, 4294901760
  %v363 = vsub.f32 %v53, %v362
  %364 = vmatmul.mubr.f32.gmra.mxu0 %v363
  %v365 = vpop.f32.mrf.mxu0
  %v366 = vadd.f32 %v266, %v365
  %v367 = vpop.f32.mrf.mxu0
  %368 = vmatprep.mubr.f32.mxu0 0.0
  %v369 = vand.u32 %v55, 4294901760
  %v370 = vsub.f32 %v55, %v369
  %371 = vmatmul.mubr.f32.gmra.mxu0 %v370
  %v372 = vpop.f32.mrf.mxu0
  %v373 = vadd.f32 %v272, %v372
  %v374 = vpop.f32.mrf.mxu0
  %375 = vdwg.mxu0
  %376 = vmatprep.subr.mxu0 0.0
  %377 = vmatpush1.msra.mxu0 0.0
  %378 = vmatprep.subr.mxu0 0.0
  %379 = vmatpush1.msra.mxu0 0.0
  %380 = vmatprep.subr.mxu0 0.0
  %381 = vmatpush1.msra.mxu0 0.0
  %382 = vmatprep.subr.mxu0 0.0
  %383 = vmatpush1.msra.mxu0 0.0
  %384 = vmatprep.subr.mxu0 0.0
  %385 = vmatpush1.msra.mxu0 0.0
  %386 = vmatprep.subr.mxu0 0.0
  %387 = vmatpush1.msra.mxu0 0.0
  %388 = vmatprep.subr.mxu0 0.0
  %389 = vmatpush1.msra.mxu0 0.0
  %390 = vmatprep.subr.mxu0 0.0
  %391 = vmatpush1.msra.mxu0 0.0
  %392 = vmatprep.subr.mxu0 0.0
  %393 = vmatpush1.msra.mxu0 0.0
  %394 = vmatprep.subr.mxu0 0.0
  %395 = vmatpush1.msra.mxu0 0.0
  %396 = vmatprep.subr.mxu0 0.0
  %397 = vmatpush1.msra.mxu0 0.0
  %398 = vmatprep.subr.mxu0 0.0
  %399 = vmatpush1.msra.mxu0 0.0
  %400 = vmatprep.subr.mxu0 0.0
  %v401 = vand.u32 %v23, 4294901760
  %402 = vmatpush1.msra.mxu0 %v401
  %403 = vmatprep.subr.mxu0 0.0
  %v404 = vand.u32 %v22, 4294901760
  %405 = vmatpush1.msra.mxu0 %v404
  %406 = vmatprep.subr.mxu0 0.0
  %v407 = vand.u32 %v21, 4294901760
  %408 = vmatpush1.msra.mxu0 %v407
  %409 = vmatprep.subr.mxu0 0.0
  %v410 = vand.u32 %v20, 4294901760
  %411 = vmatpush1.msra.mxu0 %v410
  %412 = vmatprep.subr.mxu0 0.0
  %413 = vmatpush2.msra.mxu0 0.0
  %414 = vmatprep.subr.mxu0 0.0
  %415 = vmatpush2.msra.mxu0 0.0
  %416 = vmatprep.subr.mxu0 0.0
  %417 = vmatpush2.msra.mxu0 0.0
  %418 = vmatprep.subr.mxu0 0.0
  %419 = vmatpush2.msra.mxu0 0.0
  %420 = vmatprep.subr.mxu0 0.0
  %421 = vmatpush2.msra.mxu0 0.0
  %422 = vmatprep.subr.mxu0 0.0
  %423 = vmatpush2.msra.mxu0 0.0
  %424 = vmatprep.subr.mxu0 0.0
  %425 = vmatpush2.msra.mxu0 0.0
  %426 = vmatprep.subr.mxu0 0.0
  %427 = vmatpush2.msra.mxu0 0.0
  %428 = vmatprep.subr.mxu0 0.0
  %429 = vmatpush2.msra.mxu0 0.0
  %430 = vmatprep.subr.mxu0 0.0
  %431 = vmatpush2.msra.mxu0 0.0
  %432 = vmatprep.subr.mxu0 0.0
  %433 = vmatpush2.msra.mxu0 0.0
  %434 = vmatprep.subr.mxu0 0.0
  %435 = vmatpush2.msra.mxu0 0.0
  %436 = vmatprep.subr.mxu0 0.0
  %437 = vmatpush2.msra.mxu0 0.0
  %438 = vmatprep.subr.mxu0 0.0
  %439 = vmatpush2.msra.mxu0 0.0
  %440 = vmatprep.subr.mxu0 0.0
  %441 = vmatpush2.msra.mxu0 0.0
  %442 = vmatprep.subr.mxu0 0.0
  %443 = vmatpush2.msra.mxu0 0.0
  %444 = vmatprep.mubr.f32.mxu0 0.0
  %v445 = vand.u32 %v49, 4294901760
  %v446 = vsub.f32 %v49, %v445
  %v447 = vand.u32 %v446, 4294901760
  %448 = vmatmul.mubr.f32.gmra.mxu0 %v447
  %v449 = vpop.f32.mrf.mxu0
  %v450 = vadd.f32 %v352, %v449
  %v451 = vpop.f32.mrf.mxu0
  %452 = vmatprep.mubr.f32.mxu0 0.0
  %v453 = vand.u32 %v51, 4294901760
  %v454 = vsub.f32 %v51, %v453
  %v455 = vand.u32 %v454, 4294901760
  %456 = vmatmul.mubr.f32.gmra.mxu0 %v455
  %v457 = vpop.f32.mrf.mxu0
  %v458 = vadd.f32 %v359, %v457
  %v459 = vpop.f32.mrf.mxu0
  %460 = vmatprep.mubr.f32.mxu0 0.0
  %v461 = vand.u32 %v53, 4294901760
  %v462 = vsub.f32 %v53, %v461
  %v463 = vand.u32 %v462, 4294901760
  %464 = vmatmul.mubr.f32.gmra.mxu0 %v463
  %v465 = vpop.f32.mrf.mxu0
  %v466 = vadd.f32 %v366, %v465
  %v467 = vpop.f32.mrf.mxu0
  %468 = vmatprep.mubr.f32.mxu0 0.0
  %v469 = vand.u32 %v55, 4294901760
  %v470 = vsub.f32 %v55, %v469
  %v471 = vand.u32 %v470, 4294901760
  %472 = vmatmul.mubr.f32.gmra.mxu0 %v471
  %v473 = vpop.f32.mrf.mxu0
  %v474 = vadd.f32 %v373, %v473
  %v475 = vpop.f32.mrf.mxu0
  %476 = vdwg.mxu0
  %477 = vmatprep.subr.mxu0 0.0
  %478 = vmatpush1.msra.mxu0 0.0
  %479 = vmatprep.subr.mxu0 0.0
  %480 = vmatpush1.msra.mxu0 0.0
  %481 = vmatprep.subr.mxu0 0.0
  %482 = vmatpush1.msra.mxu0 0.0
  %483 = vmatprep.subr.mxu0 0.0
  %484 = vmatpush1.msra.mxu0 0.0
  %485 = vmatprep.subr.mxu0 0.0
  %486 = vmatpush1.msra.mxu0 0.0
  %487 = vmatprep.subr.mxu0 0.0
  %488 = vmatpush1.msra.mxu0 0.0
  %489 = vmatprep.subr.mxu0 0.0
  %490 = vmatpush1.msra.mxu0 0.0
  %491 = vmatprep.subr.mxu0 0.0
  %492 = vmatpush1.msra.mxu0 0.0
  %493 = vmatprep.subr.mxu0 0.0
  %494 = vmatpush1.msra.mxu0 0.0
  %495 = vmatprep.subr.mxu0 0.0
  %496 = vmatpush1.msra.mxu0 0.0
  %497 = vmatprep.subr.mxu0 0.0
  %498 = vmatpush1.msra.mxu0 0.0
  %499 = vmatprep.subr.mxu0 0.0
  %500 = vmatpush1.msra.mxu0 0.0
  %501 = vmatprep.subr.mxu0 0.0
  %v502 = vand.u32 %v23, 4294901760
  %v503 = vsub.f32 %v23, %v502
  %v504 = vand.u32 %v503, 4294901760
  %505 = vmatpush1.msra.mxu0 %v504
  %506 = vmatprep.subr.mxu0 0.0
  %v507 = vand.u32 %v22, 4294901760
  %v508 = vsub.f32 %v22, %v507
  %v509 = vand.u32 %v508, 4294901760
  %510 = vmatpush1.msra.mxu0 %v509
  %511 = vmatprep.subr.mxu0 0.0
  %v512 = vand.u32 %v21, 4294901760
  %v513 = vsub.f32 %v21, %v512
  %v514 = vand.u32 %v513, 4294901760
  %515 = vmatpush1.msra.mxu0 %v514
  %516 = vmatprep.subr.mxu0 0.0
  %v517 = vand.u32 %v20, 4294901760
  %v518 = vsub.f32 %v20, %v517
  %v519 = vand.u32 %v518, 4294901760
  %520 = vmatpush1.msra.mxu0 %v519
  %521 = vmatprep.subr.mxu0 0.0
  %522 = vmatpush2.msra.mxu0 0.0
  %523 = vmatprep.subr.mxu0 0.0
  %524 = vmatpush2.msra.mxu0 0.0
  %525 = vmatprep.subr.mxu0 0.0
  %526 = vmatpush2.msra.mxu0 0.0
  %527 = vmatprep.subr.mxu0 0.0
  %528 = vmatpush2.msra.mxu0 0.0
  %529 = vmatprep.subr.mxu0 0.0
  %530 = vmatpush2.msra.mxu0 0.0
  %531 = vmatprep.subr.mxu0 0.0
  %532 = vmatpush2.msra.mxu0 0.0
  %533 = vmatprep.subr.mxu0 0.0
  %534 = vmatpush2.msra.mxu0 0.0
  %535 = vmatprep.subr.mxu0 0.0
  %536 = vmatpush2.msra.mxu0 0.0
  %537 = vmatprep.subr.mxu0 0.0
  %538 = vmatpush2.msra.mxu0 0.0
  %539 = vmatprep.subr.mxu0 0.0
  %540 = vmatpush2.msra.mxu0 0.0
  %541 = vmatprep.subr.mxu0 0.0
  %542 = vmatpush2.msra.mxu0 0.0
  %543 = vmatprep.subr.mxu0 0.0
  %544 = vmatpush2.msra.mxu0 0.0
  %545 = vmatprep.subr.mxu0 0.0
  %546 = vmatpush2.msra.mxu0 0.0
  %547 = vmatprep.subr.mxu0 0.0
  %548 = vmatpush2.msra.mxu0 0.0
  %549 = vmatprep.subr.mxu0 0.0
  %550 = vmatpush2.msra.mxu0 0.0
  %551 = vmatprep.subr.mxu0 0.0
  %552 = vmatpush2.msra.mxu0 0.0
  %553 = vmatprep.mubr.f32.mxu0 0.0
  %v554 = vand.u32 %v49, 4294901760
  %555 = vmatmul.mubr.f32.gmra.mxu0 %v554
  %v556 = vpop.f32.mrf.mxu0
  %v557 = vadd.f32 %v450, %v556
  %v558 = vpop.f32.mrf.mxu0
  %559 = vmatprep.mubr.f32.mxu0 0.0
  %v560 = vand.u32 %v51, 4294901760
  %561 = vmatmul.mubr.f32.gmra.mxu0 %v560
  %v562 = vpop.f32.mrf.mxu0
  %v563 = vadd.f32 %v458, %v562
  %v564 = vpop.f32.mrf.mxu0
  %565 = vmatprep.mubr.f32.mxu0 0.0
  %v566 = vand.u32 %v53, 4294901760
  %567 = vmatmul.mubr.f32.gmra.mxu0 %v566
  %v568 = vpop.f32.mrf.mxu0
  %v569 = vadd.f32 %v466, %v568
  %v570 = vpop.f32.mrf.mxu0
  %571 = vmatprep.mubr.f32.mxu0 0.0
  %v572 = vand.u32 %v55, 4294901760
  %573 = vmatmul.mubr.f32.gmra.mxu0 %v572
  %v574 = vpop.f32.mrf.mxu0
  %v575 = vadd.f32 %v474, %v574
  %v576 = vpop.f32.mrf.mxu0
  %577 = vdwg.mxu0
  %578 = vmatprep.subr.mxu0 0.0
  %579 = vmatpush1.msra.mxu0 0.0
  %580 = vmatprep.subr.mxu0 0.0
  %581 = vmatpush1.msra.mxu0 0.0
  %582 = vmatprep.subr.mxu0 0.0
  %583 = vmatpush1.msra.mxu0 0.0
  %584 = vmatprep.subr.mxu0 0.0
  %585 = vmatpush1.msra.mxu0 0.0
  %586 = vmatprep.subr.mxu0 0.0
  %587 = vmatpush1.msra.mxu0 0.0
  %588 = vmatprep.subr.mxu0 0.0
  %589 = vmatpush1.msra.mxu0 0.0
  %590 = vmatprep.subr.mxu0 0.0
  %591 = vmatpush1.msra.mxu0 0.0
  %592 = vmatprep.subr.mxu0 0.0
  %593 = vmatpush1.msra.mxu0 0.0
  %594 = vmatprep.subr.mxu0 0.0
  %595 = vmatpush1.msra.mxu0 0.0
  %596 = vmatprep.subr.mxu0 0.0
  %597 = vmatpush1.msra.mxu0 0.0
  %598 = vmatprep.subr.mxu0 0.0
  %599 = vmatpush1.msra.mxu0 0.0
  %600 = vmatprep.subr.mxu0 0.0
  %601 = vmatpush1.msra.mxu0 0.0
  %602 = vmatprep.subr.mxu0 0.0
  %v603 = vand.u32 %v23, 4294901760
  %604 = vmatpush1.msra.mxu0 %v603
  %605 = vmatprep.subr.mxu0 0.0
  %v606 = vand.u32 %v22, 4294901760
  %607 = vmatpush1.msra.mxu0 %v606
  %608 = vmatprep.subr.mxu0 0.0
  %v609 = vand.u32 %v21, 4294901760
  %610 = vmatpush1.msra.mxu0 %v609
  %611 = vmatprep.subr.mxu0 0.0
  %v612 = vand.u32 %v20, 4294901760
  %613 = vmatpush1.msra.mxu0 %v612
  %614 = vmatprep.subr.mxu0 0.0
  %615 = vmatpush2.msra.mxu0 0.0
  %616 = vmatprep.subr.mxu0 0.0
  %617 = vmatpush2.msra.mxu0 0.0
  %618 = vmatprep.subr.mxu0 0.0
  %619 = vmatpush2.msra.mxu0 0.0
  %620 = vmatprep.subr.mxu0 0.0
  %621 = vmatpush2.msra.mxu0 0.0
  %622 = vmatprep.subr.mxu0 0.0
  %623 = vmatpush2.msra.mxu0 0.0
  %624 = vmatprep.subr.mxu0 0.0
  %625 = vmatpush2.msra.mxu0 0.0
  %626 = vmatprep.subr.mxu0 0.0
  %627 = vmatpush2.msra.mxu0 0.0
  %628 = vmatprep.subr.mxu0 0.0
  %629 = vmatpush2.msra.mxu0 0.0
  %630 = vmatprep.subr.mxu0 0.0
  %631 = vmatpush2.msra.mxu0 0.0
  %632 = vmatprep.subr.mxu0 0.0
  %633 = vmatpush2.msra.mxu0 0.0
  %634 = vmatprep.subr.mxu0 0.0
  %635 = vmatpush2.msra.mxu0 0.0
  %636 = vmatprep.subr.mxu0 0.0
  %637 = vmatpush2.msra.mxu0 0.0
  %638 = vmatprep.subr.mxu0 0.0
  %639 = vmatpush2.msra.mxu0 0.0
  %640 = vmatprep.subr.mxu0 0.0
  %641 = vmatpush2.msra.mxu0 0.0
  %642 = vmatprep.subr.mxu0 0.0
  %643 = vmatpush2.msra.mxu0 0.0
  %644 = vmatprep.subr.mxu0 0.0
  %645 = vmatpush2.msra.mxu0 0.0
  %646 = vmatprep.mubr.f32.mxu0 0.0
  %v647 = vand.u32 %v49, 4294901760
  %648 = vmatmul.mubr.f32.gmra.mxu0 %v647
  %v649 = vpop.f32.mrf.mxu0
  %v650 = vadd.f32 %v557, %v649
  %v651 = vpop.f32.mrf.mxu0
  %652 = vmatprep.mubr.f32.mxu0 0.0
  %v653 = vand.u32 %v51, 4294901760
  %654 = vmatmul.mubr.f32.gmra.mxu0 %v653
  %v655 = vpop.f32.mrf.mxu0
  %v656 = vadd.f32 %v563, %v655
  %v657 = vpop.f32.mrf.mxu0
  %658 = vmatprep.mubr.f32.mxu0 0.0
  %v659 = vand.u32 %v53, 4294901760
  %660 = vmatmul.mubr.f32.gmra.mxu0 %v659
  %v661 = vpop.f32.mrf.mxu0
  %v662 = vadd.f32 %v569, %v661
  %v663 = vpop.f32.mrf.mxu0
  %664 = vmatprep.mubr.f32.mxu0 0.0
  %v665 = vand.u32 %v55, 4294901760
  %666 = vmatmul.mubr.f32.gmra.mxu0 %v665
  %v667 = vpop.f32.mrf.mxu0
  %v668 = vadd.f32 %v575, %v667
  %v669 = vpop.f32.mrf.mxu0
  %670 = vdwg.mxu0
  %v671 = vld [vmem:[%s4 + $0x20] sm:$0xff]
  %v672 = vld [vmem:[%s4 + $0x28] sm:$0xff]
  %v673 = vld [vmem:[%s4 + $0x30] sm:$0xff]
  %v674 = vld [vmem:[%s4 + $0x38] sm:$0xff]
  %v675 = vmul.f32 %v21, %v21
  %v676 = vmul.f32 %v22, %v22
  %v677 = vadd.f32 %v675, %v676
  %v678 = vmul.f32 %v23, %v23
  %v679 = vadd.f32 %v677, %v678
  %v680 = vadd.f32 %v679, 1e-12
  %v681 = vrsqrt.pop %v680
  %v682 = vmul.f32 %v680, %v681
  %vm683 = vcmp.eq.f32.partialorder %v680, inf
  %v684 = vsel %vm683, %v680, %v682
  %vm685 = vcmp.eq.f32.partialorder %v680, 0.0
  %v686 = vand.u32 %v680, 2147483648
  %v687 = vsel %vm685, %v686, %v684
  %689 = vset.pattern.permute.xlu0 32
  %690 = vperm.xlu0 %689, %v671
  %v691 = vpop.permute.xlu0 %690
  %694 = vset.pattern.permute.xlu0 32
  %695 = vperm.xlu0 %694, %v672
  %v696 = vpop.permute.xlu0 %695
  %vm698 = vcmask 130048
  %v699 = vsel %vm698, %v671, 0
  %v701 = vsel %vm698, %v672, 0
  %703 = vmatprep.subr.mxu0 0.0
  %704 = vmatpush1.msra.mxu0 0.0
  %705 = vmatprep.subr.mxu0 0.0
  %706 = vmatpush1.msra.mxu0 0.0
  %707 = vmatprep.subr.mxu0 0.0
  %708 = vmatpush1.msra.mxu0 0.0
  %709 = vmatprep.subr.mxu0 0.0
  %710 = vmatpush1.msra.mxu0 0.0
  %711 = vmatprep.subr.mxu0 0.0
  %712 = vmatpush1.msra.mxu0 0.0
  %713 = vmatprep.subr.mxu0 0.0
  %714 = vmatpush1.msra.mxu0 0.0
  %715 = vmatprep.subr.mxu0 0.0
  %716 = vmatpush1.msra.mxu0 0.0
  %717 = vmatprep.subr.mxu0 0.0
  %718 = vmatpush1.msra.mxu0 0.0
  %719 = vmatprep.subr.mxu0 0.0
  %720 = vmatpush1.msra.mxu0 0.0
  %721 = vmatprep.subr.mxu0 0.0
  %722 = vmatpush1.msra.mxu0 0.0
  %723 = vmatprep.subr.mxu0 0.0
  %724 = vmatpush1.msra.mxu0 0.0
  %725 = vmatprep.subr.mxu0 0.0
  %726 = vmatpush1.msra.mxu0 0.0
  %727 = vmatprep.subr.mxu0 0.0
  %728 = vmatpush1.msra.mxu0 0.0
  %729 = vmatprep.subr.mxu0 0.0
  %730 = vmatpush1.msra.mxu0 0.0
  %731 = vmatprep.subr.mxu0 0.0
  %v732 = vand.u32 %v687, 4294901760
  %733 = vmatpush1.msra.mxu0 %v732
  %734 = vmatprep.subr.mxu0 0.0
  %v735 = vand.u32 %v20, 4294901760
  %736 = vmatpush1.msra.mxu0 %v735
  %737 = vmatprep.subr.mxu0 0.0
  %738 = vmatpush2.msra.mxu0 0.0
  %739 = vmatprep.subr.mxu0 0.0
  %740 = vmatpush2.msra.mxu0 0.0
  %741 = vmatprep.subr.mxu0 0.0
  %742 = vmatpush2.msra.mxu0 0.0
  %743 = vmatprep.subr.mxu0 0.0
  %744 = vmatpush2.msra.mxu0 0.0
  %745 = vmatprep.subr.mxu0 0.0
  %746 = vmatpush2.msra.mxu0 0.0
  %747 = vmatprep.subr.mxu0 0.0
  %748 = vmatpush2.msra.mxu0 0.0
  %749 = vmatprep.subr.mxu0 0.0
  %750 = vmatpush2.msra.mxu0 0.0
  %751 = vmatprep.subr.mxu0 0.0
  %752 = vmatpush2.msra.mxu0 0.0
  %753 = vmatprep.subr.mxu0 0.0
  %754 = vmatpush2.msra.mxu0 0.0
  %755 = vmatprep.subr.mxu0 0.0
  %756 = vmatpush2.msra.mxu0 0.0
  %757 = vmatprep.subr.mxu0 0.0
  %758 = vmatpush2.msra.mxu0 0.0
  %759 = vmatprep.subr.mxu0 0.0
  %760 = vmatpush2.msra.mxu0 0.0
  %761 = vmatprep.subr.mxu0 0.0
  %762 = vmatpush2.msra.mxu0 0.0
  %763 = vmatprep.subr.mxu0 0.0
  %764 = vmatpush2.msra.mxu0 0.0
  %765 = vmatprep.subr.mxu0 0.0
  %766 = vmatpush2.msra.mxu0 0.0
  %767 = vmatprep.subr.mxu0 0.0
  %768 = vmatpush2.msra.mxu0 0.0
  %769 = vmatprep.mubr.f32.mxu0 0.0
  %v770 = vand.u32 %v699, 4294901760
  %v771 = vsub.f32 %v699, %v770
  %v772 = vand.u32 %v771, 4294901760
  %v773 = vsub.f32 %v771, %v772
  %v774 = vand.u32 %v773, 4294901760
  %775 = vmatmul.mubr.f32.gmra.mxu0 %v774
  %v776 = vpop.f32.mrf.mxu0
  %v777 = vadd.f32 %v691, %v776
  %v778 = vpop.f32.mrf.mxu0
  %779 = vmatprep.mubr.f32.mxu0 0.0
  %v780 = vand.u32 %v701, 4294901760
  %v781 = vsub.f32 %v701, %v780
  %v782 = vand.u32 %v781, 4294901760
  %v783 = vsub.f32 %v781, %v782
  %v784 = vand.u32 %v783, 4294901760
  %785 = vmatmul.mubr.f32.gmra.mxu0 %v784
  %v786 = vpop.f32.mrf.mxu0
  %v787 = vadd.f32 %v696, %v786
  %v788 = vpop.f32.mrf.mxu0
  %789 = vdwg.mxu0
  %790 = vmatprep.subr.mxu0 0.0
  %791 = vmatpush1.msra.mxu0 0.0
  %792 = vmatprep.subr.mxu0 0.0
  %793 = vmatpush1.msra.mxu0 0.0
  %794 = vmatprep.subr.mxu0 0.0
  %795 = vmatpush1.msra.mxu0 0.0
  %796 = vmatprep.subr.mxu0 0.0
  %797 = vmatpush1.msra.mxu0 0.0
  %798 = vmatprep.subr.mxu0 0.0
  %799 = vmatpush1.msra.mxu0 0.0
  %800 = vmatprep.subr.mxu0 0.0
  %801 = vmatpush1.msra.mxu0 0.0
  %802 = vmatprep.subr.mxu0 0.0
  %803 = vmatpush1.msra.mxu0 0.0
  %804 = vmatprep.subr.mxu0 0.0
  %805 = vmatpush1.msra.mxu0 0.0
  %806 = vmatprep.subr.mxu0 0.0
  %807 = vmatpush1.msra.mxu0 0.0
  %808 = vmatprep.subr.mxu0 0.0
  %809 = vmatpush1.msra.mxu0 0.0
  %810 = vmatprep.subr.mxu0 0.0
  %811 = vmatpush1.msra.mxu0 0.0
  %812 = vmatprep.subr.mxu0 0.0
  %813 = vmatpush1.msra.mxu0 0.0
  %814 = vmatprep.subr.mxu0 0.0
  %815 = vmatpush1.msra.mxu0 0.0
  %816 = vmatprep.subr.mxu0 0.0
  %817 = vmatpush1.msra.mxu0 0.0
  %818 = vmatprep.subr.mxu0 0.0
  %v819 = vand.u32 %v687, 4294901760
  %v820 = vsub.f32 %v687, %v819
  %v821 = vand.u32 %v820, 4294901760
  %v822 = vsub.f32 %v820, %v821
  %v823 = vand.u32 %v822, 4294901760
  %824 = vmatpush1.msra.mxu0 %v823
  %825 = vmatprep.subr.mxu0 0.0
  %v826 = vand.u32 %v20, 4294901760
  %v827 = vsub.f32 %v20, %v826
  %v828 = vand.u32 %v827, 4294901760
  %v829 = vsub.f32 %v827, %v828
  %v830 = vand.u32 %v829, 4294901760
  %831 = vmatpush1.msra.mxu0 %v830
  %832 = vmatprep.subr.mxu0 0.0
  %833 = vmatpush2.msra.mxu0 0.0
  %834 = vmatprep.subr.mxu0 0.0
  %835 = vmatpush2.msra.mxu0 0.0
  %836 = vmatprep.subr.mxu0 0.0
  %837 = vmatpush2.msra.mxu0 0.0
  %838 = vmatprep.subr.mxu0 0.0
  %839 = vmatpush2.msra.mxu0 0.0
  %840 = vmatprep.subr.mxu0 0.0
  %841 = vmatpush2.msra.mxu0 0.0
  %842 = vmatprep.subr.mxu0 0.0
  %843 = vmatpush2.msra.mxu0 0.0
  %844 = vmatprep.subr.mxu0 0.0
  %845 = vmatpush2.msra.mxu0 0.0
  %846 = vmatprep.subr.mxu0 0.0
  %847 = vmatpush2.msra.mxu0 0.0
  %848 = vmatprep.subr.mxu0 0.0
  %849 = vmatpush2.msra.mxu0 0.0
  %850 = vmatprep.subr.mxu0 0.0
  %851 = vmatpush2.msra.mxu0 0.0
  %852 = vmatprep.subr.mxu0 0.0
  %853 = vmatpush2.msra.mxu0 0.0
  %854 = vmatprep.subr.mxu0 0.0
  %855 = vmatpush2.msra.mxu0 0.0
  %856 = vmatprep.subr.mxu0 0.0
  %857 = vmatpush2.msra.mxu0 0.0
  %858 = vmatprep.subr.mxu0 0.0
  %859 = vmatpush2.msra.mxu0 0.0
  %860 = vmatprep.subr.mxu0 0.0
  %861 = vmatpush2.msra.mxu0 0.0
  %862 = vmatprep.subr.mxu0 0.0
  %863 = vmatpush2.msra.mxu0 0.0
  %864 = vmatprep.mubr.f32.mxu0 0.0
  %v865 = vand.u32 %v699, 4294901760
  %866 = vmatmul.mubr.f32.gmra.mxu0 %v865
  %v867 = vpop.f32.mrf.mxu0
  %v868 = vadd.f32 %v777, %v867
  %v869 = vpop.f32.mrf.mxu0
  %870 = vmatprep.mubr.f32.mxu0 0.0
  %v871 = vand.u32 %v701, 4294901760
  %872 = vmatmul.mubr.f32.gmra.mxu0 %v871
  %v873 = vpop.f32.mrf.mxu0
  %v874 = vadd.f32 %v787, %v873
  %v875 = vpop.f32.mrf.mxu0
  %876 = vdwg.mxu0
  %877 = vmatprep.subr.mxu0 0.0
  %878 = vmatpush1.msra.mxu0 0.0
  %879 = vmatprep.subr.mxu0 0.0
  %880 = vmatpush1.msra.mxu0 0.0
  %881 = vmatprep.subr.mxu0 0.0
  %882 = vmatpush1.msra.mxu0 0.0
  %883 = vmatprep.subr.mxu0 0.0
  %884 = vmatpush1.msra.mxu0 0.0
  %885 = vmatprep.subr.mxu0 0.0
  %886 = vmatpush1.msra.mxu0 0.0
  %887 = vmatprep.subr.mxu0 0.0
  %888 = vmatpush1.msra.mxu0 0.0
  %889 = vmatprep.subr.mxu0 0.0
  %890 = vmatpush1.msra.mxu0 0.0
  %891 = vmatprep.subr.mxu0 0.0
  %892 = vmatpush1.msra.mxu0 0.0
  %893 = vmatprep.subr.mxu0 0.0
  %894 = vmatpush1.msra.mxu0 0.0
  %895 = vmatprep.subr.mxu0 0.0
  %896 = vmatpush1.msra.mxu0 0.0
  %897 = vmatprep.subr.mxu0 0.0
  %898 = vmatpush1.msra.mxu0 0.0
  %899 = vmatprep.subr.mxu0 0.0
  %900 = vmatpush1.msra.mxu0 0.0
  %901 = vmatprep.subr.mxu0 0.0
  %902 = vmatpush1.msra.mxu0 0.0
  %903 = vmatprep.subr.mxu0 0.0
  %904 = vmatpush1.msra.mxu0 0.0
  %905 = vmatprep.subr.mxu0 0.0
  %v906 = vand.u32 %v687, 4294901760
  %v907 = vsub.f32 %v687, %v906
  %908 = vmatpush1.msra.mxu0 %v907
  %909 = vmatprep.subr.mxu0 0.0
  %v910 = vand.u32 %v20, 4294901760
  %v911 = vsub.f32 %v20, %v910
  %912 = vmatpush1.msra.mxu0 %v911
  %913 = vmatprep.subr.mxu0 0.0
  %914 = vmatpush2.msra.mxu0 0.0
  %915 = vmatprep.subr.mxu0 0.0
  %916 = vmatpush2.msra.mxu0 0.0
  %917 = vmatprep.subr.mxu0 0.0
  %918 = vmatpush2.msra.mxu0 0.0
  %919 = vmatprep.subr.mxu0 0.0
  %920 = vmatpush2.msra.mxu0 0.0
  %921 = vmatprep.subr.mxu0 0.0
  %922 = vmatpush2.msra.mxu0 0.0
  %923 = vmatprep.subr.mxu0 0.0
  %924 = vmatpush2.msra.mxu0 0.0
  %925 = vmatprep.subr.mxu0 0.0
  %926 = vmatpush2.msra.mxu0 0.0
  %927 = vmatprep.subr.mxu0 0.0
  %928 = vmatpush2.msra.mxu0 0.0
  %929 = vmatprep.subr.mxu0 0.0
  %930 = vmatpush2.msra.mxu0 0.0
  %931 = vmatprep.subr.mxu0 0.0
  %932 = vmatpush2.msra.mxu0 0.0
  %933 = vmatprep.subr.mxu0 0.0
  %934 = vmatpush2.msra.mxu0 0.0
  %935 = vmatprep.subr.mxu0 0.0
  %936 = vmatpush2.msra.mxu0 0.0
  %937 = vmatprep.subr.mxu0 0.0
  %938 = vmatpush2.msra.mxu0 0.0
  %939 = vmatprep.subr.mxu0 0.0
  %940 = vmatpush2.msra.mxu0 0.0
  %941 = vmatprep.subr.mxu0 0.0
  %942 = vmatpush2.msra.mxu0 0.0
  %943 = vmatprep.subr.mxu0 0.0
  %944 = vmatpush2.msra.mxu0 0.0
  %945 = vmatprep.mubr.f32.mxu0 0.0
  %v946 = vand.u32 %v699, 4294901760
  %v947 = vsub.f32 %v699, %v946
  %948 = vmatmul.mubr.f32.gmra.mxu0 %v947
  %v949 = vpop.f32.mrf.mxu0
  %v950 = vadd.f32 %v868, %v949
  %v951 = vpop.f32.mrf.mxu0
  %952 = vmatprep.mubr.f32.mxu0 0.0
  %v953 = vand.u32 %v701, 4294901760
  %v954 = vsub.f32 %v701, %v953
  %955 = vmatmul.mubr.f32.gmra.mxu0 %v954
  %v956 = vpop.f32.mrf.mxu0
  %v957 = vadd.f32 %v874, %v956
  %v958 = vpop.f32.mrf.mxu0
  %959 = vdwg.mxu0
  %960 = vmatprep.subr.mxu0 0.0
  %961 = vmatpush1.msra.mxu0 0.0
  %962 = vmatprep.subr.mxu0 0.0
  %963 = vmatpush1.msra.mxu0 0.0
  %964 = vmatprep.subr.mxu0 0.0
  %965 = vmatpush1.msra.mxu0 0.0
  %966 = vmatprep.subr.mxu0 0.0
  %967 = vmatpush1.msra.mxu0 0.0
  %968 = vmatprep.subr.mxu0 0.0
  %969 = vmatpush1.msra.mxu0 0.0
  %970 = vmatprep.subr.mxu0 0.0
  %971 = vmatpush1.msra.mxu0 0.0
  %972 = vmatprep.subr.mxu0 0.0
  %973 = vmatpush1.msra.mxu0 0.0
  %974 = vmatprep.subr.mxu0 0.0
  %975 = vmatpush1.msra.mxu0 0.0
  %976 = vmatprep.subr.mxu0 0.0
  %977 = vmatpush1.msra.mxu0 0.0
  %978 = vmatprep.subr.mxu0 0.0
  %979 = vmatpush1.msra.mxu0 0.0
  %980 = vmatprep.subr.mxu0 0.0
  %981 = vmatpush1.msra.mxu0 0.0
  %982 = vmatprep.subr.mxu0 0.0
  %983 = vmatpush1.msra.mxu0 0.0
  %984 = vmatprep.subr.mxu0 0.0
  %985 = vmatpush1.msra.mxu0 0.0
  %986 = vmatprep.subr.mxu0 0.0
  %987 = vmatpush1.msra.mxu0 0.0
  %988 = vmatprep.subr.mxu0 0.0
  %v989 = vand.u32 %v687, 4294901760
  %990 = vmatpush1.msra.mxu0 %v989
  %991 = vmatprep.subr.mxu0 0.0
  %v992 = vand.u32 %v20, 4294901760
  %993 = vmatpush1.msra.mxu0 %v992
  %994 = vmatprep.subr.mxu0 0.0
  %995 = vmatpush2.msra.mxu0 0.0
  %996 = vmatprep.subr.mxu0 0.0
  %997 = vmatpush2.msra.mxu0 0.0
  %998 = vmatprep.subr.mxu0 0.0
  %999 = vmatpush2.msra.mxu0 0.0
  %1000 = vmatprep.subr.mxu0 0.0
  %1001 = vmatpush2.msra.mxu0 0.0
  %1002 = vmatprep.subr.mxu0 0.0
  %1003 = vmatpush2.msra.mxu0 0.0
  %1004 = vmatprep.subr.mxu0 0.0
  %1005 = vmatpush2.msra.mxu0 0.0
  %1006 = vmatprep.subr.mxu0 0.0
  %1007 = vmatpush2.msra.mxu0 0.0
  %1008 = vmatprep.subr.mxu0 0.0
  %1009 = vmatpush2.msra.mxu0 0.0
  %1010 = vmatprep.subr.mxu0 0.0
  %1011 = vmatpush2.msra.mxu0 0.0
  %1012 = vmatprep.subr.mxu0 0.0
  %1013 = vmatpush2.msra.mxu0 0.0
  %1014 = vmatprep.subr.mxu0 0.0
  %1015 = vmatpush2.msra.mxu0 0.0
  %1016 = vmatprep.subr.mxu0 0.0
  %1017 = vmatpush2.msra.mxu0 0.0
  %1018 = vmatprep.subr.mxu0 0.0
  %1019 = vmatpush2.msra.mxu0 0.0
  %1020 = vmatprep.subr.mxu0 0.0
  %1021 = vmatpush2.msra.mxu0 0.0
  %1022 = vmatprep.subr.mxu0 0.0
  %1023 = vmatpush2.msra.mxu0 0.0
  %1024 = vmatprep.subr.mxu0 0.0
  %1025 = vmatpush2.msra.mxu0 0.0
  %1026 = vmatprep.mubr.f32.mxu0 0.0
  %v1027 = vand.u32 %v699, 4294901760
  %v1028 = vsub.f32 %v699, %v1027
  %v1029 = vand.u32 %v1028, 4294901760
  %1030 = vmatmul.mubr.f32.gmra.mxu0 %v1029
  %v1031 = vpop.f32.mrf.mxu0
  %v1032 = vadd.f32 %v950, %v1031
  %v1033 = vpop.f32.mrf.mxu0
  %1034 = vmatprep.mubr.f32.mxu0 0.0
  %v1035 = vand.u32 %v701, 4294901760
  %v1036 = vsub.f32 %v701, %v1035
  %v1037 = vand.u32 %v1036, 4294901760
  %1038 = vmatmul.mubr.f32.gmra.mxu0 %v1037
  %v1039 = vpop.f32.mrf.mxu0
  %v1040 = vadd.f32 %v957, %v1039
  %v1041 = vpop.f32.mrf.mxu0
  %1042 = vdwg.mxu0
  %1043 = vmatprep.subr.mxu0 0.0
  %1044 = vmatpush1.msra.mxu0 0.0
  %1045 = vmatprep.subr.mxu0 0.0
  %1046 = vmatpush1.msra.mxu0 0.0
  %1047 = vmatprep.subr.mxu0 0.0
  %1048 = vmatpush1.msra.mxu0 0.0
  %1049 = vmatprep.subr.mxu0 0.0
  %1050 = vmatpush1.msra.mxu0 0.0
  %1051 = vmatprep.subr.mxu0 0.0
  %1052 = vmatpush1.msra.mxu0 0.0
  %1053 = vmatprep.subr.mxu0 0.0
  %1054 = vmatpush1.msra.mxu0 0.0
  %1055 = vmatprep.subr.mxu0 0.0
  %1056 = vmatpush1.msra.mxu0 0.0
  %1057 = vmatprep.subr.mxu0 0.0
  %1058 = vmatpush1.msra.mxu0 0.0
  %1059 = vmatprep.subr.mxu0 0.0
  %1060 = vmatpush1.msra.mxu0 0.0
  %1061 = vmatprep.subr.mxu0 0.0
  %1062 = vmatpush1.msra.mxu0 0.0
  %1063 = vmatprep.subr.mxu0 0.0
  %1064 = vmatpush1.msra.mxu0 0.0
  %1065 = vmatprep.subr.mxu0 0.0
  %1066 = vmatpush1.msra.mxu0 0.0
  %1067 = vmatprep.subr.mxu0 0.0
  %1068 = vmatpush1.msra.mxu0 0.0
  %1069 = vmatprep.subr.mxu0 0.0
  %1070 = vmatpush1.msra.mxu0 0.0
  %1071 = vmatprep.subr.mxu0 0.0
  %v1072 = vand.u32 %v687, 4294901760
  %v1073 = vsub.f32 %v687, %v1072
  %v1074 = vand.u32 %v1073, 4294901760
  %1075 = vmatpush1.msra.mxu0 %v1074
  %1076 = vmatprep.subr.mxu0 0.0
  %v1077 = vand.u32 %v20, 4294901760
  %v1078 = vsub.f32 %v20, %v1077
  %v1079 = vand.u32 %v1078, 4294901760
  %1080 = vmatpush1.msra.mxu0 %v1079
  %1081 = vmatprep.subr.mxu0 0.0
  %1082 = vmatpush2.msra.mxu0 0.0
  %1083 = vmatprep.subr.mxu0 0.0
  %1084 = vmatpush2.msra.mxu0 0.0
  %1085 = vmatprep.subr.mxu0 0.0
  %1086 = vmatpush2.msra.mxu0 0.0
  %1087 = vmatprep.subr.mxu0 0.0
  %1088 = vmatpush2.msra.mxu0 0.0
  %1089 = vmatprep.subr.mxu0 0.0
  %1090 = vmatpush2.msra.mxu0 0.0
  %1091 = vmatprep.subr.mxu0 0.0
  %1092 = vmatpush2.msra.mxu0 0.0
  %1093 = vmatprep.subr.mxu0 0.0
  %1094 = vmatpush2.msra.mxu0 0.0
  %1095 = vmatprep.subr.mxu0 0.0
  %1096 = vmatpush2.msra.mxu0 0.0
  %1097 = vmatprep.subr.mxu0 0.0
  %1098 = vmatpush2.msra.mxu0 0.0
  %1099 = vmatprep.subr.mxu0 0.0
  %1100 = vmatpush2.msra.mxu0 0.0
  %1101 = vmatprep.subr.mxu0 0.0
  %1102 = vmatpush2.msra.mxu0 0.0
  %1103 = vmatprep.subr.mxu0 0.0
  %1104 = vmatpush2.msra.mxu0 0.0
  %1105 = vmatprep.subr.mxu0 0.0
  %1106 = vmatpush2.msra.mxu0 0.0
  %1107 = vmatprep.subr.mxu0 0.0
  %1108 = vmatpush2.msra.mxu0 0.0
  %1109 = vmatprep.subr.mxu0 0.0
  %1110 = vmatpush2.msra.mxu0 0.0
  %1111 = vmatprep.subr.mxu0 0.0
  %1112 = vmatpush2.msra.mxu0 0.0
  %1113 = vmatprep.mubr.f32.mxu0 0.0
  %v1114 = vand.u32 %v699, 4294901760
  %1115 = vmatmul.mubr.f32.gmra.mxu0 %v1114
  %v1116 = vpop.f32.mrf.mxu0
  %v1117 = vadd.f32 %v1032, %v1116
  %v1118 = vpop.f32.mrf.mxu0
  %1119 = vmatprep.mubr.f32.mxu0 0.0
  %v1120 = vand.u32 %v701, 4294901760
  %1121 = vmatmul.mubr.f32.gmra.mxu0 %v1120
  %v1122 = vpop.f32.mrf.mxu0
  %v1123 = vadd.f32 %v1040, %v1122
  %v1124 = vpop.f32.mrf.mxu0
  %1125 = vdwg.mxu0
  %1126 = vmatprep.subr.mxu0 0.0
  %1127 = vmatpush1.msra.mxu0 0.0
  %1128 = vmatprep.subr.mxu0 0.0
  %1129 = vmatpush1.msra.mxu0 0.0
  %1130 = vmatprep.subr.mxu0 0.0
  %1131 = vmatpush1.msra.mxu0 0.0
  %1132 = vmatprep.subr.mxu0 0.0
  %1133 = vmatpush1.msra.mxu0 0.0
  %1134 = vmatprep.subr.mxu0 0.0
  %1135 = vmatpush1.msra.mxu0 0.0
  %1136 = vmatprep.subr.mxu0 0.0
  %1137 = vmatpush1.msra.mxu0 0.0
  %1138 = vmatprep.subr.mxu0 0.0
  %1139 = vmatpush1.msra.mxu0 0.0
  %1140 = vmatprep.subr.mxu0 0.0
  %1141 = vmatpush1.msra.mxu0 0.0
  %1142 = vmatprep.subr.mxu0 0.0
  %1143 = vmatpush1.msra.mxu0 0.0
  %1144 = vmatprep.subr.mxu0 0.0
  %1145 = vmatpush1.msra.mxu0 0.0
  %1146 = vmatprep.subr.mxu0 0.0
  %1147 = vmatpush1.msra.mxu0 0.0
  %1148 = vmatprep.subr.mxu0 0.0
  %1149 = vmatpush1.msra.mxu0 0.0
  %1150 = vmatprep.subr.mxu0 0.0
  %1151 = vmatpush1.msra.mxu0 0.0
  %1152 = vmatprep.subr.mxu0 0.0
  %1153 = vmatpush1.msra.mxu0 0.0
  %1154 = vmatprep.subr.mxu0 0.0
  %v1155 = vand.u32 %v687, 4294901760
  %1156 = vmatpush1.msra.mxu0 %v1155
  %1157 = vmatprep.subr.mxu0 0.0
  %v1158 = vand.u32 %v20, 4294901760
  %1159 = vmatpush1.msra.mxu0 %v1158
  %1160 = vmatprep.subr.mxu0 0.0
  %1161 = vmatpush2.msra.mxu0 0.0
  %1162 = vmatprep.subr.mxu0 0.0
  %1163 = vmatpush2.msra.mxu0 0.0
  %1164 = vmatprep.subr.mxu0 0.0
  %1165 = vmatpush2.msra.mxu0 0.0
  %1166 = vmatprep.subr.mxu0 0.0
  %1167 = vmatpush2.msra.mxu0 0.0
  %1168 = vmatprep.subr.mxu0 0.0
  %1169 = vmatpush2.msra.mxu0 0.0
  %1170 = vmatprep.subr.mxu0 0.0
  %1171 = vmatpush2.msra.mxu0 0.0
  %1172 = vmatprep.subr.mxu0 0.0
  %1173 = vmatpush2.msra.mxu0 0.0
  %1174 = vmatprep.subr.mxu0 0.0
  %1175 = vmatpush2.msra.mxu0 0.0
  %1176 = vmatprep.subr.mxu0 0.0
  %1177 = vmatpush2.msra.mxu0 0.0
  %1178 = vmatprep.subr.mxu0 0.0
  %1179 = vmatpush2.msra.mxu0 0.0
  %1180 = vmatprep.subr.mxu0 0.0
  %1181 = vmatpush2.msra.mxu0 0.0
  %1182 = vmatprep.subr.mxu0 0.0
  %1183 = vmatpush2.msra.mxu0 0.0
  %1184 = vmatprep.subr.mxu0 0.0
  %1185 = vmatpush2.msra.mxu0 0.0
  %1186 = vmatprep.subr.mxu0 0.0
  %1187 = vmatpush2.msra.mxu0 0.0
  %1188 = vmatprep.subr.mxu0 0.0
  %1189 = vmatpush2.msra.mxu0 0.0
  %1190 = vmatprep.subr.mxu0 0.0
  %1191 = vmatpush2.msra.mxu0 0.0
  %1192 = vmatprep.mubr.f32.mxu0 0.0
  %v1193 = vand.u32 %v699, 4294901760
  %1194 = vmatmul.mubr.f32.gmra.mxu0 %v1193
  %v1195 = vpop.f32.mrf.mxu0
  %v1196 = vadd.f32 %v1117, %v1195
  %v1197 = vpop.f32.mrf.mxu0
  %1198 = vmatprep.mubr.f32.mxu0 0.0
  %v1199 = vand.u32 %v701, 4294901760
  %1200 = vmatmul.mubr.f32.gmra.mxu0 %v1199
  %v1201 = vpop.f32.mrf.mxu0
  %v1202 = vadd.f32 %v1123, %v1201
  %v1203 = vpop.f32.mrf.mxu0
  %1204 = vdwg.mxu0
  %v1205 = vsub.f32 0.0, %v1196
  %v1206 = vsub.f32 0.0, %v1202
  %v1207 = vmul.f32 %v1205, 1.442695
  %v1208 = vpow.pop %v1207
  %v1209 = vmul.f32 %v1206, 1.442695
  %v1210 = vpow.pop %v1209
  %v1211 = vadd.f32 %v1208, 1.0
  %v1212 = vadd.f32 %v1210, 1.0
  %v1213 = vrcp.pop %v1211
  %v1214 = vrcp.pop %v1212
  %v1215 = vmul.f32 %v1196, %v1213
  %v1216 = vmul.f32 %v1202, %v1214
  %1218 = vset.pattern.permute.xlu0 32
  %1219 = vperm.xlu0 %1218, %v673
  %v1220 = vpop.permute.xlu0 %1219
  %1223 = vset.pattern.permute.xlu0 32
  %1224 = vperm.xlu0 %1223, %v674
  %v1225 = vpop.permute.xlu0 %1224
  %v1227 = vsel %vm698, %v673, 0
  %v1229 = vsel %vm698, %v674, 0
  %1231 = vmatprep.subr.mxu0 0.0
  %1232 = vmatpush1.msra.mxu0 0.0
  %1233 = vmatprep.subr.mxu0 0.0
  %1234 = vmatpush1.msra.mxu0 0.0
  %1235 = vmatprep.subr.mxu0 0.0
  %1236 = vmatpush1.msra.mxu0 0.0
  %1237 = vmatprep.subr.mxu0 0.0
  %1238 = vmatpush1.msra.mxu0 0.0
  %1239 = vmatprep.subr.mxu0 0.0
  %1240 = vmatpush1.msra.mxu0 0.0
  %1241 = vmatprep.subr.mxu0 0.0
  %1242 = vmatpush1.msra.mxu0 0.0
  %1243 = vmatprep.subr.mxu0 0.0
  %1244 = vmatpush1.msra.mxu0 0.0
  %1245 = vmatprep.subr.mxu0 0.0
  %1246 = vmatpush1.msra.mxu0 0.0
  %1247 = vmatprep.subr.mxu0 0.0
  %1248 = vmatpush1.msra.mxu0 0.0
  %1249 = vmatprep.subr.mxu0 0.0
  %1250 = vmatpush1.msra.mxu0 0.0
  %1251 = vmatprep.subr.mxu0 0.0
  %1252 = vmatpush1.msra.mxu0 0.0
  %1253 = vmatprep.subr.mxu0 0.0
  %1254 = vmatpush1.msra.mxu0 0.0
  %1255 = vmatprep.subr.mxu0 0.0
  %1256 = vmatpush1.msra.mxu0 0.0
  %1257 = vmatprep.subr.mxu0 0.0
  %1258 = vmatpush1.msra.mxu0 0.0
  %1259 = vmatprep.subr.mxu0 0.0
  %v1260 = vand.u32 %v1216, 4294901760
  %1261 = vmatpush1.msra.mxu0 %v1260
  %1262 = vmatprep.subr.mxu0 0.0
  %v1263 = vand.u32 %v1215, 4294901760
  %1264 = vmatpush1.msra.mxu0 %v1263
  %1265 = vmatprep.subr.mxu0 0.0
  %1266 = vmatpush2.msra.mxu0 0.0
  %1267 = vmatprep.subr.mxu0 0.0
  %1268 = vmatpush2.msra.mxu0 0.0
  %1269 = vmatprep.subr.mxu0 0.0
  %1270 = vmatpush2.msra.mxu0 0.0
  %1271 = vmatprep.subr.mxu0 0.0
  %1272 = vmatpush2.msra.mxu0 0.0
  %1273 = vmatprep.subr.mxu0 0.0
  %1274 = vmatpush2.msra.mxu0 0.0
  %1275 = vmatprep.subr.mxu0 0.0
  %1276 = vmatpush2.msra.mxu0 0.0
  %1277 = vmatprep.subr.mxu0 0.0
  %1278 = vmatpush2.msra.mxu0 0.0
  %1279 = vmatprep.subr.mxu0 0.0
  %1280 = vmatpush2.msra.mxu0 0.0
  %1281 = vmatprep.subr.mxu0 0.0
  %1282 = vmatpush2.msra.mxu0 0.0
  %1283 = vmatprep.subr.mxu0 0.0
  %1284 = vmatpush2.msra.mxu0 0.0
  %1285 = vmatprep.subr.mxu0 0.0
  %1286 = vmatpush2.msra.mxu0 0.0
  %1287 = vmatprep.subr.mxu0 0.0
  %1288 = vmatpush2.msra.mxu0 0.0
  %1289 = vmatprep.subr.mxu0 0.0
  %1290 = vmatpush2.msra.mxu0 0.0
  %1291 = vmatprep.subr.mxu0 0.0
  %1292 = vmatpush2.msra.mxu0 0.0
  %1293 = vmatprep.subr.mxu0 0.0
  %1294 = vmatpush2.msra.mxu0 0.0
  %1295 = vmatprep.subr.mxu0 0.0
  %1296 = vmatpush2.msra.mxu0 0.0
  %1297 = vmatprep.mubr.f32.mxu0 0.0
  %v1298 = vand.u32 %v1227, 4294901760
  %v1299 = vsub.f32 %v1227, %v1298
  %v1300 = vand.u32 %v1299, 4294901760
  %v1301 = vsub.f32 %v1299, %v1300
  %v1302 = vand.u32 %v1301, 4294901760
  %1303 = vmatmul.mubr.f32.gmra.mxu0 %v1302
  %v1304 = vpop.f32.mrf.mxu0
  %v1305 = vadd.f32 %v1220, %v1304
  %v1306 = vpop.f32.mrf.mxu0
  %1307 = vmatprep.mubr.f32.mxu0 0.0
  %v1308 = vand.u32 %v1229, 4294901760
  %v1309 = vsub.f32 %v1229, %v1308
  %v1310 = vand.u32 %v1309, 4294901760
  %v1311 = vsub.f32 %v1309, %v1310
  %v1312 = vand.u32 %v1311, 4294901760
  %1313 = vmatmul.mubr.f32.gmra.mxu0 %v1312
  %v1314 = vpop.f32.mrf.mxu0
  %v1315 = vadd.f32 %v1225, %v1314
  %v1316 = vpop.f32.mrf.mxu0
  %1317 = vdwg.mxu0
  %1318 = vmatprep.subr.mxu0 0.0
  %1319 = vmatpush1.msra.mxu0 0.0
  %1320 = vmatprep.subr.mxu0 0.0
  %1321 = vmatpush1.msra.mxu0 0.0
  %1322 = vmatprep.subr.mxu0 0.0
  %1323 = vmatpush1.msra.mxu0 0.0
  %1324 = vmatprep.subr.mxu0 0.0
  %1325 = vmatpush1.msra.mxu0 0.0
  %1326 = vmatprep.subr.mxu0 0.0
  %1327 = vmatpush1.msra.mxu0 0.0
  %1328 = vmatprep.subr.mxu0 0.0
  %1329 = vmatpush1.msra.mxu0 0.0
  %1330 = vmatprep.subr.mxu0 0.0
  %1331 = vmatpush1.msra.mxu0 0.0
  %1332 = vmatprep.subr.mxu0 0.0
  %1333 = vmatpush1.msra.mxu0 0.0
  %1334 = vmatprep.subr.mxu0 0.0
  %1335 = vmatpush1.msra.mxu0 0.0
  %1336 = vmatprep.subr.mxu0 0.0
  %1337 = vmatpush1.msra.mxu0 0.0
  %1338 = vmatprep.subr.mxu0 0.0
  %1339 = vmatpush1.msra.mxu0 0.0
  %1340 = vmatprep.subr.mxu0 0.0
  %1341 = vmatpush1.msra.mxu0 0.0
  %1342 = vmatprep.subr.mxu0 0.0
  %1343 = vmatpush1.msra.mxu0 0.0
  %1344 = vmatprep.subr.mxu0 0.0
  %1345 = vmatpush1.msra.mxu0 0.0
  %1346 = vmatprep.subr.mxu0 0.0
  %v1347 = vand.u32 %v1216, 4294901760
  %v1348 = vsub.f32 %v1216, %v1347
  %v1349 = vand.u32 %v1348, 4294901760
  %v1350 = vsub.f32 %v1348, %v1349
  %v1351 = vand.u32 %v1350, 4294901760
  %1352 = vmatpush1.msra.mxu0 %v1351
  %1353 = vmatprep.subr.mxu0 0.0
  %v1354 = vand.u32 %v1215, 4294901760
  %v1355 = vsub.f32 %v1215, %v1354
  %v1356 = vand.u32 %v1355, 4294901760
  %v1357 = vsub.f32 %v1355, %v1356
  %v1358 = vand.u32 %v1357, 4294901760
  %1359 = vmatpush1.msra.mxu0 %v1358
  %1360 = vmatprep.subr.mxu0 0.0
  %1361 = vmatpush2.msra.mxu0 0.0
  %1362 = vmatprep.subr.mxu0 0.0
  %1363 = vmatpush2.msra.mxu0 0.0
  %1364 = vmatprep.subr.mxu0 0.0
  %1365 = vmatpush2.msra.mxu0 0.0
  %1366 = vmatprep.subr.mxu0 0.0
  %1367 = vmatpush2.msra.mxu0 0.0
  %1368 = vmatprep.subr.mxu0 0.0
  %1369 = vmatpush2.msra.mxu0 0.0
  %1370 = vmatprep.subr.mxu0 0.0
  %1371 = vmatpush2.msra.mxu0 0.0
  %1372 = vmatprep.subr.mxu0 0.0
  %1373 = vmatpush2.msra.mxu0 0.0
  %1374 = vmatprep.subr.mxu0 0.0
  %1375 = vmatpush2.msra.mxu0 0.0
  %1376 = vmatprep.subr.mxu0 0.0
  %1377 = vmatpush2.msra.mxu0 0.0
  %1378 = vmatprep.subr.mxu0 0.0
  %1379 = vmatpush2.msra.mxu0 0.0
  %1380 = vmatprep.subr.mxu0 0.0
  %1381 = vmatpush2.msra.mxu0 0.0
  %1382 = vmatprep.subr.mxu0 0.0
  %1383 = vmatpush2.msra.mxu0 0.0
  %1384 = vmatprep.subr.mxu0 0.0
  %1385 = vmatpush2.msra.mxu0 0.0
  %1386 = vmatprep.subr.mxu0 0.0
  %1387 = vmatpush2.msra.mxu0 0.0
  %1388 = vmatprep.subr.mxu0 0.0
  %1389 = vmatpush2.msra.mxu0 0.0
  %1390 = vmatprep.subr.mxu0 0.0
  %1391 = vmatpush2.msra.mxu0 0.0
  %1392 = vmatprep.mubr.f32.mxu0 0.0
  %v1393 = vand.u32 %v1227, 4294901760
  %1394 = vmatmul.mubr.f32.gmra.mxu0 %v1393
  %v1395 = vpop.f32.mrf.mxu0
  %v1396 = vadd.f32 %v1305, %v1395
  %v1397 = vpop.f32.mrf.mxu0
  %1398 = vmatprep.mubr.f32.mxu0 0.0
  %v1399 = vand.u32 %v1229, 4294901760
  %1400 = vmatmul.mubr.f32.gmra.mxu0 %v1399
  %v1401 = vpop.f32.mrf.mxu0
  %v1402 = vadd.f32 %v1315, %v1401
  %v1403 = vpop.f32.mrf.mxu0
  %1404 = vdwg.mxu0
  %1405 = vmatprep.subr.mxu0 0.0
  %1406 = vmatpush1.msra.mxu0 0.0
  %1407 = vmatprep.subr.mxu0 0.0
  %1408 = vmatpush1.msra.mxu0 0.0
  %1409 = vmatprep.subr.mxu0 0.0
  %1410 = vmatpush1.msra.mxu0 0.0
  %1411 = vmatprep.subr.mxu0 0.0
  %1412 = vmatpush1.msra.mxu0 0.0
  %1413 = vmatprep.subr.mxu0 0.0
  %1414 = vmatpush1.msra.mxu0 0.0
  %1415 = vmatprep.subr.mxu0 0.0
  %1416 = vmatpush1.msra.mxu0 0.0
  %1417 = vmatprep.subr.mxu0 0.0
  %1418 = vmatpush1.msra.mxu0 0.0
  %1419 = vmatprep.subr.mxu0 0.0
  %1420 = vmatpush1.msra.mxu0 0.0
  %1421 = vmatprep.subr.mxu0 0.0
  %1422 = vmatpush1.msra.mxu0 0.0
  %1423 = vmatprep.subr.mxu0 0.0
  %1424 = vmatpush1.msra.mxu0 0.0
  %1425 = vmatprep.subr.mxu0 0.0
  %1426 = vmatpush1.msra.mxu0 0.0
  %1427 = vmatprep.subr.mxu0 0.0
  %1428 = vmatpush1.msra.mxu0 0.0
  %1429 = vmatprep.subr.mxu0 0.0
  %1430 = vmatpush1.msra.mxu0 0.0
  %1431 = vmatprep.subr.mxu0 0.0
  %1432 = vmatpush1.msra.mxu0 0.0
  %1433 = vmatprep.subr.mxu0 0.0
  %v1434 = vand.u32 %v1216, 4294901760
  %v1435 = vsub.f32 %v1216, %v1434
  %1436 = vmatpush1.msra.mxu0 %v1435
  %1437 = vmatprep.subr.mxu0 0.0
  %v1438 = vand.u32 %v1215, 4294901760
  %v1439 = vsub.f32 %v1215, %v1438
  %1440 = vmatpush1.msra.mxu0 %v1439
  %1441 = vmatprep.subr.mxu0 0.0
  %1442 = vmatpush2.msra.mxu0 0.0
  %1443 = vmatprep.subr.mxu0 0.0
  %1444 = vmatpush2.msra.mxu0 0.0
  %1445 = vmatprep.subr.mxu0 0.0
  %1446 = vmatpush2.msra.mxu0 0.0
  %1447 = vmatprep.subr.mxu0 0.0
  %1448 = vmatpush2.msra.mxu0 0.0
  %1449 = vmatprep.subr.mxu0 0.0
  %1450 = vmatpush2.msra.mxu0 0.0
  %1451 = vmatprep.subr.mxu0 0.0
  %1452 = vmatpush2.msra.mxu0 0.0
  %1453 = vmatprep.subr.mxu0 0.0
  %1454 = vmatpush2.msra.mxu0 0.0
  %1455 = vmatprep.subr.mxu0 0.0
  %1456 = vmatpush2.msra.mxu0 0.0
  %1457 = vmatprep.subr.mxu0 0.0
  %1458 = vmatpush2.msra.mxu0 0.0
  %1459 = vmatprep.subr.mxu0 0.0
  %1460 = vmatpush2.msra.mxu0 0.0
  %1461 = vmatprep.subr.mxu0 0.0
  %1462 = vmatpush2.msra.mxu0 0.0
  %1463 = vmatprep.subr.mxu0 0.0
  %1464 = vmatpush2.msra.mxu0 0.0
  %1465 = vmatprep.subr.mxu0 0.0
  %1466 = vmatpush2.msra.mxu0 0.0
  %1467 = vmatprep.subr.mxu0 0.0
  %1468 = vmatpush2.msra.mxu0 0.0
  %1469 = vmatprep.subr.mxu0 0.0
  %1470 = vmatpush2.msra.mxu0 0.0
  %1471 = vmatprep.subr.mxu0 0.0
  %1472 = vmatpush2.msra.mxu0 0.0
  %1473 = vmatprep.mubr.f32.mxu0 0.0
  %v1474 = vand.u32 %v1227, 4294901760
  %v1475 = vsub.f32 %v1227, %v1474
  %1476 = vmatmul.mubr.f32.gmra.mxu0 %v1475
  %v1477 = vpop.f32.mrf.mxu0
  %v1478 = vadd.f32 %v1396, %v1477
  %v1479 = vpop.f32.mrf.mxu0
  %1480 = vmatprep.mubr.f32.mxu0 0.0
  %v1481 = vand.u32 %v1229, 4294901760
  %v1482 = vsub.f32 %v1229, %v1481
  %1483 = vmatmul.mubr.f32.gmra.mxu0 %v1482
  %v1484 = vpop.f32.mrf.mxu0
  %v1485 = vadd.f32 %v1402, %v1484
  %v1486 = vpop.f32.mrf.mxu0
  %1487 = vdwg.mxu0
  %1488 = vmatprep.subr.mxu0 0.0
  %1489 = vmatpush1.msra.mxu0 0.0
  %1490 = vmatprep.subr.mxu0 0.0
  %1491 = vmatpush1.msra.mxu0 0.0
  %1492 = vmatprep.subr.mxu0 0.0
  %1493 = vmatpush1.msra.mxu0 0.0
  %1494 = vmatprep.subr.mxu0 0.0
  %1495 = vmatpush1.msra.mxu0 0.0
  %1496 = vmatprep.subr.mxu0 0.0
  %1497 = vmatpush1.msra.mxu0 0.0
  %1498 = vmatprep.subr.mxu0 0.0
  %1499 = vmatpush1.msra.mxu0 0.0
  %1500 = vmatprep.subr.mxu0 0.0
  %1501 = vmatpush1.msra.mxu0 0.0
  %1502 = vmatprep.subr.mxu0 0.0
  %1503 = vmatpush1.msra.mxu0 0.0
  %1504 = vmatprep.subr.mxu0 0.0
  %1505 = vmatpush1.msra.mxu0 0.0
  %1506 = vmatprep.subr.mxu0 0.0
  %1507 = vmatpush1.msra.mxu0 0.0
  %1508 = vmatprep.subr.mxu0 0.0
  %1509 = vmatpush1.msra.mxu0 0.0
  %1510 = vmatprep.subr.mxu0 0.0
  %1511 = vmatpush1.msra.mxu0 0.0
  %1512 = vmatprep.subr.mxu0 0.0
  %1513 = vmatpush1.msra.mxu0 0.0
  %1514 = vmatprep.subr.mxu0 0.0
  %1515 = vmatpush1.msra.mxu0 0.0
  %1516 = vmatprep.subr.mxu0 0.0
  %v1517 = vand.u32 %v1216, 4294901760
  %1518 = vmatpush1.msra.mxu0 %v1517
  %1519 = vmatprep.subr.mxu0 0.0
  %v1520 = vand.u32 %v1215, 4294901760
  %1521 = vmatpush1.msra.mxu0 %v1520
  %1522 = vmatprep.subr.mxu0 0.0
  %1523 = vmatpush2.msra.mxu0 0.0
  %1524 = vmatprep.subr.mxu0 0.0
  %1525 = vmatpush2.msra.mxu0 0.0
  %1526 = vmatprep.subr.mxu0 0.0
  %1527 = vmatpush2.msra.mxu0 0.0
  %1528 = vmatprep.subr.mxu0 0.0
  %1529 = vmatpush2.msra.mxu0 0.0
  %1530 = vmatprep.subr.mxu0 0.0
  %1531 = vmatpush2.msra.mxu0 0.0
  %1532 = vmatprep.subr.mxu0 0.0
  %1533 = vmatpush2.msra.mxu0 0.0
  %1534 = vmatprep.subr.mxu0 0.0
  %1535 = vmatpush2.msra.mxu0 0.0
  %1536 = vmatprep.subr.mxu0 0.0
  %1537 = vmatpush2.msra.mxu0 0.0
  %1538 = vmatprep.subr.mxu0 0.0
  %1539 = vmatpush2.msra.mxu0 0.0
  %1540 = vmatprep.subr.mxu0 0.0
  %1541 = vmatpush2.msra.mxu0 0.0
  %1542 = vmatprep.subr.mxu0 0.0
  %1543 = vmatpush2.msra.mxu0 0.0
  %1544 = vmatprep.subr.mxu0 0.0
  %1545 = vmatpush2.msra.mxu0 0.0
  %1546 = vmatprep.subr.mxu0 0.0
  %1547 = vmatpush2.msra.mxu0 0.0
  %1548 = vmatprep.subr.mxu0 0.0
  %1549 = vmatpush2.msra.mxu0 0.0
  %1550 = vmatprep.subr.mxu0 0.0
  %1551 = vmatpush2.msra.mxu0 0.0
  %1552 = vmatprep.subr.mxu0 0.0
  %1553 = vmatpush2.msra.mxu0 0.0
  %1554 = vmatprep.mubr.f32.mxu0 0.0
  %v1555 = vand.u32 %v1227, 4294901760
  %v1556 = vsub.f32 %v1227, %v1555
  %v1557 = vand.u32 %v1556, 4294901760
  %1558 = vmatmul.mubr.f32.gmra.mxu0 %v1557
  %v1559 = vpop.f32.mrf.mxu0
  %v1560 = vadd.f32 %v1478, %v1559
  %v1561 = vpop.f32.mrf.mxu0
  %1562 = vmatprep.mubr.f32.mxu0 0.0
  %v1563 = vand.u32 %v1229, 4294901760
  %v1564 = vsub.f32 %v1229, %v1563
  %v1565 = vand.u32 %v1564, 4294901760
  %1566 = vmatmul.mubr.f32.gmra.mxu0 %v1565
  %v1567 = vpop.f32.mrf.mxu0
  %v1568 = vadd.f32 %v1485, %v1567
  %v1569 = vpop.f32.mrf.mxu0
  %1570 = vdwg.mxu0
  %1571 = vmatprep.subr.mxu0 0.0
  %1572 = vmatpush1.msra.mxu0 0.0
  %1573 = vmatprep.subr.mxu0 0.0
  %1574 = vmatpush1.msra.mxu0 0.0
  %1575 = vmatprep.subr.mxu0 0.0
  %1576 = vmatpush1.msra.mxu0 0.0
  %1577 = vmatprep.subr.mxu0 0.0
  %1578 = vmatpush1.msra.mxu0 0.0
  %1579 = vmatprep.subr.mxu0 0.0
  %1580 = vmatpush1.msra.mxu0 0.0
  %1581 = vmatprep.subr.mxu0 0.0
  %1582 = vmatpush1.msra.mxu0 0.0
  %1583 = vmatprep.subr.mxu0 0.0
  %1584 = vmatpush1.msra.mxu0 0.0
  %1585 = vmatprep.subr.mxu0 0.0
  %1586 = vmatpush1.msra.mxu0 0.0
  %1587 = vmatprep.subr.mxu0 0.0
  %1588 = vmatpush1.msra.mxu0 0.0
  %1589 = vmatprep.subr.mxu0 0.0
  %1590 = vmatpush1.msra.mxu0 0.0
  %1591 = vmatprep.subr.mxu0 0.0
  %1592 = vmatpush1.msra.mxu0 0.0
  %1593 = vmatprep.subr.mxu0 0.0
  %1594 = vmatpush1.msra.mxu0 0.0
  %1595 = vmatprep.subr.mxu0 0.0
  %1596 = vmatpush1.msra.mxu0 0.0
  %1597 = vmatprep.subr.mxu0 0.0
  %1598 = vmatpush1.msra.mxu0 0.0
  %1599 = vmatprep.subr.mxu0 0.0
  %v1600 = vand.u32 %v1216, 4294901760
  %v1601 = vsub.f32 %v1216, %v1600
  %v1602 = vand.u32 %v1601, 4294901760
  %1603 = vmatpush1.msra.mxu0 %v1602
  %1604 = vmatprep.subr.mxu0 0.0
  %v1605 = vand.u32 %v1215, 4294901760
  %v1606 = vsub.f32 %v1215, %v1605
  %v1607 = vand.u32 %v1606, 4294901760
  %1608 = vmatpush1.msra.mxu0 %v1607
  %1609 = vmatprep.subr.mxu0 0.0
  %1610 = vmatpush2.msra.mxu0 0.0
  %1611 = vmatprep.subr.mxu0 0.0
  %1612 = vmatpush2.msra.mxu0 0.0
  %1613 = vmatprep.subr.mxu0 0.0
  %1614 = vmatpush2.msra.mxu0 0.0
  %1615 = vmatprep.subr.mxu0 0.0
  %1616 = vmatpush2.msra.mxu0 0.0
  %1617 = vmatprep.subr.mxu0 0.0
  %1618 = vmatpush2.msra.mxu0 0.0
  %1619 = vmatprep.subr.mxu0 0.0
  %1620 = vmatpush2.msra.mxu0 0.0
  %1621 = vmatprep.subr.mxu0 0.0
  %1622 = vmatpush2.msra.mxu0 0.0
  %1623 = vmatprep.subr.mxu0 0.0
  %1624 = vmatpush2.msra.mxu0 0.0
  %1625 = vmatprep.subr.mxu0 0.0
  %1626 = vmatpush2.msra.mxu0 0.0
  %1627 = vmatprep.subr.mxu0 0.0
  %1628 = vmatpush2.msra.mxu0 0.0
  %1629 = vmatprep.subr.mxu0 0.0
  %1630 = vmatpush2.msra.mxu0 0.0
  %1631 = vmatprep.subr.mxu0 0.0
  %1632 = vmatpush2.msra.mxu0 0.0
  %1633 = vmatprep.subr.mxu0 0.0
  %1634 = vmatpush2.msra.mxu0 0.0
  %1635 = vmatprep.subr.mxu0 0.0
  %1636 = vmatpush2.msra.mxu0 0.0
  %1637 = vmatprep.subr.mxu0 0.0
  %1638 = vmatpush2.msra.mxu0 0.0
  %1639 = vmatprep.subr.mxu0 0.0
  %1640 = vmatpush2.msra.mxu0 0.0
  %1641 = vmatprep.mubr.f32.mxu0 0.0
  %v1642 = vand.u32 %v1227, 4294901760
  %1643 = vmatmul.mubr.f32.gmra.mxu0 %v1642
  %v1644 = vpop.f32.mrf.mxu0
  %v1645 = vadd.f32 %v1560, %v1644
  %v1646 = vpop.f32.mrf.mxu0
  %1647 = vmatprep.mubr.f32.mxu0 0.0
  %v1648 = vand.u32 %v1229, 4294901760
  %1649 = vmatmul.mubr.f32.gmra.mxu0 %v1648
  %v1650 = vpop.f32.mrf.mxu0
  %v1651 = vadd.f32 %v1568, %v1650
  %v1652 = vpop.f32.mrf.mxu0
  %1653 = vdwg.mxu0
  %1654 = vmatprep.subr.mxu0 0.0
  %1655 = vmatpush1.msra.mxu0 0.0
  %1656 = vmatprep.subr.mxu0 0.0
  %1657 = vmatpush1.msra.mxu0 0.0
  %1658 = vmatprep.subr.mxu0 0.0
  %1659 = vmatpush1.msra.mxu0 0.0
  %1660 = vmatprep.subr.mxu0 0.0
  %1661 = vmatpush1.msra.mxu0 0.0
  %1662 = vmatprep.subr.mxu0 0.0
  %1663 = vmatpush1.msra.mxu0 0.0
  %1664 = vmatprep.subr.mxu0 0.0
  %1665 = vmatpush1.msra.mxu0 0.0
  %1666 = vmatprep.subr.mxu0 0.0
  %1667 = vmatpush1.msra.mxu0 0.0
  %1668 = vmatprep.subr.mxu0 0.0
  %1669 = vmatpush1.msra.mxu0 0.0
  %1670 = vmatprep.subr.mxu0 0.0
  %1671 = vmatpush1.msra.mxu0 0.0
  %1672 = vmatprep.subr.mxu0 0.0
  %1673 = vmatpush1.msra.mxu0 0.0
  %1674 = vmatprep.subr.mxu0 0.0
  %1675 = vmatpush1.msra.mxu0 0.0
  %1676 = vmatprep.subr.mxu0 0.0
  %1677 = vmatpush1.msra.mxu0 0.0
  %1678 = vmatprep.subr.mxu0 0.0
  %1679 = vmatpush1.msra.mxu0 0.0
  %1680 = vmatprep.subr.mxu0 0.0
  %1681 = vmatpush1.msra.mxu0 0.0
  %1682 = vmatprep.subr.mxu0 0.0
  %v1683 = vand.u32 %v1216, 4294901760
  %1684 = vmatpush1.msra.mxu0 %v1683
  %1685 = vmatprep.subr.mxu0 0.0
  %v1686 = vand.u32 %v1215, 4294901760
  %1687 = vmatpush1.msra.mxu0 %v1686
  %1688 = vmatprep.subr.mxu0 0.0
  %1689 = vmatpush2.msra.mxu0 0.0
  %1690 = vmatprep.subr.mxu0 0.0
  %1691 = vmatpush2.msra.mxu0 0.0
  %1692 = vmatprep.subr.mxu0 0.0
  %1693 = vmatpush2.msra.mxu0 0.0
  %1694 = vmatprep.subr.mxu0 0.0
  %1695 = vmatpush2.msra.mxu0 0.0
  %1696 = vmatprep.subr.mxu0 0.0
  %1697 = vmatpush2.msra.mxu0 0.0
  %1698 = vmatprep.subr.mxu0 0.0
  %1699 = vmatpush2.msra.mxu0 0.0
  %1700 = vmatprep.subr.mxu0 0.0
  %1701 = vmatpush2.msra.mxu0 0.0
  %1702 = vmatprep.subr.mxu0 0.0
  %1703 = vmatpush2.msra.mxu0 0.0
  %1704 = vmatprep.subr.mxu0 0.0
  %1705 = vmatpush2.msra.mxu0 0.0
  %1706 = vmatprep.subr.mxu0 0.0
  %1707 = vmatpush2.msra.mxu0 0.0
  %1708 = vmatprep.subr.mxu0 0.0
  %1709 = vmatpush2.msra.mxu0 0.0
  %1710 = vmatprep.subr.mxu0 0.0
  %1711 = vmatpush2.msra.mxu0 0.0
  %1712 = vmatprep.subr.mxu0 0.0
  %1713 = vmatpush2.msra.mxu0 0.0
  %1714 = vmatprep.subr.mxu0 0.0
  %1715 = vmatpush2.msra.mxu0 0.0
  %1716 = vmatprep.subr.mxu0 0.0
  %1717 = vmatpush2.msra.mxu0 0.0
  %1718 = vmatprep.subr.mxu0 0.0
  %1719 = vmatpush2.msra.mxu0 0.0
  %1720 = vmatprep.mubr.f32.mxu0 0.0
  %v1721 = vand.u32 %v1227, 4294901760
  %1722 = vmatmul.mubr.f32.gmra.mxu0 %v1721
  %v1723 = vpop.f32.mrf.mxu0
  %v1724 = vadd.f32 %v1645, %v1723
  %v1725 = vpop.f32.mrf.mxu0
  %1726 = vmatprep.mubr.f32.mxu0 0.0
  %v1727 = vand.u32 %v1229, 4294901760
  %1728 = vmatmul.mubr.f32.gmra.mxu0 %v1727
  %v1729 = vpop.f32.mrf.mxu0
  %v1730 = vadd.f32 %v1651, %v1729
  %v1731 = vpop.f32.mrf.mxu0
  %1732 = vdwg.mxu0
  %v1733 = vmul.f32 %v21, %v1730
  %v1734 = vmul.f32 %v22, %v1730
  %v1735 = vmul.f32 %v23, %v1730
  %v1736 = vld [vmem:[%s4 + $0x40] sm:$0xff]
  %v1737 = vld [vmem:[%s4 + $0x48] sm:$0xff]
  %v1738 = vld [vmem:[%s4 + $0x50] sm:$0xff]
  %v1739 = vld [vmem:[%s4 + $0x58] sm:$0xff]
  %1741 = vset.pattern.permute.xlu0 32
  %1742 = vperm.xlu0 %1741, %v1736
  %v1743 = vpop.permute.xlu0 %1742
  %1746 = vset.pattern.permute.xlu0 32
  %1747 = vperm.xlu0 %1746, %v1737
  %v1748 = vpop.permute.xlu0 %1747
  %1751 = vset.pattern.permute.xlu0 32
  %1752 = vperm.xlu0 %1751, %v1738
  %v1753 = vpop.permute.xlu0 %1752
  %1756 = vset.pattern.permute.xlu0 32
  %1757 = vperm.xlu0 %1756, %v1739
  %v1758 = vpop.permute.xlu0 %1757
  %v1760 = vsel %vm48, %v1736, 0
  %v1762 = vsel %vm48, %v1737, 0
  %v1764 = vsel %vm48, %v1738, 0
  %v1766 = vsel %vm48, %v1739, 0
  %1768 = vmatprep.subr.mxu0 0.0
  %1769 = vmatpush1.msra.mxu0 0.0
  %1770 = vmatprep.subr.mxu0 0.0
  %1771 = vmatpush1.msra.mxu0 0.0
  %1772 = vmatprep.subr.mxu0 0.0
  %1773 = vmatpush1.msra.mxu0 0.0
  %1774 = vmatprep.subr.mxu0 0.0
  %1775 = vmatpush1.msra.mxu0 0.0
  %1776 = vmatprep.subr.mxu0 0.0
  %1777 = vmatpush1.msra.mxu0 0.0
  %1778 = vmatprep.subr.mxu0 0.0
  %1779 = vmatpush1.msra.mxu0 0.0
  %1780 = vmatprep.subr.mxu0 0.0
  %1781 = vmatpush1.msra.mxu0 0.0
  %1782 = vmatprep.subr.mxu0 0.0
  %1783 = vmatpush1.msra.mxu0 0.0
  %1784 = vmatprep.subr.mxu0 0.0
  %1785 = vmatpush1.msra.mxu0 0.0
  %1786 = vmatprep.subr.mxu0 0.0
  %1787 = vmatpush1.msra.mxu0 0.0
  %1788 = vmatprep.subr.mxu0 0.0
  %1789 = vmatpush1.msra.mxu0 0.0
  %1790 = vmatprep.subr.mxu0 0.0
  %1791 = vmatpush1.msra.mxu0 0.0
  %1792 = vmatprep.subr.mxu0 0.0
  %v1793 = vand.u32 %v1735, 4294901760
  %1794 = vmatpush1.msra.mxu0 %v1793
  %1795 = vmatprep.subr.mxu0 0.0
  %v1796 = vand.u32 %v1734, 4294901760
  %1797 = vmatpush1.msra.mxu0 %v1796
  %1798 = vmatprep.subr.mxu0 0.0
  %v1799 = vand.u32 %v1733, 4294901760
  %1800 = vmatpush1.msra.mxu0 %v1799
  %1801 = vmatprep.subr.mxu0 0.0
  %v1802 = vand.u32 %v1724, 4294901760
  %1803 = vmatpush1.msra.mxu0 %v1802
  %1804 = vmatprep.subr.mxu0 0.0
  %1805 = vmatpush2.msra.mxu0 0.0
  %1806 = vmatprep.subr.mxu0 0.0
  %1807 = vmatpush2.msra.mxu0 0.0
  %1808 = vmatprep.subr.mxu0 0.0
  %1809 = vmatpush2.msra.mxu0 0.0
  %1810 = vmatprep.subr.mxu0 0.0
  %1811 = vmatpush2.msra.mxu0 0.0
  %1812 = vmatprep.subr.mxu0 0.0
  %1813 = vmatpush2.msra.mxu0 0.0
  %1814 = vmatprep.subr.mxu0 0.0
  %1815 = vmatpush2.msra.mxu0 0.0
  %1816 = vmatprep.subr.mxu0 0.0
  %1817 = vmatpush2.msra.mxu0 0.0
  %1818 = vmatprep.subr.mxu0 0.0
  %1819 = vmatpush2.msra.mxu0 0.0
  %1820 = vmatprep.subr.mxu0 0.0
  %1821 = vmatpush2.msra.mxu0 0.0
  %1822 = vmatprep.subr.mxu0 0.0
  %1823 = vmatpush2.msra.mxu0 0.0
  %1824 = vmatprep.subr.mxu0 0.0
  %1825 = vmatpush2.msra.mxu0 0.0
  %1826 = vmatprep.subr.mxu0 0.0
  %1827 = vmatpush2.msra.mxu0 0.0
  %1828 = vmatprep.subr.mxu0 0.0
  %1829 = vmatpush2.msra.mxu0 0.0
  %1830 = vmatprep.subr.mxu0 0.0
  %1831 = vmatpush2.msra.mxu0 0.0
  %1832 = vmatprep.subr.mxu0 0.0
  %1833 = vmatpush2.msra.mxu0 0.0
  %1834 = vmatprep.subr.mxu0 0.0
  %1835 = vmatpush2.msra.mxu0 0.0
  %1836 = vmatprep.mubr.f32.mxu0 0.0
  %v1837 = vand.u32 %v1760, 4294901760
  %v1838 = vsub.f32 %v1760, %v1837
  %v1839 = vand.u32 %v1838, 4294901760
  %v1840 = vsub.f32 %v1838, %v1839
  %v1841 = vand.u32 %v1840, 4294901760
  %1842 = vmatmul.mubr.f32.gmra.mxu0 %v1841
  %v1843 = vpop.f32.mrf.mxu0
  %v1844 = vadd.f32 %v1743, %v1843
  %v1845 = vpop.f32.mrf.mxu0
  %1846 = vmatprep.mubr.f32.mxu0 0.0
  %v1847 = vand.u32 %v1762, 4294901760
  %v1848 = vsub.f32 %v1762, %v1847
  %v1849 = vand.u32 %v1848, 4294901760
  %v1850 = vsub.f32 %v1848, %v1849
  %v1851 = vand.u32 %v1850, 4294901760
  %1852 = vmatmul.mubr.f32.gmra.mxu0 %v1851
  %v1853 = vpop.f32.mrf.mxu0
  %v1854 = vadd.f32 %v1748, %v1853
  %v1855 = vpop.f32.mrf.mxu0
  %1856 = vmatprep.mubr.f32.mxu0 0.0
  %v1857 = vand.u32 %v1764, 4294901760
  %v1858 = vsub.f32 %v1764, %v1857
  %v1859 = vand.u32 %v1858, 4294901760
  %v1860 = vsub.f32 %v1858, %v1859
  %v1861 = vand.u32 %v1860, 4294901760
  %1862 = vmatmul.mubr.f32.gmra.mxu0 %v1861
  %v1863 = vpop.f32.mrf.mxu0
  %v1864 = vadd.f32 %v1753, %v1863
  %v1865 = vpop.f32.mrf.mxu0
  %1866 = vmatprep.mubr.f32.mxu0 0.0
  %v1867 = vand.u32 %v1766, 4294901760
  %v1868 = vsub.f32 %v1766, %v1867
  %v1869 = vand.u32 %v1868, 4294901760
  %v1870 = vsub.f32 %v1868, %v1869
  %v1871 = vand.u32 %v1870, 4294901760
  %1872 = vmatmul.mubr.f32.gmra.mxu0 %v1871
  %v1873 = vpop.f32.mrf.mxu0
  %v1874 = vadd.f32 %v1758, %v1873
  %v1875 = vpop.f32.mrf.mxu0
  %1876 = vdwg.mxu0
  %1877 = vmatprep.subr.mxu0 0.0
  %1878 = vmatpush1.msra.mxu0 0.0
  %1879 = vmatprep.subr.mxu0 0.0
  %1880 = vmatpush1.msra.mxu0 0.0
  %1881 = vmatprep.subr.mxu0 0.0
  %1882 = vmatpush1.msra.mxu0 0.0
  %1883 = vmatprep.subr.mxu0 0.0
  %1884 = vmatpush1.msra.mxu0 0.0
  %1885 = vmatprep.subr.mxu0 0.0
  %1886 = vmatpush1.msra.mxu0 0.0
  %1887 = vmatprep.subr.mxu0 0.0
  %1888 = vmatpush1.msra.mxu0 0.0
  %1889 = vmatprep.subr.mxu0 0.0
  %1890 = vmatpush1.msra.mxu0 0.0
  %1891 = vmatprep.subr.mxu0 0.0
  %1892 = vmatpush1.msra.mxu0 0.0
  %1893 = vmatprep.subr.mxu0 0.0
  %1894 = vmatpush1.msra.mxu0 0.0
  %1895 = vmatprep.subr.mxu0 0.0
  %1896 = vmatpush1.msra.mxu0 0.0
  %1897 = vmatprep.subr.mxu0 0.0
  %1898 = vmatpush1.msra.mxu0 0.0
  %1899 = vmatprep.subr.mxu0 0.0
  %1900 = vmatpush1.msra.mxu0 0.0
  %1901 = vmatprep.subr.mxu0 0.0
  %v1902 = vand.u32 %v1735, 4294901760
  %v1903 = vsub.f32 %v1735, %v1902
  %v1904 = vand.u32 %v1903, 4294901760
  %v1905 = vsub.f32 %v1903, %v1904
  %v1906 = vand.u32 %v1905, 4294901760
  %1907 = vmatpush1.msra.mxu0 %v1906
  %1908 = vmatprep.subr.mxu0 0.0
  %v1909 = vand.u32 %v1734, 4294901760
  %v1910 = vsub.f32 %v1734, %v1909
  %v1911 = vand.u32 %v1910, 4294901760
  %v1912 = vsub.f32 %v1910, %v1911
  %v1913 = vand.u32 %v1912, 4294901760
  %1914 = vmatpush1.msra.mxu0 %v1913
  %1915 = vmatprep.subr.mxu0 0.0
  %v1916 = vand.u32 %v1733, 4294901760
  %v1917 = vsub.f32 %v1733, %v1916
  %v1918 = vand.u32 %v1917, 4294901760
  %v1919 = vsub.f32 %v1917, %v1918
  %v1920 = vand.u32 %v1919, 4294901760
  %1921 = vmatpush1.msra.mxu0 %v1920
  %1922 = vmatprep.subr.mxu0 0.0
  %v1923 = vand.u32 %v1724, 4294901760
  %v1924 = vsub.f32 %v1724, %v1923
  %v1925 = vand.u32 %v1924, 4294901760
  %v1926 = vsub.f32 %v1924, %v1925
  %v1927 = vand.u32 %v1926, 4294901760
  %1928 = vmatpush1.msra.mxu0 %v1927
  %1929 = vmatprep.subr.mxu0 0.0
  %1930 = vmatpush2.msra.mxu0 0.0
  %1931 = vmatprep.subr.mxu0 0.0
  %1932 = vmatpush2.msra.mxu0 0.0
  %1933 = vmatprep.subr.mxu0 0.0
  %1934 = vmatpush2.msra.mxu0 0.0
  %1935 = vmatprep.subr.mxu0 0.0
  %1936 = vmatpush2.msra.mxu0 0.0
  %1937 = vmatprep.subr.mxu0 0.0
  %1938 = vmatpush2.msra.mxu0 0.0
  %1939 = vmatprep.subr.mxu0 0.0
  %1940 = vmatpush2.msra.mxu0 0.0
  %1941 = vmatprep.subr.mxu0 0.0
  %1942 = vmatpush2.msra.mxu0 0.0
  %1943 = vmatprep.subr.mxu0 0.0
  %1944 = vmatpush2.msra.mxu0 0.0
  %1945 = vmatprep.subr.mxu0 0.0
  %1946 = vmatpush2.msra.mxu0 0.0
  %1947 = vmatprep.subr.mxu0 0.0
  %1948 = vmatpush2.msra.mxu0 0.0
  %1949 = vmatprep.subr.mxu0 0.0
  %1950 = vmatpush2.msra.mxu0 0.0
  %1951 = vmatprep.subr.mxu0 0.0
  %1952 = vmatpush2.msra.mxu0 0.0
  %1953 = vmatprep.subr.mxu0 0.0
  %1954 = vmatpush2.msra.mxu0 0.0
  %1955 = vmatprep.subr.mxu0 0.0
  %1956 = vmatpush2.msra.mxu0 0.0
  %1957 = vmatprep.subr.mxu0 0.0
  %1958 = vmatpush2.msra.mxu0 0.0
  %1959 = vmatprep.subr.mxu0 0.0
  %1960 = vmatpush2.msra.mxu0 0.0
  %1961 = vmatprep.mubr.f32.mxu0 0.0
  %v1962 = vand.u32 %v1760, 4294901760
  %1963 = vmatmul.mubr.f32.gmra.mxu0 %v1962
  %v1964 = vpop.f32.mrf.mxu0
  %v1965 = vadd.f32 %v1844, %v1964
  %v1966 = vpop.f32.mrf.mxu0
  %1967 = vmatprep.mubr.f32.mxu0 0.0
  %v1968 = vand.u32 %v1762, 4294901760
  %1969 = vmatmul.mubr.f32.gmra.mxu0 %v1968
  %v1970 = vpop.f32.mrf.mxu0
  %v1971 = vadd.f32 %v1854, %v1970
  %v1972 = vpop.f32.mrf.mxu0
  %1973 = vmatprep.mubr.f32.mxu0 0.0
  %v1974 = vand.u32 %v1764, 4294901760
  %1975 = vmatmul.mubr.f32.gmra.mxu0 %v1974
  %v1976 = vpop.f32.mrf.mxu0
  %v1977 = vadd.f32 %v1864, %v1976
  %v1978 = vpop.f32.mrf.mxu0
  %1979 = vmatprep.mubr.f32.mxu0 0.0
  %v1980 = vand.u32 %v1766, 4294901760
  %1981 = vmatmul.mubr.f32.gmra.mxu0 %v1980
  %v1982 = vpop.f32.mrf.mxu0
  %v1983 = vadd.f32 %v1874, %v1982
  %v1984 = vpop.f32.mrf.mxu0
  %1985 = vdwg.mxu0
  %1986 = vmatprep.subr.mxu0 0.0
  %1987 = vmatpush1.msra.mxu0 0.0
  %1988 = vmatprep.subr.mxu0 0.0
  %1989 = vmatpush1.msra.mxu0 0.0
  %1990 = vmatprep.subr.mxu0 0.0
  %1991 = vmatpush1.msra.mxu0 0.0
  %1992 = vmatprep.subr.mxu0 0.0
  %1993 = vmatpush1.msra.mxu0 0.0
  %1994 = vmatprep.subr.mxu0 0.0
  %1995 = vmatpush1.msra.mxu0 0.0
  %1996 = vmatprep.subr.mxu0 0.0
  %1997 = vmatpush1.msra.mxu0 0.0
  %1998 = vmatprep.subr.mxu0 0.0
  %1999 = vmatpush1.msra.mxu0 0.0
  %2000 = vmatprep.subr.mxu0 0.0
  %2001 = vmatpush1.msra.mxu0 0.0
  %2002 = vmatprep.subr.mxu0 0.0
  %2003 = vmatpush1.msra.mxu0 0.0
  %2004 = vmatprep.subr.mxu0 0.0
  %2005 = vmatpush1.msra.mxu0 0.0
  %2006 = vmatprep.subr.mxu0 0.0
  %2007 = vmatpush1.msra.mxu0 0.0
  %2008 = vmatprep.subr.mxu0 0.0
  %2009 = vmatpush1.msra.mxu0 0.0
  %2010 = vmatprep.subr.mxu0 0.0
  %v2011 = vand.u32 %v1735, 4294901760
  %v2012 = vsub.f32 %v1735, %v2011
  %2013 = vmatpush1.msra.mxu0 %v2012
  %2014 = vmatprep.subr.mxu0 0.0
  %v2015 = vand.u32 %v1734, 4294901760
  %v2016 = vsub.f32 %v1734, %v2015
  %2017 = vmatpush1.msra.mxu0 %v2016
  %2018 = vmatprep.subr.mxu0 0.0
  %v2019 = vand.u32 %v1733, 4294901760
  %v2020 = vsub.f32 %v1733, %v2019
  %2021 = vmatpush1.msra.mxu0 %v2020
  %2022 = vmatprep.subr.mxu0 0.0
  %v2023 = vand.u32 %v1724, 4294901760
  %v2024 = vsub.f32 %v1724, %v2023
  %2025 = vmatpush1.msra.mxu0 %v2024
  %2026 = vmatprep.subr.mxu0 0.0
  %2027 = vmatpush2.msra.mxu0 0.0
  %2028 = vmatprep.subr.mxu0 0.0
  %2029 = vmatpush2.msra.mxu0 0.0
  %2030 = vmatprep.subr.mxu0 0.0
  %2031 = vmatpush2.msra.mxu0 0.0
  %2032 = vmatprep.subr.mxu0 0.0
  %2033 = vmatpush2.msra.mxu0 0.0
  %2034 = vmatprep.subr.mxu0 0.0
  %2035 = vmatpush2.msra.mxu0 0.0
  %2036 = vmatprep.subr.mxu0 0.0
  %2037 = vmatpush2.msra.mxu0 0.0
  %2038 = vmatprep.subr.mxu0 0.0
  %2039 = vmatpush2.msra.mxu0 0.0
  %2040 = vmatprep.subr.mxu0 0.0
  %2041 = vmatpush2.msra.mxu0 0.0
  %2042 = vmatprep.subr.mxu0 0.0
  %2043 = vmatpush2.msra.mxu0 0.0
  %2044 = vmatprep.subr.mxu0 0.0
  %2045 = vmatpush2.msra.mxu0 0.0
  %2046 = vmatprep.subr.mxu0 0.0
  %2047 = vmatpush2.msra.mxu0 0.0
  %2048 = vmatprep.subr.mxu0 0.0
  %2049 = vmatpush2.msra.mxu0 0.0
  %2050 = vmatprep.subr.mxu0 0.0
  %2051 = vmatpush2.msra.mxu0 0.0
  %2052 = vmatprep.subr.mxu0 0.0
  %2053 = vmatpush2.msra.mxu0 0.0
  %2054 = vmatprep.subr.mxu0 0.0
  %2055 = vmatpush2.msra.mxu0 0.0
  %2056 = vmatprep.subr.mxu0 0.0
  %2057 = vmatpush2.msra.mxu0 0.0
  %2058 = vmatprep.mubr.f32.mxu0 0.0
  %v2059 = vand.u32 %v1760, 4294901760
  %v2060 = vsub.f32 %v1760, %v2059
  %2061 = vmatmul.mubr.f32.gmra.mxu0 %v2060
  %v2062 = vpop.f32.mrf.mxu0
  %v2063 = vadd.f32 %v1965, %v2062
  %v2064 = vpop.f32.mrf.mxu0
  %2065 = vmatprep.mubr.f32.mxu0 0.0
  %v2066 = vand.u32 %v1762, 4294901760
  %v2067 = vsub.f32 %v1762, %v2066
  %2068 = vmatmul.mubr.f32.gmra.mxu0 %v2067
  %v2069 = vpop.f32.mrf.mxu0
  %v2070 = vadd.f32 %v1971, %v2069
  %v2071 = vpop.f32.mrf.mxu0
  %2072 = vmatprep.mubr.f32.mxu0 0.0
  %v2073 = vand.u32 %v1764, 4294901760
  %v2074 = vsub.f32 %v1764, %v2073
  %2075 = vmatmul.mubr.f32.gmra.mxu0 %v2074
  %v2076 = vpop.f32.mrf.mxu0
  %v2077 = vadd.f32 %v1977, %v2076
  %v2078 = vpop.f32.mrf.mxu0
  %2079 = vmatprep.mubr.f32.mxu0 0.0
  %v2080 = vand.u32 %v1766, 4294901760
  %v2081 = vsub.f32 %v1766, %v2080
  %2082 = vmatmul.mubr.f32.gmra.mxu0 %v2081
  %v2083 = vpop.f32.mrf.mxu0
  %v2084 = vadd.f32 %v1983, %v2083
  %v2085 = vpop.f32.mrf.mxu0
  %2086 = vdwg.mxu0
  %2087 = vmatprep.subr.mxu0 0.0
  %2088 = vmatpush1.msra.mxu0 0.0
  %2089 = vmatprep.subr.mxu0 0.0
  %2090 = vmatpush1.msra.mxu0 0.0
  %2091 = vmatprep.subr.mxu0 0.0
  %2092 = vmatpush1.msra.mxu0 0.0
  %2093 = vmatprep.subr.mxu0 0.0
  %2094 = vmatpush1.msra.mxu0 0.0
  %2095 = vmatprep.subr.mxu0 0.0
  %2096 = vmatpush1.msra.mxu0 0.0
  %2097 = vmatprep.subr.mxu0 0.0
  %2098 = vmatpush1.msra.mxu0 0.0
  %2099 = vmatprep.subr.mxu0 0.0
  %2100 = vmatpush1.msra.mxu0 0.0
  %2101 = vmatprep.subr.mxu0 0.0
  %2102 = vmatpush1.msra.mxu0 0.0
  %2103 = vmatprep.subr.mxu0 0.0
  %2104 = vmatpush1.msra.mxu0 0.0
  %2105 = vmatprep.subr.mxu0 0.0
  %2106 = vmatpush1.msra.mxu0 0.0
  %2107 = vmatprep.subr.mxu0 0.0
  %2108 = vmatpush1.msra.mxu0 0.0
  %2109 = vmatprep.subr.mxu0 0.0
  %2110 = vmatpush1.msra.mxu0 0.0
  %2111 = vmatprep.subr.mxu0 0.0
  %v2112 = vand.u32 %v1735, 4294901760
  %2113 = vmatpush1.msra.mxu0 %v2112
  %2114 = vmatprep.subr.mxu0 0.0
  %v2115 = vand.u32 %v1734, 4294901760
  %2116 = vmatpush1.msra.mxu0 %v2115
  %2117 = vmatprep.subr.mxu0 0.0
  %v2118 = vand.u32 %v1733, 4294901760
  %2119 = vmatpush1.msra.mxu0 %v2118
  %2120 = vmatprep.subr.mxu0 0.0
  %v2121 = vand.u32 %v1724, 4294901760
  %2122 = vmatpush1.msra.mxu0 %v2121
  %2123 = vmatprep.subr.mxu0 0.0
  %2124 = vmatpush2.msra.mxu0 0.0
  %2125 = vmatprep.subr.mxu0 0.0
  %2126 = vmatpush2.msra.mxu0 0.0
  %2127 = vmatprep.subr.mxu0 0.0
  %2128 = vmatpush2.msra.mxu0 0.0
  %2129 = vmatprep.subr.mxu0 0.0
  %2130 = vmatpush2.msra.mxu0 0.0
  %2131 = vmatprep.subr.mxu0 0.0
  %2132 = vmatpush2.msra.mxu0 0.0
  %2133 = vmatprep.subr.mxu0 0.0
  %2134 = vmatpush2.msra.mxu0 0.0
  %2135 = vmatprep.subr.mxu0 0.0
  %2136 = vmatpush2.msra.mxu0 0.0
  %2137 = vmatprep.subr.mxu0 0.0
  %2138 = vmatpush2.msra.mxu0 0.0
  %2139 = vmatprep.subr.mxu0 0.0
  %2140 = vmatpush2.msra.mxu0 0.0
  %2141 = vmatprep.subr.mxu0 0.0
  %2142 = vmatpush2.msra.mxu0 0.0
  %2143 = vmatprep.subr.mxu0 0.0
  %2144 = vmatpush2.msra.mxu0 0.0
  %2145 = vmatprep.subr.mxu0 0.0
  %2146 = vmatpush2.msra.mxu0 0.0
  %2147 = vmatprep.subr.mxu0 0.0
  %2148 = vmatpush2.msra.mxu0 0.0
  %2149 = vmatprep.subr.mxu0 0.0
  %2150 = vmatpush2.msra.mxu0 0.0
  %2151 = vmatprep.subr.mxu0 0.0
  %2152 = vmatpush2.msra.mxu0 0.0
  %2153 = vmatprep.subr.mxu0 0.0
  %2154 = vmatpush2.msra.mxu0 0.0
  %2155 = vmatprep.mubr.f32.mxu0 0.0
  %v2156 = vand.u32 %v1760, 4294901760
  %v2157 = vsub.f32 %v1760, %v2156
  %v2158 = vand.u32 %v2157, 4294901760
  %2159 = vmatmul.mubr.f32.gmra.mxu0 %v2158
  %v2160 = vpop.f32.mrf.mxu0
  %v2161 = vadd.f32 %v2063, %v2160
  %v2162 = vpop.f32.mrf.mxu0
  %2163 = vmatprep.mubr.f32.mxu0 0.0
  %v2164 = vand.u32 %v1762, 4294901760
  %v2165 = vsub.f32 %v1762, %v2164
  %v2166 = vand.u32 %v2165, 4294901760
  %2167 = vmatmul.mubr.f32.gmra.mxu0 %v2166
  %v2168 = vpop.f32.mrf.mxu0
  %v2169 = vadd.f32 %v2070, %v2168
  %v2170 = vpop.f32.mrf.mxu0
  %2171 = vmatprep.mubr.f32.mxu0 0.0
  %v2172 = vand.u32 %v1764, 4294901760
  %v2173 = vsub.f32 %v1764, %v2172
  %v2174 = vand.u32 %v2173, 4294901760
  %2175 = vmatmul.mubr.f32.gmra.mxu0 %v2174
  %v2176 = vpop.f32.mrf.mxu0
  %v2177 = vadd.f32 %v2077, %v2176
  %v2178 = vpop.f32.mrf.mxu0
  %2179 = vmatprep.mubr.f32.mxu0 0.0
  %v2180 = vand.u32 %v1766, 4294901760
  %v2181 = vsub.f32 %v1766, %v2180
  %v2182 = vand.u32 %v2181, 4294901760
  %2183 = vmatmul.mubr.f32.gmra.mxu0 %v2182
  %v2184 = vpop.f32.mrf.mxu0
  %v2185 = vadd.f32 %v2084, %v2184
  %v2186 = vpop.f32.mrf.mxu0
  %2187 = vdwg.mxu0
  %2188 = vmatprep.subr.mxu0 0.0
  %2189 = vmatpush1.msra.mxu0 0.0
  %2190 = vmatprep.subr.mxu0 0.0
  %2191 = vmatpush1.msra.mxu0 0.0
  %2192 = vmatprep.subr.mxu0 0.0
  %2193 = vmatpush1.msra.mxu0 0.0
  %2194 = vmatprep.subr.mxu0 0.0
  %2195 = vmatpush1.msra.mxu0 0.0
  %2196 = vmatprep.subr.mxu0 0.0
  %2197 = vmatpush1.msra.mxu0 0.0
  %2198 = vmatprep.subr.mxu0 0.0
  %2199 = vmatpush1.msra.mxu0 0.0
  %2200 = vmatprep.subr.mxu0 0.0
  %2201 = vmatpush1.msra.mxu0 0.0
  %2202 = vmatprep.subr.mxu0 0.0
  %2203 = vmatpush1.msra.mxu0 0.0
  %2204 = vmatprep.subr.mxu0 0.0
  %2205 = vmatpush1.msra.mxu0 0.0
  %2206 = vmatprep.subr.mxu0 0.0
  %2207 = vmatpush1.msra.mxu0 0.0
  %2208 = vmatprep.subr.mxu0 0.0
  %2209 = vmatpush1.msra.mxu0 0.0
  %2210 = vmatprep.subr.mxu0 0.0
  %2211 = vmatpush1.msra.mxu0 0.0
  %2212 = vmatprep.subr.mxu0 0.0
  %v2213 = vand.u32 %v1735, 4294901760
  %v2214 = vsub.f32 %v1735, %v2213
  %v2215 = vand.u32 %v2214, 4294901760
  %2216 = vmatpush1.msra.mxu0 %v2215
  %2217 = vmatprep.subr.mxu0 0.0
  %v2218 = vand.u32 %v1734, 4294901760
  %v2219 = vsub.f32 %v1734, %v2218
  %v2220 = vand.u32 %v2219, 4294901760
  %2221 = vmatpush1.msra.mxu0 %v2220
  %2222 = vmatprep.subr.mxu0 0.0
  %v2223 = vand.u32 %v1733, 4294901760
  %v2224 = vsub.f32 %v1733, %v2223
  %v2225 = vand.u32 %v2224, 4294901760
  %2226 = vmatpush1.msra.mxu0 %v2225
  %2227 = vmatprep.subr.mxu0 0.0
  %v2228 = vand.u32 %v1724, 4294901760
  %v2229 = vsub.f32 %v1724, %v2228
  %v2230 = vand.u32 %v2229, 4294901760
  %2231 = vmatpush1.msra.mxu0 %v2230
  %2232 = vmatprep.subr.mxu0 0.0
  %2233 = vmatpush2.msra.mxu0 0.0
  %2234 = vmatprep.subr.mxu0 0.0
  %2235 = vmatpush2.msra.mxu0 0.0
  %2236 = vmatprep.subr.mxu0 0.0
  %2237 = vmatpush2.msra.mxu0 0.0
  %2238 = vmatprep.subr.mxu0 0.0
  %2239 = vmatpush2.msra.mxu0 0.0
  %2240 = vmatprep.subr.mxu0 0.0
  %2241 = vmatpush2.msra.mxu0 0.0
  %2242 = vmatprep.subr.mxu0 0.0
  %2243 = vmatpush2.msra.mxu0 0.0
  %2244 = vmatprep.subr.mxu0 0.0
  %2245 = vmatpush2.msra.mxu0 0.0
  %2246 = vmatprep.subr.mxu0 0.0
  %2247 = vmatpush2.msra.mxu0 0.0
  %2248 = vmatprep.subr.mxu0 0.0
  %2249 = vmatpush2.msra.mxu0 0.0
  %2250 = vmatprep.subr.mxu0 0.0
  %2251 = vmatpush2.msra.mxu0 0.0
  %2252 = vmatprep.subr.mxu0 0.0
  %2253 = vmatpush2.msra.mxu0 0.0
  %2254 = vmatprep.subr.mxu0 0.0
  %2255 = vmatpush2.msra.mxu0 0.0
  %2256 = vmatprep.subr.mxu0 0.0
  %2257 = vmatpush2.msra.mxu0 0.0
  %2258 = vmatprep.subr.mxu0 0.0
  %2259 = vmatpush2.msra.mxu0 0.0
  %2260 = vmatprep.subr.mxu0 0.0
  %2261 = vmatpush2.msra.mxu0 0.0
  %2262 = vmatprep.subr.mxu0 0.0
  %2263 = vmatpush2.msra.mxu0 0.0
  %2264 = vmatprep.mubr.f32.mxu0 0.0
  %v2265 = vand.u32 %v1760, 4294901760
  %2266 = vmatmul.mubr.f32.gmra.mxu0 %v2265
  %v2267 = vpop.f32.mrf.mxu0
  %v2268 = vadd.f32 %v2161, %v2267
  %v2269 = vpop.f32.mrf.mxu0
  %2270 = vmatprep.mubr.f32.mxu0 0.0
  %v2271 = vand.u32 %v1762, 4294901760
  %2272 = vmatmul.mubr.f32.gmra.mxu0 %v2271
  %v2273 = vpop.f32.mrf.mxu0
  %v2274 = vadd.f32 %v2169, %v2273
  %v2275 = vpop.f32.mrf.mxu0
  %2276 = vmatprep.mubr.f32.mxu0 0.0
  %v2277 = vand.u32 %v1764, 4294901760
  %2278 = vmatmul.mubr.f32.gmra.mxu0 %v2277
  %v2279 = vpop.f32.mrf.mxu0
  %v2280 = vadd.f32 %v2177, %v2279
  %v2281 = vpop.f32.mrf.mxu0
  %2282 = vmatprep.mubr.f32.mxu0 0.0
  %v2283 = vand.u32 %v1766, 4294901760
  %2284 = vmatmul.mubr.f32.gmra.mxu0 %v2283
  %v2285 = vpop.f32.mrf.mxu0
  %v2286 = vadd.f32 %v2185, %v2285
  %v2287 = vpop.f32.mrf.mxu0
  %2288 = vdwg.mxu0
  %2289 = vmatprep.subr.mxu0 0.0
  %2290 = vmatpush1.msra.mxu0 0.0
  %2291 = vmatprep.subr.mxu0 0.0
  %2292 = vmatpush1.msra.mxu0 0.0
  %2293 = vmatprep.subr.mxu0 0.0
  %2294 = vmatpush1.msra.mxu0 0.0
  %2295 = vmatprep.subr.mxu0 0.0
  %2296 = vmatpush1.msra.mxu0 0.0
  %2297 = vmatprep.subr.mxu0 0.0
  %2298 = vmatpush1.msra.mxu0 0.0
  %2299 = vmatprep.subr.mxu0 0.0
  %2300 = vmatpush1.msra.mxu0 0.0
  %2301 = vmatprep.subr.mxu0 0.0
  %2302 = vmatpush1.msra.mxu0 0.0
  %2303 = vmatprep.subr.mxu0 0.0
  %2304 = vmatpush1.msra.mxu0 0.0
  %2305 = vmatprep.subr.mxu0 0.0
  %2306 = vmatpush1.msra.mxu0 0.0
  %2307 = vmatprep.subr.mxu0 0.0
  %2308 = vmatpush1.msra.mxu0 0.0
  %2309 = vmatprep.subr.mxu0 0.0
  %2310 = vmatpush1.msra.mxu0 0.0
  %2311 = vmatprep.subr.mxu0 0.0
  %2312 = vmatpush1.msra.mxu0 0.0
  %2313 = vmatprep.subr.mxu0 0.0
  %v2314 = vand.u32 %v1735, 4294901760
  %2315 = vmatpush1.msra.mxu0 %v2314
  %2316 = vmatprep.subr.mxu0 0.0
  %v2317 = vand.u32 %v1734, 4294901760
  %2318 = vmatpush1.msra.mxu0 %v2317
  %2319 = vmatprep.subr.mxu0 0.0
  %v2320 = vand.u32 %v1733, 4294901760
  %2321 = vmatpush1.msra.mxu0 %v2320
  %2322 = vmatprep.subr.mxu0 0.0
  %v2323 = vand.u32 %v1724, 4294901760
  %2324 = vmatpush1.msra.mxu0 %v2323
  %2325 = vmatprep.subr.mxu0 0.0
  %2326 = vmatpush2.msra.mxu0 0.0
  %2327 = vmatprep.subr.mxu0 0.0
  %2328 = vmatpush2.msra.mxu0 0.0
  %2329 = vmatprep.subr.mxu0 0.0
  %2330 = vmatpush2.msra.mxu0 0.0
  %2331 = vmatprep.subr.mxu0 0.0
  %2332 = vmatpush2.msra.mxu0 0.0
  %2333 = vmatprep.subr.mxu0 0.0
  %2334 = vmatpush2.msra.mxu0 0.0
  %2335 = vmatprep.subr.mxu0 0.0
  %2336 = vmatpush2.msra.mxu0 0.0
  %2337 = vmatprep.subr.mxu0 0.0
  %2338 = vmatpush2.msra.mxu0 0.0
  %2339 = vmatprep.subr.mxu0 0.0
  %2340 = vmatpush2.msra.mxu0 0.0
  %2341 = vmatprep.subr.mxu0 0.0
  %2342 = vmatpush2.msra.mxu0 0.0
  %2343 = vmatprep.subr.mxu0 0.0
  %2344 = vmatpush2.msra.mxu0 0.0
  %2345 = vmatprep.subr.mxu0 0.0
  %2346 = vmatpush2.msra.mxu0 0.0
  %2347 = vmatprep.subr.mxu0 0.0
  %2348 = vmatpush2.msra.mxu0 0.0
  %2349 = vmatprep.subr.mxu0 0.0
  %2350 = vmatpush2.msra.mxu0 0.0
  %2351 = vmatprep.subr.mxu0 0.0
  %2352 = vmatpush2.msra.mxu0 0.0
  %2353 = vmatprep.subr.mxu0 0.0
  %2354 = vmatpush2.msra.mxu0 0.0
  %2355 = vmatprep.subr.mxu0 0.0
  %2356 = vmatpush2.msra.mxu0 0.0
  %2357 = vmatprep.mubr.f32.mxu0 0.0
  %v2358 = vand.u32 %v1760, 4294901760
  %2359 = vmatmul.mubr.f32.gmra.mxu0 %v2358
  %v2360 = vpop.f32.mrf.mxu0
  %v2361 = vadd.f32 %v2268, %v2360
  %v2362 = vpop.f32.mrf.mxu0
  %2363 = vmatprep.mubr.f32.mxu0 0.0
  %v2364 = vand.u32 %v1762, 4294901760
  %2365 = vmatmul.mubr.f32.gmra.mxu0 %v2364
  %v2366 = vpop.f32.mrf.mxu0
  %v2367 = vadd.f32 %v2274, %v2366
  %v2368 = vpop.f32.mrf.mxu0
  %2369 = vmatprep.mubr.f32.mxu0 0.0
  %v2370 = vand.u32 %v1764, 4294901760
  %2371 = vmatmul.mubr.f32.gmra.mxu0 %v2370
  %v2372 = vpop.f32.mrf.mxu0
  %v2373 = vadd.f32 %v2280, %v2372
  %v2374 = vpop.f32.mrf.mxu0
  %2375 = vmatprep.mubr.f32.mxu0 0.0
  %v2376 = vand.u32 %v1766, 4294901760
  %2377 = vmatmul.mubr.f32.gmra.mxu0 %v2376
  %v2378 = vpop.f32.mrf.mxu0
  %v2379 = vadd.f32 %v2286, %v2378
  %v2380 = vpop.f32.mrf.mxu0
  %2381 = vdwg.mxu0
  %v2382 = vld [vmem:[%s1] sm:$0x1]
  %v2383 = vld [vmem:[%s1 + $0x1] sm:$0x1]
  %v2384 = vlaneseq
  %v2385 = vshrl.u32 %v2384, 7
  %v2386 = vadd.s32 %v2385, 8
  %v2387 = vadd.s32 %v2385, 16
  %v2388 = vadd.s32 %v2385, 24
  %v2389 = vadd.s32 %v2385, 32
  %v2390 = vadd.s32 %v2385, 40
  %v2391 = vadd.s32 %v2385, 48
  %v2392 = vadd.s32 %v2385, 56
  %v2393 = vlaneseq
  %v2394 = vshrl.u32 %v2393, 7
  %v2395 = vsub.s32 0, %v2394
  %v2396 = vrot.slane %v2382, %v2395
  %v2397 = vlaneseq
  %v2398 = vshrl.u32 %v2397, 7
  %v2399 = vsub.s32 0, %v2398
  %v2400 = vrot.slane %v2383, %v2399
  %vm2401 = vcmp.eq.s32.totalorder %v2385, %v2396
  %vm2402 = vcmp.eq.s32.totalorder %v2385, %v2400
  %vm2403 = vcmp.eq.s32.totalorder %v2386, %v2396
  %vm2404 = vcmp.eq.s32.totalorder %v2386, %v2400
  %vm2405 = vcmp.eq.s32.totalorder %v2387, %v2396
  %vm2406 = vcmp.eq.s32.totalorder %v2387, %v2400
  %vm2407 = vcmp.eq.s32.totalorder %v2388, %v2396
  %vm2408 = vcmp.eq.s32.totalorder %v2388, %v2400
  %vm2409 = vcmp.eq.s32.totalorder %v2389, %v2396
  %vm2410 = vcmp.eq.s32.totalorder %v2389, %v2400
  %vm2411 = vcmp.eq.s32.totalorder %v2390, %v2396
  %vm2412 = vcmp.eq.s32.totalorder %v2390, %v2400
  %vm2413 = vcmp.eq.s32.totalorder %v2391, %v2396
  %vm2414 = vcmp.eq.s32.totalorder %v2391, %v2400
  %vm2415 = vcmp.eq.s32.totalorder %v2392, %v2396
  %vm2416 = vcmp.eq.s32.totalorder %v2392, %v2400
  %v2417 = vsel %vm2401, 1, 0
  %v2418 = vsel %vm2402, 1, 0
  %v2419 = vsel %vm2403, 1, 0
  %v2420 = vsel %vm2404, 1, 0
  %v2421 = vsel %vm2405, 1, 0
  %v2422 = vsel %vm2406, 1, 0
  %v2423 = vsel %vm2407, 1, 0
  %v2424 = vsel %vm2408, 1, 0
  %v2425 = vsel %vm2409, 1, 0
  %v2426 = vsel %vm2410, 1, 0
  %v2427 = vsel %vm2411, 1, 0
  %v2428 = vsel %vm2412, 1, 0
  %v2429 = vsel %vm2413, 1, 0
  %v2430 = vsel %vm2414, 1, 0
  %v2431 = vsel %vm2415, 1, 0
  %v2432 = vsel %vm2416, 1, 0
  %v2433 = vcvt.s32.f32 %v2417
  %v2434 = vcvt.s32.f32 %v2418
  %v2435 = vcvt.s32.f32 %v2419
  %v2436 = vcvt.s32.f32 %v2420
  %v2437 = vcvt.s32.f32 %v2421
  %v2438 = vcvt.s32.f32 %v2422
  %v2439 = vcvt.s32.f32 %v2423
  %v2440 = vcvt.s32.f32 %v2424
  %v2441 = vcvt.s32.f32 %v2425
  %v2442 = vcvt.s32.f32 %v2426
  %v2443 = vcvt.s32.f32 %v2427
  %v2444 = vcvt.s32.f32 %v2428
  %v2445 = vcvt.s32.f32 %v2429
  %v2446 = vcvt.s32.f32 %v2430
  %v2447 = vcvt.s32.f32 %v2431
  %v2448 = vcvt.s32.f32 %v2432
  %vm2449 = vcmask 523264
  %v2451 = vsel %vm2449, %v650, 0
  %v2454 = vsel %vm2449, %v656, 0
  %v2457 = vsel %vm2449, %v662, 0
  %v2460 = vsel %vm2449, %v668, 0
  %v2463 = vsel %vm2449, %v2361, 0
  %v2466 = vsel %vm2449, %v2367, 0
  %v2469 = vsel %vm2449, %v2373, 0
  %v2472 = vsel %vm2449, %v2379, 0
  %2474 = vmatprep.subr.mxu0 0.0
  %2475 = vmatpush1.msra.mxu0 0.0
  %2476 = vmatprep.subr.mxu0 0.0
  %2477 = vmatpush1.msra.mxu0 0.0
  %2478 = vmatprep.subr.mxu0 0.0
  %2479 = vmatpush1.msra.mxu0 0.0
  %2480 = vmatprep.subr.mxu0 0.0
  %2481 = vmatpush1.msra.mxu0 0.0
  %2482 = vmatprep.subr.mxu0 0.0
  %2483 = vmatpush1.msra.mxu0 0.0
  %2484 = vmatprep.subr.mxu0 0.0
  %2485 = vmatpush1.msra.mxu0 0.0
  %2486 = vmatprep.subr.mxu0 0.0
  %2487 = vmatpush1.msra.mxu0 0.0
  %2488 = vmatprep.subr.mxu0 0.0
  %2489 = vmatpush1.msra.mxu0 0.0
  %v2490 = vand.u32 %v2448, 4294901760
  %2491 = vmatprep.subr.mxu0 %v2490
  %v2492 = vand.u32 %v2447, 4294901760
  %2493 = vmatpush1.msra.mxu0 %v2492
  %v2494 = vand.u32 %v2446, 4294901760
  %2495 = vmatprep.subr.mxu0 %v2494
  %v2496 = vand.u32 %v2445, 4294901760
  %2497 = vmatpush1.msra.mxu0 %v2496
  %v2498 = vand.u32 %v2444, 4294901760
  %2499 = vmatprep.subr.mxu0 %v2498
  %v2500 = vand.u32 %v2443, 4294901760
  %2501 = vmatpush1.msra.mxu0 %v2500
  %v2502 = vand.u32 %v2442, 4294901760
  %2503 = vmatprep.subr.mxu0 %v2502
  %v2504 = vand.u32 %v2441, 4294901760
  %2505 = vmatpush1.msra.mxu0 %v2504
  %v2506 = vand.u32 %v2440, 4294901760
  %2507 = vmatprep.subr.mxu0 %v2506
  %v2508 = vand.u32 %v2439, 4294901760
  %2509 = vmatpush1.msra.mxu0 %v2508
  %v2510 = vand.u32 %v2438, 4294901760
  %2511 = vmatprep.subr.mxu0 %v2510
  %v2512 = vand.u32 %v2437, 4294901760
  %2513 = vmatpush1.msra.mxu0 %v2512
  %v2514 = vand.u32 %v2436, 4294901760
  %2515 = vmatprep.subr.mxu0 %v2514
  %v2516 = vand.u32 %v2435, 4294901760
  %2517 = vmatpush1.msra.mxu0 %v2516
  %v2518 = vand.u32 %v2434, 4294901760
  %2519 = vmatprep.subr.mxu0 %v2518
  %v2520 = vand.u32 %v2433, 4294901760
  %2521 = vmatpush1.msra.mxu0 %v2520
  %2522 = vmatprep.subr.mxu0 0.0
  %2523 = vmatpush2.msra.mxu0 0.0
  %2524 = vmatprep.subr.mxu0 0.0
  %2525 = vmatpush2.msra.mxu0 0.0
  %2526 = vmatprep.subr.mxu0 0.0
  %2527 = vmatpush2.msra.mxu0 0.0
  %2528 = vmatprep.subr.mxu0 0.0
  %2529 = vmatpush2.msra.mxu0 0.0
  %2530 = vmatprep.subr.mxu0 0.0
  %2531 = vmatpush2.msra.mxu0 0.0
  %2532 = vmatprep.subr.mxu0 0.0
  %2533 = vmatpush2.msra.mxu0 0.0
  %2534 = vmatprep.subr.mxu0 0.0
  %2535 = vmatpush2.msra.mxu0 0.0
  %2536 = vmatprep.subr.mxu0 0.0
  %2537 = vmatpush2.msra.mxu0 0.0
  %2538 = vmatprep.subr.mxu0 0.0
  %2539 = vmatpush2.msra.mxu0 0.0
  %2540 = vmatprep.subr.mxu0 0.0
  %2541 = vmatpush2.msra.mxu0 0.0
  %2542 = vmatprep.subr.mxu0 0.0
  %2543 = vmatpush2.msra.mxu0 0.0
  %2544 = vmatprep.subr.mxu0 0.0
  %2545 = vmatpush2.msra.mxu0 0.0
  %2546 = vmatprep.subr.mxu0 0.0
  %2547 = vmatpush2.msra.mxu0 0.0
  %2548 = vmatprep.subr.mxu0 0.0
  %2549 = vmatpush2.msra.mxu0 0.0
  %2550 = vmatprep.subr.mxu0 0.0
  %2551 = vmatpush2.msra.mxu0 0.0
  %2552 = vmatprep.subr.mxu0 0.0
  %2553 = vmatpush2.msra.mxu0 0.0
  %2554 = vmatprep.mubr.f32.mxu0 0.0
  %v2555 = vand.u32 %v2451, 4294901760
  %v2556 = vsub.f32 %v2451, %v2555
  %v2557 = vand.u32 %v2556, 4294901760
  %v2558 = vsub.f32 %v2556, %v2557
  %v2559 = vand.u32 %v2558, 4294901760
  %2560 = vmatmul.mubr.f32.gmra.mxu0 %v2559
  %v2561 = vpop.f32.mrf.mxu0
  %v2562 = vadd.f32 0.0, %v2561
  %v2563 = vpop.f32.mrf.mxu0
  %v2564 = vadd.f32 0.0, %v2563
  %2565 = vmatprep.mubr.f32.mxu0 0.0
  %v2566 = vand.u32 %v2454, 4294901760
  %v2567 = vsub.f32 %v2454, %v2566
  %v2568 = vand.u32 %v2567, 4294901760
  %v2569 = vsub.f32 %v2567, %v2568
  %v2570 = vand.u32 %v2569, 4294901760
  %2571 = vmatmul.mubr.f32.gmra.mxu0 %v2570
  %v2572 = vpop.f32.mrf.mxu0
  %v2573 = vadd.f32 0.0, %v2572
  %v2574 = vpop.f32.mrf.mxu0
  %v2575 = vadd.f32 0.0, %v2574
  %2576 = vmatprep.mubr.f32.mxu0 0.0
  %v2577 = vand.u32 %v2457, 4294901760
  %v2578 = vsub.f32 %v2457, %v2577
  %v2579 = vand.u32 %v2578, 4294901760
  %v2580 = vsub.f32 %v2578, %v2579
  %v2581 = vand.u32 %v2580, 4294901760
  %2582 = vmatmul.mubr.f32.gmra.mxu0 %v2581
  %v2583 = vpop.f32.mrf.mxu0
  %v2584 = vadd.f32 0.0, %v2583
  %v2585 = vpop.f32.mrf.mxu0
  %v2586 = vadd.f32 0.0, %v2585
  %2587 = vmatprep.mubr.f32.mxu0 0.0
  %v2588 = vand.u32 %v2460, 4294901760
  %v2589 = vsub.f32 %v2460, %v2588
  %v2590 = vand.u32 %v2589, 4294901760
  %v2591 = vsub.f32 %v2589, %v2590
  %v2592 = vand.u32 %v2591, 4294901760
  %2593 = vmatmul.mubr.f32.gmra.mxu0 %v2592
  %v2594 = vpop.f32.mrf.mxu0
  %v2595 = vadd.f32 0.0, %v2594
  %v2596 = vpop.f32.mrf.mxu0
  %v2597 = vadd.f32 0.0, %v2596
  %2598 = vmatprep.mubr.f32.mxu0 0.0
  %v2599 = vand.u32 %v2463, 4294901760
  %v2600 = vsub.f32 %v2463, %v2599
  %v2601 = vand.u32 %v2600, 4294901760
  %v2602 = vsub.f32 %v2600, %v2601
  %v2603 = vand.u32 %v2602, 4294901760
  %2604 = vmatmul.mubr.f32.gmra.mxu0 %v2603
  %v2605 = vpop.f32.mrf.mxu0
  %v2606 = vadd.f32 0.0, %v2605
  %v2607 = vpop.f32.mrf.mxu0
  %v2608 = vadd.f32 0.0, %v2607
  %2609 = vmatprep.mubr.f32.mxu0 0.0
  %v2610 = vand.u32 %v2466, 4294901760
  %v2611 = vsub.f32 %v2466, %v2610
  %v2612 = vand.u32 %v2611, 4294901760
  %v2613 = vsub.f32 %v2611, %v2612
  %v2614 = vand.u32 %v2613, 4294901760
  %2615 = vmatmul.mubr.f32.gmra.mxu0 %v2614
  %v2616 = vpop.f32.mrf.mxu0
  %v2617 = vadd.f32 0.0, %v2616
  %v2618 = vpop.f32.mrf.mxu0
  %v2619 = vadd.f32 0.0, %v2618
  %2620 = vmatprep.mubr.f32.mxu0 0.0
  %v2621 = vand.u32 %v2469, 4294901760
  %v2622 = vsub.f32 %v2469, %v2621
  %v2623 = vand.u32 %v2622, 4294901760
  %v2624 = vsub.f32 %v2622, %v2623
  %v2625 = vand.u32 %v2624, 4294901760
  %2626 = vmatmul.mubr.f32.gmra.mxu0 %v2625
  %v2627 = vpop.f32.mrf.mxu0
  %v2628 = vadd.f32 0.0, %v2627
  %v2629 = vpop.f32.mrf.mxu0
  %v2630 = vadd.f32 0.0, %v2629
  %2631 = vmatprep.mubr.f32.mxu0 0.0
  %v2632 = vand.u32 %v2472, 4294901760
  %v2633 = vsub.f32 %v2472, %v2632
  %v2634 = vand.u32 %v2633, 4294901760
  %v2635 = vsub.f32 %v2633, %v2634
  %v2636 = vand.u32 %v2635, 4294901760
  %2637 = vmatmul.mubr.f32.gmra.mxu0 %v2636
  %v2638 = vpop.f32.mrf.mxu0
  %v2639 = vadd.f32 0.0, %v2638
  %v2640 = vpop.f32.mrf.mxu0
  %v2641 = vadd.f32 0.0, %v2640
  %2642 = vdwg.mxu0
  %2643 = vmatprep.subr.mxu0 0.0
  %2644 = vmatpush1.msra.mxu0 0.0
  %2645 = vmatprep.subr.mxu0 0.0
  %2646 = vmatpush1.msra.mxu0 0.0
  %2647 = vmatprep.subr.mxu0 0.0
  %2648 = vmatpush1.msra.mxu0 0.0
  %2649 = vmatprep.subr.mxu0 0.0
  %2650 = vmatpush1.msra.mxu0 0.0
  %2651 = vmatprep.subr.mxu0 0.0
  %2652 = vmatpush1.msra.mxu0 0.0
  %2653 = vmatprep.subr.mxu0 0.0
  %2654 = vmatpush1.msra.mxu0 0.0
  %2655 = vmatprep.subr.mxu0 0.0
  %2656 = vmatpush1.msra.mxu0 0.0
  %2657 = vmatprep.subr.mxu0 0.0
  %2658 = vmatpush1.msra.mxu0 0.0
  %v2659 = vand.u32 %v2448, 4294901760
  %v2660 = vsub.f32 %v2448, %v2659
  %v2661 = vand.u32 %v2660, 4294901760
  %v2662 = vsub.f32 %v2660, %v2661
  %v2663 = vand.u32 %v2662, 4294901760
  %2664 = vmatprep.subr.mxu0 %v2663
  %v2665 = vand.u32 %v2447, 4294901760
  %v2666 = vsub.f32 %v2447, %v2665
  %v2667 = vand.u32 %v2666, 4294901760
  %v2668 = vsub.f32 %v2666, %v2667
  %v2669 = vand.u32 %v2668, 4294901760
  %2670 = vmatpush1.msra.mxu0 %v2669
  %v2671 = vand.u32 %v2446, 4294901760
  %v2672 = vsub.f32 %v2446, %v2671
  %v2673 = vand.u32 %v2672, 4294901760
  %v2674 = vsub.f32 %v2672, %v2673
  %v2675 = vand.u32 %v2674, 4294901760
  %2676 = vmatprep.subr.mxu0 %v2675
  %v2677 = vand.u32 %v2445, 4294901760
  %v2678 = vsub.f32 %v2445, %v2677
  %v2679 = vand.u32 %v2678, 4294901760
  %v2680 = vsub.f32 %v2678, %v2679
  %v2681 = vand.u32 %v2680, 4294901760
  %2682 = vmatpush1.msra.mxu0 %v2681
  %v2683 = vand.u32 %v2444, 4294901760
  %v2684 = vsub.f32 %v2444, %v2683
  %v2685 = vand.u32 %v2684, 4294901760
  %v2686 = vsub.f32 %v2684, %v2685
  %v2687 = vand.u32 %v2686, 4294901760
  %2688 = vmatprep.subr.mxu0 %v2687
  %v2689 = vand.u32 %v2443, 4294901760
  %v2690 = vsub.f32 %v2443, %v2689
  %v2691 = vand.u32 %v2690, 4294901760
  %v2692 = vsub.f32 %v2690, %v2691
  %v2693 = vand.u32 %v2692, 4294901760
  %2694 = vmatpush1.msra.mxu0 %v2693
  %v2695 = vand.u32 %v2442, 4294901760
  %v2696 = vsub.f32 %v2442, %v2695
  %v2697 = vand.u32 %v2696, 4294901760
  %v2698 = vsub.f32 %v2696, %v2697
  %v2699 = vand.u32 %v2698, 4294901760
  %2700 = vmatprep.subr.mxu0 %v2699
  %v2701 = vand.u32 %v2441, 4294901760
  %v2702 = vsub.f32 %v2441, %v2701
  %v2703 = vand.u32 %v2702, 4294901760
  %v2704 = vsub.f32 %v2702, %v2703
  %v2705 = vand.u32 %v2704, 4294901760
  %2706 = vmatpush1.msra.mxu0 %v2705
  %v2707 = vand.u32 %v2440, 4294901760
  %v2708 = vsub.f32 %v2440, %v2707
  %v2709 = vand.u32 %v2708, 4294901760
  %v2710 = vsub.f32 %v2708, %v2709
  %v2711 = vand.u32 %v2710, 4294901760
  %2712 = vmatprep.subr.mxu0 %v2711
  %v2713 = vand.u32 %v2439, 4294901760
  %v2714 = vsub.f32 %v2439, %v2713
  %v2715 = vand.u32 %v2714, 4294901760
  %v2716 = vsub.f32 %v2714, %v2715
  %v2717 = vand.u32 %v2716, 4294901760
  %2718 = vmatpush1.msra.mxu0 %v2717
  %v2719 = vand.u32 %v2438, 4294901760
  %v2720 = vsub.f32 %v2438, %v2719
  %v2721 = vand.u32 %v2720, 4294901760
  %v2722 = vsub.f32 %v2720, %v2721
  %v2723 = vand.u32 %v2722, 4294901760
  %2724 = vmatprep.subr.mxu0 %v2723
  %v2725 = vand.u32 %v2437, 4294901760
  %v2726 = vsub.f32 %v2437, %v2725
  %v2727 = vand.u32 %v2726, 4294901760
  %v2728 = vsub.f32 %v2726, %v2727
  %v2729 = vand.u32 %v2728, 4294901760
  %2730 = vmatpush1.msra.mxu0 %v2729
  %v2731 = vand.u32 %v2436, 4294901760
  %v2732 = vsub.f32 %v2436, %v2731
  %v2733 = vand.u32 %v2732, 4294901760
  %v2734 = vsub.f32 %v2732, %v2733
  %v2735 = vand.u32 %v2734, 4294901760
  %2736 = vmatprep.subr.mxu0 %v2735
  %v2737 = vand.u32 %v2435, 4294901760
  %v2738 = vsub.f32 %v2435, %v2737
  %v2739 = vand.u32 %v2738, 4294901760
  %v2740 = vsub.f32 %v2738, %v2739
  %v2741 = vand.u32 %v2740, 4294901760
  %2742 = vmatpush1.msra.mxu0 %v2741
  %v2743 = vand.u32 %v2434, 4294901760
  %v2744 = vsub.f32 %v2434, %v2743
  %v2745 = vand.u32 %v2744, 4294901760
  %v2746 = vsub.f32 %v2744, %v2745
  %v2747 = vand.u32 %v2746, 4294901760
  %2748 = vmatprep.subr.mxu0 %v2747
  %v2749 = vand.u32 %v2433, 4294901760
  %v2750 = vsub.f32 %v2433, %v2749
  %v2751 = vand.u32 %v2750, 4294901760
  %v2752 = vsub.f32 %v2750, %v2751
  %v2753 = vand.u32 %v2752, 4294901760
  %2754 = vmatpush1.msra.mxu0 %v2753
  %2755 = vmatprep.subr.mxu0 0.0
  %2756 = vmatpush2.msra.mxu0 0.0
  %2757 = vmatprep.subr.mxu0 0.0
  %2758 = vmatpush2.msra.mxu0 0.0
  %2759 = vmatprep.subr.mxu0 0.0
  %2760 = vmatpush2.msra.mxu0 0.0
  %2761 = vmatprep.subr.mxu0 0.0
  %2762 = vmatpush2.msra.mxu0 0.0
  %2763 = vmatprep.subr.mxu0 0.0
  %2764 = vmatpush2.msra.mxu0 0.0
  %2765 = vmatprep.subr.mxu0 0.0
  %2766 = vmatpush2.msra.mxu0 0.0
  %2767 = vmatprep.subr.mxu0 0.0
  %2768 = vmatpush2.msra.mxu0 0.0
  %2769 = vmatprep.subr.mxu0 0.0
  %2770 = vmatpush2.msra.mxu0 0.0
  %2771 = vmatprep.subr.mxu0 0.0
  %2772 = vmatpush2.msra.mxu0 0.0
  %2773 = vmatprep.subr.mxu0 0.0
  %2774 = vmatpush2.msra.mxu0 0.0
  %2775 = vmatprep.subr.mxu0 0.0
  %2776 = vmatpush2.msra.mxu0 0.0
  %2777 = vmatprep.subr.mxu0 0.0
  %2778 = vmatpush2.msra.mxu0 0.0
  %2779 = vmatprep.subr.mxu0 0.0
  %2780 = vmatpush2.msra.mxu0 0.0
  %2781 = vmatprep.subr.mxu0 0.0
  %2782 = vmatpush2.msra.mxu0 0.0
  %2783 = vmatprep.subr.mxu0 0.0
  %2784 = vmatpush2.msra.mxu0 0.0
  %2785 = vmatprep.subr.mxu0 0.0
  %2786 = vmatpush2.msra.mxu0 0.0
  %2787 = vmatprep.mubr.f32.mxu0 0.0
  %v2788 = vand.u32 %v2451, 4294901760
  %2789 = vmatmul.mubr.f32.gmra.mxu0 %v2788
  %v2790 = vpop.f32.mrf.mxu0
  %v2791 = vadd.f32 %v2562, %v2790
  %v2792 = vpop.f32.mrf.mxu0
  %v2793 = vadd.f32 %v2564, %v2792
  %2794 = vmatprep.mubr.f32.mxu0 0.0
  %v2795 = vand.u32 %v2454, 4294901760
  %2796 = vmatmul.mubr.f32.gmra.mxu0 %v2795
  %v2797 = vpop.f32.mrf.mxu0
  %v2798 = vadd.f32 %v2573, %v2797
  %v2799 = vpop.f32.mrf.mxu0
  %v2800 = vadd.f32 %v2575, %v2799
  %2801 = vmatprep.mubr.f32.mxu0 0.0
  %v2802 = vand.u32 %v2457, 4294901760
  %2803 = vmatmul.mubr.f32.gmra.mxu0 %v2802
  %v2804 = vpop.f32.mrf.mxu0
  %v2805 = vadd.f32 %v2584, %v2804
  %v2806 = vpop.f32.mrf.mxu0
  %v2807 = vadd.f32 %v2586, %v2806
  %2808 = vmatprep.mubr.f32.mxu0 0.0
  %v2809 = vand.u32 %v2460, 4294901760
  %2810 = vmatmul.mubr.f32.gmra.mxu0 %v2809
  %v2811 = vpop.f32.mrf.mxu0
  %v2812 = vadd.f32 %v2595, %v2811
  %v2813 = vpop.f32.mrf.mxu0
  %v2814 = vadd.f32 %v2597, %v2813
  %2815 = vmatprep.mubr.f32.mxu0 0.0
  %v2816 = vand.u32 %v2463, 4294901760
  %2817 = vmatmul.mubr.f32.gmra.mxu0 %v2816
  %v2818 = vpop.f32.mrf.mxu0
  %v2819 = vadd.f32 %v2606, %v2818
  %v2820 = vpop.f32.mrf.mxu0
  %v2821 = vadd.f32 %v2608, %v2820
  %2822 = vmatprep.mubr.f32.mxu0 0.0
  %v2823 = vand.u32 %v2466, 4294901760
  %2824 = vmatmul.mubr.f32.gmra.mxu0 %v2823
  %v2825 = vpop.f32.mrf.mxu0
  %v2826 = vadd.f32 %v2617, %v2825
  %v2827 = vpop.f32.mrf.mxu0
  %v2828 = vadd.f32 %v2619, %v2827
  %2829 = vmatprep.mubr.f32.mxu0 0.0
  %v2830 = vand.u32 %v2469, 4294901760
  %2831 = vmatmul.mubr.f32.gmra.mxu0 %v2830
  %v2832 = vpop.f32.mrf.mxu0
  %v2833 = vadd.f32 %v2628, %v2832
  %v2834 = vpop.f32.mrf.mxu0
  %v2835 = vadd.f32 %v2630, %v2834
  %2836 = vmatprep.mubr.f32.mxu0 0.0
  %v2837 = vand.u32 %v2472, 4294901760
  %2838 = vmatmul.mubr.f32.gmra.mxu0 %v2837
  %v2839 = vpop.f32.mrf.mxu0
  %v2840 = vadd.f32 %v2639, %v2839
  %v2841 = vpop.f32.mrf.mxu0
  %v2842 = vadd.f32 %v2641, %v2841
  %2843 = vdwg.mxu0
  %2844 = vmatprep.subr.mxu0 0.0
  %2845 = vmatpush1.msra.mxu0 0.0
  %2846 = vmatprep.subr.mxu0 0.0
  %2847 = vmatpush1.msra.mxu0 0.0
  %2848 = vmatprep.subr.mxu0 0.0
  %2849 = vmatpush1.msra.mxu0 0.0
  %2850 = vmatprep.subr.mxu0 0.0
  %2851 = vmatpush1.msra.mxu0 0.0
  %2852 = vmatprep.subr.mxu0 0.0
  %2853 = vmatpush1.msra.mxu0 0.0
  %2854 = vmatprep.subr.mxu0 0.0
  %2855 = vmatpush1.msra.mxu0 0.0
  %2856 = vmatprep.subr.mxu0 0.0
  %2857 = vmatpush1.msra.mxu0 0.0
  %2858 = vmatprep.subr.mxu0 0.0
  %2859 = vmatpush1.msra.mxu0 0.0
  %v2860 = vand.u32 %v2448, 4294901760
  %v2861 = vsub.f32 %v2448, %v2860
  %2862 = vmatprep.subr.mxu0 %v2861
  %v2863 = vand.u32 %v2447, 4294901760
  %v2864 = vsub.f32 %v2447, %v2863
  %2865 = vmatpush1.msra.mxu0 %v2864
  %v2866 = vand.u32 %v2446, 4294901760
  %v2867 = vsub.f32 %v2446, %v2866
  %2868 = vmatprep.subr.mxu0 %v2867
  %v2869 = vand.u32 %v2445, 4294901760
  %v2870 = vsub.f32 %v2445, %v2869
  %2871 = vmatpush1.msra.mxu0 %v2870
  %v2872 = vand.u32 %v2444, 4294901760
  %v2873 = vsub.f32 %v2444, %v2872
  %2874 = vmatprep.subr.mxu0 %v2873
  %v2875 = vand.u32 %v2443, 4294901760
  %v2876 = vsub.f32 %v2443, %v2875
  %2877 = vmatpush1.msra.mxu0 %v2876
  %v2878 = vand.u32 %v2442, 4294901760
  %v2879 = vsub.f32 %v2442, %v2878
  %2880 = vmatprep.subr.mxu0 %v2879
  %v2881 = vand.u32 %v2441, 4294901760
  %v2882 = vsub.f32 %v2441, %v2881
  %2883 = vmatpush1.msra.mxu0 %v2882
  %v2884 = vand.u32 %v2440, 4294901760
  %v2885 = vsub.f32 %v2440, %v2884
  %2886 = vmatprep.subr.mxu0 %v2885
  %v2887 = vand.u32 %v2439, 4294901760
  %v2888 = vsub.f32 %v2439, %v2887
  %2889 = vmatpush1.msra.mxu0 %v2888
  %v2890 = vand.u32 %v2438, 4294901760
  %v2891 = vsub.f32 %v2438, %v2890
  %2892 = vmatprep.subr.mxu0 %v2891
  %v2893 = vand.u32 %v2437, 4294901760
  %v2894 = vsub.f32 %v2437, %v2893
  %2895 = vmatpush1.msra.mxu0 %v2894
  %v2896 = vand.u32 %v2436, 4294901760
  %v2897 = vsub.f32 %v2436, %v2896
  %2898 = vmatprep.subr.mxu0 %v2897
  %v2899 = vand.u32 %v2435, 4294901760
  %v2900 = vsub.f32 %v2435, %v2899
  %2901 = vmatpush1.msra.mxu0 %v2900
  %v2902 = vand.u32 %v2434, 4294901760
  %v2903 = vsub.f32 %v2434, %v2902
  %2904 = vmatprep.subr.mxu0 %v2903
  %v2905 = vand.u32 %v2433, 4294901760
  %v2906 = vsub.f32 %v2433, %v2905
  %2907 = vmatpush1.msra.mxu0 %v2906
  %2908 = vmatprep.subr.mxu0 0.0
  %2909 = vmatpush2.msra.mxu0 0.0
  %2910 = vmatprep.subr.mxu0 0.0
  %2911 = vmatpush2.msra.mxu0 0.0
  %2912 = vmatprep.subr.mxu0 0.0
  %2913 = vmatpush2.msra.mxu0 0.0
  %2914 = vmatprep.subr.mxu0 0.0
  %2915 = vmatpush2.msra.mxu0 0.0
  %2916 = vmatprep.subr.mxu0 0.0
  %2917 = vmatpush2.msra.mxu0 0.0
  %2918 = vmatprep.subr.mxu0 0.0
  %2919 = vmatpush2.msra.mxu0 0.0
  %2920 = vmatprep.subr.mxu0 0.0
  %2921 = vmatpush2.msra.mxu0 0.0
  %2922 = vmatprep.subr.mxu0 0.0
  %2923 = vmatpush2.msra.mxu0 0.0
  %2924 = vmatprep.subr.mxu0 0.0
  %2925 = vmatpush2.msra.mxu0 0.0
  %2926 = vmatprep.subr.mxu0 0.0
  %2927 = vmatpush2.msra.mxu0 0.0
  %2928 = vmatprep.subr.mxu0 0.0
  %2929 = vmatpush2.msra.mxu0 0.0
  %2930 = vmatprep.subr.mxu0 0.0
  %2931 = vmatpush2.msra.mxu0 0.0
  %2932 = vmatprep.subr.mxu0 0.0
  %2933 = vmatpush2.msra.mxu0 0.0
  %2934 = vmatprep.subr.mxu0 0.0
  %2935 = vmatpush2.msra.mxu0 0.0
  %2936 = vmatprep.subr.mxu0 0.0
  %2937 = vmatpush2.msra.mxu0 0.0
  %2938 = vmatprep.subr.mxu0 0.0
  %2939 = vmatpush2.msra.mxu0 0.0
  %2940 = vmatprep.mubr.f32.mxu0 0.0
  %v2941 = vand.u32 %v2451, 4294901760
  %v2942 = vsub.f32 %v2451, %v2941
  %2943 = vmatmul.mubr.f32.gmra.mxu0 %v2942
  %v2944 = vpop.f32.mrf.mxu0
  %v2945 = vadd.f32 %v2791, %v2944
  %v2946 = vpop.f32.mrf.mxu0
  %v2947 = vadd.f32 %v2793, %v2946
  %2948 = vmatprep.mubr.f32.mxu0 0.0
  %v2949 = vand.u32 %v2454, 4294901760
  %v2950 = vsub.f32 %v2454, %v2949
  %2951 = vmatmul.mubr.f32.gmra.mxu0 %v2950
  %v2952 = vpop.f32.mrf.mxu0
  %v2953 = vadd.f32 %v2798, %v2952
  %v2954 = vpop.f32.mrf.mxu0
  %v2955 = vadd.f32 %v2800, %v2954
  %2956 = vmatprep.mubr.f32.mxu0 0.0
  %v2957 = vand.u32 %v2457, 4294901760
  %v2958 = vsub.f32 %v2457, %v2957
  %2959 = vmatmul.mubr.f32.gmra.mxu0 %v2958
  %v2960 = vpop.f32.mrf.mxu0
  %v2961 = vadd.f32 %v2805, %v2960
  %v2962 = vpop.f32.mrf.mxu0
  %v2963 = vadd.f32 %v2807, %v2962
  %2964 = vmatprep.mubr.f32.mxu0 0.0
  %v2965 = vand.u32 %v2460, 4294901760
  %v2966 = vsub.f32 %v2460, %v2965
  %2967 = vmatmul.mubr.f32.gmra.mxu0 %v2966
  %v2968 = vpop.f32.mrf.mxu0
  %v2969 = vadd.f32 %v2812, %v2968
  %v2970 = vpop.f32.mrf.mxu0
  %v2971 = vadd.f32 %v2814, %v2970
  %2972 = vmatprep.mubr.f32.mxu0 0.0
  %v2973 = vand.u32 %v2463, 4294901760
  %v2974 = vsub.f32 %v2463, %v2973
  %2975 = vmatmul.mubr.f32.gmra.mxu0 %v2974
  %v2976 = vpop.f32.mrf.mxu0
  %v2977 = vadd.f32 %v2819, %v2976
  %v2978 = vpop.f32.mrf.mxu0
  %v2979 = vadd.f32 %v2821, %v2978
  %2980 = vmatprep.mubr.f32.mxu0 0.0
  %v2981 = vand.u32 %v2466, 4294901760
  %v2982 = vsub.f32 %v2466, %v2981
  %2983 = vmatmul.mubr.f32.gmra.mxu0 %v2982
  %v2984 = vpop.f32.mrf.mxu0
  %v2985 = vadd.f32 %v2826, %v2984
  %v2986 = vpop.f32.mrf.mxu0
  %v2987 = vadd.f32 %v2828, %v2986
  %2988 = vmatprep.mubr.f32.mxu0 0.0
  %v2989 = vand.u32 %v2469, 4294901760
  %v2990 = vsub.f32 %v2469, %v2989
  %2991 = vmatmul.mubr.f32.gmra.mxu0 %v2990
  %v2992 = vpop.f32.mrf.mxu0
  %v2993 = vadd.f32 %v2833, %v2992
  %v2994 = vpop.f32.mrf.mxu0
  %v2995 = vadd.f32 %v2835, %v2994
  %2996 = vmatprep.mubr.f32.mxu0 0.0
  %v2997 = vand.u32 %v2472, 4294901760
  %v2998 = vsub.f32 %v2472, %v2997
  %2999 = vmatmul.mubr.f32.gmra.mxu0 %v2998
  %v3000 = vpop.f32.mrf.mxu0
  %v3001 = vadd.f32 %v2840, %v3000
  %v3002 = vpop.f32.mrf.mxu0
  %v3003 = vadd.f32 %v2842, %v3002
  %3004 = vdwg.mxu0
  %3005 = vmatprep.subr.mxu0 0.0
  %3006 = vmatpush1.msra.mxu0 0.0
  %3007 = vmatprep.subr.mxu0 0.0
  %3008 = vmatpush1.msra.mxu0 0.0
  %3009 = vmatprep.subr.mxu0 0.0
  %3010 = vmatpush1.msra.mxu0 0.0
  %3011 = vmatprep.subr.mxu0 0.0
  %3012 = vmatpush1.msra.mxu0 0.0
  %3013 = vmatprep.subr.mxu0 0.0
  %3014 = vmatpush1.msra.mxu0 0.0
  %3015 = vmatprep.subr.mxu0 0.0
  %3016 = vmatpush1.msra.mxu0 0.0
  %3017 = vmatprep.subr.mxu0 0.0
  %3018 = vmatpush1.msra.mxu0 0.0
  %3019 = vmatprep.subr.mxu0 0.0
  %3020 = vmatpush1.msra.mxu0 0.0
  %v3021 = vand.u32 %v2448, 4294901760
  %3022 = vmatprep.subr.mxu0 %v3021
  %v3023 = vand.u32 %v2447, 4294901760
  %3024 = vmatpush1.msra.mxu0 %v3023
  %v3025 = vand.u32 %v2446, 4294901760
  %3026 = vmatprep.subr.mxu0 %v3025
  %v3027 = vand.u32 %v2445, 4294901760
  %3028 = vmatpush1.msra.mxu0 %v3027
  %v3029 = vand.u32 %v2444, 4294901760
  %3030 = vmatprep.subr.mxu0 %v3029
  %v3031 = vand.u32 %v2443, 4294901760
  %3032 = vmatpush1.msra.mxu0 %v3031
  %v3033 = vand.u32 %v2442, 4294901760
  %3034 = vmatprep.subr.mxu0 %v3033
  %v3035 = vand.u32 %v2441, 4294901760
  %3036 = vmatpush1.msra.mxu0 %v3035
  %v3037 = vand.u32 %v2440, 4294901760
  %3038 = vmatprep.subr.mxu0 %v3037
  %v3039 = vand.u32 %v2439, 4294901760
  %3040 = vmatpush1.msra.mxu0 %v3039
  %v3041 = vand.u32 %v2438, 4294901760
  %3042 = vmatprep.subr.mxu0 %v3041
  %v3043 = vand.u32 %v2437, 4294901760
  %3044 = vmatpush1.msra.mxu0 %v3043
  %v3045 = vand.u32 %v2436, 4294901760
  %3046 = vmatprep.subr.mxu0 %v3045
  %v3047 = vand.u32 %v2435, 4294901760
  %3048 = vmatpush1.msra.mxu0 %v3047
  %v3049 = vand.u32 %v2434, 4294901760
  %3050 = vmatprep.subr.mxu0 %v3049
  %v3051 = vand.u32 %v2433, 4294901760
  %3052 = vmatpush1.msra.mxu0 %v3051
  %3053 = vmatprep.subr.mxu0 0.0
  %3054 = vmatpush2.msra.mxu0 0.0
  %3055 = vmatprep.subr.mxu0 0.0
  %3056 = vmatpush2.msra.mxu0 0.0
  %3057 = vmatprep.subr.mxu0 0.0
  %3058 = vmatpush2.msra.mxu0 0.0
  %3059 = vmatprep.subr.mxu0 0.0
  %3060 = vmatpush2.msra.mxu0 0.0
  %3061 = vmatprep.subr.mxu0 0.0
  %3062 = vmatpush2.msra.mxu0 0.0
  %3063 = vmatprep.subr.mxu0 0.0
  %3064 = vmatpush2.msra.mxu0 0.0
  %3065 = vmatprep.subr.mxu0 0.0
  %3066 = vmatpush2.msra.mxu0 0.0
  %3067 = vmatprep.subr.mxu0 0.0
  %3068 = vmatpush2.msra.mxu0 0.0
  %3069 = vmatprep.subr.mxu0 0.0
  %3070 = vmatpush2.msra.mxu0 0.0
  %3071 = vmatprep.subr.mxu0 0.0
  %3072 = vmatpush2.msra.mxu0 0.0
  %3073 = vmatprep.subr.mxu0 0.0
  %3074 = vmatpush2.msra.mxu0 0.0
  %3075 = vmatprep.subr.mxu0 0.0
  %3076 = vmatpush2.msra.mxu0 0.0
  %3077 = vmatprep.subr.mxu0 0.0
  %3078 = vmatpush2.msra.mxu0 0.0
  %3079 = vmatprep.subr.mxu0 0.0
  %3080 = vmatpush2.msra.mxu0 0.0
  %3081 = vmatprep.subr.mxu0 0.0
  %3082 = vmatpush2.msra.mxu0 0.0
  %3083 = vmatprep.subr.mxu0 0.0
  %3084 = vmatpush2.msra.mxu0 0.0
  %3085 = vmatprep.mubr.f32.mxu0 0.0
  %v3086 = vand.u32 %v2451, 4294901760
  %v3087 = vsub.f32 %v2451, %v3086
  %v3088 = vand.u32 %v3087, 4294901760
  %3089 = vmatmul.mubr.f32.gmra.mxu0 %v3088
  %v3090 = vpop.f32.mrf.mxu0
  %v3091 = vadd.f32 %v2945, %v3090
  %v3092 = vpop.f32.mrf.mxu0
  %v3093 = vadd.f32 %v2947, %v3092
  %3094 = vmatprep.mubr.f32.mxu0 0.0
  %v3095 = vand.u32 %v2454, 4294901760
  %v3096 = vsub.f32 %v2454, %v3095
  %v3097 = vand.u32 %v3096, 4294901760
  %3098 = vmatmul.mubr.f32.gmra.mxu0 %v3097
  %v3099 = vpop.f32.mrf.mxu0
  %v3100 = vadd.f32 %v2953, %v3099
  %v3101 = vpop.f32.mrf.mxu0
  %v3102 = vadd.f32 %v2955, %v3101
  %3103 = vmatprep.mubr.f32.mxu0 0.0
  %v3104 = vand.u32 %v2457, 4294901760
  %v3105 = vsub.f32 %v2457, %v3104
  %v3106 = vand.u32 %v3105, 4294901760
  %3107 = vmatmul.mubr.f32.gmra.mxu0 %v3106
  %v3108 = vpop.f32.mrf.mxu0
  %v3109 = vadd.f32 %v2961, %v3108
  %v3110 = vpop.f32.mrf.mxu0
  %v3111 = vadd.f32 %v2963, %v3110
  %3112 = vmatprep.mubr.f32.mxu0 0.0
  %v3113 = vand.u32 %v2460, 4294901760
  %v3114 = vsub.f32 %v2460, %v3113
  %v3115 = vand.u32 %v3114, 4294901760
  %3116 = vmatmul.mubr.f32.gmra.mxu0 %v3115
  %v3117 = vpop.f32.mrf.mxu0
  %v3118 = vadd.f32 %v2969, %v3117
  %v3119 = vpop.f32.mrf.mxu0
  %v3120 = vadd.f32 %v2971, %v3119
  %3121 = vmatprep.mubr.f32.mxu0 0.0
  %v3122 = vand.u32 %v2463, 4294901760
  %v3123 = vsub.f32 %v2463, %v3122
  %v3124 = vand.u32 %v3123, 4294901760
  %3125 = vmatmul.mubr.f32.gmra.mxu0 %v3124
  %v3126 = vpop.f32.mrf.mxu0
  %v3127 = vadd.f32 %v2977, %v3126
  %v3128 = vpop.f32.mrf.mxu0
  %v3129 = vadd.f32 %v2979, %v3128
  %3130 = vmatprep.mubr.f32.mxu0 0.0
  %v3131 = vand.u32 %v2466, 4294901760
  %v3132 = vsub.f32 %v2466, %v3131
  %v3133 = vand.u32 %v3132, 4294901760
  %3134 = vmatmul.mubr.f32.gmra.mxu0 %v3133
  %v3135 = vpop.f32.mrf.mxu0
  %v3136 = vadd.f32 %v2985, %v3135
  %v3137 = vpop.f32.mrf.mxu0
  %v3138 = vadd.f32 %v2987, %v3137
  %3139 = vmatprep.mubr.f32.mxu0 0.0
  %v3140 = vand.u32 %v2469, 4294901760
  %v3141 = vsub.f32 %v2469, %v3140
  %v3142 = vand.u32 %v3141, 4294901760
  %3143 = vmatmul.mubr.f32.gmra.mxu0 %v3142
  %v3144 = vpop.f32.mrf.mxu0
  %v3145 = vadd.f32 %v2993, %v3144
  %v3146 = vpop.f32.mrf.mxu0
  %v3147 = vadd.f32 %v2995, %v3146
  %3148 = vmatprep.mubr.f32.mxu0 0.0
  %v3149 = vand.u32 %v2472, 4294901760
  %v3150 = vsub.f32 %v2472, %v3149
  %v3151 = vand.u32 %v3150, 4294901760
  %3152 = vmatmul.mubr.f32.gmra.mxu0 %v3151
  %v3153 = vpop.f32.mrf.mxu0
  %v3154 = vadd.f32 %v3001, %v3153
  %v3155 = vpop.f32.mrf.mxu0
  %v3156 = vadd.f32 %v3003, %v3155
  %3157 = vdwg.mxu0
  %3158 = vmatprep.subr.mxu0 0.0
  %3159 = vmatpush1.msra.mxu0 0.0
  %3160 = vmatprep.subr.mxu0 0.0
  %3161 = vmatpush1.msra.mxu0 0.0
  %3162 = vmatprep.subr.mxu0 0.0
  %3163 = vmatpush1.msra.mxu0 0.0
  %3164 = vmatprep.subr.mxu0 0.0
  %3165 = vmatpush1.msra.mxu0 0.0
  %3166 = vmatprep.subr.mxu0 0.0
  %3167 = vmatpush1.msra.mxu0 0.0
  %3168 = vmatprep.subr.mxu0 0.0
  %3169 = vmatpush1.msra.mxu0 0.0
  %3170 = vmatprep.subr.mxu0 0.0
  %3171 = vmatpush1.msra.mxu0 0.0
  %3172 = vmatprep.subr.mxu0 0.0
  %3173 = vmatpush1.msra.mxu0 0.0
  %v3174 = vand.u32 %v2448, 4294901760
  %v3175 = vsub.f32 %v2448, %v3174
  %v3176 = vand.u32 %v3175, 4294901760
  %3177 = vmatprep.subr.mxu0 %v3176
  %v3178 = vand.u32 %v2447, 4294901760
  %v3179 = vsub.f32 %v2447, %v3178
  %v3180 = vand.u32 %v3179, 4294901760
  %3181 = vmatpush1.msra.mxu0 %v3180
  %v3182 = vand.u32 %v2446, 4294901760
  %v3183 = vsub.f32 %v2446, %v3182
  %v3184 = vand.u32 %v3183, 4294901760
  %3185 = vmatprep.subr.mxu0 %v3184
  %v3186 = vand.u32 %v2445, 4294901760
  %v3187 = vsub.f32 %v2445, %v3186
  %v3188 = vand.u32 %v3187, 4294901760
  %3189 = vmatpush1.msra.mxu0 %v3188
  %v3190 = vand.u32 %v2444, 4294901760
  %v3191 = vsub.f32 %v2444, %v3190
  %v3192 = vand.u32 %v3191, 4294901760
  %3193 = vmatprep.subr.mxu0 %v3192
  %v3194 = vand.u32 %v2443, 4294901760
  %v3195 = vsub.f32 %v2443, %v3194
  %v3196 = vand.u32 %v3195, 4294901760
  %3197 = vmatpush1.msra.mxu0 %v3196
  %v3198 = vand.u32 %v2442, 4294901760
  %v3199 = vsub.f32 %v2442, %v3198
  %v3200 = vand.u32 %v3199, 4294901760
  %3201 = vmatprep.subr.mxu0 %v3200
  %v3202 = vand.u32 %v2441, 4294901760
  %v3203 = vsub.f32 %v2441, %v3202
  %v3204 = vand.u32 %v3203, 4294901760
  %3205 = vmatpush1.msra.mxu0 %v3204
  %v3206 = vand.u32 %v2440, 4294901760
  %v3207 = vsub.f32 %v2440, %v3206
  %v3208 = vand.u32 %v3207, 4294901760
  %3209 = vmatprep.subr.mxu0 %v3208
  %v3210 = vand.u32 %v2439, 4294901760
  %v3211 = vsub.f32 %v2439, %v3210
  %v3212 = vand.u32 %v3211, 4294901760
  %3213 = vmatpush1.msra.mxu0 %v3212
  %v3214 = vand.u32 %v2438, 4294901760
  %v3215 = vsub.f32 %v2438, %v3214
  %v3216 = vand.u32 %v3215, 4294901760
  %3217 = vmatprep.subr.mxu0 %v3216
  %v3218 = vand.u32 %v2437, 4294901760
  %v3219 = vsub.f32 %v2437, %v3218
  %v3220 = vand.u32 %v3219, 4294901760
  %3221 = vmatpush1.msra.mxu0 %v3220
  %v3222 = vand.u32 %v2436, 4294901760
  %v3223 = vsub.f32 %v2436, %v3222
  %v3224 = vand.u32 %v3223, 4294901760
  %3225 = vmatprep.subr.mxu0 %v3224
  %v3226 = vand.u32 %v2435, 4294901760
  %v3227 = vsub.f32 %v2435, %v3226
  %v3228 = vand.u32 %v3227, 4294901760
  %3229 = vmatpush1.msra.mxu0 %v3228
  %v3230 = vand.u32 %v2434, 4294901760
  %v3231 = vsub.f32 %v2434, %v3230
  %v3232 = vand.u32 %v3231, 4294901760
  %3233 = vmatprep.subr.mxu0 %v3232
  %v3234 = vand.u32 %v2433, 4294901760
  %v3235 = vsub.f32 %v2433, %v3234
  %v3236 = vand.u32 %v3235, 4294901760
  %3237 = vmatpush1.msra.mxu0 %v3236
  %3238 = vmatprep.subr.mxu0 0.0
  %3239 = vmatpush2.msra.mxu0 0.0
  %3240 = vmatprep.subr.mxu0 0.0
  %3241 = vmatpush2.msra.mxu0 0.0
  %3242 = vmatprep.subr.mxu0 0.0
  %3243 = vmatpush2.msra.mxu0 0.0
  %3244 = vmatprep.subr.mxu0 0.0
  %3245 = vmatpush2.msra.mxu0 0.0
  %3246 = vmatprep.subr.mxu0 0.0
  %3247 = vmatpush2.msra.mxu0 0.0
  %3248 = vmatprep.subr.mxu0 0.0
  %3249 = vmatpush2.msra.mxu0 0.0
  %3250 = vmatprep.subr.mxu0 0.0
  %3251 = vmatpush2.msra.mxu0 0.0
  %3252 = vmatprep.subr.mxu0 0.0
  %3253 = vmatpush2.msra.mxu0 0.0
  %3254 = vmatprep.subr.mxu0 0.0
  %3255 = vmatpush2.msra.mxu0 0.0
  %3256 = vmatprep.subr.mxu0 0.0
  %3257 = vmatpush2.msra.mxu0 0.0
  %3258 = vmatprep.subr.mxu0 0.0
  %3259 = vmatpush2.msra.mxu0 0.0
  %3260 = vmatprep.subr.mxu0 0.0
  %3261 = vmatpush2.msra.mxu0 0.0
  %3262 = vmatprep.subr.mxu0 0.0
  %3263 = vmatpush2.msra.mxu0 0.0
  %3264 = vmatprep.subr.mxu0 0.0
  %3265 = vmatpush2.msra.mxu0 0.0
  %3266 = vmatprep.subr.mxu0 0.0
  %3267 = vmatpush2.msra.mxu0 0.0
  %3268 = vmatprep.subr.mxu0 0.0
  %3269 = vmatpush2.msra.mxu0 0.0
  %3270 = vmatprep.mubr.f32.mxu0 0.0
  %v3271 = vand.u32 %v2451, 4294901760
  %3272 = vmatmul.mubr.f32.gmra.mxu0 %v3271
  %v3273 = vpop.f32.mrf.mxu0
  %v3274 = vadd.f32 %v3091, %v3273
  %v3275 = vpop.f32.mrf.mxu0
  %v3276 = vadd.f32 %v3093, %v3275
  %3277 = vmatprep.mubr.f32.mxu0 0.0
  %v3278 = vand.u32 %v2454, 4294901760
  %3279 = vmatmul.mubr.f32.gmra.mxu0 %v3278
  %v3280 = vpop.f32.mrf.mxu0
  %v3281 = vadd.f32 %v3100, %v3280
  %v3282 = vpop.f32.mrf.mxu0
  %v3283 = vadd.f32 %v3102, %v3282
  %3284 = vmatprep.mubr.f32.mxu0 0.0
  %v3285 = vand.u32 %v2457, 4294901760
  %3286 = vmatmul.mubr.f32.gmra.mxu0 %v3285
  %v3287 = vpop.f32.mrf.mxu0
  %v3288 = vadd.f32 %v3109, %v3287
  %v3289 = vpop.f32.mrf.mxu0
  %v3290 = vadd.f32 %v3111, %v3289
  %3291 = vmatprep.mubr.f32.mxu0 0.0
  %v3292 = vand.u32 %v2460, 4294901760
  %3293 = vmatmul.mubr.f32.gmra.mxu0 %v3292
  %v3294 = vpop.f32.mrf.mxu0
  %v3295 = vadd.f32 %v3118, %v3294
  %v3296 = vpop.f32.mrf.mxu0
  %v3297 = vadd.f32 %v3120, %v3296
  %3298 = vmatprep.mubr.f32.mxu0 0.0
  %v3299 = vand.u32 %v2463, 4294901760
  %3300 = vmatmul.mubr.f32.gmra.mxu0 %v3299
  %v3301 = vpop.f32.mrf.mxu0
  %v3302 = vadd.f32 %v3127, %v3301
  %v3303 = vpop.f32.mrf.mxu0
  %v3304 = vadd.f32 %v3129, %v3303
  %3305 = vmatprep.mubr.f32.mxu0 0.0
  %v3306 = vand.u32 %v2466, 4294901760
  %3307 = vmatmul.mubr.f32.gmra.mxu0 %v3306
  %v3308 = vpop.f32.mrf.mxu0
  %v3309 = vadd.f32 %v3136, %v3308
  %v3310 = vpop.f32.mrf.mxu0
  %v3311 = vadd.f32 %v3138, %v3310
  %3312 = vmatprep.mubr.f32.mxu0 0.0
  %v3313 = vand.u32 %v2469, 4294901760
  %3314 = vmatmul.mubr.f32.gmra.mxu0 %v3313
  %v3315 = vpop.f32.mrf.mxu0
  %v3316 = vadd.f32 %v3145, %v3315
  %v3317 = vpop.f32.mrf.mxu0
  %v3318 = vadd.f32 %v3147, %v3317
  %3319 = vmatprep.mubr.f32.mxu0 0.0
  %v3320 = vand.u32 %v2472, 4294901760
  %3321 = vmatmul.mubr.f32.gmra.mxu0 %v3320
  %v3322 = vpop.f32.mrf.mxu0
  %v3323 = vadd.f32 %v3154, %v3322
  %v3324 = vpop.f32.mrf.mxu0
  %v3325 = vadd.f32 %v3156, %v3324
  %3326 = vdwg.mxu0
  %3327 = vmatprep.subr.mxu0 0.0
  %3328 = vmatpush1.msra.mxu0 0.0
  %3329 = vmatprep.subr.mxu0 0.0
  %3330 = vmatpush1.msra.mxu0 0.0
  %3331 = vmatprep.subr.mxu0 0.0
  %3332 = vmatpush1.msra.mxu0 0.0
  %3333 = vmatprep.subr.mxu0 0.0
  %3334 = vmatpush1.msra.mxu0 0.0
  %3335 = vmatprep.subr.mxu0 0.0
  %3336 = vmatpush1.msra.mxu0 0.0
  %3337 = vmatprep.subr.mxu0 0.0
  %3338 = vmatpush1.msra.mxu0 0.0
  %3339 = vmatprep.subr.mxu0 0.0
  %3340 = vmatpush1.msra.mxu0 0.0
  %3341 = vmatprep.subr.mxu0 0.0
  %3342 = vmatpush1.msra.mxu0 0.0
  %v3343 = vand.u32 %v2448, 4294901760
  %3344 = vmatprep.subr.mxu0 %v3343
  %v3345 = vand.u32 %v2447, 4294901760
  %3346 = vmatpush1.msra.mxu0 %v3345
  %v3347 = vand.u32 %v2446, 4294901760
  %3348 = vmatprep.subr.mxu0 %v3347
  %v3349 = vand.u32 %v2445, 4294901760
  %3350 = vmatpush1.msra.mxu0 %v3349
  %v3351 = vand.u32 %v2444, 4294901760
  %3352 = vmatprep.subr.mxu0 %v3351
  %v3353 = vand.u32 %v2443, 4294901760
  %3354 = vmatpush1.msra.mxu0 %v3353
  %v3355 = vand.u32 %v2442, 4294901760
  %3356 = vmatprep.subr.mxu0 %v3355
  %v3357 = vand.u32 %v2441, 4294901760
  %3358 = vmatpush1.msra.mxu0 %v3357
  %v3359 = vand.u32 %v2440, 4294901760
  %3360 = vmatprep.subr.mxu0 %v3359
  %v3361 = vand.u32 %v2439, 4294901760
  %3362 = vmatpush1.msra.mxu0 %v3361
  %v3363 = vand.u32 %v2438, 4294901760
  %3364 = vmatprep.subr.mxu0 %v3363
  %v3365 = vand.u32 %v2437, 4294901760
  %3366 = vmatpush1.msra.mxu0 %v3365
  %v3367 = vand.u32 %v2436, 4294901760
  %3368 = vmatprep.subr.mxu0 %v3367
  %v3369 = vand.u32 %v2435, 4294901760
  %3370 = vmatpush1.msra.mxu0 %v3369
  %v3371 = vand.u32 %v2434, 4294901760
  %3372 = vmatprep.subr.mxu0 %v3371
  %v3373 = vand.u32 %v2433, 4294901760
  %3374 = vmatpush1.msra.mxu0 %v3373
  %3375 = vmatprep.subr.mxu0 0.0
  %3376 = vmatpush2.msra.mxu0 0.0
  %3377 = vmatprep.subr.mxu0 0.0
  %3378 = vmatpush2.msra.mxu0 0.0
  %3379 = vmatprep.subr.mxu0 0.0
  %3380 = vmatpush2.msra.mxu0 0.0
  %3381 = vmatprep.subr.mxu0 0.0
  %3382 = vmatpush2.msra.mxu0 0.0
  %3383 = vmatprep.subr.mxu0 0.0
  %3384 = vmatpush2.msra.mxu0 0.0
  %3385 = vmatprep.subr.mxu0 0.0
  %3386 = vmatpush2.msra.mxu0 0.0
  %3387 = vmatprep.subr.mxu0 0.0
  %3388 = vmatpush2.msra.mxu0 0.0
  %3389 = vmatprep.subr.mxu0 0.0
  %3390 = vmatpush2.msra.mxu0 0.0
  %3391 = vmatprep.subr.mxu0 0.0
  %3392 = vmatpush2.msra.mxu0 0.0
  %3393 = vmatprep.subr.mxu0 0.0
  %3394 = vmatpush2.msra.mxu0 0.0
  %3395 = vmatprep.subr.mxu0 0.0
  %3396 = vmatpush2.msra.mxu0 0.0
  %3397 = vmatprep.subr.mxu0 0.0
  %3398 = vmatpush2.msra.mxu0 0.0
  %3399 = vmatprep.subr.mxu0 0.0
  %3400 = vmatpush2.msra.mxu0 0.0
  %3401 = vmatprep.subr.mxu0 0.0
  %3402 = vmatpush2.msra.mxu0 0.0
  %3403 = vmatprep.subr.mxu0 0.0
  %3404 = vmatpush2.msra.mxu0 0.0
  %3405 = vmatprep.subr.mxu0 0.0
  %3406 = vmatpush2.msra.mxu0 0.0
  %3407 = vmatprep.mubr.f32.mxu0 0.0
  %v3408 = vand.u32 %v2451, 4294901760
  %3409 = vmatmul.mubr.f32.gmra.mxu0 %v3408
  %v3410 = vpop.f32.mrf.mxu0
  %v3411 = vadd.f32 %v3274, %v3410
  %v3412 = vpop.f32.mrf.mxu0
  %v3413 = vadd.f32 %v3276, %v3412
  %3414 = vmatprep.mubr.f32.mxu0 0.0
  %v3415 = vand.u32 %v2454, 4294901760
  %3416 = vmatmul.mubr.f32.gmra.mxu0 %v3415
  %v3417 = vpop.f32.mrf.mxu0
  %v3418 = vadd.f32 %v3281, %v3417
  %v3419 = vpop.f32.mrf.mxu0
  %v3420 = vadd.f32 %v3283, %v3419
  %3421 = vmatprep.mubr.f32.mxu0 0.0
  %v3422 = vand.u32 %v2457, 4294901760
  %3423 = vmatmul.mubr.f32.gmra.mxu0 %v3422
  %v3424 = vpop.f32.mrf.mxu0
  %v3425 = vadd.f32 %v3288, %v3424
  %v3426 = vpop.f32.mrf.mxu0
  %v3427 = vadd.f32 %v3290, %v3426
  %3428 = vmatprep.mubr.f32.mxu0 0.0
  %v3429 = vand.u32 %v2460, 4294901760
  %3430 = vmatmul.mubr.f32.gmra.mxu0 %v3429
  %v3431 = vpop.f32.mrf.mxu0
  %v3432 = vadd.f32 %v3295, %v3431
  %v3433 = vpop.f32.mrf.mxu0
  %v3434 = vadd.f32 %v3297, %v3433
  %3435 = vmatprep.mubr.f32.mxu0 0.0
  %v3436 = vand.u32 %v2463, 4294901760
  %3437 = vmatmul.mubr.f32.gmra.mxu0 %v3436
  %v3438 = vpop.f32.mrf.mxu0
  %v3439 = vadd.f32 %v3302, %v3438
  %v3440 = vpop.f32.mrf.mxu0
  %v3441 = vadd.f32 %v3304, %v3440
  %3442 = vmatprep.mubr.f32.mxu0 0.0
  %v3443 = vand.u32 %v2466, 4294901760
  %3444 = vmatmul.mubr.f32.gmra.mxu0 %v3443
  %v3445 = vpop.f32.mrf.mxu0
  %v3446 = vadd.f32 %v3309, %v3445
  %v3447 = vpop.f32.mrf.mxu0
  %v3448 = vadd.f32 %v3311, %v3447
  %3449 = vmatprep.mubr.f32.mxu0 0.0
  %v3450 = vand.u32 %v2469, 4294901760
  %3451 = vmatmul.mubr.f32.gmra.mxu0 %v3450
  %v3452 = vpop.f32.mrf.mxu0
  %v3453 = vadd.f32 %v3316, %v3452
  %v3454 = vpop.f32.mrf.mxu0
  %v3455 = vadd.f32 %v3318, %v3454
  %3456 = vmatprep.mubr.f32.mxu0 0.0
  %v3457 = vand.u32 %v2472, 4294901760
  %3458 = vmatmul.mubr.f32.gmra.mxu0 %v3457
  %v3459 = vpop.f32.mrf.mxu0
  %v3460 = vadd.f32 %v3323, %v3459
  %v3461 = vpop.f32.mrf.mxu0
  %v3462 = vadd.f32 %v3325, %v3461
  %3463 = vdwg.mxu0
  %v3464 = vmul.f32 %v3418, %v3420
  %v3465 = vmul.f32 %v3425, %v3427
  %v3466 = vadd.f32 %v3464, %v3465
  %v3467 = vmul.f32 %v3432, %v3434
  %v3468 = vadd.f32 %v3466, %v3467
  %v3469 = vmul.f32 %v3468, 0.33333334
  %v3470 = vmul.f32 %v3411, 0.5
  %v3471 = vmul.f32 %v3413, 0.5
  %v3472 = vadd.f32 %v3470, %v3471
  %v3473 = vld [vmem:[%s2] sm:$0xff]
  %v3474 = vld [vmem:[%s2 + $0x8] sm:$0xff]
  %v3475 = vld [vmem:[%s4 + $0x60] sm:$0xff]
  %v3476 = vld [vmem:[%s4 + $0x68] sm:$0xff]
  %v3477 = vld [vmem:[%s4 + $0x70] sm:$0xff]
  %v3478 = vld [vmem:[%s4 + $0x78] sm:$0xff]
  %v3479 = vld [vmem:[%s4 + $0x80] sm:$0xff]
  %v3480 = vld [vmem:[%s4 + $0x88] sm:$0xff]
  %v3481 = vld [vmem:[%s4 + $0x90] sm:$0xff]
  %v3482 = vld [vmem:[%s4 + $0x98] sm:$0xff]
  %v3483 = vld [vmem:[%s4 + $0xa0] sm:$0xff]
  %v3484 = vld [vmem:[%s4 + $0xa8] sm:$0xff]
  %3486 = vset.pattern.permute.xlu0 32
  %3487 = vperm.xlu0 %3486, %v3475
  %v3488 = vpop.permute.xlu0 %3487
  %3491 = vset.pattern.permute.xlu0 32
  %3492 = vperm.xlu0 %3491, %v3476
  %v3493 = vpop.permute.xlu0 %3492
  %v3495 = vsel %vm48, %v3475, 0
  %v3497 = vsel %vm48, %v3476, 0
  %3499 = vmatprep.subr.mxu0 0.0
  %3500 = vmatpush1.msra.mxu0 0.0
  %3501 = vmatprep.subr.mxu0 0.0
  %3502 = vmatpush1.msra.mxu0 0.0
  %3503 = vmatprep.subr.mxu0 0.0
  %3504 = vmatpush1.msra.mxu0 0.0
  %3505 = vmatprep.subr.mxu0 0.0
  %3506 = vmatpush1.msra.mxu0 0.0
  %3507 = vmatprep.subr.mxu0 0.0
  %3508 = vmatpush1.msra.mxu0 0.0
  %3509 = vmatprep.subr.mxu0 0.0
  %3510 = vmatpush1.msra.mxu0 0.0
  %3511 = vmatprep.subr.mxu0 0.0
  %3512 = vmatpush1.msra.mxu0 0.0
  %3513 = vmatprep.subr.mxu0 0.0
  %3514 = vmatpush1.msra.mxu0 0.0
  %3515 = vmatprep.subr.mxu0 0.0
  %3516 = vmatpush1.msra.mxu0 0.0
  %3517 = vmatprep.subr.mxu0 0.0
  %3518 = vmatpush1.msra.mxu0 0.0
  %3519 = vmatprep.subr.mxu0 0.0
  %3520 = vmatpush1.msra.mxu0 0.0
  %3521 = vmatprep.subr.mxu0 0.0
  %3522 = vmatpush1.msra.mxu0 0.0
  %3523 = vmatprep.subr.mxu0 0.0
  %v3524 = vand.u32 %v3469, 4294901760
  %3525 = vmatpush1.msra.mxu0 %v3524
  %3526 = vmatprep.subr.mxu0 0.0
  %v3527 = vand.u32 %v3472, 4294901760
  %3528 = vmatpush1.msra.mxu0 %v3527
  %3529 = vmatprep.subr.mxu0 0.0
  %v3530 = vand.u32 %v3474, 4294901760
  %3531 = vmatpush1.msra.mxu0 %v3530
  %3532 = vmatprep.subr.mxu0 0.0
  %v3533 = vand.u32 %v3473, 4294901760
  %3534 = vmatpush1.msra.mxu0 %v3533
  %3535 = vmatprep.subr.mxu0 0.0
  %3536 = vmatpush2.msra.mxu0 0.0
  %3537 = vmatprep.subr.mxu0 0.0
  %3538 = vmatpush2.msra.mxu0 0.0
  %3539 = vmatprep.subr.mxu0 0.0
  %3540 = vmatpush2.msra.mxu0 0.0
  %3541 = vmatprep.subr.mxu0 0.0
  %3542 = vmatpush2.msra.mxu0 0.0
  %3543 = vmatprep.subr.mxu0 0.0
  %3544 = vmatpush2.msra.mxu0 0.0
  %3545 = vmatprep.subr.mxu0 0.0
  %3546 = vmatpush2.msra.mxu0 0.0
  %3547 = vmatprep.subr.mxu0 0.0
  %3548 = vmatpush2.msra.mxu0 0.0
  %3549 = vmatprep.subr.mxu0 0.0
  %3550 = vmatpush2.msra.mxu0 0.0
  %3551 = vmatprep.subr.mxu0 0.0
  %3552 = vmatpush2.msra.mxu0 0.0
  %3553 = vmatprep.subr.mxu0 0.0
  %3554 = vmatpush2.msra.mxu0 0.0
  %3555 = vmatprep.subr.mxu0 0.0
  %3556 = vmatpush2.msra.mxu0 0.0
  %3557 = vmatprep.subr.mxu0 0.0
  %3558 = vmatpush2.msra.mxu0 0.0
  %3559 = vmatprep.subr.mxu0 0.0
  %3560 = vmatpush2.msra.mxu0 0.0
  %3561 = vmatprep.subr.mxu0 0.0
  %3562 = vmatpush2.msra.mxu0 0.0
  %3563 = vmatprep.subr.mxu0 0.0
  %3564 = vmatpush2.msra.mxu0 0.0
  %3565 = vmatprep.subr.mxu0 0.0
  %3566 = vmatpush2.msra.mxu0 0.0
  %3567 = vmatprep.mubr.f32.mxu0 0.0
  %v3568 = vand.u32 %v3495, 4294901760
  %v3569 = vsub.f32 %v3495, %v3568
  %v3570 = vand.u32 %v3569, 4294901760
  %v3571 = vsub.f32 %v3569, %v3570
  %v3572 = vand.u32 %v3571, 4294901760
  %3573 = vmatmul.mubr.f32.gmra.mxu0 %v3572
  %v3574 = vpop.f32.mrf.mxu0
  %v3575 = vadd.f32 %v3488, %v3574
  %v3576 = vpop.f32.mrf.mxu0
  %3577 = vmatprep.mubr.f32.mxu0 0.0
  %v3578 = vand.u32 %v3497, 4294901760
  %v3579 = vsub.f32 %v3497, %v3578
  %v3580 = vand.u32 %v3579, 4294901760
  %v3581 = vsub.f32 %v3579, %v3580
  %v3582 = vand.u32 %v3581, 4294901760
  %3583 = vmatmul.mubr.f32.gmra.mxu0 %v3582
  %v3584 = vpop.f32.mrf.mxu0
  %v3585 = vadd.f32 %v3493, %v3584
  %v3586 = vpop.f32.mrf.mxu0
  %3587 = vdwg.mxu0
  %3588 = vmatprep.subr.mxu0 0.0
  %3589 = vmatpush1.msra.mxu0 0.0
  %3590 = vmatprep.subr.mxu0 0.0
  %3591 = vmatpush1.msra.mxu0 0.0
  %3592 = vmatprep.subr.mxu0 0.0
  %3593 = vmatpush1.msra.mxu0 0.0
  %3594 = vmatprep.subr.mxu0 0.0
  %3595 = vmatpush1.msra.mxu0 0.0
  %3596 = vmatprep.subr.mxu0 0.0
  %3597 = vmatpush1.msra.mxu0 0.0
  %3598 = vmatprep.subr.mxu0 0.0
  %3599 = vmatpush1.msra.mxu0 0.0
  %3600 = vmatprep.subr.mxu0 0.0
  %3601 = vmatpush1.msra.mxu0 0.0
  %3602 = vmatprep.subr.mxu0 0.0
  %3603 = vmatpush1.msra.mxu0 0.0
  %3604 = vmatprep.subr.mxu0 0.0
  %3605 = vmatpush1.msra.mxu0 0.0
  %3606 = vmatprep.subr.mxu0 0.0
  %3607 = vmatpush1.msra.mxu0 0.0
  %3608 = vmatprep.subr.mxu0 0.0
  %3609 = vmatpush1.msra.mxu0 0.0
  %3610 = vmatprep.subr.mxu0 0.0
  %3611 = vmatpush1.msra.mxu0 0.0
  %3612 = vmatprep.subr.mxu0 0.0
  %v3613 = vand.u32 %v3469, 4294901760
  %v3614 = vsub.f32 %v3469, %v3613
  %v3615 = vand.u32 %v3614, 4294901760
  %v3616 = vsub.f32 %v3614, %v3615
  %v3617 = vand.u32 %v3616, 4294901760
  %3618 = vmatpush1.msra.mxu0 %v3617
  %3619 = vmatprep.subr.mxu0 0.0
  %v3620 = vand.u32 %v3472, 4294901760
  %v3621 = vsub.f32 %v3472, %v3620
  %v3622 = vand.u32 %v3621, 4294901760
  %v3623 = vsub.f32 %v3621, %v3622
  %v3624 = vand.u32 %v3623, 4294901760
  %3625 = vmatpush1.msra.mxu0 %v3624
  %3626 = vmatprep.subr.mxu0 0.0
  %v3627 = vand.u32 %v3474, 4294901760
  %v3628 = vsub.f32 %v3474, %v3627
  %v3629 = vand.u32 %v3628, 4294901760
  %v3630 = vsub.f32 %v3628, %v3629
  %v3631 = vand.u32 %v3630, 4294901760
  %3632 = vmatpush1.msra.mxu0 %v3631
  %3633 = vmatprep.subr.mxu0 0.0
  %v3634 = vand.u32 %v3473, 4294901760
  %v3635 = vsub.f32 %v3473, %v3634
  %v3636 = vand.u32 %v3635, 4294901760
  %v3637 = vsub.f32 %v3635, %v3636
  %v3638 = vand.u32 %v3637, 4294901760
  %3639 = vmatpush1.msra.mxu0 %v3638
  %3640 = vmatprep.subr.mxu0 0.0
  %3641 = vmatpush2.msra.mxu0 0.0
  %3642 = vmatprep.subr.mxu0 0.0
  %3643 = vmatpush2.msra.mxu0 0.0
  %3644 = vmatprep.subr.mxu0 0.0
  %3645 = vmatpush2.msra.mxu0 0.0
  %3646 = vmatprep.subr.mxu0 0.0
  %3647 = vmatpush2.msra.mxu0 0.0
  %3648 = vmatprep.subr.mxu0 0.0
  %3649 = vmatpush2.msra.mxu0 0.0
  %3650 = vmatprep.subr.mxu0 0.0
  %3651 = vmatpush2.msra.mxu0 0.0
  %3652 = vmatprep.subr.mxu0 0.0
  %3653 = vmatpush2.msra.mxu0 0.0
  %3654 = vmatprep.subr.mxu0 0.0
  %3655 = vmatpush2.msra.mxu0 0.0
  %3656 = vmatprep.subr.mxu0 0.0
  %3657 = vmatpush2.msra.mxu0 0.0
  %3658 = vmatprep.subr.mxu0 0.0
  %3659 = vmatpush2.msra.mxu0 0.0
  %3660 = vmatprep.subr.mxu0 0.0
  %3661 = vmatpush2.msra.mxu0 0.0
  %3662 = vmatprep.subr.mxu0 0.0
  %3663 = vmatpush2.msra.mxu0 0.0
  %3664 = vmatprep.subr.mxu0 0.0
  %3665 = vmatpush2.msra.mxu0 0.0
  %3666 = vmatprep.subr.mxu0 0.0
  %3667 = vmatpush2.msra.mxu0 0.0
  %3668 = vmatprep.subr.mxu0 0.0
  %3669 = vmatpush2.msra.mxu0 0.0
  %3670 = vmatprep.subr.mxu0 0.0
  %3671 = vmatpush2.msra.mxu0 0.0
  %3672 = vmatprep.mubr.f32.mxu0 0.0
  %v3673 = vand.u32 %v3495, 4294901760
  %3674 = vmatmul.mubr.f32.gmra.mxu0 %v3673
  %v3675 = vpop.f32.mrf.mxu0
  %v3676 = vadd.f32 %v3575, %v3675
  %v3677 = vpop.f32.mrf.mxu0
  %3678 = vmatprep.mubr.f32.mxu0 0.0
  %v3679 = vand.u32 %v3497, 4294901760
  %3680 = vmatmul.mubr.f32.gmra.mxu0 %v3679
  %v3681 = vpop.f32.mrf.mxu0
  %v3682 = vadd.f32 %v3585, %v3681
  %v3683 = vpop.f32.mrf.mxu0
  %3684 = vdwg.mxu0
  %3685 = vmatprep.subr.mxu0 0.0
  %3686 = vmatpush1.msra.mxu0 0.0
  %3687 = vmatprep.subr.mxu0 0.0
  %3688 = vmatpush1.msra.mxu0 0.0
  %3689 = vmatprep.subr.mxu0 0.0
  %3690 = vmatpush1.msra.mxu0 0.0
  %3691 = vmatprep.subr.mxu0 0.0
  %3692 = vmatpush1.msra.mxu0 0.0
  %3693 = vmatprep.subr.mxu0 0.0
  %3694 = vmatpush1.msra.mxu0 0.0
  %3695 = vmatprep.subr.mxu0 0.0
  %3696 = vmatpush1.msra.mxu0 0.0
  %3697 = vmatprep.subr.mxu0 0.0
  %3698 = vmatpush1.msra.mxu0 0.0
  %3699 = vmatprep.subr.mxu0 0.0
  %3700 = vmatpush1.msra.mxu0 0.0
  %3701 = vmatprep.subr.mxu0 0.0
  %3702 = vmatpush1.msra.mxu0 0.0
  %3703 = vmatprep.subr.mxu0 0.0
  %3704 = vmatpush1.msra.mxu0 0.0
  %3705 = vmatprep.subr.mxu0 0.0
  %3706 = vmatpush1.msra.mxu0 0.0
  %3707 = vmatprep.subr.mxu0 0.0
  %3708 = vmatpush1.msra.mxu0 0.0
  %3709 = vmatprep.subr.mxu0 0.0
  %v3710 = vand.u32 %v3469, 4294901760
  %v3711 = vsub.f32 %v3469, %v3710
  %3712 = vmatpush1.msra.mxu0 %v3711
  %3713 = vmatprep.subr.mxu0 0.0
  %v3714 = vand.u32 %v3472, 4294901760
  %v3715 = vsub.f32 %v3472, %v3714
  %3716 = vmatpush1.msra.mxu0 %v3715
  %3717 = vmatprep.subr.mxu0 0.0
  %v3718 = vand.u32 %v3474, 4294901760
  %v3719 = vsub.f32 %v3474, %v3718
  %3720 = vmatpush1.msra.mxu0 %v3719
  %3721 = vmatprep.subr.mxu0 0.0
  %v3722 = vand.u32 %v3473, 4294901760
  %v3723 = vsub.f32 %v3473, %v3722
  %3724 = vmatpush1.msra.mxu0 %v3723
  %3725 = vmatprep.subr.mxu0 0.0
  %3726 = vmatpush2.msra.mxu0 0.0
  %3727 = vmatprep.subr.mxu0 0.0
  %3728 = vmatpush2.msra.mxu0 0.0
  %3729 = vmatprep.subr.mxu0 0.0
  %3730 = vmatpush2.msra.mxu0 0.0
  %3731 = vmatprep.subr.mxu0 0.0
  %3732 = vmatpush2.msra.mxu0 0.0
  %3733 = vmatprep.subr.mxu0 0.0
  %3734 = vmatpush2.msra.mxu0 0.0
  %3735 = vmatprep.subr.mxu0 0.0
  %3736 = vmatpush2.msra.mxu0 0.0
  %3737 = vmatprep.subr.mxu0 0.0
  %3738 = vmatpush2.msra.mxu0 0.0
  %3739 = vmatprep.subr.mxu0 0.0
  %3740 = vmatpush2.msra.mxu0 0.0
  %3741 = vmatprep.subr.mxu0 0.0
  %3742 = vmatpush2.msra.mxu0 0.0
  %3743 = vmatprep.subr.mxu0 0.0
  %3744 = vmatpush2.msra.mxu0 0.0
  %3745 = vmatprep.subr.mxu0 0.0
  %3746 = vmatpush2.msra.mxu0 0.0
  %3747 = vmatprep.subr.mxu0 0.0
  %3748 = vmatpush2.msra.mxu0 0.0
  %3749 = vmatprep.subr.mxu0 0.0
  %3750 = vmatpush2.msra.mxu0 0.0
  %3751 = vmatprep.subr.mxu0 0.0
  %3752 = vmatpush2.msra.mxu0 0.0
  %3753 = vmatprep.subr.mxu0 0.0
  %3754 = vmatpush2.msra.mxu0 0.0
  %3755 = vmatprep.subr.mxu0 0.0
  %3756 = vmatpush2.msra.mxu0 0.0
  %3757 = vmatprep.mubr.f32.mxu0 0.0
  %v3758 = vand.u32 %v3495, 4294901760
  %v3759 = vsub.f32 %v3495, %v3758
  %3760 = vmatmul.mubr.f32.gmra.mxu0 %v3759
  %v3761 = vpop.f32.mrf.mxu0
  %v3762 = vadd.f32 %v3676, %v3761
  %v3763 = vpop.f32.mrf.mxu0
  %3764 = vmatprep.mubr.f32.mxu0 0.0
  %v3765 = vand.u32 %v3497, 4294901760
  %v3766 = vsub.f32 %v3497, %v3765
  %3767 = vmatmul.mubr.f32.gmra.mxu0 %v3766
  %v3768 = vpop.f32.mrf.mxu0
  %v3769 = vadd.f32 %v3682, %v3768
  %v3770 = vpop.f32.mrf.mxu0
  %3771 = vdwg.mxu0
  %3772 = vmatprep.subr.mxu0 0.0
  %3773 = vmatpush1.msra.mxu0 0.0
  %3774 = vmatprep.subr.mxu0 0.0
  %3775 = vmatpush1.msra.mxu0 0.0
  %3776 = vmatprep.subr.mxu0 0.0
  %3777 = vmatpush1.msra.mxu0 0.0
  %3778 = vmatprep.subr.mxu0 0.0
  %3779 = vmatpush1.msra.mxu0 0.0
  %3780 = vmatprep.subr.mxu0 0.0
  %3781 = vmatpush1.msra.mxu0 0.0
  %3782 = vmatprep.subr.mxu0 0.0
  %3783 = vmatpush1.msra.mxu0 0.0
  %3784 = vmatprep.subr.mxu0 0.0
  %3785 = vmatpush1.msra.mxu0 0.0
  %3786 = vmatprep.subr.mxu0 0.0
  %3787 = vmatpush1.msra.mxu0 0.0
  %3788 = vmatprep.subr.mxu0 0.0
  %3789 = vmatpush1.msra.mxu0 0.0
  %3790 = vmatprep.subr.mxu0 0.0
  %3791 = vmatpush1.msra.mxu0 0.0
  %3792 = vmatprep.subr.mxu0 0.0
  %3793 = vmatpush1.msra.mxu0 0.0
  %3794 = vmatprep.subr.mxu0 0.0
  %3795 = vmatpush1.msra.mxu0 0.0
  %3796 = vmatprep.subr.mxu0 0.0
  %v3797 = vand.u32 %v3469, 4294901760
  %3798 = vmatpush1.msra.mxu0 %v3797
  %3799 = vmatprep.subr.mxu0 0.0
  %v3800 = vand.u32 %v3472, 4294901760
  %3801 = vmatpush1.msra.mxu0 %v3800
  %3802 = vmatprep.subr.mxu0 0.0
  %v3803 = vand.u32 %v3474, 4294901760
  %3804 = vmatpush1.msra.mxu0 %v3803
  %3805 = vmatprep.subr.mxu0 0.0
  %v3806 = vand.u32 %v3473, 4294901760
  %3807 = vmatpush1.msra.mxu0 %v3806
  %3808 = vmatprep.subr.mxu0 0.0
  %3809 = vmatpush2.msra.mxu0 0.0
  %3810 = vmatprep.subr.mxu0 0.0
  %3811 = vmatpush2.msra.mxu0 0.0
  %3812 = vmatprep.subr.mxu0 0.0
  %3813 = vmatpush2.msra.mxu0 0.0
  %3814 = vmatprep.subr.mxu0 0.0
  %3815 = vmatpush2.msra.mxu0 0.0
  %3816 = vmatprep.subr.mxu0 0.0
  %3817 = vmatpush2.msra.mxu0 0.0
  %3818 = vmatprep.subr.mxu0 0.0
  %3819 = vmatpush2.msra.mxu0 0.0
  %3820 = vmatprep.subr.mxu0 0.0
  %3821 = vmatpush2.msra.mxu0 0.0
  %3822 = vmatprep.subr.mxu0 0.0
  %3823 = vmatpush2.msra.mxu0 0.0
  %3824 = vmatprep.subr.mxu0 0.0
  %3825 = vmatpush2.msra.mxu0 0.0
  %3826 = vmatprep.subr.mxu0 0.0
  %3827 = vmatpush2.msra.mxu0 0.0
  %3828 = vmatprep.subr.mxu0 0.0
  %3829 = vmatpush2.msra.mxu0 0.0
  %3830 = vmatprep.subr.mxu0 0.0
  %3831 = vmatpush2.msra.mxu0 0.0
  %3832 = vmatprep.subr.mxu0 0.0
  %3833 = vmatpush2.msra.mxu0 0.0
  %3834 = vmatprep.subr.mxu0 0.0
  %3835 = vmatpush2.msra.mxu0 0.0
  %3836 = vmatprep.subr.mxu0 0.0
  %3837 = vmatpush2.msra.mxu0 0.0
  %3838 = vmatprep.subr.mxu0 0.0
  %3839 = vmatpush2.msra.mxu0 0.0
  %3840 = vmatprep.mubr.f32.mxu0 0.0
  %v3841 = vand.u32 %v3495, 4294901760
  %v3842 = vsub.f32 %v3495, %v3841
  %v3843 = vand.u32 %v3842, 4294901760
  %3844 = vmatmul.mubr.f32.gmra.mxu0 %v3843
  %v3845 = vpop.f32.mrf.mxu0
  %v3846 = vadd.f32 %v3762, %v3845
  %v3847 = vpop.f32.mrf.mxu0
  %3848 = vmatprep.mubr.f32.mxu0 0.0
  %v3849 = vand.u32 %v3497, 4294901760
  %v3850 = vsub.f32 %v3497, %v3849
  %v3851 = vand.u32 %v3850, 4294901760
  %3852 = vmatmul.mubr.f32.gmra.mxu0 %v3851
  %v3853 = vpop.f32.mrf.mxu0
  %v3854 = vadd.f32 %v3769, %v3853
  %v3855 = vpop.f32.mrf.mxu0
  %3856 = vdwg.mxu0
  %3857 = vmatprep.subr.mxu0 0.0
  %3858 = vmatpush1.msra.mxu0 0.0
  %3859 = vmatprep.subr.mxu0 0.0
  %3860 = vmatpush1.msra.mxu0 0.0
  %3861 = vmatprep.subr.mxu0 0.0
  %3862 = vmatpush1.msra.mxu0 0.0
  %3863 = vmatprep.subr.mxu0 0.0
  %3864 = vmatpush1.msra.mxu0 0.0
  %3865 = vmatprep.subr.mxu0 0.0
  %3866 = vmatpush1.msra.mxu0 0.0
  %3867 = vmatprep.subr.mxu0 0.0
  %3868 = vmatpush1.msra.mxu0 0.0
  %3869 = vmatprep.subr.mxu0 0.0
  %3870 = vmatpush1.msra.mxu0 0.0
  %3871 = vmatprep.subr.mxu0 0.0
  %3872 = vmatpush1.msra.mxu0 0.0
  %3873 = vmatprep.subr.mxu0 0.0
  %3874 = vmatpush1.msra.mxu0 0.0
  %3875 = vmatprep.subr.mxu0 0.0
  %3876 = vmatpush1.msra.mxu0 0.0
  %3877 = vmatprep.subr.mxu0 0.0
  %3878 = vmatpush1.msra.mxu0 0.0
  %3879 = vmatprep.subr.mxu0 0.0
  %3880 = vmatpush1.msra.mxu0 0.0
  %3881 = vmatprep.subr.mxu0 0.0
  %v3882 = vand.u32 %v3469, 4294901760
  %v3883 = vsub.f32 %v3469, %v3882
  %v3884 = vand.u32 %v3883, 4294901760
  %3885 = vmatpush1.msra.mxu0 %v3884
  %3886 = vmatprep.subr.mxu0 0.0
  %v3887 = vand.u32 %v3472, 4294901760
  %v3888 = vsub.f32 %v3472, %v3887
  %v3889 = vand.u32 %v3888, 4294901760
  %3890 = vmatpush1.msra.mxu0 %v3889
  %3891 = vmatprep.subr.mxu0 0.0
  %v3892 = vand.u32 %v3474, 4294901760
  %v3893 = vsub.f32 %v3474, %v3892
  %v3894 = vand.u32 %v3893, 4294901760
  %3895 = vmatpush1.msra.mxu0 %v3894
  %3896 = vmatprep.subr.mxu0 0.0
  %v3897 = vand.u32 %v3473, 4294901760
  %v3898 = vsub.f32 %v3473, %v3897
  %v3899 = vand.u32 %v3898, 4294901760
  %3900 = vmatpush1.msra.mxu0 %v3899
  %3901 = vmatprep.subr.mxu0 0.0
  %3902 = vmatpush2.msra.mxu0 0.0
  %3903 = vmatprep.subr.mxu0 0.0
  %3904 = vmatpush2.msra.mxu0 0.0
  %3905 = vmatprep.subr.mxu0 0.0
  %3906 = vmatpush2.msra.mxu0 0.0
  %3907 = vmatprep.subr.mxu0 0.0
  %3908 = vmatpush2.msra.mxu0 0.0
  %3909 = vmatprep.subr.mxu0 0.0
  %3910 = vmatpush2.msra.mxu0 0.0
  %3911 = vmatprep.subr.mxu0 0.0
  %3912 = vmatpush2.msra.mxu0 0.0
  %3913 = vmatprep.subr.mxu0 0.0
  %3914 = vmatpush2.msra.mxu0 0.0
  %3915 = vmatprep.subr.mxu0 0.0
  %3916 = vmatpush2.msra.mxu0 0.0
  %3917 = vmatprep.subr.mxu0 0.0
  %3918 = vmatpush2.msra.mxu0 0.0
  %3919 = vmatprep.subr.mxu0 0.0
  %3920 = vmatpush2.msra.mxu0 0.0
  %3921 = vmatprep.subr.mxu0 0.0
  %3922 = vmatpush2.msra.mxu0 0.0
  %3923 = vmatprep.subr.mxu0 0.0
  %3924 = vmatpush2.msra.mxu0 0.0
  %3925 = vmatprep.subr.mxu0 0.0
  %3926 = vmatpush2.msra.mxu0 0.0
  %3927 = vmatprep.subr.mxu0 0.0
  %3928 = vmatpush2.msra.mxu0 0.0
  %3929 = vmatprep.subr.mxu0 0.0
  %3930 = vmatpush2.msra.mxu0 0.0
  %3931 = vmatprep.subr.mxu0 0.0
  %3932 = vmatpush2.msra.mxu0 0.0
  %3933 = vmatprep.mubr.f32.mxu0 0.0
  %v3934 = vand.u32 %v3495, 4294901760
  %3935 = vmatmul.mubr.f32.gmra.mxu0 %v3934
  %v3936 = vpop.f32.mrf.mxu0
  %v3937 = vadd.f32 %v3846, %v3936
  %v3938 = vpop.f32.mrf.mxu0
  %3939 = vmatprep.mubr.f32.mxu0 0.0
  %v3940 = vand.u32 %v3497, 4294901760
  %3941 = vmatmul.mubr.f32.gmra.mxu0 %v3940
  %v3942 = vpop.f32.mrf.mxu0
  %v3943 = vadd.f32 %v3854, %v3942
  %v3944 = vpop.f32.mrf.mxu0
  %3945 = vdwg.mxu0
  %3946 = vmatprep.subr.mxu0 0.0
  %3947 = vmatpush1.msra.mxu0 0.0
  %3948 = vmatprep.subr.mxu0 0.0
  %3949 = vmatpush1.msra.mxu0 0.0
  %3950 = vmatprep.subr.mxu0 0.0
  %3951 = vmatpush1.msra.mxu0 0.0
  %3952 = vmatprep.subr.mxu0 0.0
  %3953 = vmatpush1.msra.mxu0 0.0
  %3954 = vmatprep.subr.mxu0 0.0
  %3955 = vmatpush1.msra.mxu0 0.0
  %3956 = vmatprep.subr.mxu0 0.0
  %3957 = vmatpush1.msra.mxu0 0.0
  %3958 = vmatprep.subr.mxu0 0.0
  %3959 = vmatpush1.msra.mxu0 0.0
  %3960 = vmatprep.subr.mxu0 0.0
  %3961 = vmatpush1.msra.mxu0 0.0
  %3962 = vmatprep.subr.mxu0 0.0
  %3963 = vmatpush1.msra.mxu0 0.0
  %3964 = vmatprep.subr.mxu0 0.0
  %3965 = vmatpush1.msra.mxu0 0.0
  %3966 = vmatprep.subr.mxu0 0.0
  %3967 = vmatpush1.msra.mxu0 0.0
  %3968 = vmatprep.subr.mxu0 0.0
  %3969 = vmatpush1.msra.mxu0 0.0
  %3970 = vmatprep.subr.mxu0 0.0
  %v3971 = vand.u32 %v3469, 4294901760
  %3972 = vmatpush1.msra.mxu0 %v3971
  %3973 = vmatprep.subr.mxu0 0.0
  %v3974 = vand.u32 %v3472, 4294901760
  %3975 = vmatpush1.msra.mxu0 %v3974
  %3976 = vmatprep.subr.mxu0 0.0
  %v3977 = vand.u32 %v3474, 4294901760
  %3978 = vmatpush1.msra.mxu0 %v3977
  %3979 = vmatprep.subr.mxu0 0.0
  %v3980 = vand.u32 %v3473, 4294901760
  %3981 = vmatpush1.msra.mxu0 %v3980
  %3982 = vmatprep.subr.mxu0 0.0
  %3983 = vmatpush2.msra.mxu0 0.0
  %3984 = vmatprep.subr.mxu0 0.0
  %3985 = vmatpush2.msra.mxu0 0.0
  %3986 = vmatprep.subr.mxu0 0.0
  %3987 = vmatpush2.msra.mxu0 0.0
  %3988 = vmatprep.subr.mxu0 0.0
  %3989 = vmatpush2.msra.mxu0 0.0
  %3990 = vmatprep.subr.mxu0 0.0
  %3991 = vmatpush2.msra.mxu0 0.0
  %3992 = vmatprep.subr.mxu0 0.0
  %3993 = vmatpush2.msra.mxu0 0.0
  %3994 = vmatprep.subr.mxu0 0.0
  %3995 = vmatpush2.msra.mxu0 0.0
  %3996 = vmatprep.subr.mxu0 0.0
  %3997 = vmatpush2.msra.mxu0 0.0
  %3998 = vmatprep.subr.mxu0 0.0
  %3999 = vmatpush2.msra.mxu0 0.0
  %4000 = vmatprep.subr.mxu0 0.0
  %4001 = vmatpush2.msra.mxu0 0.0
  %4002 = vmatprep.subr.mxu0 0.0
  %4003 = vmatpush2.msra.mxu0 0.0
  %4004 = vmatprep.subr.mxu0 0.0
  %4005 = vmatpush2.msra.mxu0 0.0
  %4006 = vmatprep.subr.mxu0 0.0
  %4007 = vmatpush2.msra.mxu0 0.0
  %4008 = vmatprep.subr.mxu0 0.0
  %4009 = vmatpush2.msra.mxu0 0.0
  %4010 = vmatprep.subr.mxu0 0.0
  %4011 = vmatpush2.msra.mxu0 0.0
  %4012 = vmatprep.subr.mxu0 0.0
  %4013 = vmatpush2.msra.mxu0 0.0
  %4014 = vmatprep.mubr.f32.mxu0 0.0
  %v4015 = vand.u32 %v3495, 4294901760
  %4016 = vmatmul.mubr.f32.gmra.mxu0 %v4015
  %v4017 = vpop.f32.mrf.mxu0
  %v4018 = vadd.f32 %v3937, %v4017
  %v4019 = vpop.f32.mrf.mxu0
  %4020 = vmatprep.mubr.f32.mxu0 0.0
  %v4021 = vand.u32 %v3497, 4294901760
  %4022 = vmatmul.mubr.f32.gmra.mxu0 %v4021
  %v4023 = vpop.f32.mrf.mxu0
  %v4024 = vadd.f32 %v3943, %v4023
  %v4025 = vpop.f32.mrf.mxu0
  %4026 = vdwg.mxu0
  %v4027 = vmax.f32 %v4018, 0.0
  %v4028 = vand.u32 2147483647, %v4018
  %v4029 = vsub.f32 0.0, %v4028
  %v4030 = vmul.f32 %v4029, 1.442695
  %v4031 = vpow.pop %v4030
  %v4032 = vadd.f32 %v4031, 1.0
  %v4033 = vlog2.pop %v4032
  %v4034 = vmul.f32 %v4033, 0.6931472
  %v4035 = vadd.f32 %v4027, %v4034
  %v4036 = vsub.f32 %v4035, 0.6931472
  %v4037 = vsub.f32 0.0, %v4024
  %v4038 = vmul.f32 %v4037, 1.442695
  %v4039 = vpow.pop %v4038
  %v4040 = vadd.f32 %v4039, 1.0
  %v4041 = vrcp.pop %v4040
  %v4042 = vmul.f32 %v4024, %v4041
  %4044 = vset.pattern.permute.xlu0 32
  %4045 = vperm.xlu0 %4044, %v3477
  %v4046 = vpop.permute.xlu0 %4045
  %4049 = vset.pattern.permute.xlu0 32
  %4050 = vperm.xlu0 %4049, %v3478
  %v4051 = vpop.permute.xlu0 %4050
  %4054 = vset.pattern.permute.xlu0 32
  %4055 = vperm.xlu0 %4054, %v3479
  %v4056 = vpop.permute.xlu0 %4055
  %4059 = vset.pattern.permute.xlu0 32
  %4060 = vperm.xlu0 %4059, %v3480
  %v4061 = vpop.permute.xlu0 %4060
  %4064 = vset.pattern.permute.xlu0 32
  %4065 = vperm.xlu0 %4064, %v3481
  %v4066 = vpop.permute.xlu0 %4065
  %4069 = vset.pattern.permute.xlu0 32
  %4070 = vperm.xlu0 %4069, %v3482
  %v4071 = vpop.permute.xlu0 %4070
  %4074 = vset.pattern.permute.xlu0 32
  %4075 = vperm.xlu0 %4074, %v3483
  %v4076 = vpop.permute.xlu0 %4075
  %4079 = vset.pattern.permute.xlu0 32
  %4080 = vperm.xlu0 %4079, %v3484
  %v4081 = vpop.permute.xlu0 %4080
  %v4083 = vsel %vm698, %v3477, 0
  %v4085 = vsel %vm698, %v3478, 0
  %v4087 = vsel %vm698, %v3479, 0
  %v4089 = vsel %vm698, %v3480, 0
  %v4091 = vsel %vm698, %v3481, 0
  %v4093 = vsel %vm698, %v3482, 0
  %v4095 = vsel %vm698, %v3483, 0
  %v4097 = vsel %vm698, %v3484, 0
  %4099 = vmatprep.subr.mxu0 0.0
  %4100 = vmatpush1.msra.mxu0 0.0
  %4101 = vmatprep.subr.mxu0 0.0
  %4102 = vmatpush1.msra.mxu0 0.0
  %4103 = vmatprep.subr.mxu0 0.0
  %4104 = vmatpush1.msra.mxu0 0.0
  %4105 = vmatprep.subr.mxu0 0.0
  %4106 = vmatpush1.msra.mxu0 0.0
  %4107 = vmatprep.subr.mxu0 0.0
  %4108 = vmatpush1.msra.mxu0 0.0
  %4109 = vmatprep.subr.mxu0 0.0
  %4110 = vmatpush1.msra.mxu0 0.0
  %4111 = vmatprep.subr.mxu0 0.0
  %4112 = vmatpush1.msra.mxu0 0.0
  %4113 = vmatprep.subr.mxu0 0.0
  %4114 = vmatpush1.msra.mxu0 0.0
  %4115 = vmatprep.subr.mxu0 0.0
  %4116 = vmatpush1.msra.mxu0 0.0
  %4117 = vmatprep.subr.mxu0 0.0
  %4118 = vmatpush1.msra.mxu0 0.0
  %4119 = vmatprep.subr.mxu0 0.0
  %4120 = vmatpush1.msra.mxu0 0.0
  %4121 = vmatprep.subr.mxu0 0.0
  %4122 = vmatpush1.msra.mxu0 0.0
  %4123 = vmatprep.subr.mxu0 0.0
  %4124 = vmatpush1.msra.mxu0 0.0
  %4125 = vmatprep.subr.mxu0 0.0
  %4126 = vmatpush1.msra.mxu0 0.0
  %4127 = vmatprep.subr.mxu0 0.0
  %v4128 = vand.u32 %v4042, 4294901760
  %4129 = vmatpush1.msra.mxu0 %v4128
  %4130 = vmatprep.subr.mxu0 0.0
  %v4131 = vand.u32 %v4036, 4294901760
  %4132 = vmatpush1.msra.mxu0 %v4131
  %4133 = vmatprep.subr.mxu0 0.0
  %4134 = vmatpush2.msra.mxu0 0.0
  %4135 = vmatprep.subr.mxu0 0.0
  %4136 = vmatpush2.msra.mxu0 0.0
  %4137 = vmatprep.subr.mxu0 0.0
  %4138 = vmatpush2.msra.mxu0 0.0
  %4139 = vmatprep.subr.mxu0 0.0
  %4140 = vmatpush2.msra.mxu0 0.0
  %4141 = vmatprep.subr.mxu0 0.0
  %4142 = vmatpush2.msra.mxu0 0.0
  %4143 = vmatprep.subr.mxu0 0.0
  %4144 = vmatpush2.msra.mxu0 0.0
  %4145 = vmatprep.subr.mxu0 0.0
  %4146 = vmatpush2.msra.mxu0 0.0
  %4147 = vmatprep.subr.mxu0 0.0
  %4148 = vmatpush2.msra.mxu0 0.0
  %4149 = vmatprep.subr.mxu0 0.0
  %4150 = vmatpush2.msra.mxu0 0.0
  %4151 = vmatprep.subr.mxu0 0.0
  %4152 = vmatpush2.msra.mxu0 0.0
  %4153 = vmatprep.subr.mxu0 0.0
  %4154 = vmatpush2.msra.mxu0 0.0
  %4155 = vmatprep.subr.mxu0 0.0
  %4156 = vmatpush2.msra.mxu0 0.0
  %4157 = vmatprep.subr.mxu0 0.0
  %4158 = vmatpush2.msra.mxu0 0.0
  %4159 = vmatprep.subr.mxu0 0.0
  %4160 = vmatpush2.msra.mxu0 0.0
  %4161 = vmatprep.subr.mxu0 0.0
  %4162 = vmatpush2.msra.mxu0 0.0
  %4163 = vmatprep.subr.mxu0 0.0
  %4164 = vmatpush2.msra.mxu0 0.0
  %4165 = vmatprep.mubr.f32.mxu0 0.0
  %v4166 = vand.u32 %v4083, 4294901760
  %v4167 = vsub.f32 %v4083, %v4166
  %v4168 = vand.u32 %v4167, 4294901760
  %v4169 = vsub.f32 %v4167, %v4168
  %v4170 = vand.u32 %v4169, 4294901760
  %4171 = vmatmul.mubr.f32.gmra.mxu0 %v4170
  %v4172 = vpop.f32.mrf.mxu0
  %v4173 = vadd.f32 %v4046, %v4172
  %v4174 = vpop.f32.mrf.mxu0
  %4175 = vmatprep.mubr.f32.mxu0 0.0
  %v4176 = vand.u32 %v4085, 4294901760
  %v4177 = vsub.f32 %v4085, %v4176
  %v4178 = vand.u32 %v4177, 4294901760
  %v4179 = vsub.f32 %v4177, %v4178
  %v4180 = vand.u32 %v4179, 4294901760
  %4181 = vmatmul.mubr.f32.gmra.mxu0 %v4180
  %v4182 = vpop.f32.mrf.mxu0
  %v4183 = vadd.f32 %v4051, %v4182
  %v4184 = vpop.f32.mrf.mxu0
  %4185 = vmatprep.mubr.f32.mxu0 0.0
  %v4186 = vand.u32 %v4087, 4294901760
  %v4187 = vsub.f32 %v4087, %v4186
  %v4188 = vand.u32 %v4187, 4294901760
  %v4189 = vsub.f32 %v4187, %v4188
  %v4190 = vand.u32 %v4189, 4294901760
  %4191 = vmatmul.mubr.f32.gmra.mxu0 %v4190
  %v4192 = vpop.f32.mrf.mxu0
  %v4193 = vadd.f32 %v4056, %v4192
  %v4194 = vpop.f32.mrf.mxu0
  %4195 = vmatprep.mubr.f32.mxu0 0.0
  %v4196 = vand.u32 %v4089, 4294901760
  %v4197 = vsub.f32 %v4089, %v4196
  %v4198 = vand.u32 %v4197, 4294901760
  %v4199 = vsub.f32 %v4197, %v4198
  %v4200 = vand.u32 %v4199, 4294901760
  %4201 = vmatmul.mubr.f32.gmra.mxu0 %v4200
  %v4202 = vpop.f32.mrf.mxu0
  %v4203 = vadd.f32 %v4061, %v4202
  %v4204 = vpop.f32.mrf.mxu0
  %4205 = vmatprep.mubr.f32.mxu0 0.0
  %v4206 = vand.u32 %v4091, 4294901760
  %v4207 = vsub.f32 %v4091, %v4206
  %v4208 = vand.u32 %v4207, 4294901760
  %v4209 = vsub.f32 %v4207, %v4208
  %v4210 = vand.u32 %v4209, 4294901760
  %4211 = vmatmul.mubr.f32.gmra.mxu0 %v4210
  %v4212 = vpop.f32.mrf.mxu0
  %v4213 = vadd.f32 %v4066, %v4212
  %v4214 = vpop.f32.mrf.mxu0
  %4215 = vmatprep.mubr.f32.mxu0 0.0
  %v4216 = vand.u32 %v4093, 4294901760
  %v4217 = vsub.f32 %v4093, %v4216
  %v4218 = vand.u32 %v4217, 4294901760
  %v4219 = vsub.f32 %v4217, %v4218
  %v4220 = vand.u32 %v4219, 4294901760
  %4221 = vmatmul.mubr.f32.gmra.mxu0 %v4220
  %v4222 = vpop.f32.mrf.mxu0
  %v4223 = vadd.f32 %v4071, %v4222
  %v4224 = vpop.f32.mrf.mxu0
  %4225 = vmatprep.mubr.f32.mxu0 0.0
  %v4226 = vand.u32 %v4095, 4294901760
  %v4227 = vsub.f32 %v4095, %v4226
  %v4228 = vand.u32 %v4227, 4294901760
  %v4229 = vsub.f32 %v4227, %v4228
  %v4230 = vand.u32 %v4229, 4294901760
  %4231 = vmatmul.mubr.f32.gmra.mxu0 %v4230
  %v4232 = vpop.f32.mrf.mxu0
  %v4233 = vadd.f32 %v4076, %v4232
  %v4234 = vpop.f32.mrf.mxu0
  %4235 = vmatprep.mubr.f32.mxu0 0.0
  %v4236 = vand.u32 %v4097, 4294901760
  %v4237 = vsub.f32 %v4097, %v4236
  %v4238 = vand.u32 %v4237, 4294901760
  %v4239 = vsub.f32 %v4237, %v4238
  %v4240 = vand.u32 %v4239, 4294901760
  %4241 = vmatmul.mubr.f32.gmra.mxu0 %v4240
  %v4242 = vpop.f32.mrf.mxu0
  %v4243 = vadd.f32 %v4081, %v4242
  %v4244 = vpop.f32.mrf.mxu0
  %4245 = vdwg.mxu0
  %4246 = vmatprep.subr.mxu0 0.0
  %4247 = vmatpush1.msra.mxu0 0.0
  %4248 = vmatprep.subr.mxu0 0.0
  %4249 = vmatpush1.msra.mxu0 0.0
  %4250 = vmatprep.subr.mxu0 0.0
  %4251 = vmatpush1.msra.mxu0 0.0
  %4252 = vmatprep.subr.mxu0 0.0
  %4253 = vmatpush1.msra.mxu0 0.0
  %4254 = vmatprep.subr.mxu0 0.0
  %4255 = vmatpush1.msra.mxu0 0.0
  %4256 = vmatprep.subr.mxu0 0.0
  %4257 = vmatpush1.msra.mxu0 0.0
  %4258 = vmatprep.subr.mxu0 0.0
  %4259 = vmatpush1.msra.mxu0 0.0
  %4260 = vmatprep.subr.mxu0 0.0
  %4261 = vmatpush1.msra.mxu0 0.0
  %4262 = vmatprep.subr.mxu0 0.0
  %4263 = vmatpush1.msra.mxu0 0.0
  %4264 = vmatprep.subr.mxu0 0.0
  %4265 = vmatpush1.msra.mxu0 0.0
  %4266 = vmatprep.subr.mxu0 0.0
  %4267 = vmatpush1.msra.mxu0 0.0
  %4268 = vmatprep.subr.mxu0 0.0
  %4269 = vmatpush1.msra.mxu0 0.0
  %4270 = vmatprep.subr.mxu0 0.0
  %4271 = vmatpush1.msra.mxu0 0.0
  %4272 = vmatprep.subr.mxu0 0.0
  %4273 = vmatpush1.msra.mxu0 0.0
  %4274 = vmatprep.subr.mxu0 0.0
  %v4275 = vand.u32 %v4042, 4294901760
  %v4276 = vsub.f32 %v4042, %v4275
  %v4277 = vand.u32 %v4276, 4294901760
  %v4278 = vsub.f32 %v4276, %v4277
  %v4279 = vand.u32 %v4278, 4294901760
  %4280 = vmatpush1.msra.mxu0 %v4279
  %4281 = vmatprep.subr.mxu0 0.0
  %v4282 = vand.u32 %v4036, 4294901760
  %v4283 = vsub.f32 %v4036, %v4282
  %v4284 = vand.u32 %v4283, 4294901760
  %v4285 = vsub.f32 %v4283, %v4284
  %v4286 = vand.u32 %v4285, 4294901760
  %4287 = vmatpush1.msra.mxu0 %v4286
  %4288 = vmatprep.subr.mxu0 0.0
  %4289 = vmatpush2.msra.mxu0 0.0
  %4290 = vmatprep.subr.mxu0 0.0
  %4291 = vmatpush2.msra.mxu0 0.0
  %4292 = vmatprep.subr.mxu0 0.0
  %4293 = vmatpush2.msra.mxu0 0.0
  %4294 = vmatprep.subr.mxu0 0.0
  %4295 = vmatpush2.msra.mxu0 0.0
  %4296 = vmatprep.subr.mxu0 0.0
  %4297 = vmatpush2.msra.mxu0 0.0
  %4298 = vmatprep.subr.mxu0 0.0
  %4299 = vmatpush2.msra.mxu0 0.0
  %4300 = vmatprep.subr.mxu0 0.0
  %4301 = vmatpush2.msra.mxu0 0.0
  %4302 = vmatprep.subr.mxu0 0.0
  %4303 = vmatpush2.msra.mxu0 0.0
  %4304 = vmatprep.subr.mxu0 0.0
  %4305 = vmatpush2.msra.mxu0 0.0
  %4306 = vmatprep.subr.mxu0 0.0
  %4307 = vmatpush2.msra.mxu0 0.0
  %4308 = vmatprep.subr.mxu0 0.0
  %4309 = vmatpush2.msra.mxu0 0.0
  %4310 = vmatprep.subr.mxu0 0.0
  %4311 = vmatpush2.msra.mxu0 0.0
  %4312 = vmatprep.subr.mxu0 0.0
  %4313 = vmatpush2.msra.mxu0 0.0
  %4314 = vmatprep.subr.mxu0 0.0
  %4315 = vmatpush2.msra.mxu0 0.0
  %4316 = vmatprep.subr.mxu0 0.0
  %4317 = vmatpush2.msra.mxu0 0.0
  %4318 = vmatprep.subr.mxu0 0.0
  %4319 = vmatpush2.msra.mxu0 0.0
  %4320 = vmatprep.mubr.f32.mxu0 0.0
  %v4321 = vand.u32 %v4083, 4294901760
  %4322 = vmatmul.mubr.f32.gmra.mxu0 %v4321
  %v4323 = vpop.f32.mrf.mxu0
  %v4324 = vadd.f32 %v4173, %v4323
  %v4325 = vpop.f32.mrf.mxu0
  %4326 = vmatprep.mubr.f32.mxu0 0.0
  %v4327 = vand.u32 %v4085, 4294901760
  %4328 = vmatmul.mubr.f32.gmra.mxu0 %v4327
  %v4329 = vpop.f32.mrf.mxu0
  %v4330 = vadd.f32 %v4183, %v4329
  %v4331 = vpop.f32.mrf.mxu0
  %4332 = vmatprep.mubr.f32.mxu0 0.0
  %v4333 = vand.u32 %v4087, 4294901760
  %4334 = vmatmul.mubr.f32.gmra.mxu0 %v4333
  %v4335 = vpop.f32.mrf.mxu0
  %v4336 = vadd.f32 %v4193, %v4335
  %v4337 = vpop.f32.mrf.mxu0
  %4338 = vmatprep.mubr.f32.mxu0 0.0
  %v4339 = vand.u32 %v4089, 4294901760
  %4340 = vmatmul.mubr.f32.gmra.mxu0 %v4339
  %v4341 = vpop.f32.mrf.mxu0
  %v4342 = vadd.f32 %v4203, %v4341
  %v4343 = vpop.f32.mrf.mxu0
  %4344 = vmatprep.mubr.f32.mxu0 0.0
  %v4345 = vand.u32 %v4091, 4294901760
  %4346 = vmatmul.mubr.f32.gmra.mxu0 %v4345
  %v4347 = vpop.f32.mrf.mxu0
  %v4348 = vadd.f32 %v4213, %v4347
  %v4349 = vpop.f32.mrf.mxu0
  %4350 = vmatprep.mubr.f32.mxu0 0.0
  %v4351 = vand.u32 %v4093, 4294901760
  %4352 = vmatmul.mubr.f32.gmra.mxu0 %v4351
  %v4353 = vpop.f32.mrf.mxu0
  %v4354 = vadd.f32 %v4223, %v4353
  %v4355 = vpop.f32.mrf.mxu0
  %4356 = vmatprep.mubr.f32.mxu0 0.0
  %v4357 = vand.u32 %v4095, 4294901760
  %4358 = vmatmul.mubr.f32.gmra.mxu0 %v4357
  %v4359 = vpop.f32.mrf.mxu0
  %v4360 = vadd.f32 %v4233, %v4359
  %v4361 = vpop.f32.mrf.mxu0
  %4362 = vmatprep.mubr.f32.mxu0 0.0
  %v4363 = vand.u32 %v4097, 4294901760
  %4364 = vmatmul.mubr.f32.gmra.mxu0 %v4363
  %v4365 = vpop.f32.mrf.mxu0
  %v4366 = vadd.f32 %v4243, %v4365
  %v4367 = vpop.f32.mrf.mxu0
  %4368 = vdwg.mxu0
  %4369 = vmatprep.subr.mxu0 0.0
  %4370 = vmatpush1.msra.mxu0 0.0
  %4371 = vmatprep.subr.mxu0 0.0
  %4372 = vmatpush1.msra.mxu0 0.0
  %4373 = vmatprep.subr.mxu0 0.0
  %4374 = vmatpush1.msra.mxu0 0.0
  %4375 = vmatprep.subr.mxu0 0.0
  %4376 = vmatpush1.msra.mxu0 0.0
  %4377 = vmatprep.subr.mxu0 0.0
  %4378 = vmatpush1.msra.mxu0 0.0
  %4379 = vmatprep.subr.mxu0 0.0
  %4380 = vmatpush1.msra.mxu0 0.0
  %4381 = vmatprep.subr.mxu0 0.0
  %4382 = vmatpush1.msra.mxu0 0.0
  %4383 = vmatprep.subr.mxu0 0.0
  %4384 = vmatpush1.msra.mxu0 0.0
  %4385 = vmatprep.subr.mxu0 0.0
  %4386 = vmatpush1.msra.mxu0 0.0
  %4387 = vmatprep.subr.mxu0 0.0
  %4388 = vmatpush1.msra.mxu0 0.0
  %4389 = vmatprep.subr.mxu0 0.0
  %4390 = vmatpush1.msra.mxu0 0.0
  %4391 = vmatprep.subr.mxu0 0.0
  %4392 = vmatpush1.msra.mxu0 0.0
  %4393 = vmatprep.subr.mxu0 0.0
  %4394 = vmatpush1.msra.mxu0 0.0
  %4395 = vmatprep.subr.mxu0 0.0
  %4396 = vmatpush1.msra.mxu0 0.0
  %4397 = vmatprep.subr.mxu0 0.0
  %v4398 = vand.u32 %v4042, 4294901760
  %v4399 = vsub.f32 %v4042, %v4398
  %4400 = vmatpush1.msra.mxu0 %v4399
  %4401 = vmatprep.subr.mxu0 0.0
  %v4402 = vand.u32 %v4036, 4294901760
  %v4403 = vsub.f32 %v4036, %v4402
  %4404 = vmatpush1.msra.mxu0 %v4403
  %4405 = vmatprep.subr.mxu0 0.0
  %4406 = vmatpush2.msra.mxu0 0.0
  %4407 = vmatprep.subr.mxu0 0.0
  %4408 = vmatpush2.msra.mxu0 0.0
  %4409 = vmatprep.subr.mxu0 0.0
  %4410 = vmatpush2.msra.mxu0 0.0
  %4411 = vmatprep.subr.mxu0 0.0
  %4412 = vmatpush2.msra.mxu0 0.0
  %4413 = vmatprep.subr.mxu0 0.0
  %4414 = vmatpush2.msra.mxu0 0.0
  %4415 = vmatprep.subr.mxu0 0.0
  %4416 = vmatpush2.msra.mxu0 0.0
  %4417 = vmatprep.subr.mxu0 0.0
  %4418 = vmatpush2.msra.mxu0 0.0
  %4419 = vmatprep.subr.mxu0 0.0
  %4420 = vmatpush2.msra.mxu0 0.0
  %4421 = vmatprep.subr.mxu0 0.0
  %4422 = vmatpush2.msra.mxu0 0.0
  %4423 = vmatprep.subr.mxu0 0.0
  %4424 = vmatpush2.msra.mxu0 0.0
  %4425 = vmatprep.subr.mxu0 0.0
  %4426 = vmatpush2.msra.mxu0 0.0
  %4427 = vmatprep.subr.mxu0 0.0
  %4428 = vmatpush2.msra.mxu0 0.0
  %4429 = vmatprep.subr.mxu0 0.0
  %4430 = vmatpush2.msra.mxu0 0.0
  %4431 = vmatprep.subr.mxu0 0.0
  %4432 = vmatpush2.msra.mxu0 0.0
  %4433 = vmatprep.subr.mxu0 0.0
  %4434 = vmatpush2.msra.mxu0 0.0
  %4435 = vmatprep.subr.mxu0 0.0
  %4436 = vmatpush2.msra.mxu0 0.0
  %4437 = vmatprep.mubr.f32.mxu0 0.0
  %v4438 = vand.u32 %v4083, 4294901760
  %v4439 = vsub.f32 %v4083, %v4438
  %4440 = vmatmul.mubr.f32.gmra.mxu0 %v4439
  %v4441 = vpop.f32.mrf.mxu0
  %v4442 = vadd.f32 %v4324, %v4441
  %v4443 = vpop.f32.mrf.mxu0
  %4444 = vmatprep.mubr.f32.mxu0 0.0
  %v4445 = vand.u32 %v4085, 4294901760
  %v4446 = vsub.f32 %v4085, %v4445
  %4447 = vmatmul.mubr.f32.gmra.mxu0 %v4446
  %v4448 = vpop.f32.mrf.mxu0
  %v4449 = vadd.f32 %v4330, %v4448
  %v4450 = vpop.f32.mrf.mxu0
  %4451 = vmatprep.mubr.f32.mxu0 0.0
  %v4452 = vand.u32 %v4087, 4294901760
  %v4453 = vsub.f32 %v4087, %v4452
  %4454 = vmatmul.mubr.f32.gmra.mxu0 %v4453
  %v4455 = vpop.f32.mrf.mxu0
  %v4456 = vadd.f32 %v4336, %v4455
  %v4457 = vpop.f32.mrf.mxu0
  %4458 = vmatprep.mubr.f32.mxu0 0.0
  %v4459 = vand.u32 %v4089, 4294901760
  %v4460 = vsub.f32 %v4089, %v4459
  %4461 = vmatmul.mubr.f32.gmra.mxu0 %v4460
  %v4462 = vpop.f32.mrf.mxu0
  %v4463 = vadd.f32 %v4342, %v4462
  %v4464 = vpop.f32.mrf.mxu0
  %4465 = vmatprep.mubr.f32.mxu0 0.0
  %v4466 = vand.u32 %v4091, 4294901760
  %v4467 = vsub.f32 %v4091, %v4466
  %4468 = vmatmul.mubr.f32.gmra.mxu0 %v4467
  %v4469 = vpop.f32.mrf.mxu0
  %v4470 = vadd.f32 %v4348, %v4469
  %v4471 = vpop.f32.mrf.mxu0
  %4472 = vmatprep.mubr.f32.mxu0 0.0
  %v4473 = vand.u32 %v4093, 4294901760
  %v4474 = vsub.f32 %v4093, %v4473
  %4475 = vmatmul.mubr.f32.gmra.mxu0 %v4474
  %v4476 = vpop.f32.mrf.mxu0
  %v4477 = vadd.f32 %v4354, %v4476
  %v4478 = vpop.f32.mrf.mxu0
  %4479 = vmatprep.mubr.f32.mxu0 0.0
  %v4480 = vand.u32 %v4095, 4294901760
  %v4481 = vsub.f32 %v4095, %v4480
  %4482 = vmatmul.mubr.f32.gmra.mxu0 %v4481
  %v4483 = vpop.f32.mrf.mxu0
  %v4484 = vadd.f32 %v4360, %v4483
  %v4485 = vpop.f32.mrf.mxu0
  %4486 = vmatprep.mubr.f32.mxu0 0.0
  %v4487 = vand.u32 %v4097, 4294901760
  %v4488 = vsub.f32 %v4097, %v4487
  %4489 = vmatmul.mubr.f32.gmra.mxu0 %v4488
  %v4490 = vpop.f32.mrf.mxu0
  %v4491 = vadd.f32 %v4366, %v4490
  %v4492 = vpop.f32.mrf.mxu0
  %4493 = vdwg.mxu0
  %4494 = vmatprep.subr.mxu0 0.0
  %4495 = vmatpush1.msra.mxu0 0.0
  %4496 = vmatprep.subr.mxu0 0.0
  %4497 = vmatpush1.msra.mxu0 0.0
  %4498 = vmatprep.subr.mxu0 0.0
  %4499 = vmatpush1.msra.mxu0 0.0
  %4500 = vmatprep.subr.mxu0 0.0
  %4501 = vmatpush1.msra.mxu0 0.0
  %4502 = vmatprep.subr.mxu0 0.0
  %4503 = vmatpush1.msra.mxu0 0.0
  %4504 = vmatprep.subr.mxu0 0.0
  %4505 = vmatpush1.msra.mxu0 0.0
  %4506 = vmatprep.subr.mxu0 0.0
  %4507 = vmatpush1.msra.mxu0 0.0
  %4508 = vmatprep.subr.mxu0 0.0
  %4509 = vmatpush1.msra.mxu0 0.0
  %4510 = vmatprep.subr.mxu0 0.0
  %4511 = vmatpush1.msra.mxu0 0.0
  %4512 = vmatprep.subr.mxu0 0.0
  %4513 = vmatpush1.msra.mxu0 0.0
  %4514 = vmatprep.subr.mxu0 0.0
  %4515 = vmatpush1.msra.mxu0 0.0
  %4516 = vmatprep.subr.mxu0 0.0
  %4517 = vmatpush1.msra.mxu0 0.0
  %4518 = vmatprep.subr.mxu0 0.0
  %4519 = vmatpush1.msra.mxu0 0.0
  %4520 = vmatprep.subr.mxu0 0.0
  %4521 = vmatpush1.msra.mxu0 0.0
  %4522 = vmatprep.subr.mxu0 0.0
  %v4523 = vand.u32 %v4042, 4294901760
  %4524 = vmatpush1.msra.mxu0 %v4523
  %4525 = vmatprep.subr.mxu0 0.0
  %v4526 = vand.u32 %v4036, 4294901760
  %4527 = vmatpush1.msra.mxu0 %v4526
  %4528 = vmatprep.subr.mxu0 0.0
  %4529 = vmatpush2.msra.mxu0 0.0
  %4530 = vmatprep.subr.mxu0 0.0
  %4531 = vmatpush2.msra.mxu0 0.0
  %4532 = vmatprep.subr.mxu0 0.0
  %4533 = vmatpush2.msra.mxu0 0.0
  %4534 = vmatprep.subr.mxu0 0.0
  %4535 = vmatpush2.msra.mxu0 0.0
  %4536 = vmatprep.subr.mxu0 0.0
  %4537 = vmatpush2.msra.mxu0 0.0
  %4538 = vmatprep.subr.mxu0 0.0
  %4539 = vmatpush2.msra.mxu0 0.0
  %4540 = vmatprep.subr.mxu0 0.0
  %4541 = vmatpush2.msra.mxu0 0.0
  %4542 = vmatprep.subr.mxu0 0.0
  %4543 = vmatpush2.msra.mxu0 0.0
  %4544 = vmatprep.subr.mxu0 0.0
  %4545 = vmatpush2.msra.mxu0 0.0
  %4546 = vmatprep.subr.mxu0 0.0
  %4547 = vmatpush2.msra.mxu0 0.0
  %4548 = vmatprep.subr.mxu0 0.0
  %4549 = vmatpush2.msra.mxu0 0.0
  %4550 = vmatprep.subr.mxu0 0.0
  %4551 = vmatpush2.msra.mxu0 0.0
  %4552 = vmatprep.subr.mxu0 0.0
  %4553 = vmatpush2.msra.mxu0 0.0
  %4554 = vmatprep.subr.mxu0 0.0
  %4555 = vmatpush2.msra.mxu0 0.0
  %4556 = vmatprep.subr.mxu0 0.0
  %4557 = vmatpush2.msra.mxu0 0.0
  %4558 = vmatprep.subr.mxu0 0.0
  %4559 = vmatpush2.msra.mxu0 0.0
  %4560 = vmatprep.mubr.f32.mxu0 0.0
  %v4561 = vand.u32 %v4083, 4294901760
  %v4562 = vsub.f32 %v4083, %v4561
  %v4563 = vand.u32 %v4562, 4294901760
  %4564 = vmatmul.mubr.f32.gmra.mxu0 %v4563
  %v4565 = vpop.f32.mrf.mxu0
  %v4566 = vadd.f32 %v4442, %v4565
  %v4567 = vpop.f32.mrf.mxu0
  %4568 = vmatprep.mubr.f32.mxu0 0.0
  %v4569 = vand.u32 %v4085, 4294901760
  %v4570 = vsub.f32 %v4085, %v4569
  %v4571 = vand.u32 %v4570, 4294901760
  %4572 = vmatmul.mubr.f32.gmra.mxu0 %v4571
  %v4573 = vpop.f32.mrf.mxu0
  %v4574 = vadd.f32 %v4449, %v4573
  %v4575 = vpop.f32.mrf.mxu0
  %4576 = vmatprep.mubr.f32.mxu0 0.0
  %v4577 = vand.u32 %v4087, 4294901760
  %v4578 = vsub.f32 %v4087, %v4577
  %v4579 = vand.u32 %v4578, 4294901760
  %4580 = vmatmul.mubr.f32.gmra.mxu0 %v4579
  %v4581 = vpop.f32.mrf.mxu0
  %v4582 = vadd.f32 %v4456, %v4581
  %v4583 = vpop.f32.mrf.mxu0
  %4584 = vmatprep.mubr.f32.mxu0 0.0
  %v4585 = vand.u32 %v4089, 4294901760
  %v4586 = vsub.f32 %v4089, %v4585
  %v4587 = vand.u32 %v4586, 4294901760
  %4588 = vmatmul.mubr.f32.gmra.mxu0 %v4587
  %v4589 = vpop.f32.mrf.mxu0
  %v4590 = vadd.f32 %v4463, %v4589
  %v4591 = vpop.f32.mrf.mxu0
  %4592 = vmatprep.mubr.f32.mxu0 0.0
  %v4593 = vand.u32 %v4091, 4294901760
  %v4594 = vsub.f32 %v4091, %v4593
  %v4595 = vand.u32 %v4594, 4294901760
  %4596 = vmatmul.mubr.f32.gmra.mxu0 %v4595
  %v4597 = vpop.f32.mrf.mxu0
  %v4598 = vadd.f32 %v4470, %v4597
  %v4599 = vpop.f32.mrf.mxu0
  %4600 = vmatprep.mubr.f32.mxu0 0.0
  %v4601 = vand.u32 %v4093, 4294901760
  %v4602 = vsub.f32 %v4093, %v4601
  %v4603 = vand.u32 %v4602, 4294901760
  %4604 = vmatmul.mubr.f32.gmra.mxu0 %v4603
  %v4605 = vpop.f32.mrf.mxu0
  %v4606 = vadd.f32 %v4477, %v4605
  %v4607 = vpop.f32.mrf.mxu0
  %4608 = vmatprep.mubr.f32.mxu0 0.0
  %v4609 = vand.u32 %v4095, 4294901760
  %v4610 = vsub.f32 %v4095, %v4609
  %v4611 = vand.u32 %v4610, 4294901760
  %4612 = vmatmul.mubr.f32.gmra.mxu0 %v4611
  %v4613 = vpop.f32.mrf.mxu0
  %v4614 = vadd.f32 %v4484, %v4613
  %v4615 = vpop.f32.mrf.mxu0
  %4616 = vmatprep.mubr.f32.mxu0 0.0
  %v4617 = vand.u32 %v4097, 4294901760
  %v4618 = vsub.f32 %v4097, %v4617
  %v4619 = vand.u32 %v4618, 4294901760
  %4620 = vmatmul.mubr.f32.gmra.mxu0 %v4619
  %v4621 = vpop.f32.mrf.mxu0
  %v4622 = vadd.f32 %v4491, %v4621
  %v4623 = vpop.f32.mrf.mxu0
  %4624 = vdwg.mxu0
  %4625 = vmatprep.subr.mxu0 0.0
  %4626 = vmatpush1.msra.mxu0 0.0
  %4627 = vmatprep.subr.mxu0 0.0
  %4628 = vmatpush1.msra.mxu0 0.0
  %4629 = vmatprep.subr.mxu0 0.0
  %4630 = vmatpush1.msra.mxu0 0.0
  %4631 = vmatprep.subr.mxu0 0.0
  %4632 = vmatpush1.msra.mxu0 0.0
  %4633 = vmatprep.subr.mxu0 0.0
  %4634 = vmatpush1.msra.mxu0 0.0
  %4635 = vmatprep.subr.mxu0 0.0
  %4636 = vmatpush1.msra.mxu0 0.0
  %4637 = vmatprep.subr.mxu0 0.0
  %4638 = vmatpush1.msra.mxu0 0.0
  %4639 = vmatprep.subr.mxu0 0.0
  %4640 = vmatpush1.msra.mxu0 0.0
  %4641 = vmatprep.subr.mxu0 0.0
  %4642 = vmatpush1.msra.mxu0 0.0
  %4643 = vmatprep.subr.mxu0 0.0
  %4644 = vmatpush1.msra.mxu0 0.0
  %4645 = vmatprep.subr.mxu0 0.0
  %4646 = vmatpush1.msra.mxu0 0.0
  %4647 = vmatprep.subr.mxu0 0.0
  %4648 = vmatpush1.msra.mxu0 0.0
  %4649 = vmatprep.subr.mxu0 0.0
  %4650 = vmatpush1.msra.mxu0 0.0
  %4651 = vmatprep.subr.mxu0 0.0
  %4652 = vmatpush1.msra.mxu0 0.0
  %4653 = vmatprep.subr.mxu0 0.0
  %v4654 = vand.u32 %v4042, 4294901760
  %v4655 = vsub.f32 %v4042, %v4654
  %v4656 = vand.u32 %v4655, 4294901760
  %4657 = vmatpush1.msra.mxu0 %v4656
  %4658 = vmatprep.subr.mxu0 0.0
  %v4659 = vand.u32 %v4036, 4294901760
  %v4660 = vsub.f32 %v4036, %v4659
  %v4661 = vand.u32 %v4660, 4294901760
  %4662 = vmatpush1.msra.mxu0 %v4661
  %4663 = vmatprep.subr.mxu0 0.0
  %4664 = vmatpush2.msra.mxu0 0.0
  %4665 = vmatprep.subr.mxu0 0.0
  %4666 = vmatpush2.msra.mxu0 0.0
  %4667 = vmatprep.subr.mxu0 0.0
  %4668 = vmatpush2.msra.mxu0 0.0
  %4669 = vmatprep.subr.mxu0 0.0
  %4670 = vmatpush2.msra.mxu0 0.0
  %4671 = vmatprep.subr.mxu0 0.0
  %4672 = vmatpush2.msra.mxu0 0.0
  %4673 = vmatprep.subr.mxu0 0.0
  %4674 = vmatpush2.msra.mxu0 0.0
  %4675 = vmatprep.subr.mxu0 0.0
  %4676 = vmatpush2.msra.mxu0 0.0
  %4677 = vmatprep.subr.mxu0 0.0
  %4678 = vmatpush2.msra.mxu0 0.0
  %4679 = vmatprep.subr.mxu0 0.0
  %4680 = vmatpush2.msra.mxu0 0.0
  %4681 = vmatprep.subr.mxu0 0.0
  %4682 = vmatpush2.msra.mxu0 0.0
  %4683 = vmatprep.subr.mxu0 0.0
  %4684 = vmatpush2.msra.mxu0 0.0
  %4685 = vmatprep.subr.mxu0 0.0
  %4686 = vmatpush2.msra.mxu0 0.0
  %4687 = vmatprep.subr.mxu0 0.0
  %4688 = vmatpush2.msra.mxu0 0.0
  %4689 = vmatprep.subr.mxu0 0.0
  %4690 = vmatpush2.msra.mxu0 0.0
  %4691 = vmatprep.subr.mxu0 0.0
  %4692 = vmatpush2.msra.mxu0 0.0
  %4693 = vmatprep.subr.mxu0 0.0
  %4694 = vmatpush2.msra.mxu0 0.0
  %4695 = vmatprep.mubr.f32.mxu0 0.0
  %v4696 = vand.u32 %v4083, 4294901760
  %4697 = vmatmul.mubr.f32.gmra.mxu0 %v4696
  %v4698 = vpop.f32.mrf.mxu0
  %v4699 = vadd.f32 %v4566, %v4698
  %v4700 = vpop.f32.mrf.mxu0
  %4701 = vmatprep.mubr.f32.mxu0 0.0
  %v4702 = vand.u32 %v4085, 4294901760
  %4703 = vmatmul.mubr.f32.gmra.mxu0 %v4702
  %v4704 = vpop.f32.mrf.mxu0
  %v4705 = vadd.f32 %v4574, %v4704
  %v4706 = vpop.f32.mrf.mxu0
  %4707 = vmatprep.mubr.f32.mxu0 0.0
  %v4708 = vand.u32 %v4087, 4294901760
  %4709 = vmatmul.mubr.f32.gmra.mxu0 %v4708
  %v4710 = vpop.f32.mrf.mxu0
  %v4711 = vadd.f32 %v4582, %v4710
  %v4712 = vpop.f32.mrf.mxu0
  %4713 = vmatprep.mubr.f32.mxu0 0.0
  %v4714 = vand.u32 %v4089, 4294901760
  %4715 = vmatmul.mubr.f32.gmra.mxu0 %v4714
  %v4716 = vpop.f32.mrf.mxu0
  %v4717 = vadd.f32 %v4590, %v4716
  %v4718 = vpop.f32.mrf.mxu0
  %4719 = vmatprep.mubr.f32.mxu0 0.0
  %v4720 = vand.u32 %v4091, 4294901760
  %4721 = vmatmul.mubr.f32.gmra.mxu0 %v4720
  %v4722 = vpop.f32.mrf.mxu0
  %v4723 = vadd.f32 %v4598, %v4722
  %v4724 = vpop.f32.mrf.mxu0
  %4725 = vmatprep.mubr.f32.mxu0 0.0
  %v4726 = vand.u32 %v4093, 4294901760
  %4727 = vmatmul.mubr.f32.gmra.mxu0 %v4726
  %v4728 = vpop.f32.mrf.mxu0
  %v4729 = vadd.f32 %v4606, %v4728
  %v4730 = vpop.f32.mrf.mxu0
  %4731 = vmatprep.mubr.f32.mxu0 0.0
  %v4732 = vand.u32 %v4095, 4294901760
  %4733 = vmatmul.mubr.f32.gmra.mxu0 %v4732
  %v4734 = vpop.f32.mrf.mxu0
  %v4735 = vadd.f32 %v4614, %v4734
  %v4736 = vpop.f32.mrf.mxu0
  %4737 = vmatprep.mubr.f32.mxu0 0.0
  %v4738 = vand.u32 %v4097, 4294901760
  %4739 = vmatmul.mubr.f32.gmra.mxu0 %v4738
  %v4740 = vpop.f32.mrf.mxu0
  %v4741 = vadd.f32 %v4622, %v4740
  %v4742 = vpop.f32.mrf.mxu0
  %4743 = vdwg.mxu0
  %4744 = vmatprep.subr.mxu0 0.0
  %4745 = vmatpush1.msra.mxu0 0.0
  %4746 = vmatprep.subr.mxu0 0.0
  %4747 = vmatpush1.msra.mxu0 0.0
  %4748 = vmatprep.subr.mxu0 0.0
  %4749 = vmatpush1.msra.mxu0 0.0
  %4750 = vmatprep.subr.mxu0 0.0
  %4751 = vmatpush1.msra.mxu0 0.0
  %4752 = vmatprep.subr.mxu0 0.0
  %4753 = vmatpush1.msra.mxu0 0.0
  %4754 = vmatprep.subr.mxu0 0.0
  %4755 = vmatpush1.msra.mxu0 0.0
  %4756 = vmatprep.subr.mxu0 0.0
  %4757 = vmatpush1.msra.mxu0 0.0
  %4758 = vmatprep.subr.mxu0 0.0
  %4759 = vmatpush1.msra.mxu0 0.0
  %4760 = vmatprep.subr.mxu0 0.0
  %4761 = vmatpush1.msra.mxu0 0.0
  %4762 = vmatprep.subr.mxu0 0.0
  %4763 = vmatpush1.msra.mxu0 0.0
  %4764 = vmatprep.subr.mxu0 0.0
  %4765 = vmatpush1.msra.mxu0 0.0
  %4766 = vmatprep.subr.mxu0 0.0
  %4767 = vmatpush1.msra.mxu0 0.0
  %4768 = vmatprep.subr.mxu0 0.0
  %4769 = vmatpush1.msra.mxu0 0.0
  %4770 = vmatprep.subr.mxu0 0.0
  %4771 = vmatpush1.msra.mxu0 0.0
  %4772 = vmatprep.subr.mxu0 0.0
  %v4773 = vand.u32 %v4042, 4294901760
  %4774 = vmatpush1.msra.mxu0 %v4773
  %4775 = vmatprep.subr.mxu0 0.0
  %v4776 = vand.u32 %v4036, 4294901760
  %4777 = vmatpush1.msra.mxu0 %v4776
  %4778 = vmatprep.subr.mxu0 0.0
  %4779 = vmatpush2.msra.mxu0 0.0
  %4780 = vmatprep.subr.mxu0 0.0
  %4781 = vmatpush2.msra.mxu0 0.0
  %4782 = vmatprep.subr.mxu0 0.0
  %4783 = vmatpush2.msra.mxu0 0.0
  %4784 = vmatprep.subr.mxu0 0.0
  %4785 = vmatpush2.msra.mxu0 0.0
  %4786 = vmatprep.subr.mxu0 0.0
  %4787 = vmatpush2.msra.mxu0 0.0
  %4788 = vmatprep.subr.mxu0 0.0
  %4789 = vmatpush2.msra.mxu0 0.0
  %4790 = vmatprep.subr.mxu0 0.0
  %4791 = vmatpush2.msra.mxu0 0.0
  %4792 = vmatprep.subr.mxu0 0.0
  %4793 = vmatpush2.msra.mxu0 0.0
  %4794 = vmatprep.subr.mxu0 0.0
  %4795 = vmatpush2.msra.mxu0 0.0
  %4796 = vmatprep.subr.mxu0 0.0
  %4797 = vmatpush2.msra.mxu0 0.0
  %4798 = vmatprep.subr.mxu0 0.0
  %4799 = vmatpush2.msra.mxu0 0.0
  %4800 = vmatprep.subr.mxu0 0.0
  %4801 = vmatpush2.msra.mxu0 0.0
  %4802 = vmatprep.subr.mxu0 0.0
  %4803 = vmatpush2.msra.mxu0 0.0
  %4804 = vmatprep.subr.mxu0 0.0
  %4805 = vmatpush2.msra.mxu0 0.0
  %4806 = vmatprep.subr.mxu0 0.0
  %4807 = vmatpush2.msra.mxu0 0.0
  %4808 = vmatprep.subr.mxu0 0.0
  %4809 = vmatpush2.msra.mxu0 0.0
  %4810 = vmatprep.mubr.f32.mxu0 0.0
  %v4811 = vand.u32 %v4083, 4294901760
  %4812 = vmatmul.mubr.f32.gmra.mxu0 %v4811
  %v4813 = vpop.f32.mrf.mxu0
  %v4814 = vadd.f32 %v4699, %v4813
  %v4815 = vpop.f32.mrf.mxu0
  %4816 = vmatprep.mubr.f32.mxu0 0.0
  %v4817 = vand.u32 %v4085, 4294901760
  %4818 = vmatmul.mubr.f32.gmra.mxu0 %v4817
  %v4819 = vpop.f32.mrf.mxu0
  %v4820 = vadd.f32 %v4705, %v4819
  %v4821 = vpop.f32.mrf.mxu0
  %4822 = vmatprep.mubr.f32.mxu0 0.0
  %v4823 = vand.u32 %v4087, 4294901760
  %4824 = vmatmul.mubr.f32.gmra.mxu0 %v4823
  %v4825 = vpop.f32.mrf.mxu0
  %v4826 = vadd.f32 %v4711, %v4825
  %v4827 = vpop.f32.mrf.mxu0
  %4828 = vmatprep.mubr.f32.mxu0 0.0
  %v4829 = vand.u32 %v4089, 4294901760
  %4830 = vmatmul.mubr.f32.gmra.mxu0 %v4829
  %v4831 = vpop.f32.mrf.mxu0
  %v4832 = vadd.f32 %v4717, %v4831
  %v4833 = vpop.f32.mrf.mxu0
  %4834 = vmatprep.mubr.f32.mxu0 0.0
  %v4835 = vand.u32 %v4091, 4294901760
  %4836 = vmatmul.mubr.f32.gmra.mxu0 %v4835
  %v4837 = vpop.f32.mrf.mxu0
  %v4838 = vadd.f32 %v4723, %v4837
  %v4839 = vpop.f32.mrf.mxu0
  %4840 = vmatprep.mubr.f32.mxu0 0.0
  %v4841 = vand.u32 %v4093, 4294901760
  %4842 = vmatmul.mubr.f32.gmra.mxu0 %v4841
  %v4843 = vpop.f32.mrf.mxu0
  %v4844 = vadd.f32 %v4729, %v4843
  %v4845 = vpop.f32.mrf.mxu0
  %4846 = vmatprep.mubr.f32.mxu0 0.0
  %v4847 = vand.u32 %v4095, 4294901760
  %4848 = vmatmul.mubr.f32.gmra.mxu0 %v4847
  %v4849 = vpop.f32.mrf.mxu0
  %v4850 = vadd.f32 %v4735, %v4849
  %v4851 = vpop.f32.mrf.mxu0
  %4852 = vmatprep.mubr.f32.mxu0 0.0
  %v4853 = vand.u32 %v4097, 4294901760
  %4854 = vmatmul.mubr.f32.gmra.mxu0 %v4853
  %v4855 = vpop.f32.mrf.mxu0
  %v4856 = vadd.f32 %v4741, %v4855
  %v4857 = vpop.f32.mrf.mxu0
  %4858 = vdwg.mxu0
  %v4859 = vmul.f32 %v4814, %v4838
  %v4860 = vmul.f32 %v4820, %v4844
  %v4861 = vmul.f32 %v4826, %v4850
  %v4862 = vmul.f32 %v4832, %v4856
  %v4863 = vmul.f32 %v3448, %v3446
  %v4864 = vmul.f32 %v3455, %v3453
  %v4865 = vadd.f32 %v4863, %v4864
  %v4866 = vmul.f32 %v3462, %v3460
  %v4867 = vadd.f32 %v4865, %v4866
  %v4868 = vmul.f32 %v4867, 0.57735026
  %v4869 = vmul.f32 %v4859, %v3441
  %v4870 = vmul.f32 %v4869, %v3439
  %v4871 = vmul.f32 %v4862, %v4868
  %v4872 = vadd.f32 %v4870, %v4871
  %v4873 = vmul.f32 %v4872, 0.5
  %v4874 = vmul.f32 %v4860, 0.8660254
  %v4875 = vmul.f32 %v4874, %v3441
  %v4876 = vmul.f32 %v4861, 0.8660254
  %v4877 = vmul.f32 %v4876, %v3439
  %v4878 = vmul.f32 %v4875, %v3446
  %v4879 = vmul.f32 %v4877, %v3448
  %v4880 = vadd.f32 %v4878, %v4879
  %v4881 = vmul.f32 %v4875, %v3453
  %v4882 = vmul.f32 %v4877, %v3455
  %v4883 = vadd.f32 %v4881, %v4882
  %v4884 = vmul.f32 %v4875, %v3460
  %v4885 = vmul.f32 %v4877, %v3462
  %v4886 = vadd.f32 %v4884, %v4885
  %v4887 = vld [vmem:[%s4 + $0xb0] sm:$0xff]
  %v4888 = vld [vmem:[%s4 + $0xb8] sm:$0xff]
  %v4889 = vld [vmem:[%s4 + $0xc0] sm:$0xff]
  %v4890 = vld [vmem:[%s4 + $0xc8] sm:$0xff]
  %v4891 = vmul.f32 %v4880, %v4880
  %v4892 = vmul.f32 %v4883, %v4883
  %v4893 = vadd.f32 %v4891, %v4892
  %v4894 = vmul.f32 %v4886, %v4886
  %v4895 = vadd.f32 %v4893, %v4894
  %v4896 = vadd.f32 %v4895, 1e-12
  %v4897 = vrsqrt.pop %v4896
  %v4898 = vmul.f32 %v4896, %v4897
  %vm4899 = vcmp.eq.f32.partialorder %v4896, inf
  %v4900 = vsel %vm4899, %v4896, %v4898
  %vm4901 = vcmp.eq.f32.partialorder %v4896, 0.0
  %v4902 = vand.u32 %v4896, 2147483648
  %v4903 = vsel %vm4901, %v4902, %v4900
  %4905 = vset.pattern.permute.xlu0 32
  %4906 = vperm.xlu0 %4905, %v4887
  %v4907 = vpop.permute.xlu0 %4906
  %4910 = vset.pattern.permute.xlu0 32
  %4911 = vperm.xlu0 %4910, %v4888
  %v4912 = vpop.permute.xlu0 %4911
  %v4914 = vsel %vm698, %v4887, 0
  %v4916 = vsel %vm698, %v4888, 0
  %4918 = vmatprep.subr.mxu0 0.0
  %4919 = vmatpush1.msra.mxu0 0.0
  %4920 = vmatprep.subr.mxu0 0.0
  %4921 = vmatpush1.msra.mxu0 0.0
  %4922 = vmatprep.subr.mxu0 0.0
  %4923 = vmatpush1.msra.mxu0 0.0
  %4924 = vmatprep.subr.mxu0 0.0
  %4925 = vmatpush1.msra.mxu0 0.0
  %4926 = vmatprep.subr.mxu0 0.0
  %4927 = vmatpush1.msra.mxu0 0.0
  %4928 = vmatprep.subr.mxu0 0.0
  %4929 = vmatpush1.msra.mxu0 0.0
  %4930 = vmatprep.subr.mxu0 0.0
  %4931 = vmatpush1.msra.mxu0 0.0
  %4932 = vmatprep.subr.mxu0 0.0
  %4933 = vmatpush1.msra.mxu0 0.0
  %4934 = vmatprep.subr.mxu0 0.0
  %4935 = vmatpush1.msra.mxu0 0.0
  %4936 = vmatprep.subr.mxu0 0.0
  %4937 = vmatpush1.msra.mxu0 0.0
  %4938 = vmatprep.subr.mxu0 0.0
  %4939 = vmatpush1.msra.mxu0 0.0
  %4940 = vmatprep.subr.mxu0 0.0
  %4941 = vmatpush1.msra.mxu0 0.0
  %4942 = vmatprep.subr.mxu0 0.0
  %4943 = vmatpush1.msra.mxu0 0.0
  %4944 = vmatprep.subr.mxu0 0.0
  %4945 = vmatpush1.msra.mxu0 0.0
  %4946 = vmatprep.subr.mxu0 0.0
  %v4947 = vand.u32 %v4903, 4294901760
  %4948 = vmatpush1.msra.mxu0 %v4947
  %4949 = vmatprep.subr.mxu0 0.0
  %v4950 = vand.u32 %v4873, 4294901760
  %4951 = vmatpush1.msra.mxu0 %v4950
  %4952 = vmatprep.subr.mxu0 0.0
  %4953 = vmatpush2.msra.mxu0 0.0
  %4954 = vmatprep.subr.mxu0 0.0
  %4955 = vmatpush2.msra.mxu0 0.0
  %4956 = vmatprep.subr.mxu0 0.0
  %4957 = vmatpush2.msra.mxu0 0.0
  %4958 = vmatprep.subr.mxu0 0.0
  %4959 = vmatpush2.msra.mxu0 0.0
  %4960 = vmatprep.subr.mxu0 0.0
  %4961 = vmatpush2.msra.mxu0 0.0
  %4962 = vmatprep.subr.mxu0 0.0
  %4963 = vmatpush2.msra.mxu0 0.0
  %4964 = vmatprep.subr.mxu0 0.0
  %4965 = vmatpush2.msra.mxu0 0.0
  %4966 = vmatprep.subr.mxu0 0.0
  %4967 = vmatpush2.msra.mxu0 0.0
  %4968 = vmatprep.subr.mxu0 0.0
  %4969 = vmatpush2.msra.mxu0 0.0
  %4970 = vmatprep.subr.mxu0 0.0
  %4971 = vmatpush2.msra.mxu0 0.0
  %4972 = vmatprep.subr.mxu0 0.0
  %4973 = vmatpush2.msra.mxu0 0.0
  %4974 = vmatprep.subr.mxu0 0.0
  %4975 = vmatpush2.msra.mxu0 0.0
  %4976 = vmatprep.subr.mxu0 0.0
  %4977 = vmatpush2.msra.mxu0 0.0
  %4978 = vmatprep.subr.mxu0 0.0
  %4979 = vmatpush2.msra.mxu0 0.0
  %4980 = vmatprep.subr.mxu0 0.0
  %4981 = vmatpush2.msra.mxu0 0.0
  %4982 = vmatprep.subr.mxu0 0.0
  %4983 = vmatpush2.msra.mxu0 0.0
  %4984 = vmatprep.mubr.f32.mxu0 0.0
  %v4985 = vand.u32 %v4914, 4294901760
  %v4986 = vsub.f32 %v4914, %v4985
  %v4987 = vand.u32 %v4986, 4294901760
  %v4988 = vsub.f32 %v4986, %v4987
  %v4989 = vand.u32 %v4988, 4294901760
  %4990 = vmatmul.mubr.f32.gmra.mxu0 %v4989
  %v4991 = vpop.f32.mrf.mxu0
  %v4992 = vadd.f32 %v4907, %v4991
  %v4993 = vpop.f32.mrf.mxu0
  %4994 = vmatprep.mubr.f32.mxu0 0.0
  %v4995 = vand.u32 %v4916, 4294901760
  %v4996 = vsub.f32 %v4916, %v4995
  %v4997 = vand.u32 %v4996, 4294901760
  %v4998 = vsub.f32 %v4996, %v4997
  %v4999 = vand.u32 %v4998, 4294901760
  %5000 = vmatmul.mubr.f32.gmra.mxu0 %v4999
  %v5001 = vpop.f32.mrf.mxu0
  %v5002 = vadd.f32 %v4912, %v5001
  %v5003 = vpop.f32.mrf.mxu0
  %5004 = vdwg.mxu0
  %5005 = vmatprep.subr.mxu0 0.0
  %5006 = vmatpush1.msra.mxu0 0.0
  %5007 = vmatprep.subr.mxu0 0.0
  %5008 = vmatpush1.msra.mxu0 0.0
  %5009 = vmatprep.subr.mxu0 0.0
  %5010 = vmatpush1.msra.mxu0 0.0
  %5011 = vmatprep.subr.mxu0 0.0
  %5012 = vmatpush1.msra.mxu0 0.0
  %5013 = vmatprep.subr.mxu0 0.0
  %5014 = vmatpush1.msra.mxu0 0.0
  %5015 = vmatprep.subr.mxu0 0.0
  %5016 = vmatpush1.msra.mxu0 0.0
  %5017 = vmatprep.subr.mxu0 0.0
  %5018 = vmatpush1.msra.mxu0 0.0
  %5019 = vmatprep.subr.mxu0 0.0
  %5020 = vmatpush1.msra.mxu0 0.0
  %5021 = vmatprep.subr.mxu0 0.0
  %5022 = vmatpush1.msra.mxu0 0.0
  %5023 = vmatprep.subr.mxu0 0.0
  %5024 = vmatpush1.msra.mxu0 0.0
  %5025 = vmatprep.subr.mxu0 0.0
  %5026 = vmatpush1.msra.mxu0 0.0
  %5027 = vmatprep.subr.mxu0 0.0
  %5028 = vmatpush1.msra.mxu0 0.0
  %5029 = vmatprep.subr.mxu0 0.0
  %5030 = vmatpush1.msra.mxu0 0.0
  %5031 = vmatprep.subr.mxu0 0.0
  %5032 = vmatpush1.msra.mxu0 0.0
  %5033 = vmatprep.subr.mxu0 0.0
  %v5034 = vand.u32 %v4903, 4294901760
  %v5035 = vsub.f32 %v4903, %v5034
  %v5036 = vand.u32 %v5035, 4294901760
  %v5037 = vsub.f32 %v5035, %v5036
  %v5038 = vand.u32 %v5037, 4294901760
  %5039 = vmatpush1.msra.mxu0 %v5038
  %5040 = vmatprep.subr.mxu0 0.0
  %v5041 = vand.u32 %v4873, 4294901760
  %v5042 = vsub.f32 %v4873, %v5041
  %v5043 = vand.u32 %v5042, 4294901760
  %v5044 = vsub.f32 %v5042, %v5043
  %v5045 = vand.u32 %v5044, 4294901760
  %5046 = vmatpush1.msra.mxu0 %v5045
  %5047 = vmatprep.subr.mxu0 0.0
  %5048 = vmatpush2.msra.mxu0 0.0
  %5049 = vmatprep.subr.mxu0 0.0
  %5050 = vmatpush2.msra.mxu0 0.0
  %5051 = vmatprep.subr.mxu0 0.0
  %5052 = vmatpush2.msra.mxu0 0.0
  %5053 = vmatprep.subr.mxu0 0.0
  %5054 = vmatpush2.msra.mxu0 0.0
  %5055 = vmatprep.subr.mxu0 0.0
  %5056 = vmatpush2.msra.mxu0 0.0
  %5057 = vmatprep.subr.mxu0 0.0
  %5058 = vmatpush2.msra.mxu0 0.0
  %5059 = vmatprep.subr.mxu0 0.0
  %5060 = vmatpush2.msra.mxu0 0.0
  %5061 = vmatprep.subr.mxu0 0.0
  %5062 = vmatpush2.msra.mxu0 0.0
  %5063 = vmatprep.subr.mxu0 0.0
  %5064 = vmatpush2.msra.mxu0 0.0
  %5065 = vmatprep.subr.mxu0 0.0
  %5066 = vmatpush2.msra.mxu0 0.0
  %5067 = vmatprep.subr.mxu0 0.0
  %5068 = vmatpush2.msra.mxu0 0.0
  %5069 = vmatprep.subr.mxu0 0.0
  %5070 = vmatpush2.msra.mxu0 0.0
  %5071 = vmatprep.subr.mxu0 0.0
  %5072 = vmatpush2.msra.mxu0 0.0
  %5073 = vmatprep.subr.mxu0 0.0
  %5074 = vmatpush2.msra.mxu0 0.0
  %5075 = vmatprep.subr.mxu0 0.0
  %5076 = vmatpush2.msra.mxu0 0.0
  %5077 = vmatprep.subr.mxu0 0.0
  %5078 = vmatpush2.msra.mxu0 0.0
  %5079 = vmatprep.mubr.f32.mxu0 0.0
  %v5080 = vand.u32 %v4914, 4294901760
  %5081 = vmatmul.mubr.f32.gmra.mxu0 %v5080
  %v5082 = vpop.f32.mrf.mxu0
  %v5083 = vadd.f32 %v4992, %v5082
  %v5084 = vpop.f32.mrf.mxu0
  %5085 = vmatprep.mubr.f32.mxu0 0.0
  %v5086 = vand.u32 %v4916, 4294901760
  %5087 = vmatmul.mubr.f32.gmra.mxu0 %v5086
  %v5088 = vpop.f32.mrf.mxu0
  %v5089 = vadd.f32 %v5002, %v5088
  %v5090 = vpop.f32.mrf.mxu0
  %5091 = vdwg.mxu0
  %5092 = vmatprep.subr.mxu0 0.0
  %5093 = vmatpush1.msra.mxu0 0.0
  %5094 = vmatprep.subr.mxu0 0.0
  %5095 = vmatpush1.msra.mxu0 0.0
  %5096 = vmatprep.subr.mxu0 0.0
  %5097 = vmatpush1.msra.mxu0 0.0
  %5098 = vmatprep.subr.mxu0 0.0
  %5099 = vmatpush1.msra.mxu0 0.0
  %5100 = vmatprep.subr.mxu0 0.0
  %5101 = vmatpush1.msra.mxu0 0.0
  %5102 = vmatprep.subr.mxu0 0.0
  %5103 = vmatpush1.msra.mxu0 0.0
  %5104 = vmatprep.subr.mxu0 0.0
  %5105 = vmatpush1.msra.mxu0 0.0
  %5106 = vmatprep.subr.mxu0 0.0
  %5107 = vmatpush1.msra.mxu0 0.0
  %5108 = vmatprep.subr.mxu0 0.0
  %5109 = vmatpush1.msra.mxu0 0.0
  %5110 = vmatprep.subr.mxu0 0.0
  %5111 = vmatpush1.msra.mxu0 0.0
  %5112 = vmatprep.subr.mxu0 0.0
  %5113 = vmatpush1.msra.mxu0 0.0
  %5114 = vmatprep.subr.mxu0 0.0
  %5115 = vmatpush1.msra.mxu0 0.0
  %5116 = vmatprep.subr.mxu0 0.0
  %5117 = vmatpush1.msra.mxu0 0.0
  %5118 = vmatprep.subr.mxu0 0.0
  %5119 = vmatpush1.msra.mxu0 0.0
  %5120 = vmatprep.subr.mxu0 0.0
  %v5121 = vand.u32 %v4903, 4294901760
  %v5122 = vsub.f32 %v4903, %v5121
  %5123 = vmatpush1.msra.mxu0 %v5122
  %5124 = vmatprep.subr.mxu0 0.0
  %v5125 = vand.u32 %v4873, 4294901760
  %v5126 = vsub.f32 %v4873, %v5125
  %5127 = vmatpush1.msra.mxu0 %v5126
  %5128 = vmatprep.subr.mxu0 0.0
  %5129 = vmatpush2.msra.mxu0 0.0
  %5130 = vmatprep.subr.mxu0 0.0
  %5131 = vmatpush2.msra.mxu0 0.0
  %5132 = vmatprep.subr.mxu0 0.0
  %5133 = vmatpush2.msra.mxu0 0.0
  %5134 = vmatprep.subr.mxu0 0.0
  %5135 = vmatpush2.msra.mxu0 0.0
  %5136 = vmatprep.subr.mxu0 0.0
  %5137 = vmatpush2.msra.mxu0 0.0
  %5138 = vmatprep.subr.mxu0 0.0
  %5139 = vmatpush2.msra.mxu0 0.0
  %5140 = vmatprep.subr.mxu0 0.0
  %5141 = vmatpush2.msra.mxu0 0.0
  %5142 = vmatprep.subr.mxu0 0.0
  %5143 = vmatpush2.msra.mxu0 0.0
  %5144 = vmatprep.subr.mxu0 0.0
  %5145 = vmatpush2.msra.mxu0 0.0
  %5146 = vmatprep.subr.mxu0 0.0
  %5147 = vmatpush2.msra.mxu0 0.0
  %5148 = vmatprep.subr.mxu0 0.0
  %5149 = vmatpush2.msra.mxu0 0.0
  %5150 = vmatprep.subr.mxu0 0.0
  %5151 = vmatpush2.msra.mxu0 0.0
  %5152 = vmatprep.subr.mxu0 0.0
  %5153 = vmatpush2.msra.mxu0 0.0
  %5154 = vmatprep.subr.mxu0 0.0
  %5155 = vmatpush2.msra.mxu0 0.0
  %5156 = vmatprep.subr.mxu0 0.0
  %5157 = vmatpush2.msra.mxu0 0.0
  %5158 = vmatprep.subr.mxu0 0.0
  %5159 = vmatpush2.msra.mxu0 0.0
  %5160 = vmatprep.mubr.f32.mxu0 0.0
  %v5161 = vand.u32 %v4914, 4294901760
  %v5162 = vsub.f32 %v4914, %v5161
  %5163 = vmatmul.mubr.f32.gmra.mxu0 %v5162
  %v5164 = vpop.f32.mrf.mxu0
  %v5165 = vadd.f32 %v5083, %v5164
  %v5166 = vpop.f32.mrf.mxu0
  %5167 = vmatprep.mubr.f32.mxu0 0.0
  %v5168 = vand.u32 %v4916, 4294901760
  %v5169 = vsub.f32 %v4916, %v5168
  %5170 = vmatmul.mubr.f32.gmra.mxu0 %v5169
  %v5171 = vpop.f32.mrf.mxu0
  %v5172 = vadd.f32 %v5089, %v5171
  %v5173 = vpop.f32.mrf.mxu0
  %5174 = vdwg.mxu0
  %5175 = vmatprep.subr.mxu0 0.0
  %5176 = vmatpush1.msra.mxu0 0.0
  %5177 = vmatprep.subr.mxu0 0.0
  %5178 = vmatpush1.msra.mxu0 0.0
  %5179 = vmatprep.subr.mxu0 0.0
  %5180 = vmatpush1.msra.mxu0 0.0
  %5181 = vmatprep.subr.mxu0 0.0
  %5182 = vmatpush1.msra.mxu0 0.0
  %5183 = vmatprep.subr.mxu0 0.0
  %5184 = vmatpush1.msra.mxu0 0.0
  %5185 = vmatprep.subr.mxu0 0.0
  %5186 = vmatpush1.msra.mxu0 0.0
  %5187 = vmatprep.subr.mxu0 0.0
  %5188 = vmatpush1.msra.mxu0 0.0
  %5189 = vmatprep.subr.mxu0 0.0
  %5190 = vmatpush1.msra.mxu0 0.0
  %5191 = vmatprep.subr.mxu0 0.0
  %5192 = vmatpush1.msra.mxu0 0.0
  %5193 = vmatprep.subr.mxu0 0.0
  %5194 = vmatpush1.msra.mxu0 0.0
  %5195 = vmatprep.subr.mxu0 0.0
  %5196 = vmatpush1.msra.mxu0 0.0
  %5197 = vmatprep.subr.mxu0 0.0
  %5198 = vmatpush1.msra.mxu0 0.0
  %5199 = vmatprep.subr.mxu0 0.0
  %5200 = vmatpush1.msra.mxu0 0.0
  %5201 = vmatprep.subr.mxu0 0.0
  %5202 = vmatpush1.msra.mxu0 0.0
  %5203 = vmatprep.subr.mxu0 0.0
  %v5204 = vand.u32 %v4903, 4294901760
  %5205 = vmatpush1.msra.mxu0 %v5204
  %5206 = vmatprep.subr.mxu0 0.0
  %v5207 = vand.u32 %v4873, 4294901760
  %5208 = vmatpush1.msra.mxu0 %v5207
  %5209 = vmatprep.subr.mxu0 0.0
  %5210 = vmatpush2.msra.mxu0 0.0
  %5211 = vmatprep.subr.mxu0 0.0
  %5212 = vmatpush2.msra.mxu0 0.0
  %5213 = vmatprep.subr.mxu0 0.0
  %5214 = vmatpush2.msra.mxu0 0.0
  %5215 = vmatprep.subr.mxu0 0.0
  %5216 = vmatpush2.msra.mxu0 0.0
  %5217 = vmatprep.subr.mxu0 0.0
  %5218 = vmatpush2.msra.mxu0 0.0
  %5219 = vmatprep.subr.mxu0 0.0
  %5220 = vmatpush2.msra.mxu0 0.0
  %5221 = vmatprep.subr.mxu0 0.0
  %5222 = vmatpush2.msra.mxu0 0.0
  %5223 = vmatprep.subr.mxu0 0.0
  %5224 = vmatpush2.msra.mxu0 0.0
  %5225 = vmatprep.subr.mxu0 0.0
  %5226 = vmatpush2.msra.mxu0 0.0
  %5227 = vmatprep.subr.mxu0 0.0
  %5228 = vmatpush2.msra.mxu0 0.0
  %5229 = vmatprep.subr.mxu0 0.0
  %5230 = vmatpush2.msra.mxu0 0.0
  %5231 = vmatprep.subr.mxu0 0.0
  %5232 = vmatpush2.msra.mxu0 0.0
  %5233 = vmatprep.subr.mxu0 0.0
  %5234 = vmatpush2.msra.mxu0 0.0
  %5235 = vmatprep.subr.mxu0 0.0
  %5236 = vmatpush2.msra.mxu0 0.0
  %5237 = vmatprep.subr.mxu0 0.0
  %5238 = vmatpush2.msra.mxu0 0.0
  %5239 = vmatprep.subr.mxu0 0.0
  %5240 = vmatpush2.msra.mxu0 0.0
  %5241 = vmatprep.mubr.f32.mxu0 0.0
  %v5242 = vand.u32 %v4914, 4294901760
  %v5243 = vsub.f32 %v4914, %v5242
  %v5244 = vand.u32 %v5243, 4294901760
  %5245 = vmatmul.mubr.f32.gmra.mxu0 %v5244
  %v5246 = vpop.f32.mrf.mxu0
  %v5247 = vadd.f32 %v5165, %v5246
  %v5248 = vpop.f32.mrf.mxu0
  %5249 = vmatprep.mubr.f32.mxu0 0.0
  %v5250 = vand.u32 %v4916, 4294901760
  %v5251 = vsub.f32 %v4916, %v5250
  %v5252 = vand.u32 %v5251, 4294901760
  %5253 = vmatmul.mubr.f32.gmra.mxu0 %v5252
  %v5254 = vpop.f32.mrf.mxu0
  %v5255 = vadd.f32 %v5172, %v5254
  %v5256 = vpop.f32.mrf.mxu0
  %5257 = vdwg.mxu0
  %5258 = vmatprep.subr.mxu0 0.0
  %5259 = vmatpush1.msra.mxu0 0.0
  %5260 = vmatprep.subr.mxu0 0.0
  %5261 = vmatpush1.msra.mxu0 0.0
  %5262 = vmatprep.subr.mxu0 0.0
  %5263 = vmatpush1.msra.mxu0 0.0
  %5264 = vmatprep.subr.mxu0 0.0
  %5265 = vmatpush1.msra.mxu0 0.0
  %5266 = vmatprep.subr.mxu0 0.0
  %5267 = vmatpush1.msra.mxu0 0.0
  %5268 = vmatprep.subr.mxu0 0.0
  %5269 = vmatpush1.msra.mxu0 0.0
  %5270 = vmatprep.subr.mxu0 0.0
  %5271 = vmatpush1.msra.mxu0 0.0
  %5272 = vmatprep.subr.mxu0 0.0
  %5273 = vmatpush1.msra.mxu0 0.0
  %5274 = vmatprep.subr.mxu0 0.0
  %5275 = vmatpush1.msra.mxu0 0.0
  %5276 = vmatprep.subr.mxu0 0.0
  %5277 = vmatpush1.msra.mxu0 0.0
  %5278 = vmatprep.subr.mxu0 0.0
  %5279 = vmatpush1.msra.mxu0 0.0
  %5280 = vmatprep.subr.mxu0 0.0
  %5281 = vmatpush1.msra.mxu0 0.0
  %5282 = vmatprep.subr.mxu0 0.0
  %5283 = vmatpush1.msra.mxu0 0.0
  %5284 = vmatprep.subr.mxu0 0.0
  %5285 = vmatpush1.msra.mxu0 0.0
  %5286 = vmatprep.subr.mxu0 0.0
  %v5287 = vand.u32 %v4903, 4294901760
  %v5288 = vsub.f32 %v4903, %v5287
  %v5289 = vand.u32 %v5288, 4294901760
  %5290 = vmatpush1.msra.mxu0 %v5289
  %5291 = vmatprep.subr.mxu0 0.0
  %v5292 = vand.u32 %v4873, 4294901760
  %v5293 = vsub.f32 %v4873, %v5292
  %v5294 = vand.u32 %v5293, 4294901760
  %5295 = vmatpush1.msra.mxu0 %v5294
  %5296 = vmatprep.subr.mxu0 0.0
  %5297 = vmatpush2.msra.mxu0 0.0
  %5298 = vmatprep.subr.mxu0 0.0
  %5299 = vmatpush2.msra.mxu0 0.0
  %5300 = vmatprep.subr.mxu0 0.0
  %5301 = vmatpush2.msra.mxu0 0.0
  %5302 = vmatprep.subr.mxu0 0.0
  %5303 = vmatpush2.msra.mxu0 0.0
  %5304 = vmatprep.subr.mxu0 0.0
  %5305 = vmatpush2.msra.mxu0 0.0
  %5306 = vmatprep.subr.mxu0 0.0
  %5307 = vmatpush2.msra.mxu0 0.0
  %5308 = vmatprep.subr.mxu0 0.0
  %5309 = vmatpush2.msra.mxu0 0.0
  %5310 = vmatprep.subr.mxu0 0.0
  %5311 = vmatpush2.msra.mxu0 0.0
  %5312 = vmatprep.subr.mxu0 0.0
  %5313 = vmatpush2.msra.mxu0 0.0
  %5314 = vmatprep.subr.mxu0 0.0
  %5315 = vmatpush2.msra.mxu0 0.0
  %5316 = vmatprep.subr.mxu0 0.0
  %5317 = vmatpush2.msra.mxu0 0.0
  %5318 = vmatprep.subr.mxu0 0.0
  %5319 = vmatpush2.msra.mxu0 0.0
  %5320 = vmatprep.subr.mxu0 0.0
  %5321 = vmatpush2.msra.mxu0 0.0
  %5322 = vmatprep.subr.mxu0 0.0
  %5323 = vmatpush2.msra.mxu0 0.0
  %5324 = vmatprep.subr.mxu0 0.0
  %5325 = vmatpush2.msra.mxu0 0.0
  %5326 = vmatprep.subr.mxu0 0.0
  %5327 = vmatpush2.msra.mxu0 0.0
  %5328 = vmatprep.mubr.f32.mxu0 0.0
  %v5329 = vand.u32 %v4914, 4294901760
  %5330 = vmatmul.mubr.f32.gmra.mxu0 %v5329
  %v5331 = vpop.f32.mrf.mxu0
  %v5332 = vadd.f32 %v5247, %v5331
  %v5333 = vpop.f32.mrf.mxu0
  %5334 = vmatprep.mubr.f32.mxu0 0.0
  %v5335 = vand.u32 %v4916, 4294901760
  %5336 = vmatmul.mubr.f32.gmra.mxu0 %v5335
  %v5337 = vpop.f32.mrf.mxu0
  %v5338 = vadd.f32 %v5255, %v5337
  %v5339 = vpop.f32.mrf.mxu0
  %5340 = vdwg.mxu0
  %5341 = vmatprep.subr.mxu0 0.0
  %5342 = vmatpush1.msra.mxu0 0.0
  %5343 = vmatprep.subr.mxu0 0.0
  %5344 = vmatpush1.msra.mxu0 0.0
  %5345 = vmatprep.subr.mxu0 0.0
  %5346 = vmatpush1.msra.mxu0 0.0
  %5347 = vmatprep.subr.mxu0 0.0
  %5348 = vmatpush1.msra.mxu0 0.0
  %5349 = vmatprep.subr.mxu0 0.0
  %5350 = vmatpush1.msra.mxu0 0.0
  %5351 = vmatprep.subr.mxu0 0.0
  %5352 = vmatpush1.msra.mxu0 0.0
  %5353 = vmatprep.subr.mxu0 0.0
  %5354 = vmatpush1.msra.mxu0 0.0
  %5355 = vmatprep.subr.mxu0 0.0
  %5356 = vmatpush1.msra.mxu0 0.0
  %5357 = vmatprep.subr.mxu0 0.0
  %5358 = vmatpush1.msra.mxu0 0.0
  %5359 = vmatprep.subr.mxu0 0.0
  %5360 = vmatpush1.msra.mxu0 0.0
  %5361 = vmatprep.subr.mxu0 0.0
  %5362 = vmatpush1.msra.mxu0 0.0
  %5363 = vmatprep.subr.mxu0 0.0
  %5364 = vmatpush1.msra.mxu0 0.0
  %5365 = vmatprep.subr.mxu0 0.0
  %5366 = vmatpush1.msra.mxu0 0.0
  %5367 = vmatprep.subr.mxu0 0.0
  %5368 = vmatpush1.msra.mxu0 0.0
  %5369 = vmatprep.subr.mxu0 0.0
  %v5370 = vand.u32 %v4903, 4294901760
  %5371 = vmatpush1.msra.mxu0 %v5370
  %5372 = vmatprep.subr.mxu0 0.0
  %v5373 = vand.u32 %v4873, 4294901760
  %5374 = vmatpush1.msra.mxu0 %v5373
  %5375 = vmatprep.subr.mxu0 0.0
  %5376 = vmatpush2.msra.mxu0 0.0
  %5377 = vmatprep.subr.mxu0 0.0
  %5378 = vmatpush2.msra.mxu0 0.0
  %5379 = vmatprep.subr.mxu0 0.0
  %5380 = vmatpush2.msra.mxu0 0.0
  %5381 = vmatprep.subr.mxu0 0.0
  %5382 = vmatpush2.msra.mxu0 0.0
  %5383 = vmatprep.subr.mxu0 0.0
  %5384 = vmatpush2.msra.mxu0 0.0
  %5385 = vmatprep.subr.mxu0 0.0
  %5386 = vmatpush2.msra.mxu0 0.0
  %5387 = vmatprep.subr.mxu0 0.0
  %5388 = vmatpush2.msra.mxu0 0.0
  %5389 = vmatprep.subr.mxu0 0.0
  %5390 = vmatpush2.msra.mxu0 0.0
  %5391 = vmatprep.subr.mxu0 0.0
  %5392 = vmatpush2.msra.mxu0 0.0
  %5393 = vmatprep.subr.mxu0 0.0
  %5394 = vmatpush2.msra.mxu0 0.0
  %5395 = vmatprep.subr.mxu0 0.0
  %5396 = vmatpush2.msra.mxu0 0.0
  %5397 = vmatprep.subr.mxu0 0.0
  %5398 = vmatpush2.msra.mxu0 0.0
  %5399 = vmatprep.subr.mxu0 0.0
  %5400 = vmatpush2.msra.mxu0 0.0
  %5401 = vmatprep.subr.mxu0 0.0
  %5402 = vmatpush2.msra.mxu0 0.0
  %5403 = vmatprep.subr.mxu0 0.0
  %5404 = vmatpush2.msra.mxu0 0.0
  %5405 = vmatprep.subr.mxu0 0.0
  %5406 = vmatpush2.msra.mxu0 0.0
  %5407 = vmatprep.mubr.f32.mxu0 0.0
  %v5408 = vand.u32 %v4914, 4294901760
  %5409 = vmatmul.mubr.f32.gmra.mxu0 %v5408
  %v5410 = vpop.f32.mrf.mxu0
  %v5411 = vadd.f32 %v5332, %v5410
  %v5412 = vpop.f32.mrf.mxu0
  %5413 = vmatprep.mubr.f32.mxu0 0.0
  %v5414 = vand.u32 %v4916, 4294901760
  %5415 = vmatmul.mubr.f32.gmra.mxu0 %v5414
  %v5416 = vpop.f32.mrf.mxu0
  %v5417 = vadd.f32 %v5338, %v5416
  %v5418 = vpop.f32.mrf.mxu0
  %5419 = vdwg.mxu0
  %v5420 = vsub.f32 0.0, %v5411
  %v5421 = vsub.f32 0.0, %v5417
  %v5422 = vmul.f32 %v5420, 1.442695
  %v5423 = vpow.pop %v5422
  %v5424 = vmul.f32 %v5421, 1.442695
  %v5425 = vpow.pop %v5424
  %v5426 = vadd.f32 %v5423, 1.0
  %v5427 = vadd.f32 %v5425, 1.0
  %v5428 = vrcp.pop %v5426
  %v5429 = vrcp.pop %v5427
  %v5430 = vmul.f32 %v5411, %v5428
  %v5431 = vmul.f32 %v5417, %v5429
  %5433 = vset.pattern.permute.xlu0 32
  %5434 = vperm.xlu0 %5433, %v4889
  %v5435 = vpop.permute.xlu0 %5434
  %5438 = vset.pattern.permute.xlu0 32
  %5439 = vperm.xlu0 %5438, %v4890
  %v5440 = vpop.permute.xlu0 %5439
  %v5442 = vsel %vm698, %v4889, 0
  %v5444 = vsel %vm698, %v4890, 0
  %5446 = vmatprep.subr.mxu0 0.0
  %5447 = vmatpush1.msra.mxu0 0.0
  %5448 = vmatprep.subr.mxu0 0.0
  %5449 = vmatpush1.msra.mxu0 0.0
  %5450 = vmatprep.subr.mxu0 0.0
  %5451 = vmatpush1.msra.mxu0 0.0
  %5452 = vmatprep.subr.mxu0 0.0
  %5453 = vmatpush1.msra.mxu0 0.0
  %5454 = vmatprep.subr.mxu0 0.0
  %5455 = vmatpush1.msra.mxu0 0.0
  %5456 = vmatprep.subr.mxu0 0.0
  %5457 = vmatpush1.msra.mxu0 0.0
  %5458 = vmatprep.subr.mxu0 0.0
  %5459 = vmatpush1.msra.mxu0 0.0
  %5460 = vmatprep.subr.mxu0 0.0
  %5461 = vmatpush1.msra.mxu0 0.0
  %5462 = vmatprep.subr.mxu0 0.0
  %5463 = vmatpush1.msra.mxu0 0.0
  %5464 = vmatprep.subr.mxu0 0.0
  %5465 = vmatpush1.msra.mxu0 0.0
  %5466 = vmatprep.subr.mxu0 0.0
  %5467 = vmatpush1.msra.mxu0 0.0
  %5468 = vmatprep.subr.mxu0 0.0
  %5469 = vmatpush1.msra.mxu0 0.0
  %5470 = vmatprep.subr.mxu0 0.0
  %5471 = vmatpush1.msra.mxu0 0.0
  %5472 = vmatprep.subr.mxu0 0.0
  %5473 = vmatpush1.msra.mxu0 0.0
  %5474 = vmatprep.subr.mxu0 0.0
  %v5475 = vand.u32 %v5431, 4294901760
  %5476 = vmatpush1.msra.mxu0 %v5475
  %5477 = vmatprep.subr.mxu0 0.0
  %v5478 = vand.u32 %v5430, 4294901760
  %5479 = vmatpush1.msra.mxu0 %v5478
  %5480 = vmatprep.subr.mxu0 0.0
  %5481 = vmatpush2.msra.mxu0 0.0
  %5482 = vmatprep.subr.mxu0 0.0
  %5483 = vmatpush2.msra.mxu0 0.0
  %5484 = vmatprep.subr.mxu0 0.0
  %5485 = vmatpush2.msra.mxu0 0.0
  %5486 = vmatprep.subr.mxu0 0.0
  %5487 = vmatpush2.msra.mxu0 0.0
  %5488 = vmatprep.subr.mxu0 0.0
  %5489 = vmatpush2.msra.mxu0 0.0
  %5490 = vmatprep.subr.mxu0 0.0
  %5491 = vmatpush2.msra.mxu0 0.0
  %5492 = vmatprep.subr.mxu0 0.0
  %5493 = vmatpush2.msra.mxu0 0.0
  %5494 = vmatprep.subr.mxu0 0.0
  %5495 = vmatpush2.msra.mxu0 0.0
  %5496 = vmatprep.subr.mxu0 0.0
  %5497 = vmatpush2.msra.mxu0 0.0
  %5498 = vmatprep.subr.mxu0 0.0
  %5499 = vmatpush2.msra.mxu0 0.0
  %5500 = vmatprep.subr.mxu0 0.0
  %5501 = vmatpush2.msra.mxu0 0.0
  %5502 = vmatprep.subr.mxu0 0.0
  %5503 = vmatpush2.msra.mxu0 0.0
  %5504 = vmatprep.subr.mxu0 0.0
  %5505 = vmatpush2.msra.mxu0 0.0
  %5506 = vmatprep.subr.mxu0 0.0
  %5507 = vmatpush2.msra.mxu0 0.0
  %5508 = vmatprep.subr.mxu0 0.0
  %5509 = vmatpush2.msra.mxu0 0.0
  %5510 = vmatprep.subr.mxu0 0.0
  %5511 = vmatpush2.msra.mxu0 0.0
  %5512 = vmatprep.mubr.f32.mxu0 0.0
  %v5513 = vand.u32 %v5442, 4294901760
  %v5514 = vsub.f32 %v5442, %v5513
  %v5515 = vand.u32 %v5514, 4294901760
  %v5516 = vsub.f32 %v5514, %v5515
  %v5517 = vand.u32 %v5516, 4294901760
  %5518 = vmatmul.mubr.f32.gmra.mxu0 %v5517
  %v5519 = vpop.f32.mrf.mxu0
  %v5520 = vadd.f32 %v5435, %v5519
  %v5521 = vpop.f32.mrf.mxu0
  %5522 = vmatprep.mubr.f32.mxu0 0.0
  %v5523 = vand.u32 %v5444, 4294901760
  %v5524 = vsub.f32 %v5444, %v5523
  %v5525 = vand.u32 %v5524, 4294901760
  %v5526 = vsub.f32 %v5524, %v5525
  %v5527 = vand.u32 %v5526, 4294901760
  %5528 = vmatmul.mubr.f32.gmra.mxu0 %v5527
  %v5529 = vpop.f32.mrf.mxu0
  %v5530 = vadd.f32 %v5440, %v5529
  %v5531 = vpop.f32.mrf.mxu0
  %5532 = vdwg.mxu0
  %5533 = vmatprep.subr.mxu0 0.0
  %5534 = vmatpush1.msra.mxu0 0.0
  %5535 = vmatprep.subr.mxu0 0.0
  %5536 = vmatpush1.msra.mxu0 0.0
  %5537 = vmatprep.subr.mxu0 0.0
  %5538 = vmatpush1.msra.mxu0 0.0
  %5539 = vmatprep.subr.mxu0 0.0
  %5540 = vmatpush1.msra.mxu0 0.0
  %5541 = vmatprep.subr.mxu0 0.0
  %5542 = vmatpush1.msra.mxu0 0.0
  %5543 = vmatprep.subr.mxu0 0.0
  %5544 = vmatpush1.msra.mxu0 0.0
  %5545 = vmatprep.subr.mxu0 0.0
  %5546 = vmatpush1.msra.mxu0 0.0
  %5547 = vmatprep.subr.mxu0 0.0
  %5548 = vmatpush1.msra.mxu0 0.0
  %5549 = vmatprep.subr.mxu0 0.0
  %5550 = vmatpush1.msra.mxu0 0.0
  %5551 = vmatprep.subr.mxu0 0.0
  %5552 = vmatpush1.msra.mxu0 0.0
  %5553 = vmatprep.subr.mxu0 0.0
  %5554 = vmatpush1.msra.mxu0 0.0
  %5555 = vmatprep.subr.mxu0 0.0
  %5556 = vmatpush1.msra.mxu0 0.0
  %5557 = vmatprep.subr.mxu0 0.0
  %5558 = vmatpush1.msra.mxu0 0.0
  %5559 = vmatprep.subr.mxu0 0.0
  %5560 = vmatpush1.msra.mxu0 0.0
  %5561 = vmatprep.subr.mxu0 0.0
  %v5562 = vand.u32 %v5431, 4294901760
  %v5563 = vsub.f32 %v5431, %v5562
  %v5564 = vand.u32 %v5563, 4294901760
  %v5565 = vsub.f32 %v5563, %v5564
  %v5566 = vand.u32 %v5565, 4294901760
  %5567 = vmatpush1.msra.mxu0 %v5566
  %5568 = vmatprep.subr.mxu0 0.0
  %v5569 = vand.u32 %v5430, 4294901760
  %v5570 = vsub.f32 %v5430, %v5569
  %v5571 = vand.u32 %v5570, 4294901760
  %v5572 = vsub.f32 %v5570, %v5571
  %v5573 = vand.u32 %v5572, 4294901760
  %5574 = vmatpush1.msra.mxu0 %v5573
  %5575 = vmatprep.subr.mxu0 0.0
  %5576 = vmatpush2.msra.mxu0 0.0
  %5577 = vmatprep.subr.mxu0 0.0
  %5578 = vmatpush2.msra.mxu0 0.0
  %5579 = vmatprep.subr.mxu0 0.0
  %5580 = vmatpush2.msra.mxu0 0.0
  %5581 = vmatprep.subr.mxu0 0.0
  %5582 = vmatpush2.msra.mxu0 0.0
  %5583 = vmatprep.subr.mxu0 0.0
  %5584 = vmatpush2.msra.mxu0 0.0
  %5585 = vmatprep.subr.mxu0 0.0
  %5586 = vmatpush2.msra.mxu0 0.0
  %5587 = vmatprep.subr.mxu0 0.0
  %5588 = vmatpush2.msra.mxu0 0.0
  %5589 = vmatprep.subr.mxu0 0.0
  %5590 = vmatpush2.msra.mxu0 0.0
  %5591 = vmatprep.subr.mxu0 0.0
  %5592 = vmatpush2.msra.mxu0 0.0
  %5593 = vmatprep.subr.mxu0 0.0
  %5594 = vmatpush2.msra.mxu0 0.0
  %5595 = vmatprep.subr.mxu0 0.0
  %5596 = vmatpush2.msra.mxu0 0.0
  %5597 = vmatprep.subr.mxu0 0.0
  %5598 = vmatpush2.msra.mxu0 0.0
  %5599 = vmatprep.subr.mxu0 0.0
  %5600 = vmatpush2.msra.mxu0 0.0
  %5601 = vmatprep.subr.mxu0 0.0
  %5602 = vmatpush2.msra.mxu0 0.0
  %5603 = vmatprep.subr.mxu0 0.0
  %5604 = vmatpush2.msra.mxu0 0.0
  %5605 = vmatprep.subr.mxu0 0.0
  %5606 = vmatpush2.msra.mxu0 0.0
  %5607 = vmatprep.mubr.f32.mxu0 0.0
  %v5608 = vand.u32 %v5442, 4294901760
  %5609 = vmatmul.mubr.f32.gmra.mxu0 %v5608
  %v5610 = vpop.f32.mrf.mxu0
  %v5611 = vadd.f32 %v5520, %v5610
  %v5612 = vpop.f32.mrf.mxu0
  %5613 = vmatprep.mubr.f32.mxu0 0.0
  %v5614 = vand.u32 %v5444, 4294901760
  %5615 = vmatmul.mubr.f32.gmra.mxu0 %v5614
  %v5616 = vpop.f32.mrf.mxu0
  %v5617 = vadd.f32 %v5530, %v5616
  %v5618 = vpop.f32.mrf.mxu0
  %5619 = vdwg.mxu0
  %5620 = vmatprep.subr.mxu0 0.0
  %5621 = vmatpush1.msra.mxu0 0.0
  %5622 = vmatprep.subr.mxu0 0.0
  %5623 = vmatpush1.msra.mxu0 0.0
  %5624 = vmatprep.subr.mxu0 0.0
  %5625 = vmatpush1.msra.mxu0 0.0
  %5626 = vmatprep.subr.mxu0 0.0
  %5627 = vmatpush1.msra.mxu0 0.0
  %5628 = vmatprep.subr.mxu0 0.0
  %5629 = vmatpush1.msra.mxu0 0.0
  %5630 = vmatprep.subr.mxu0 0.0
  %5631 = vmatpush1.msra.mxu0 0.0
  %5632 = vmatprep.subr.mxu0 0.0
  %5633 = vmatpush1.msra.mxu0 0.0
  %5634 = vmatprep.subr.mxu0 0.0
  %5635 = vmatpush1.msra.mxu0 0.0
  %5636 = vmatprep.subr.mxu0 0.0
  %5637 = vmatpush1.msra.mxu0 0.0
  %5638 = vmatprep.subr.mxu0 0.0
  %5639 = vmatpush1.msra.mxu0 0.0
  %5640 = vmatprep.subr.mxu0 0.0
  %5641 = vmatpush1.msra.mxu0 0.0
  %5642 = vmatprep.subr.mxu0 0.0
  %5643 = vmatpush1.msra.mxu0 0.0
  %5644 = vmatprep.subr.mxu0 0.0
  %5645 = vmatpush1.msra.mxu0 0.0
  %5646 = vmatprep.subr.mxu0 0.0
  %5647 = vmatpush1.msra.mxu0 0.0
  %5648 = vmatprep.subr.mxu0 0.0
  %v5649 = vand.u32 %v5431, 4294901760
  %v5650 = vsub.f32 %v5431, %v5649
  %5651 = vmatpush1.msra.mxu0 %v5650
  %5652 = vmatprep.subr.mxu0 0.0
  %v5653 = vand.u32 %v5430, 4294901760
  %v5654 = vsub.f32 %v5430, %v5653
  %5655 = vmatpush1.msra.mxu0 %v5654
  %5656 = vmatprep.subr.mxu0 0.0
  %5657 = vmatpush2.msra.mxu0 0.0
  %5658 = vmatprep.subr.mxu0 0.0
  %5659 = vmatpush2.msra.mxu0 0.0
  %5660 = vmatprep.subr.mxu0 0.0
  %5661 = vmatpush2.msra.mxu0 0.0
  %5662 = vmatprep.subr.mxu0 0.0
  %5663 = vmatpush2.msra.mxu0 0.0
  %5664 = vmatprep.subr.mxu0 0.0
  %5665 = vmatpush2.msra.mxu0 0.0
  %5666 = vmatprep.subr.mxu0 0.0
  %5667 = vmatpush2.msra.mxu0 0.0
  %5668 = vmatprep.subr.mxu0 0.0
  %5669 = vmatpush2.msra.mxu0 0.0
  %5670 = vmatprep.subr.mxu0 0.0
  %5671 = vmatpush2.msra.mxu0 0.0
  %5672 = vmatprep.subr.mxu0 0.0
  %5673 = vmatpush2.msra.mxu0 0.0
  %5674 = vmatprep.subr.mxu0 0.0
  %5675 = vmatpush2.msra.mxu0 0.0
  %5676 = vmatprep.subr.mxu0 0.0
  %5677 = vmatpush2.msra.mxu0 0.0
  %5678 = vmatprep.subr.mxu0 0.0
  %5679 = vmatpush2.msra.mxu0 0.0
  %5680 = vmatprep.subr.mxu0 0.0
  %5681 = vmatpush2.msra.mxu0 0.0
  %5682 = vmatprep.subr.mxu0 0.0
  %5683 = vmatpush2.msra.mxu0 0.0
  %5684 = vmatprep.subr.mxu0 0.0
  %5685 = vmatpush2.msra.mxu0 0.0
  %5686 = vmatprep.subr.mxu0 0.0
  %5687 = vmatpush2.msra.mxu0 0.0
  %5688 = vmatprep.mubr.f32.mxu0 0.0
  %v5689 = vand.u32 %v5442, 4294901760
  %v5690 = vsub.f32 %v5442, %v5689
  %5691 = vmatmul.mubr.f32.gmra.mxu0 %v5690
  %v5692 = vpop.f32.mrf.mxu0
  %v5693 = vadd.f32 %v5611, %v5692
  %v5694 = vpop.f32.mrf.mxu0
  %5695 = vmatprep.mubr.f32.mxu0 0.0
  %v5696 = vand.u32 %v5444, 4294901760
  %v5697 = vsub.f32 %v5444, %v5696
  %5698 = vmatmul.mubr.f32.gmra.mxu0 %v5697
  %v5699 = vpop.f32.mrf.mxu0
  %v5700 = vadd.f32 %v5617, %v5699
  %v5701 = vpop.f32.mrf.mxu0
  %5702 = vdwg.mxu0
  %5703 = vmatprep.subr.mxu0 0.0
  %5704 = vmatpush1.msra.mxu0 0.0
  %5705 = vmatprep.subr.mxu0 0.0
  %5706 = vmatpush1.msra.mxu0 0.0
  %5707 = vmatprep.subr.mxu0 0.0
  %5708 = vmatpush1.msra.mxu0 0.0
  %5709 = vmatprep.subr.mxu0 0.0
  %5710 = vmatpush1.msra.mxu0 0.0
  %5711 = vmatprep.subr.mxu0 0.0
  %5712 = vmatpush1.msra.mxu0 0.0
  %5713 = vmatprep.subr.mxu0 0.0
  %5714 = vmatpush1.msra.mxu0 0.0
  %5715 = vmatprep.subr.mxu0 0.0
  %5716 = vmatpush1.msra.mxu0 0.0
  %5717 = vmatprep.subr.mxu0 0.0
  %5718 = vmatpush1.msra.mxu0 0.0
  %5719 = vmatprep.subr.mxu0 0.0
  %5720 = vmatpush1.msra.mxu0 0.0
  %5721 = vmatprep.subr.mxu0 0.0
  %5722 = vmatpush1.msra.mxu0 0.0
  %5723 = vmatprep.subr.mxu0 0.0
  %5724 = vmatpush1.msra.mxu0 0.0
  %5725 = vmatprep.subr.mxu0 0.0
  %5726 = vmatpush1.msra.mxu0 0.0
  %5727 = vmatprep.subr.mxu0 0.0
  %5728 = vmatpush1.msra.mxu0 0.0
  %5729 = vmatprep.subr.mxu0 0.0
  %5730 = vmatpush1.msra.mxu0 0.0
  %5731 = vmatprep.subr.mxu0 0.0
  %v5732 = vand.u32 %v5431, 4294901760
  %5733 = vmatpush1.msra.mxu0 %v5732
  %5734 = vmatprep.subr.mxu0 0.0
  %v5735 = vand.u32 %v5430, 4294901760
  %5736 = vmatpush1.msra.mxu0 %v5735
  %5737 = vmatprep.subr.mxu0 0.0
  %5738 = vmatpush2.msra.mxu0 0.0
  %5739 = vmatprep.subr.mxu0 0.0
  %5740 = vmatpush2.msra.mxu0 0.0
  %5741 = vmatprep.subr.mxu0 0.0
  %5742 = vmatpush2.msra.mxu0 0.0
  %5743 = vmatprep.subr.mxu0 0.0
  %5744 = vmatpush2.msra.mxu0 0.0
  %5745 = vmatprep.subr.mxu0 0.0
  %5746 = vmatpush2.msra.mxu0 0.0
  %5747 = vmatprep.subr.mxu0 0.0
  %5748 = vmatpush2.msra.mxu0 0.0
  %5749 = vmatprep.subr.mxu0 0.0
  %5750 = vmatpush2.msra.mxu0 0.0
  %5751 = vmatprep.subr.mxu0 0.0
  %5752 = vmatpush2.msra.mxu0 0.0
  %5753 = vmatprep.subr.mxu0 0.0
  %5754 = vmatpush2.msra.mxu0 0.0
  %5755 = vmatprep.subr.mxu0 0.0
  %5756 = vmatpush2.msra.mxu0 0.0
  %5757 = vmatprep.subr.mxu0 0.0
  %5758 = vmatpush2.msra.mxu0 0.0
  %5759 = vmatprep.subr.mxu0 0.0
  %5760 = vmatpush2.msra.mxu0 0.0
  %5761 = vmatprep.subr.mxu0 0.0
  %5762 = vmatpush2.msra.mxu0 0.0
  %5763 = vmatprep.subr.mxu0 0.0
  %5764 = vmatpush2.msra.mxu0 0.0
  %5765 = vmatprep.subr.mxu0 0.0
  %5766 = vmatpush2.msra.mxu0 0.0
  %5767 = vmatprep.subr.mxu0 0.0
  %5768 = vmatpush2.msra.mxu0 0.0
  %5769 = vmatprep.mubr.f32.mxu0 0.0
  %v5770 = vand.u32 %v5442, 4294901760
  %v5771 = vsub.f32 %v5442, %v5770
  %v5772 = vand.u32 %v5771, 4294901760
  %5773 = vmatmul.mubr.f32.gmra.mxu0 %v5772
  %v5774 = vpop.f32.mrf.mxu0
  %v5775 = vadd.f32 %v5693, %v5774
  %v5776 = vpop.f32.mrf.mxu0
  %5777 = vmatprep.mubr.f32.mxu0 0.0
  %v5778 = vand.u32 %v5444, 4294901760
  %v5779 = vsub.f32 %v5444, %v5778
  %v5780 = vand.u32 %v5779, 4294901760
  %5781 = vmatmul.mubr.f32.gmra.mxu0 %v5780
  %v5782 = vpop.f32.mrf.mxu0
  %v5783 = vadd.f32 %v5700, %v5782
  %v5784 = vpop.f32.mrf.mxu0
  %5785 = vdwg.mxu0
  %5786 = vmatprep.subr.mxu0 0.0
  %5787 = vmatpush1.msra.mxu0 0.0
  %5788 = vmatprep.subr.mxu0 0.0
  %5789 = vmatpush1.msra.mxu0 0.0
  %5790 = vmatprep.subr.mxu0 0.0
  %5791 = vmatpush1.msra.mxu0 0.0
  %5792 = vmatprep.subr.mxu0 0.0
  %5793 = vmatpush1.msra.mxu0 0.0
  %5794 = vmatprep.subr.mxu0 0.0
  %5795 = vmatpush1.msra.mxu0 0.0
  %5796 = vmatprep.subr.mxu0 0.0
  %5797 = vmatpush1.msra.mxu0 0.0
  %5798 = vmatprep.subr.mxu0 0.0
  %5799 = vmatpush1.msra.mxu0 0.0
  %5800 = vmatprep.subr.mxu0 0.0
  %5801 = vmatpush1.msra.mxu0 0.0
  %5802 = vmatprep.subr.mxu0 0.0
  %5803 = vmatpush1.msra.mxu0 0.0
  %5804 = vmatprep.subr.mxu0 0.0
  %5805 = vmatpush1.msra.mxu0 0.0
  %5806 = vmatprep.subr.mxu0 0.0
  %5807 = vmatpush1.msra.mxu0 0.0
  %5808 = vmatprep.subr.mxu0 0.0
  %5809 = vmatpush1.msra.mxu0 0.0
  %5810 = vmatprep.subr.mxu0 0.0
  %5811 = vmatpush1.msra.mxu0 0.0
  %5812 = vmatprep.subr.mxu0 0.0
  %5813 = vmatpush1.msra.mxu0 0.0
  %5814 = vmatprep.subr.mxu0 0.0
  %v5815 = vand.u32 %v5431, 4294901760
  %v5816 = vsub.f32 %v5431, %v5815
  %v5817 = vand.u32 %v5816, 4294901760
  %5818 = vmatpush1.msra.mxu0 %v5817
  %5819 = vmatprep.subr.mxu0 0.0
  %v5820 = vand.u32 %v5430, 4294901760
  %v5821 = vsub.f32 %v5430, %v5820
  %v5822 = vand.u32 %v5821, 4294901760
  %5823 = vmatpush1.msra.mxu0 %v5822
  %5824 = vmatprep.subr.mxu0 0.0
  %5825 = vmatpush2.msra.mxu0 0.0
  %5826 = vmatprep.subr.mxu0 0.0
  %5827 = vmatpush2.msra.mxu0 0.0
  %5828 = vmatprep.subr.mxu0 0.0
  %5829 = vmatpush2.msra.mxu0 0.0
  %5830 = vmatprep.subr.mxu0 0.0
  %5831 = vmatpush2.msra.mxu0 0.0
  %5832 = vmatprep.subr.mxu0 0.0
  %5833 = vmatpush2.msra.mxu0 0.0
  %5834 = vmatprep.subr.mxu0 0.0
  %5835 = vmatpush2.msra.mxu0 0.0
  %5836 = vmatprep.subr.mxu0 0.0
  %5837 = vmatpush2.msra.mxu0 0.0
  %5838 = vmatprep.subr.mxu0 0.0
  %5839 = vmatpush2.msra.mxu0 0.0
  %5840 = vmatprep.subr.mxu0 0.0
  %5841 = vmatpush2.msra.mxu0 0.0
  %5842 = vmatprep.subr.mxu0 0.0
  %5843 = vmatpush2.msra.mxu0 0.0
  %5844 = vmatprep.subr.mxu0 0.0
  %5845 = vmatpush2.msra.mxu0 0.0
  %5846 = vmatprep.subr.mxu0 0.0
  %5847 = vmatpush2.msra.mxu0 0.0
  %5848 = vmatprep.subr.mxu0 0.0
  %5849 = vmatpush2.msra.mxu0 0.0
  %5850 = vmatprep.subr.mxu0 0.0
  %5851 = vmatpush2.msra.mxu0 0.0
  %5852 = vmatprep.subr.mxu0 0.0
  %5853 = vmatpush2.msra.mxu0 0.0
  %5854 = vmatprep.subr.mxu0 0.0
  %5855 = vmatpush2.msra.mxu0 0.0
  %5856 = vmatprep.mubr.f32.mxu0 0.0
  %v5857 = vand.u32 %v5442, 4294901760
  %5858 = vmatmul.mubr.f32.gmra.mxu0 %v5857
  %v5859 = vpop.f32.mrf.mxu0
  %v5860 = vadd.f32 %v5775, %v5859
  %v5861 = vpop.f32.mrf.mxu0
  %5862 = vmatprep.mubr.f32.mxu0 0.0
  %v5863 = vand.u32 %v5444, 4294901760
  %5864 = vmatmul.mubr.f32.gmra.mxu0 %v5863
  %v5865 = vpop.f32.mrf.mxu0
  %v5866 = vadd.f32 %v5783, %v5865
  %v5867 = vpop.f32.mrf.mxu0
  %5868 = vdwg.mxu0
  %5869 = vmatprep.subr.mxu0 0.0
  %5870 = vmatpush1.msra.mxu0 0.0
  %5871 = vmatprep.subr.mxu0 0.0
  %5872 = vmatpush1.msra.mxu0 0.0
  %5873 = vmatprep.subr.mxu0 0.0
  %5874 = vmatpush1.msra.mxu0 0.0
  %5875 = vmatprep.subr.mxu0 0.0
  %5876 = vmatpush1.msra.mxu0 0.0
  %5877 = vmatprep.subr.mxu0 0.0
  %5878 = vmatpush1.msra.mxu0 0.0
  %5879 = vmatprep.subr.mxu0 0.0
  %5880 = vmatpush1.msra.mxu0 0.0
  %5881 = vmatprep.subr.mxu0 0.0
  %5882 = vmatpush1.msra.mxu0 0.0
  %5883 = vmatprep.subr.mxu0 0.0
  %5884 = vmatpush1.msra.mxu0 0.0
  %5885 = vmatprep.subr.mxu0 0.0
  %5886 = vmatpush1.msra.mxu0 0.0
  %5887 = vmatprep.subr.mxu0 0.0
  %5888 = vmatpush1.msra.mxu0 0.0
  %5889 = vmatprep.subr.mxu0 0.0
  %5890 = vmatpush1.msra.mxu0 0.0
  %5891 = vmatprep.subr.mxu0 0.0
  %5892 = vmatpush1.msra.mxu0 0.0
  %5893 = vmatprep.subr.mxu0 0.0
  %5894 = vmatpush1.msra.mxu0 0.0
  %5895 = vmatprep.subr.mxu0 0.0
  %5896 = vmatpush1.msra.mxu0 0.0
  %5897 = vmatprep.subr.mxu0 0.0
  %v5898 = vand.u32 %v5431, 4294901760
  %5899 = vmatpush1.msra.mxu0 %v5898
  %5900 = vmatprep.subr.mxu0 0.0
  %v5901 = vand.u32 %v5430, 4294901760
  %5902 = vmatpush1.msra.mxu0 %v5901
  %5903 = vmatprep.subr.mxu0 0.0
  %5904 = vmatpush2.msra.mxu0 0.0
  %5905 = vmatprep.subr.mxu0 0.0
  %5906 = vmatpush2.msra.mxu0 0.0
  %5907 = vmatprep.subr.mxu0 0.0
  %5908 = vmatpush2.msra.mxu0 0.0
  %5909 = vmatprep.subr.mxu0 0.0
  %5910 = vmatpush2.msra.mxu0 0.0
  %5911 = vmatprep.subr.mxu0 0.0
  %5912 = vmatpush2.msra.mxu0 0.0
  %5913 = vmatprep.subr.mxu0 0.0
  %5914 = vmatpush2.msra.mxu0 0.0
  %5915 = vmatprep.subr.mxu0 0.0
  %5916 = vmatpush2.msra.mxu0 0.0
  %5917 = vmatprep.subr.mxu0 0.0
  %5918 = vmatpush2.msra.mxu0 0.0
  %5919 = vmatprep.subr.mxu0 0.0
  %5920 = vmatpush2.msra.mxu0 0.0
  %5921 = vmatprep.subr.mxu0 0.0
  %5922 = vmatpush2.msra.mxu0 0.0
  %5923 = vmatprep.subr.mxu0 0.0
  %5924 = vmatpush2.msra.mxu0 0.0
  %5925 = vmatprep.subr.mxu0 0.0
  %5926 = vmatpush2.msra.mxu0 0.0
  %5927 = vmatprep.subr.mxu0 0.0
  %5928 = vmatpush2.msra.mxu0 0.0
  %5929 = vmatprep.subr.mxu0 0.0
  %5930 = vmatpush2.msra.mxu0 0.0
  %5931 = vmatprep.subr.mxu0 0.0
  %5932 = vmatpush2.msra.mxu0 0.0
  %5933 = vmatprep.subr.mxu0 0.0
  %5934 = vmatpush2.msra.mxu0 0.0
  %5935 = vmatprep.mubr.f32.mxu0 0.0
  %v5936 = vand.u32 %v5442, 4294901760
  %5937 = vmatmul.mubr.f32.gmra.mxu0 %v5936
  %v5938 = vpop.f32.mrf.mxu0
  %v5939 = vadd.f32 %v5860, %v5938
  %v5940 = vpop.f32.mrf.mxu0
  %5941 = vmatprep.mubr.f32.mxu0 0.0
  %v5942 = vand.u32 %v5444, 4294901760
  %5943 = vmatmul.mubr.f32.gmra.mxu0 %v5942
  %v5944 = vpop.f32.mrf.mxu0
  %v5945 = vadd.f32 %v5866, %v5944
  %v5946 = vpop.f32.mrf.mxu0
  %5947 = vdwg.mxu0
  %v5948 = vmul.f32 %v4880, %v5945
  %v5949 = vmul.f32 %v4883, %v5945
  %v5950 = vmul.f32 %v4886, %v5945
  %v5951 = vld [vmem:[%s4 + $0xd0] sm:$0xff]
  %v5952 = vld [vmem:[%s4 + $0xd8] sm:$0xff]
  %v5953 = vld [vmem:[%s4 + $0xe0] sm:$0xff]
  %v5954 = vld [vmem:[%s4 + $0xe8] sm:$0xff]
  %5956 = vset.pattern.permute.xlu0 32
  %5957 = vperm.xlu0 %5956, %v5951
  %v5958 = vpop.permute.xlu0 %5957
  %5961 = vset.pattern.permute.xlu0 32
  %5962 = vperm.xlu0 %5961, %v5952
  %v5963 = vpop.permute.xlu0 %5962
  %5966 = vset.pattern.permute.xlu0 32
  %5967 = vperm.xlu0 %5966, %v5953
  %v5968 = vpop.permute.xlu0 %5967
  %5971 = vset.pattern.permute.xlu0 32
  %5972 = vperm.xlu0 %5971, %v5954
  %v5973 = vpop.permute.xlu0 %5972
  %v5975 = vsel %vm48, %v5951, 0
  %v5977 = vsel %vm48, %v5952, 0
  %v5979 = vsel %vm48, %v5953, 0
  %v5981 = vsel %vm48, %v5954, 0
  %5983 = vmatprep.subr.mxu0 0.0
  %5984 = vmatpush1.msra.mxu0 0.0
  %5985 = vmatprep.subr.mxu0 0.0
  %5986 = vmatpush1.msra.mxu0 0.0
  %5987 = vmatprep.subr.mxu0 0.0
  %5988 = vmatpush1.msra.mxu0 0.0
  %5989 = vmatprep.subr.mxu0 0.0
  %5990 = vmatpush1.msra.mxu0 0.0
  %5991 = vmatprep.subr.mxu0 0.0
  %5992 = vmatpush1.msra.mxu0 0.0
  %5993 = vmatprep.subr.mxu0 0.0
  %5994 = vmatpush1.msra.mxu0 0.0
  %5995 = vmatprep.subr.mxu0 0.0
  %5996 = vmatpush1.msra.mxu0 0.0
  %5997 = vmatprep.subr.mxu0 0.0
  %5998 = vmatpush1.msra.mxu0 0.0
  %5999 = vmatprep.subr.mxu0 0.0
  %6000 = vmatpush1.msra.mxu0 0.0
  %6001 = vmatprep.subr.mxu0 0.0
  %6002 = vmatpush1.msra.mxu0 0.0
  %6003 = vmatprep.subr.mxu0 0.0
  %6004 = vmatpush1.msra.mxu0 0.0
  %6005 = vmatprep.subr.mxu0 0.0
  %6006 = vmatpush1.msra.mxu0 0.0
  %6007 = vmatprep.subr.mxu0 0.0
  %v6008 = vand.u32 %v5950, 4294901760
  %6009 = vmatpush1.msra.mxu0 %v6008
  %6010 = vmatprep.subr.mxu0 0.0
  %v6011 = vand.u32 %v5949, 4294901760
  %6012 = vmatpush1.msra.mxu0 %v6011
  %6013 = vmatprep.subr.mxu0 0.0
  %v6014 = vand.u32 %v5948, 4294901760
  %6015 = vmatpush1.msra.mxu0 %v6014
  %6016 = vmatprep.subr.mxu0 0.0
  %v6017 = vand.u32 %v5939, 4294901760
  %6018 = vmatpush1.msra.mxu0 %v6017
  %6019 = vmatprep.subr.mxu0 0.0
  %6020 = vmatpush2.msra.mxu0 0.0
  %6021 = vmatprep.subr.mxu0 0.0
  %6022 = vmatpush2.msra.mxu0 0.0
  %6023 = vmatprep.subr.mxu0 0.0
  %6024 = vmatpush2.msra.mxu0 0.0
  %6025 = vmatprep.subr.mxu0 0.0
  %6026 = vmatpush2.msra.mxu0 0.0
  %6027 = vmatprep.subr.mxu0 0.0
  %6028 = vmatpush2.msra.mxu0 0.0
  %6029 = vmatprep.subr.mxu0 0.0
  %6030 = vmatpush2.msra.mxu0 0.0
  %6031 = vmatprep.subr.mxu0 0.0
  %6032 = vmatpush2.msra.mxu0 0.0
  %6033 = vmatprep.subr.mxu0 0.0
  %6034 = vmatpush2.msra.mxu0 0.0
  %6035 = vmatprep.subr.mxu0 0.0
  %6036 = vmatpush2.msra.mxu0 0.0
  %6037 = vmatprep.subr.mxu0 0.0
  %6038 = vmatpush2.msra.mxu0 0.0
  %6039 = vmatprep.subr.mxu0 0.0
  %6040 = vmatpush2.msra.mxu0 0.0
  %6041 = vmatprep.subr.mxu0 0.0
  %6042 = vmatpush2.msra.mxu0 0.0
  %6043 = vmatprep.subr.mxu0 0.0
  %6044 = vmatpush2.msra.mxu0 0.0
  %6045 = vmatprep.subr.mxu0 0.0
  %6046 = vmatpush2.msra.mxu0 0.0
  %6047 = vmatprep.subr.mxu0 0.0
  %6048 = vmatpush2.msra.mxu0 0.0
  %6049 = vmatprep.subr.mxu0 0.0
  %6050 = vmatpush2.msra.mxu0 0.0
  %6051 = vmatprep.mubr.f32.mxu0 0.0
  %v6052 = vand.u32 %v5975, 4294901760
  %v6053 = vsub.f32 %v5975, %v6052
  %v6054 = vand.u32 %v6053, 4294901760
  %v6055 = vsub.f32 %v6053, %v6054
  %v6056 = vand.u32 %v6055, 4294901760
  %6057 = vmatmul.mubr.f32.gmra.mxu0 %v6056
  %v6058 = vpop.f32.mrf.mxu0
  %v6059 = vadd.f32 %v5958, %v6058
  %v6060 = vpop.f32.mrf.mxu0
  %6061 = vmatprep.mubr.f32.mxu0 0.0
  %v6062 = vand.u32 %v5977, 4294901760
  %v6063 = vsub.f32 %v5977, %v6062
  %v6064 = vand.u32 %v6063, 4294901760
  %v6065 = vsub.f32 %v6063, %v6064
  %v6066 = vand.u32 %v6065, 4294901760
  %6067 = vmatmul.mubr.f32.gmra.mxu0 %v6066
  %v6068 = vpop.f32.mrf.mxu0
  %v6069 = vadd.f32 %v5963, %v6068
  %v6070 = vpop.f32.mrf.mxu0
  %6071 = vmatprep.mubr.f32.mxu0 0.0
  %v6072 = vand.u32 %v5979, 4294901760
  %v6073 = vsub.f32 %v5979, %v6072
  %v6074 = vand.u32 %v6073, 4294901760
  %v6075 = vsub.f32 %v6073, %v6074
  %v6076 = vand.u32 %v6075, 4294901760
  %6077 = vmatmul.mubr.f32.gmra.mxu0 %v6076
  %v6078 = vpop.f32.mrf.mxu0
  %v6079 = vadd.f32 %v5968, %v6078
  %v6080 = vpop.f32.mrf.mxu0
  %6081 = vmatprep.mubr.f32.mxu0 0.0
  %v6082 = vand.u32 %v5981, 4294901760
  %v6083 = vsub.f32 %v5981, %v6082
  %v6084 = vand.u32 %v6083, 4294901760
  %v6085 = vsub.f32 %v6083, %v6084
  %v6086 = vand.u32 %v6085, 4294901760
  %6087 = vmatmul.mubr.f32.gmra.mxu0 %v6086
  %v6088 = vpop.f32.mrf.mxu0
  %v6089 = vadd.f32 %v5973, %v6088
  %v6090 = vpop.f32.mrf.mxu0
  %6091 = vdwg.mxu0
  %6092 = vmatprep.subr.mxu0 0.0
  %6093 = vmatpush1.msra.mxu0 0.0
  %6094 = vmatprep.subr.mxu0 0.0
  %6095 = vmatpush1.msra.mxu0 0.0
  %6096 = vmatprep.subr.mxu0 0.0
  %6097 = vmatpush1.msra.mxu0 0.0
  %6098 = vmatprep.subr.mxu0 0.0
  %6099 = vmatpush1.msra.mxu0 0.0
  %6100 = vmatprep.subr.mxu0 0.0
  %6101 = vmatpush1.msra.mxu0 0.0
  %6102 = vmatprep.subr.mxu0 0.0
  %6103 = vmatpush1.msra.mxu0 0.0
  %6104 = vmatprep.subr.mxu0 0.0
  %6105 = vmatpush1.msra.mxu0 0.0
  %6106 = vmatprep.subr.mxu0 0.0
  %6107 = vmatpush1.msra.mxu0 0.0
  %6108 = vmatprep.subr.mxu0 0.0
  %6109 = vmatpush1.msra.mxu0 0.0
  %6110 = vmatprep.subr.mxu0 0.0
  %6111 = vmatpush1.msra.mxu0 0.0
  %6112 = vmatprep.subr.mxu0 0.0
  %6113 = vmatpush1.msra.mxu0 0.0
  %6114 = vmatprep.subr.mxu0 0.0
  %6115 = vmatpush1.msra.mxu0 0.0
  %6116 = vmatprep.subr.mxu0 0.0
  %v6117 = vand.u32 %v5950, 4294901760
  %v6118 = vsub.f32 %v5950, %v6117
  %v6119 = vand.u32 %v6118, 4294901760
  %v6120 = vsub.f32 %v6118, %v6119
  %v6121 = vand.u32 %v6120, 4294901760
  %6122 = vmatpush1.msra.mxu0 %v6121
  %6123 = vmatprep.subr.mxu0 0.0
  %v6124 = vand.u32 %v5949, 4294901760
  %v6125 = vsub.f32 %v5949, %v6124
  %v6126 = vand.u32 %v6125, 4294901760
  %v6127 = vsub.f32 %v6125, %v6126
  %v6128 = vand.u32 %v6127, 4294901760
  %6129 = vmatpush1.msra.mxu0 %v6128
  %6130 = vmatprep.subr.mxu0 0.0
  %v6131 = vand.u32 %v5948, 4294901760
  %v6132 = vsub.f32 %v5948, %v6131
  %v6133 = vand.u32 %v6132, 4294901760
  %v6134 = vsub.f32 %v6132, %v6133
  %v6135 = vand.u32 %v6134, 4294901760
  %6136 = vmatpush1.msra.mxu0 %v6135
  %6137 = vmatprep.subr.mxu0 0.0
  %v6138 = vand.u32 %v5939, 4294901760
  %v6139 = vsub.f32 %v5939, %v6138
  %v6140 = vand.u32 %v6139, 4294901760
  %v6141 = vsub.f32 %v6139, %v6140
  %v6142 = vand.u32 %v6141, 4294901760
  %6143 = vmatpush1.msra.mxu0 %v6142
  %6144 = vmatprep.subr.mxu0 0.0
  %6145 = vmatpush2.msra.mxu0 0.0
  %6146 = vmatprep.subr.mxu0 0.0
  %6147 = vmatpush2.msra.mxu0 0.0
  %6148 = vmatprep.subr.mxu0 0.0
  %6149 = vmatpush2.msra.mxu0 0.0
  %6150 = vmatprep.subr.mxu0 0.0
  %6151 = vmatpush2.msra.mxu0 0.0
  %6152 = vmatprep.subr.mxu0 0.0
  %6153 = vmatpush2.msra.mxu0 0.0
  %6154 = vmatprep.subr.mxu0 0.0
  %6155 = vmatpush2.msra.mxu0 0.0
  %6156 = vmatprep.subr.mxu0 0.0
  %6157 = vmatpush2.msra.mxu0 0.0
  %6158 = vmatprep.subr.mxu0 0.0
  %6159 = vmatpush2.msra.mxu0 0.0
  %6160 = vmatprep.subr.mxu0 0.0
  %6161 = vmatpush2.msra.mxu0 0.0
  %6162 = vmatprep.subr.mxu0 0.0
  %6163 = vmatpush2.msra.mxu0 0.0
  %6164 = vmatprep.subr.mxu0 0.0
  %6165 = vmatpush2.msra.mxu0 0.0
  %6166 = vmatprep.subr.mxu0 0.0
  %6167 = vmatpush2.msra.mxu0 0.0
  %6168 = vmatprep.subr.mxu0 0.0
  %6169 = vmatpush2.msra.mxu0 0.0
  %6170 = vmatprep.subr.mxu0 0.0
  %6171 = vmatpush2.msra.mxu0 0.0
  %6172 = vmatprep.subr.mxu0 0.0
  %6173 = vmatpush2.msra.mxu0 0.0
  %6174 = vmatprep.subr.mxu0 0.0
  %6175 = vmatpush2.msra.mxu0 0.0
  %6176 = vmatprep.mubr.f32.mxu0 0.0
  %v6177 = vand.u32 %v5975, 4294901760
  %6178 = vmatmul.mubr.f32.gmra.mxu0 %v6177
  %v6179 = vpop.f32.mrf.mxu0
  %v6180 = vadd.f32 %v6059, %v6179
  %v6181 = vpop.f32.mrf.mxu0
  %6182 = vmatprep.mubr.f32.mxu0 0.0
  %v6183 = vand.u32 %v5977, 4294901760
  %6184 = vmatmul.mubr.f32.gmra.mxu0 %v6183
  %v6185 = vpop.f32.mrf.mxu0
  %v6186 = vadd.f32 %v6069, %v6185
  %v6187 = vpop.f32.mrf.mxu0
  %6188 = vmatprep.mubr.f32.mxu0 0.0
  %v6189 = vand.u32 %v5979, 4294901760
  %6190 = vmatmul.mubr.f32.gmra.mxu0 %v6189
  %v6191 = vpop.f32.mrf.mxu0
  %v6192 = vadd.f32 %v6079, %v6191
  %v6193 = vpop.f32.mrf.mxu0
  %6194 = vmatprep.mubr.f32.mxu0 0.0
  %v6195 = vand.u32 %v5981, 4294901760
  %6196 = vmatmul.mubr.f32.gmra.mxu0 %v6195
  %v6197 = vpop.f32.mrf.mxu0
  %v6198 = vadd.f32 %v6089, %v6197
  %v6199 = vpop.f32.mrf.mxu0
  %6200 = vdwg.mxu0
  %6201 = vmatprep.subr.mxu0 0.0
  %6202 = vmatpush1.msra.mxu0 0.0
  %6203 = vmatprep.subr.mxu0 0.0
  %6204 = vmatpush1.msra.mxu0 0.0
  %6205 = vmatprep.subr.mxu0 0.0
  %6206 = vmatpush1.msra.mxu0 0.0
  %6207 = vmatprep.subr.mxu0 0.0
  %6208 = vmatpush1.msra.mxu0 0.0
  %6209 = vmatprep.subr.mxu0 0.0
  %6210 = vmatpush1.msra.mxu0 0.0
  %6211 = vmatprep.subr.mxu0 0.0
  %6212 = vmatpush1.msra.mxu0 0.0
  %6213 = vmatprep.subr.mxu0 0.0
  %6214 = vmatpush1.msra.mxu0 0.0
  %6215 = vmatprep.subr.mxu0 0.0
  %6216 = vmatpush1.msra.mxu0 0.0
  %6217 = vmatprep.subr.mxu0 0.0
  %6218 = vmatpush1.msra.mxu0 0.0
  %6219 = vmatprep.subr.mxu0 0.0
  %6220 = vmatpush1.msra.mxu0 0.0
  %6221 = vmatprep.subr.mxu0 0.0
  %6222 = vmatpush1.msra.mxu0 0.0
  %6223 = vmatprep.subr.mxu0 0.0
  %6224 = vmatpush1.msra.mxu0 0.0
  %6225 = vmatprep.subr.mxu0 0.0
  %v6226 = vand.u32 %v5950, 4294901760
  %v6227 = vsub.f32 %v5950, %v6226
  %6228 = vmatpush1.msra.mxu0 %v6227
  %6229 = vmatprep.subr.mxu0 0.0
  %v6230 = vand.u32 %v5949, 4294901760
  %v6231 = vsub.f32 %v5949, %v6230
  %6232 = vmatpush1.msra.mxu0 %v6231
  %6233 = vmatprep.subr.mxu0 0.0
  %v6234 = vand.u32 %v5948, 4294901760
  %v6235 = vsub.f32 %v5948, %v6234
  %6236 = vmatpush1.msra.mxu0 %v6235
  %6237 = vmatprep.subr.mxu0 0.0
  %v6238 = vand.u32 %v5939, 4294901760
  %v6239 = vsub.f32 %v5939, %v6238
  %6240 = vmatpush1.msra.mxu0 %v6239
  %6241 = vmatprep.subr.mxu0 0.0
  %6242 = vmatpush2.msra.mxu0 0.0
  %6243 = vmatprep.subr.mxu0 0.0
  %6244 = vmatpush2.msra.mxu0 0.0
  %6245 = vmatprep.subr.mxu0 0.0
  %6246 = vmatpush2.msra.mxu0 0.0
  %6247 = vmatprep.subr.mxu0 0.0
  %6248 = vmatpush2.msra.mxu0 0.0
  %6249 = vmatprep.subr.mxu0 0.0
  %6250 = vmatpush2.msra.mxu0 0.0
  %6251 = vmatprep.subr.mxu0 0.0
  %6252 = vmatpush2.msra.mxu0 0.0
  %6253 = vmatprep.subr.mxu0 0.0
  %6254 = vmatpush2.msra.mxu0 0.0
  %6255 = vmatprep.subr.mxu0 0.0
  %6256 = vmatpush2.msra.mxu0 0.0
  %6257 = vmatprep.subr.mxu0 0.0
  %6258 = vmatpush2.msra.mxu0 0.0
  %6259 = vmatprep.subr.mxu0 0.0
  %6260 = vmatpush2.msra.mxu0 0.0
  %6261 = vmatprep.subr.mxu0 0.0
  %6262 = vmatpush2.msra.mxu0 0.0
  %6263 = vmatprep.subr.mxu0 0.0
  %6264 = vmatpush2.msra.mxu0 0.0
  %6265 = vmatprep.subr.mxu0 0.0
  %6266 = vmatpush2.msra.mxu0 0.0
  %6267 = vmatprep.subr.mxu0 0.0
  %6268 = vmatpush2.msra.mxu0 0.0
  %6269 = vmatprep.subr.mxu0 0.0
  %6270 = vmatpush2.msra.mxu0 0.0
  %6271 = vmatprep.subr.mxu0 0.0
  %6272 = vmatpush2.msra.mxu0 0.0
  %6273 = vmatprep.mubr.f32.mxu0 0.0
  %v6274 = vand.u32 %v5975, 4294901760
  %v6275 = vsub.f32 %v5975, %v6274
  %6276 = vmatmul.mubr.f32.gmra.mxu0 %v6275
  %v6277 = vpop.f32.mrf.mxu0
  %v6278 = vadd.f32 %v6180, %v6277
  %v6279 = vpop.f32.mrf.mxu0
  %6280 = vmatprep.mubr.f32.mxu0 0.0
  %v6281 = vand.u32 %v5977, 4294901760
  %v6282 = vsub.f32 %v5977, %v6281
  %6283 = vmatmul.mubr.f32.gmra.mxu0 %v6282
  %v6284 = vpop.f32.mrf.mxu0
  %v6285 = vadd.f32 %v6186, %v6284
  %v6286 = vpop.f32.mrf.mxu0
  %6287 = vmatprep.mubr.f32.mxu0 0.0
  %v6288 = vand.u32 %v5979, 4294901760
  %v6289 = vsub.f32 %v5979, %v6288
  %6290 = vmatmul.mubr.f32.gmra.mxu0 %v6289
  %v6291 = vpop.f32.mrf.mxu0
  %v6292 = vadd.f32 %v6192, %v6291
  %v6293 = vpop.f32.mrf.mxu0
  %6294 = vmatprep.mubr.f32.mxu0 0.0
  %v6295 = vand.u32 %v5981, 4294901760
  %v6296 = vsub.f32 %v5981, %v6295
  %6297 = vmatmul.mubr.f32.gmra.mxu0 %v6296
  %v6298 = vpop.f32.mrf.mxu0
  %v6299 = vadd.f32 %v6198, %v6298
  %v6300 = vpop.f32.mrf.mxu0
  %6301 = vdwg.mxu0
  %6302 = vmatprep.subr.mxu0 0.0
  %6303 = vmatpush1.msra.mxu0 0.0
  %6304 = vmatprep.subr.mxu0 0.0
  %6305 = vmatpush1.msra.mxu0 0.0
  %6306 = vmatprep.subr.mxu0 0.0
  %6307 = vmatpush1.msra.mxu0 0.0
  %6308 = vmatprep.subr.mxu0 0.0
  %6309 = vmatpush1.msra.mxu0 0.0
  %6310 = vmatprep.subr.mxu0 0.0
  %6311 = vmatpush1.msra.mxu0 0.0
  %6312 = vmatprep.subr.mxu0 0.0
  %6313 = vmatpush1.msra.mxu0 0.0
  %6314 = vmatprep.subr.mxu0 0.0
  %6315 = vmatpush1.msra.mxu0 0.0
  %6316 = vmatprep.subr.mxu0 0.0
  %6317 = vmatpush1.msra.mxu0 0.0
  %6318 = vmatprep.subr.mxu0 0.0
  %6319 = vmatpush1.msra.mxu0 0.0
  %6320 = vmatprep.subr.mxu0 0.0
  %6321 = vmatpush1.msra.mxu0 0.0
  %6322 = vmatprep.subr.mxu0 0.0
  %6323 = vmatpush1.msra.mxu0 0.0
  %6324 = vmatprep.subr.mxu0 0.0
  %6325 = vmatpush1.msra.mxu0 0.0
  %6326 = vmatprep.subr.mxu0 0.0
  %v6327 = vand.u32 %v5950, 4294901760
  %6328 = vmatpush1.msra.mxu0 %v6327
  %6329 = vmatprep.subr.mxu0 0.0
  %v6330 = vand.u32 %v5949, 4294901760
  %6331 = vmatpush1.msra.mxu0 %v6330
  %6332 = vmatprep.subr.mxu0 0.0
  %v6333 = vand.u32 %v5948, 4294901760
  %6334 = vmatpush1.msra.mxu0 %v6333
  %6335 = vmatprep.subr.mxu0 0.0
  %v6336 = vand.u32 %v5939, 4294901760
  %6337 = vmatpush1.msra.mxu0 %v6336
  %6338 = vmatprep.subr.mxu0 0.0
  %6339 = vmatpush2.msra.mxu0 0.0
  %6340 = vmatprep.subr.mxu0 0.0
  %6341 = vmatpush2.msra.mxu0 0.0
  %6342 = vmatprep.subr.mxu0 0.0
  %6343 = vmatpush2.msra.mxu0 0.0
  %6344 = vmatprep.subr.mxu0 0.0
  %6345 = vmatpush2.msra.mxu0 0.0
  %6346 = vmatprep.subr.mxu0 0.0
  %6347 = vmatpush2.msra.mxu0 0.0
  %6348 = vmatprep.subr.mxu0 0.0
  %6349 = vmatpush2.msra.mxu0 0.0
  %6350 = vmatprep.subr.mxu0 0.0
  %6351 = vmatpush2.msra.mxu0 0.0
  %6352 = vmatprep.subr.mxu0 0.0
  %6353 = vmatpush2.msra.mxu0 0.0
  %6354 = vmatprep.subr.mxu0 0.0
  %6355 = vmatpush2.msra.mxu0 0.0
  %6356 = vmatprep.subr.mxu0 0.0
  %6357 = vmatpush2.msra.mxu0 0.0
  %6358 = vmatprep.subr.mxu0 0.0
  %6359 = vmatpush2.msra.mxu0 0.0
  %6360 = vmatprep.subr.mxu0 0.0
  %6361 = vmatpush2.msra.mxu0 0.0
  %6362 = vmatprep.subr.mxu0 0.0
  %6363 = vmatpush2.msra.mxu0 0.0
  %6364 = vmatprep.subr.mxu0 0.0
  %6365 = vmatpush2.msra.mxu0 0.0
  %6366 = vmatprep.subr.mxu0 0.0
  %6367 = vmatpush2.msra.mxu0 0.0
  %6368 = vmatprep.subr.mxu0 0.0
  %6369 = vmatpush2.msra.mxu0 0.0
  %6370 = vmatprep.mubr.f32.mxu0 0.0
  %v6371 = vand.u32 %v5975, 4294901760
  %v6372 = vsub.f32 %v5975, %v6371
  %v6373 = vand.u32 %v6372, 4294901760
  %6374 = vmatmul.mubr.f32.gmra.mxu0 %v6373
  %v6375 = vpop.f32.mrf.mxu0
  %v6376 = vadd.f32 %v6278, %v6375
  %v6377 = vpop.f32.mrf.mxu0
  %6378 = vmatprep.mubr.f32.mxu0 0.0
  %v6379 = vand.u32 %v5977, 4294901760
  %v6380 = vsub.f32 %v5977, %v6379
  %v6381 = vand.u32 %v6380, 4294901760
  %6382 = vmatmul.mubr.f32.gmra.mxu0 %v6381
  %v6383 = vpop.f32.mrf.mxu0
  %v6384 = vadd.f32 %v6285, %v6383
  %v6385 = vpop.f32.mrf.mxu0
  %6386 = vmatprep.mubr.f32.mxu0 0.0
  %v6387 = vand.u32 %v5979, 4294901760
  %v6388 = vsub.f32 %v5979, %v6387
  %v6389 = vand.u32 %v6388, 4294901760
  %6390 = vmatmul.mubr.f32.gmra.mxu0 %v6389
  %v6391 = vpop.f32.mrf.mxu0
  %v6392 = vadd.f32 %v6292, %v6391
  %v6393 = vpop.f32.mrf.mxu0
  %6394 = vmatprep.mubr.f32.mxu0 0.0
  %v6395 = vand.u32 %v5981, 4294901760
  %v6396 = vsub.f32 %v5981, %v6395
  %v6397 = vand.u32 %v6396, 4294901760
  %6398 = vmatmul.mubr.f32.gmra.mxu0 %v6397
  %v6399 = vpop.f32.mrf.mxu0
  %v6400 = vadd.f32 %v6299, %v6399
  %v6401 = vpop.f32.mrf.mxu0
  %6402 = vdwg.mxu0
  %6403 = vmatprep.subr.mxu0 0.0
  %6404 = vmatpush1.msra.mxu0 0.0
  %6405 = vmatprep.subr.mxu0 0.0
  %6406 = vmatpush1.msra.mxu0 0.0
  %6407 = vmatprep.subr.mxu0 0.0
  %6408 = vmatpush1.msra.mxu0 0.0
  %6409 = vmatprep.subr.mxu0 0.0
  %6410 = vmatpush1.msra.mxu0 0.0
  %6411 = vmatprep.subr.mxu0 0.0
  %6412 = vmatpush1.msra.mxu0 0.0
  %6413 = vmatprep.subr.mxu0 0.0
  %6414 = vmatpush1.msra.mxu0 0.0
  %6415 = vmatprep.subr.mxu0 0.0
  %6416 = vmatpush1.msra.mxu0 0.0
  %6417 = vmatprep.subr.mxu0 0.0
  %6418 = vmatpush1.msra.mxu0 0.0
  %6419 = vmatprep.subr.mxu0 0.0
  %6420 = vmatpush1.msra.mxu0 0.0
  %6421 = vmatprep.subr.mxu0 0.0
  %6422 = vmatpush1.msra.mxu0 0.0
  %6423 = vmatprep.subr.mxu0 0.0
  %6424 = vmatpush1.msra.mxu0 0.0
  %6425 = vmatprep.subr.mxu0 0.0
  %6426 = vmatpush1.msra.mxu0 0.0
  %6427 = vmatprep.subr.mxu0 0.0
  %v6428 = vand.u32 %v5950, 4294901760
  %v6429 = vsub.f32 %v5950, %v6428
  %v6430 = vand.u32 %v6429, 4294901760
  %6431 = vmatpush1.msra.mxu0 %v6430
  %6432 = vmatprep.subr.mxu0 0.0
  %v6433 = vand.u32 %v5949, 4294901760
  %v6434 = vsub.f32 %v5949, %v6433
  %v6435 = vand.u32 %v6434, 4294901760
  %6436 = vmatpush1.msra.mxu0 %v6435
  %6437 = vmatprep.subr.mxu0 0.0
  %v6438 = vand.u32 %v5948, 4294901760
  %v6439 = vsub.f32 %v5948, %v6438
  %v6440 = vand.u32 %v6439, 4294901760
  %6441 = vmatpush1.msra.mxu0 %v6440
  %6442 = vmatprep.subr.mxu0 0.0
  %v6443 = vand.u32 %v5939, 4294901760
  %v6444 = vsub.f32 %v5939, %v6443
  %v6445 = vand.u32 %v6444, 4294901760
  %6446 = vmatpush1.msra.mxu0 %v6445
  %6447 = vmatprep.subr.mxu0 0.0
  %6448 = vmatpush2.msra.mxu0 0.0
  %6449 = vmatprep.subr.mxu0 0.0
  %6450 = vmatpush2.msra.mxu0 0.0
  %6451 = vmatprep.subr.mxu0 0.0
  %6452 = vmatpush2.msra.mxu0 0.0
  %6453 = vmatprep.subr.mxu0 0.0
  %6454 = vmatpush2.msra.mxu0 0.0
  %6455 = vmatprep.subr.mxu0 0.0
  %6456 = vmatpush2.msra.mxu0 0.0
  %6457 = vmatprep.subr.mxu0 0.0
  %6458 = vmatpush2.msra.mxu0 0.0
  %6459 = vmatprep.subr.mxu0 0.0
  %6460 = vmatpush2.msra.mxu0 0.0
  %6461 = vmatprep.subr.mxu0 0.0
  %6462 = vmatpush2.msra.mxu0 0.0
  %6463 = vmatprep.subr.mxu0 0.0
  %6464 = vmatpush2.msra.mxu0 0.0
  %6465 = vmatprep.subr.mxu0 0.0
  %6466 = vmatpush2.msra.mxu0 0.0
  %6467 = vmatprep.subr.mxu0 0.0
  %6468 = vmatpush2.msra.mxu0 0.0
  %6469 = vmatprep.subr.mxu0 0.0
  %6470 = vmatpush2.msra.mxu0 0.0
  %6471 = vmatprep.subr.mxu0 0.0
  %6472 = vmatpush2.msra.mxu0 0.0
  %6473 = vmatprep.subr.mxu0 0.0
  %6474 = vmatpush2.msra.mxu0 0.0
  %6475 = vmatprep.subr.mxu0 0.0
  %6476 = vmatpush2.msra.mxu0 0.0
  %6477 = vmatprep.subr.mxu0 0.0
  %6478 = vmatpush2.msra.mxu0 0.0
  %6479 = vmatprep.mubr.f32.mxu0 0.0
  %v6480 = vand.u32 %v5975, 4294901760
  %6481 = vmatmul.mubr.f32.gmra.mxu0 %v6480
  %v6482 = vpop.f32.mrf.mxu0
  %v6483 = vadd.f32 %v6376, %v6482
  %v6484 = vpop.f32.mrf.mxu0
  %6485 = vmatprep.mubr.f32.mxu0 0.0
  %v6486 = vand.u32 %v5977, 4294901760
  %6487 = vmatmul.mubr.f32.gmra.mxu0 %v6486
  %v6488 = vpop.f32.mrf.mxu0
  %v6489 = vadd.f32 %v6384, %v6488
  %v6490 = vpop.f32.mrf.mxu0
  %6491 = vmatprep.mubr.f32.mxu0 0.0
  %v6492 = vand.u32 %v5979, 4294901760
  %6493 = vmatmul.mubr.f32.gmra.mxu0 %v6492
  %v6494 = vpop.f32.mrf.mxu0
  %v6495 = vadd.f32 %v6392, %v6494
  %v6496 = vpop.f32.mrf.mxu0
  %6497 = vmatprep.mubr.f32.mxu0 0.0
  %v6498 = vand.u32 %v5981, 4294901760
  %6499 = vmatmul.mubr.f32.gmra.mxu0 %v6498
  %v6500 = vpop.f32.mrf.mxu0
  %v6501 = vadd.f32 %v6400, %v6500
  %v6502 = vpop.f32.mrf.mxu0
  %6503 = vdwg.mxu0
  %6504 = vmatprep.subr.mxu0 0.0
  %6505 = vmatpush1.msra.mxu0 0.0
  %6506 = vmatprep.subr.mxu0 0.0
  %6507 = vmatpush1.msra.mxu0 0.0
  %6508 = vmatprep.subr.mxu0 0.0
  %6509 = vmatpush1.msra.mxu0 0.0
  %6510 = vmatprep.subr.mxu0 0.0
  %6511 = vmatpush1.msra.mxu0 0.0
  %6512 = vmatprep.subr.mxu0 0.0
  %6513 = vmatpush1.msra.mxu0 0.0
  %6514 = vmatprep.subr.mxu0 0.0
  %6515 = vmatpush1.msra.mxu0 0.0
  %6516 = vmatprep.subr.mxu0 0.0
  %6517 = vmatpush1.msra.mxu0 0.0
  %6518 = vmatprep.subr.mxu0 0.0
  %6519 = vmatpush1.msra.mxu0 0.0
  %6520 = vmatprep.subr.mxu0 0.0
  %6521 = vmatpush1.msra.mxu0 0.0
  %6522 = vmatprep.subr.mxu0 0.0
  %6523 = vmatpush1.msra.mxu0 0.0
  %6524 = vmatprep.subr.mxu0 0.0
  %6525 = vmatpush1.msra.mxu0 0.0
  %6526 = vmatprep.subr.mxu0 0.0
  %6527 = vmatpush1.msra.mxu0 0.0
  %6528 = vmatprep.subr.mxu0 0.0
  %v6529 = vand.u32 %v5950, 4294901760
  %6530 = vmatpush1.msra.mxu0 %v6529
  %6531 = vmatprep.subr.mxu0 0.0
  %v6532 = vand.u32 %v5949, 4294901760
  %6533 = vmatpush1.msra.mxu0 %v6532
  %6534 = vmatprep.subr.mxu0 0.0
  %v6535 = vand.u32 %v5948, 4294901760
  %6536 = vmatpush1.msra.mxu0 %v6535
  %6537 = vmatprep.subr.mxu0 0.0
  %v6538 = vand.u32 %v5939, 4294901760
  %6539 = vmatpush1.msra.mxu0 %v6538
  %6540 = vmatprep.subr.mxu0 0.0
  %6541 = vmatpush2.msra.mxu0 0.0
  %6542 = vmatprep.subr.mxu0 0.0
  %6543 = vmatpush2.msra.mxu0 0.0
  %6544 = vmatprep.subr.mxu0 0.0
  %6545 = vmatpush2.msra.mxu0 0.0
  %6546 = vmatprep.subr.mxu0 0.0
  %6547 = vmatpush2.msra.mxu0 0.0
  %6548 = vmatprep.subr.mxu0 0.0
  %6549 = vmatpush2.msra.mxu0 0.0
  %6550 = vmatprep.subr.mxu0 0.0
  %6551 = vmatpush2.msra.mxu0 0.0
  %6552 = vmatprep.subr.mxu0 0.0
  %6553 = vmatpush2.msra.mxu0 0.0
  %6554 = vmatprep.subr.mxu0 0.0
  %6555 = vmatpush2.msra.mxu0 0.0
  %6556 = vmatprep.subr.mxu0 0.0
  %6557 = vmatpush2.msra.mxu0 0.0
  %6558 = vmatprep.subr.mxu0 0.0
  %6559 = vmatpush2.msra.mxu0 0.0
  %6560 = vmatprep.subr.mxu0 0.0
  %6561 = vmatpush2.msra.mxu0 0.0
  %6562 = vmatprep.subr.mxu0 0.0
  %6563 = vmatpush2.msra.mxu0 0.0
  %6564 = vmatprep.subr.mxu0 0.0
  %6565 = vmatpush2.msra.mxu0 0.0
  %6566 = vmatprep.subr.mxu0 0.0
  %6567 = vmatpush2.msra.mxu0 0.0
  %6568 = vmatprep.subr.mxu0 0.0
  %6569 = vmatpush2.msra.mxu0 0.0
  %6570 = vmatprep.subr.mxu0 0.0
  %6571 = vmatpush2.msra.mxu0 0.0
  %6572 = vmatprep.mubr.f32.mxu0 0.0
  %v6573 = vand.u32 %v5975, 4294901760
  %6574 = vmatmul.mubr.f32.gmra.mxu0 %v6573
  %v6575 = vpop.f32.mrf.mxu0
  %v6576 = vadd.f32 %v6483, %v6575
  %v6577 = vpop.f32.mrf.mxu0
  %6578 = vmatprep.mubr.f32.mxu0 0.0
  %v6579 = vand.u32 %v5977, 4294901760
  %6580 = vmatmul.mubr.f32.gmra.mxu0 %v6579
  %v6581 = vpop.f32.mrf.mxu0
  %v6582 = vadd.f32 %v6489, %v6581
  %v6583 = vpop.f32.mrf.mxu0
  %6584 = vmatprep.mubr.f32.mxu0 0.0
  %v6585 = vand.u32 %v5979, 4294901760
  %6586 = vmatmul.mubr.f32.gmra.mxu0 %v6585
  %v6587 = vpop.f32.mrf.mxu0
  %v6588 = vadd.f32 %v6495, %v6587
  %v6589 = vpop.f32.mrf.mxu0
  %6590 = vmatprep.mubr.f32.mxu0 0.0
  %v6591 = vand.u32 %v5981, 4294901760
  %6592 = vmatmul.mubr.f32.gmra.mxu0 %v6591
  %v6593 = vpop.f32.mrf.mxu0
  %v6594 = vadd.f32 %v6501, %v6593
  %v6595 = vpop.f32.mrf.mxu0
  %6596 = vdwg.mxu0
  %v6597 = vld [vmem:[%s3] sm:$0xff]
  %v6598 = vld [vmem:[%s3 + $0x8] sm:$0xff]
  %v6599 = vld [vmem:[%s3 + $0x10] sm:$0xff]
  %v6600 = vld [vmem:[%s3 + $0x18] sm:$0xff]
  %v6601 = vadd.f32 %v6576, %v6597
  %v6602 = vadd.f32 %v6582, %v6598
  %v6603 = vadd.f32 %v6588, %v6599
  %v6604 = vadd.f32 %v6594, %v6600
  %6605 = vst [vmem:[%s5] sm:$0xff] %v6601
  %6606 = vst [vmem:[%s5 + $0x8] sm:$0xff] %v6602
  %6607 = vst [vmem:[%s5 + $0x10] sm:$0xff] %v6603
  %6608 = vst [vmem:[%s5 + $0x18] sm:$0xff] %v6604
  // Predicated region
  $region22: #{nondiag_forward.1} parent=0 // pred_check
    _
  $region23: #{nondiag_forward.1} parent=0 // pred_check_branch
    %6610 = sbr.rel (0) target = $region25
  $region24: #{nondiag_forward.1} parent=0 // pred_region
    _
  $region25: #{nondiag_forward.1} parent=0 // pred_fallthru
    _
  // Predicated region
  $region26: #{nondiag_forward.1} parent=0 // pred_check
    _
  $region27: #{nondiag_forward.1} parent=0 // pred_check_branch
    %6612 = sbr.rel (0) target = $region29
  $region28: #{nondiag_forward.1} parent=0 // pred_region
    _
  $region29: #{nondiag_forward.1} parent=0 // pred_fallthru
    _

</llo_original>
